<compile_context>
chip_gen: v7x
topology: tpu7x:2x2x1
jax: 0.10.0
libtpu: 0.0.40
codegen_flags: <defaults>
</compile_context>

<pallas_src>
import functools

import jax
import jax.numpy as jnp
import numpy as np
from jax.experimental import pallas as pl
from jax.experimental.pallas import tpu as pltpu


# Parameters as produced by init_params (mirrors the PyTorch module's layers).
PARAM_ORDER = [
    "vsn_w1x", "vsn_w1s", "vsn_b1", "vsn_w2", "vsn_b2", "vsn_wvar", "vsn_bvar",
    "ffn3_w1", "ffn3_b1", "ffn3_w2", "ffn3_b2",
    "ffn4_w1", "ffn4_b1", "ffn4_w2", "ffn4_b2",
    "lstm_wih", "lstm_whh", "lstm_bih", "lstm_bhh",
    "ln1_g", "ln1_b",
    "lin1_w", "lin1_b", "lin2_w", "lin2_b", "lin3_w", "lin3_b",
    "ln2_g", "ln2_b",
]

# Packed / dtype-cast parameter set actually fed to the kernel:
#   * vsn_wvarcat = concat(vsn_wvar, vsn_bvar) along K (fuses two K=Din matmuls)
#   * lstm_b      = lstm_bih + lstm_bhh (added once)
#   * every matmul weight matrix cast to bf16 (single-pass MXU, f32 accumulation)
KERNEL_PARAMS = [
    "vsn_w1x", "vsn_w1s", "vsn_b1", "vsn_w2", "vsn_b2", "vsn_wvarcat",
    "ffn3_w1", "ffn3_b1", "ffn3_w2", "ffn3_b2",
    "ffn4_w1", "ffn4_b1", "ffn4_w2", "ffn4_b2",
    "lstm_wih", "lstm_whh", "lstm_b",
    "ln1_g", "ln1_b",
    "lin1_w", "lin1_b", "lin2_w", "lin2_b", "lin3_w", "lin3_b",
    "ln2_g", "ln2_b",
]
_BF16_WEIGHTS = frozenset([
    "vsn_w1x", "vsn_w1s", "vsn_w2", "vsn_wvarcat",
    "ffn3_w1", "ffn3_w2", "ffn4_w1", "ffn4_w2",
    "lstm_wih", "lstm_whh", "lin1_w", "lin2_w", "lin3_w",
])


def _elu(v):
    # ELU(alpha=1): v if v>0 else exp(v)-1   (clamp exp arg to avoid overflow)
    return jnp.where(v > 0, v, jnp.exp(jnp.minimum(v, 0.0)) - 1.0)


def _layer_norm(v, gamma, beta, eps=1e-5):
    mu = jnp.mean(v, axis=-1, keepdims=True)
    var = jnp.mean((v - mu) ** 2, axis=-1, keepdims=True)
    return (v - mu) * jax.lax.rsqrt(var + eps) * gamma + beta


def _dot(a, w):
    # bf16 operands, f32 accumulation: single-pass MXU on v5e/v6e/v7x.
    return jnp.dot(a.astype(jnp.bfloat16), w.astype(jnp.bfloat16),
                   preferred_element_type=jnp.float32)


def _temporal_block_kernel(seq_len, tb, H, *refs):
    """refs = (x_ref, s_ref, <kernel params>, out_ref, xp_sc, gx_sc, h_sc, c_sc)."""
    n_params = len(KERNEL_PARAMS)
    x_ref, s_ref = refs[0], refs[1]
    p = {name: refs[2 + i] for i, name in enumerate(KERNEL_PARAMS)}
    out_ref = refs[2 + n_params]
    xp_sc, gx_sc, h_sc, c_sc = refs[3 + n_params:]

    Din = x_ref.shape[-1]
    rows = seq_len * tb

    x3 = x_ref[...]                                  # (T, tb, Din) f32
    x2 = x3.reshape(rows, Din)                       # leading-dim merge: free
    s = s_ref[...]                                   # (tb, Ds)     f32

    # -------- static-feature projections: once per chunk, broadcast over T ----
    vsn_s = _dot(s, p["vsn_w1s"][...]) + p["vsn_b1"][...]     # (tb, H)
    ffn_s = _dot(s, p["lin2_w"][...]) + p["lin2_b"][...]      # (tb, H)

    # -------- VSN (variable selection network) --------
    hid = _elu(_dot(x2, p["vsn_w1x"][...]).reshape(seq_len, tb, H)
               + vsn_s[None, :, :])                           # (T, tb, H)
    logits = _dot(hid.reshape(rows, H), p["vsn_w2"][...]) + p["vsn_b2"][...]
    w = jax.nn.softmax(logits, axis=-1)                       # (rows, Din)
    # sum_i w_i*(x_i*Wvar[i] + bvar[i]) == concat(w*x, w) @ concat(Wvar; bvar)
    wx = jnp.concatenate([w * x2, w], axis=-1)                # (rows, 2*Din)
    xp = _dot(wx, p["vsn_wvarcat"][...])                      # (rows, H)
    xp_sc[...] = xp.reshape(seq_len, tb, H)

    # -------- LSTM initial state from static features (ffn_3 / ffn_4) --------
    h_sc[...] = _dot(_elu(_dot(s, p["ffn3_w1"][...]) + p["ffn3_b1"][...]),
                     p["ffn3_w2"][...]) + p["ffn3_b2"][...]
    c_sc[...] = _dot(_elu(_dot(s, p["ffn4_w1"][...]) + p["ffn4_b1"][...]),
                     p["ffn4_w2"][...]) + p["ffn4_b2"][...]

    # -------- hoist input-side gate matmul out of the recurrence (bf16) ------
    gx_sc[...] = (_dot(xp, p["lstm_wih"][...]) + p["lstm_b"][...]
                  ).reshape(seq_len, tb, 4 * H).astype(jnp.bfloat16)

    whh = p["lstm_whh"][...]                                  # (H, 4H) bf16
    # TODO(synk): optionally keep whh staged in MXU weight registers via
    # pltpu.matmul_push_rhs / matmul_acc_lhs / matmul_pop.

    # -------- LSTM recurrence (PyTorch gate order: i, f, g, o) --------
    def lstm_step(t):
        hp = h_sc[...]
        cp = c_sc[...]
        gates = gx_sc[t].astype(jnp.float32) + _dot(hp, whh)  # (tb, 4H) f32
        i_g = jax.nn.sigmoid(gates[:, 0:H])
        f_g = jax.nn.sigmoid(gates[:, H:2 * H])
        g_g = jnp.tanh(gates[:, 2 * H:3 * H])
        o_g = jax.nn.sigmoid(gates[:, 3 * H:4 * H])
        c_new = f_g * cp + i_g * g_g
        h_new = o_g * jnp.tanh(c_new)
        h_sc[...] = h_new
        c_sc[...] = c_new
        out_ref[t] = h_new      # park per-step hidden states in the out block

    # TODO(synk): for very long T, tile time onto the grid ("arbitrary" axis,
    # h/c carried in resident scratch) instead of holding (T, tb, 4H) in VMEM.
    if seq_len <= 16:
        for t in range(seq_len):          # fully unrolled: scheduler visibility
            lstm_step(t)
    else:
        def body(t, carry):
            lstm_step(t)
            return carry
        jax.lax.fori_loop(0, seq_len, body, 0, unroll=4)      # partial unroll

    # -------- residual + LN1 + gated static FFN + LN2 --------
    a = _layer_norm(out_ref[...] + xp_sc[...], p["ln1_g"][...], p["ln1_b"][...])
    ffn = _elu((_dot(a.reshape(rows, H), p["lin1_w"][...])
                + p["lin1_b"][...]).reshape(seq_len, tb, H)
               + ffn_s[None, :, :])
    ffn = (_dot(ffn.reshape(rows, H), p["lin3_w"][...])
           + p["lin3_b"][...]).reshape(seq_len, tb, H)
    out_ref[...] = _layer_norm(ffn + a, p["ln2_g"][...], p["ln2_b"][...])


def _round_up(v, m):
    return ((v + m - 1) // m) * m


def _pick_batch_tile(B, batch_tile):
    """Largest sublane-aligned tile <= batch_tile that still leaves >= 2 grid
    chunks when the batch allows it (so v7x's two TensorCores both get work)."""
    b8 = _round_up(B, 8)
    tb = max(8, (min(batch_tile, b8) // 8) * 8)
    if b8 // tb < 2 and b8 >= 16:
        tb = max(8, _round_up(b8 // 2, 8))
    return tb


def _vmem_bytes(shape, itemsize):
    shape = tuple(int(d) for d in shape)
    if len(shape) == 1:
        shape = (1,) + shape
    lead = 1
    for d in shape[:-2]:
        lead *= d
    return lead * _round_up(shape[-2], 8) * _round_up(shape[-1], 128) * itemsize


@functools.partial(jax.jit, static_argnames=("batch_tile",))
def temporal_block_forward(x_seq, s, params, *, batch_tile=256):
    """x_seq: (B, T, Din), s: (B, Ds) -> (B, T, H).

    batch_tile is the main perf knob (MXU M dimension of every matmul):
    ~128 on v5e, ~256 on v6e/v7x.  It is clamped so small batches still give
    at least two grid chunks.
    """
    B, T, Din = x_seq.shape
    Ds = s.shape[-1]
    H = params["ln1_g"].shape[-1]
    F = params["ln2_g"].shape[-1]
    assert H == F, "module residuals require lstm_hidden_dim == ffn_hidden_dim"

    tb = _pick_batch_tile(B, batch_tile)
    B_pad = _round_up(B, tb)
    if B_pad != B:
        x_seq = jnp.pad(x_seq, ((0, B_pad - B), (0, 0), (0, 0)))
        s = jnp.pad(s, ((0, B_pad - B), (0, 0)))

    # Time-major layout: timestep t is one contiguous (tb, .) slab per chunk.
    x_tm = jnp.transpose(x_seq, (1, 0, 2)).astype(jnp.float32)   # (T, B_pad, Din)
    s32 = s.astype(jnp.float32)

    # ---- pack / cast parameters once, outside the kernel ----
    kp = dict(params)
    kp["vsn_wvarcat"] = jnp.concatenate(
        [params["vsn_wvar"], params["vsn_bvar"]], axis=0)
    kp["lstm_b"] = params["lstm_bih"] + params["lstm_bhh"]
    flat_params = [
        kp[name].astype(jnp.bfloat16) if name in _BF16_WEIGHTS
        else kp[name].astype(jnp.float32)
        for name in KERNEL_PARAMS
    ]

    kernel = functools.partial(_temporal_block_kernel, T, tb, H)
    grid = (B_pad // tb,)

    # Small weights stay resident in VMEM for the whole grid (constant index).
    param_specs = [pl.BlockSpec(memory_space=pltpu.MemorySpace.VMEM)] * len(flat_params)

    # ---- VMEM budget ((8,128)-padded) with a device-aware ceiling ----
    param_bytes = sum(_vmem_bytes(w.shape, w.dtype.itemsize) for w in flat_params)
    io_bytes = 2 * (_vmem_bytes((T, tb, Din), 4) + _vmem_bytes((tb, Ds), 4)
                    + _vmem_bytes((T, tb, F), 4))            # double-buffered blocks
    scratch_bytes = (_vmem_bytes((T, tb, H), 4) + _vmem_bytes((T, tb, 4 * H), 2)
                     + 2 * _vmem_bytes((tb, H), 4))
    vmem_needed = param_bytes + io_bytes + scratch_bytes
    try:
        vmem_physical = int(pltpu.get_tpu_info().vmem_capacity_bytes)
    except Exception:
        vmem_physical = 64 * 2 ** 20          # conservative (v7x per-TC size)
    vmem_ceiling = (vmem_physical * 3) // 4   # headroom for compiler scratch
    vmem_limit = int(min(vmem_ceiling, max(32 * 2 ** 20, 2 * vmem_needed)))

    rows = T * B_pad
    flops = int(2 * rows * (5 * Din * H + 10 * H * H)
                + 4 * B_pad * (Ds * H + H * H))
    transcendentals = int(rows * (7 * H + 2 * Din))
    bytes_accessed = int(4 * rows * (Din + F) + 4 * B_pad * Ds + param_bytes)
    cost = pl.CostEstimate(flops=flops, transcendentals=transcendentals,
                           bytes_accessed=bytes_accessed)

    out_tm = pl.pallas_call(
        kernel,
        out_shape=jax.ShapeDtypeStruct((T, B_pad, F), jnp.float32),
        grid=grid,
        in_specs=[
            pl.BlockSpec((T, tb, Din), lambda i: (0, i, 0)),   # x chunk (time-major)
            pl.BlockSpec((tb, Ds), lambda i: (i, 0)),          # static-feature chunk
            *param_specs,
        ],
        out_specs=pl.BlockSpec((T, tb, F), lambda i: (0, i, 0)),
        scratch_shapes=[
            pltpu.VMEM((T, tb, H), jnp.float32),        # xp (VSN output, residual)
            pltpu.VMEM((T, tb, 4 * H), jnp.bfloat16),   # hoisted input gates
            pltpu.VMEM((tb, H), jnp.float32),           # h state
            pltpu.VMEM((tb, H), jnp.float32),           # c state
        ],
        compiler_params=pltpu.CompilerParams(
            dimension_semantics=("parallel",),          # megacore: split batch chunks
            vmem_limit_bytes=vmem_limit,
        ),
        cost_estimate=cost,
    )(x_tm, s32, *flat_params)

    out = jnp.transpose(out_tm, (1, 0, 2))               # (B_pad, T, F)
    return out[:B]


def init_params(key, input_dim, static_dim, hidden_dim):
    H = hidden_dim
    shapes = {
        "vsn_w1x": (input_dim, H), "vsn_w1s": (static_dim, H), "vsn_b1": (1, H),
        "vsn_w2": (H, input_dim), "vsn_b2": (1, input_dim),
        "vsn_wvar": (input_dim, H), "vsn_bvar": (input_dim, H),
        "ffn3_w1": (static_dim, H), "ffn3_b1": (1, H),
        "ffn3_w2": (H, H), "ffn3_b2": (1, H),
        "ffn4_w1": (static_dim, H), "ffn4_b1": (1, H),
        "ffn4_w2": (H, H), "ffn4_b2": (1, H),
        "lstm_wih": (H, 4 * H), "lstm_whh": (H, 4 * H),
        "lstm_bih": (1, 4 * H), "lstm_bhh": (1, 4 * H),
        "ln1_g": (1, H), "ln1_b": (1, H),
        "lin1_w": (H, H), "lin1_b": (1, H),
        "lin2_w": (static_dim, H), "lin2_b": (1, H),
        "lin3_w": (H, H), "lin3_b": (1, H),
        "ln2_g": (1, H), "ln2_b": (1, H),
    }
    keys = jax.random.split(key, len(PARAM_ORDER))
    params = {
        name: 0.1 * jax.random.normal(k, shapes[name], dtype=jnp.float32)
        for name, k in zip(PARAM_ORDER, keys)
    }
    # LayerNorm affine params initialized like torch: weight=1, bias=0.
    for name in ("ln1_g", "ln2_g"):
        params[name] = jnp.ones((1, H), jnp.float32)
    for name in ("ln1_b", "ln2_b"):
        params[name] = jnp.zeros((1, H), jnp.float32)
    return params


def reference_forward(x_seq, s, p):
    """Pure-JAX reference mirroring the kernel numerics (bf16 matmuls with f32
    accumulation, bf16-rounded hoisted input gates, f32 elementwise/state)."""
    B, T, Din = x_seq.shape
    H = p["ln1_g"].shape[-1]

    def dot(a, w):
        return jnp.dot(a.astype(jnp.bfloat16), w.astype(jnp.bfloat16),
                       preferred_element_type=jnp.float32)

    xf = x_seq.reshape(B * T, Din).astype(jnp.float32)
    vsn_s = dot(s, p["vsn_w1s"]) + p["vsn_b1"]
    vsn_s_e = jnp.broadcast_to(vsn_s[:, None, :], (B, T, H)).reshape(B * T, H)
    hid = _elu(dot(xf, p["vsn_w1x"]) + vsn_s_e)
    w = jax.nn.softmax(dot(hid, p["vsn_w2"]) + p["vsn_b2"], axis=-1)
    wvarcat = jnp.concatenate([p["vsn_wvar"], p["vsn_bvar"]], axis=0)
    xp = dot(jnp.concatenate([w * xf, w], axis=-1), wvarcat).reshape(B, T, H)

    h = dot(_elu(dot(s, p["ffn3_w1"]) + p["ffn3_b1"]), p["ffn3_w2"]) + p["ffn3_b2"]
    c = dot(_elu(dot(s, p["ffn4_w1"]) + p["ffn4_b1"]), p["ffn4_w2"]) + p["ffn4_b2"]
    bias = p["lstm_bih"] + p["lstm_bhh"]
    gx = dot(xp.reshape(B * T, H), p["lstm_wih"]) + bias
    gx = gx.astype(jnp.bfloat16).astype(jnp.float32).reshape(B, T, 4 * H)
    outs = []
    for t in range(T):
        gates = gx[:, t, :] + dot(h, p["lstm_whh"])
        i_g = jax.nn.sigmoid(gates[:, 0:H])
        f_g = jax.nn.sigmoid(gates[:, H:2 * H])
        g_g = jnp.tanh(gates[:, 2 * H:3 * H])
        o_g = jax.nn.sigmoid(gates[:, 3 * H:4 * H])
        c = f_g * c + i_g * g_g
        h = o_g * jnp.tanh(c)
        outs.append(h)
    lstm_out = jnp.stack(outs, axis=1)
    a = _layer_norm(lstm_out + xp, p["ln1_g"], p["ln1_b"])
    ffn_s = dot(s, p["lin2_w"]) + p["lin2_b"]
    ffn_s_e = jnp.broadcast_to(ffn_s[:, None, :], (B, T, H)).reshape(B * T, H)
    ffn = _elu(dot(a.reshape(B * T, H), p["lin1_w"]) + p["lin1_b"] + ffn_s_e)
    ffn = (dot(ffn, p["lin3_w"]) + p["lin3_b"]).reshape(B, T, H)
    return _layer_norm(ffn + a, p["ln2_g"], p["ln2_b"])


if __name__ == "__main__":
    B, T = 44, 8                  # B=44 -> batch tile 24, B_pad=48, grid=(2,)
    input_dim, static_dim = 8, 6
    hidden = 128                  # lane-dense H; shared by vsn/lstm/ffn (residuals)

    key = jax.random.PRNGKey(0)
    k_x, k_s, k_p = jax.random.split(key, 3)
    x_seq = jax.random.normal(k_x, (B, T, input_dim), dtype=jnp.float32)
    s = jax.random.normal(k_s, (B, static_dim), dtype=jnp.float32)
    params = init_params(k_p, input_dim, static_dim, hidden)

    out = jax.block_until_ready(temporal_block_forward(x_seq, s, params))

    ref = reference_forward(x_seq, s, params)
    np.testing.assert_allclose(np.asarray(out), np.asarray(ref),
                               rtol=5e-3, atol=5e-3)
    print("KERNEL_OK")
</pallas_src>

<mosaic_0001>
module attributes {stable_mosaic.version = 11 : i64} {
  func.func @_temporal_block_kernel(%arg0: i32, %arg1: memref<8x24x8xf32, #tpu.memory_space<vmem>>, %arg2: memref<24x6xf32, #tpu.memory_space<vmem>>, %arg3: memref<8x128xbf16, #tpu.memory_space<vmem>>, %arg4: memref<6x128xbf16, #tpu.memory_space<vmem>>, %arg5: memref<1x128xf32, #tpu.memory_space<vmem>>, %arg6: memref<128x8xbf16, #tpu.memory_space<vmem>>, %arg7: memref<1x8xf32, #tpu.memory_space<vmem>>, %arg8: memref<16x128xbf16, #tpu.memory_space<vmem>>, %arg9: memref<6x128xbf16, #tpu.memory_space<vmem>>, %arg10: memref<1x128xf32, #tpu.memory_space<vmem>>, %arg11: memref<128x128xbf16, #tpu.memory_space<vmem>>, %arg12: memref<1x128xf32, #tpu.memory_space<vmem>>, %arg13: memref<6x128xbf16, #tpu.memory_space<vmem>>, %arg14: memref<1x128xf32, #tpu.memory_space<vmem>>, %arg15: memref<128x128xbf16, #tpu.memory_space<vmem>>, %arg16: memref<1x128xf32, #tpu.memory_space<vmem>>, %arg17: memref<128x512xbf16, #tpu.memory_space<vmem>>, %arg18: memref<128x512xbf16, #tpu.memory_space<vmem>>, %arg19: memref<1x512xf32, #tpu.memory_space<vmem>>, %arg20: memref<1x128xf32, #tpu.memory_space<vmem>>, %arg21: memref<1x128xf32, #tpu.memory_space<vmem>>, %arg22: memref<128x128xbf16, #tpu.memory_space<vmem>>, %arg23: memref<1x128xf32, #tpu.memory_space<vmem>>, %arg24: memref<6x128xbf16, #tpu.memory_space<vmem>>, %arg25: memref<1x128xf32, #tpu.memory_space<vmem>>, %arg26: memref<128x128xbf16, #tpu.memory_space<vmem>>, %arg27: memref<1x128xf32, #tpu.memory_space<vmem>>, %arg28: memref<1x128xf32, #tpu.memory_space<vmem>>, %arg29: memref<1x128xf32, #tpu.memory_space<vmem>>, %arg30: memref<8x24x128xf32, #tpu.memory_space<vmem>>, %arg31: memref<8x24x128xf32, #tpu.memory_space<vmem>>, %arg32: memref<8x24x512xbf16, #tpu.memory_space<vmem>>, %arg33: memref<24x128xf32, #tpu.memory_space<vmem>>, %arg34: memref<24x128xf32, #tpu.memory_space<vmem>>) attributes {dimension_semantics = [#tpu.dimension_semantics<parallel>], iteration_bounds = array<i64: 2>, scalar_prefetch = 0 : i64, scratch_operands = 4 : i64, tpu.core_type = #tpu.core_type<tc>, window_params = [{transform_indices = @transform_0, window_bounds = array<i64: 8, 24, 8>}, {transform_indices = @transform_1, window_bounds = array<i64: 24, 6>}, {pipeline_mode = #tpu.pipeline_mode<synchronous>, transform_indices = @transform_2, window_bounds = array<i64: 8, 128>}, {pipeline_mode = #tpu.pipeline_mode<synchronous>, transform_indices = @transform_3, window_bounds = array<i64: 6, 128>}, {pipeline_mode = #tpu.pipeline_mode<synchronous>, transform_indices = @transform_4, window_bounds = array<i64: 1, 128>}, {pipeline_mode = #tpu.pipeline_mode<synchronous>, transform_indices = @transform_5, window_bounds = array<i64: 128, 8>}, {pipeline_mode = #tpu.pipeline_mode<synchronous>, transform_indices = @transform_6, window_bounds = array<i64: 1, 8>}, {pipeline_mode = #tpu.pipeline_mode<synchronous>, transform_indices = @transform_7, window_bounds = array<i64: 16, 128>}, {pipeline_mode = #tpu.pipeline_mode<synchronous>, transform_indices = @transform_8, window_bounds = array<i64: 6, 128>}, {pipeline_mode = #tpu.pipeline_mode<synchronous>, transform_indices = @transform_9, window_bounds = array<i64: 1, 128>}, {pipeline_mode = #tpu.pipeline_mode<synchronous>, transform_indices = @transform_10, window_bounds = array<i64: 128, 128>}, {pipeline_mode = #tpu.pipeline_mode<synchronous>, transform_indices = @transform_11, window_bounds = array<i64: 1, 128>}, {pipeline_mode = #tpu.pipeline_mode<synchronous>, transform_indices = @transform_12, window_bounds = array<i64: 6, 128>}, {pipeline_mode = #tpu.pipeline_mode<synchronous>, transform_indices = @transform_13, window_bounds = array<i64: 1, 128>}, {pipeline_mode = #tpu.pipeline_mode<synchronous>, transform_indices = @transform_14, window_bounds = array<i64: 128, 128>}, {pipeline_mode = #tpu.pipeline_mode<synchronous>, transform_indices = @transform_15, window_bounds = array<i64: 1, 128>}, {pipeline_mode = #tpu.pipeline_mode<synchronous>, transform_indices = @transform_16, window_bounds = array<i64: 128, 512>}, {pipeline_mode = #tpu.pipeline_mode<synchronous>, transform_indices = @transform_17, window_bounds = array<i64: 128, 512>}, {pipeline_mode = #tpu.pipeline_mode<synchronous>, transform_indices = @transform_18, window_bounds = array<i64: 1, 512>}, {pipeline_mode = #tpu.pipeline_mode<synchronous>, transform_indices = @transform_19, window_bounds = array<i64: 1, 128>}, {pipeline_mode = #tpu.pipeline_mode<synchronous>, transform_indices = @transform_20, window_bounds = array<i64: 1, 128>}, {pipeline_mode = #tpu.pipeline_mode<synchronous>, transform_indices = @transform_21, window_bounds = array<i64: 128, 128>}, {pipeline_mode = #tpu.pipeline_mode<synchronous>, transform_indices = @transform_22, window_bounds = array<i64: 1, 128>}, {pipeline_mode = #tpu.pipeline_mode<synchronous>, transform_indices = @transform_23, window_bounds = array<i64: 6, 128>}, {pipeline_mode = #tpu.pipeline_mode<synchronous>, transform_indices = @transform_24, window_bounds = array<i64: 1, 128>}, {pipeline_mode = #tpu.pipeline_mode<synchronous>, transform_indices = @transform_25, window_bounds = array<i64: 128, 128>}, {pipeline_mode = #tpu.pipeline_mode<synchronous>, transform_indices = @transform_26, window_bounds = array<i64: 1, 128>}, {pipeline_mode = #tpu.pipeline_mode<synchronous>, transform_indices = @transform_27, window_bounds = array<i64: 1, 128>}, {pipeline_mode = #tpu.pipeline_mode<synchronous>, transform_indices = @transform_28, window_bounds = array<i64: 1, 128>}, {transform_indices = @transform_29, window_bounds = array<i64: 8, 24, 128>}]} {
    %c0 = arith.constant 0 : index
    %c0_0 = arith.constant 0 : index
    %c0_1 = arith.constant 0 : index
    %0 = vector.load %arg1[%c0, %c0_0, %c0_1] : memref<8x24x8xf32, #tpu.memory_space<vmem>>, vector<8x24x8xf32>
    %1 = vector.shape_cast %0 : vector<8x24x8xf32> to vector<192x8xf32>
    %c0_2 = arith.constant 0 : index
    %c0_3 = arith.constant 0 : index
    %2 = vector.load %arg2[%c0_2, %c0_3] : memref<24x6xf32, #tpu.memory_space<vmem>>, vector<24x6xf32>
    %c0_4 = arith.constant 0 : index
    %c0_5 = arith.constant 0 : index
    %3 = vector.load %arg4[%c0_4, %c0_5] : memref<6x128xbf16, #tpu.memory_space<vmem>>, vector<6x128xbf16>
    %4 = arith.truncf %2 : vector<24x6xf32> to vector<24x6xbf16>
    %cst = arith.constant dense<0.000000e+00> : vector<24x128xf32>
    %5 = tpu.matmul %4, %3, %cst {dimension_numbers = #tpu.dot_dimension_numbers<[1], [0], [0], [1], [0, 0, 1, 1], [], []>} : vector<24x6xbf16>, vector<6x128xbf16>, vector<24x128xf32> -> vector<24x128xf32>
    %c0_6 = arith.constant 0 : index
    %c0_7 = arith.constant 0 : index
    %6 = vector.load %arg5[%c0_6, %c0_7] : memref<1x128xf32, #tpu.memory_space<vmem>>, vector<1x128xf32>
    %7 = vector.broadcast %6 : vector<1x128xf32> to vector<24x128xf32>
    %8 = arith.addf %5, %7 : vector<24x128xf32>
    %c0_8 = arith.constant 0 : index
    %c0_9 = arith.constant 0 : index
    %9 = vector.load %arg24[%c0_8, %c0_9] : memref<6x128xbf16, #tpu.memory_space<vmem>>, vector<6x128xbf16>
    %10 = arith.truncf %2 : vector<24x6xf32> to vector<24x6xbf16>
    %cst_10 = arith.constant dense<0.000000e+00> : vector<24x128xf32>
    %11 = tpu.matmul %10, %9, %cst_10 {dimension_numbers = #tpu.dot_dimension_numbers<[1], [0], [0], [1], [0, 0, 1, 1], [], []>} : vector<24x6xbf16>, vector<6x128xbf16>, vector<24x128xf32> -> vector<24x128xf32>
    %c0_11 = arith.constant 0 : index
    %c0_12 = arith.constant 0 : index
    %12 = vector.load %arg25[%c0_11, %c0_12] : memref<1x128xf32, #tpu.memory_space<vmem>>, vector<1x128xf32>
    %13 = vector.broadcast %12 : vector<1x128xf32> to vector<24x128xf32>
    %14 = arith.addf %11, %13 : vector<24x128xf32>
    %c0_13 = arith.constant 0 : index
    %c0_14 = arith.constant 0 : index
    %15 = vector.load %arg3[%c0_13, %c0_14] : memref<8x128xbf16, #tpu.memory_space<vmem>>, vector<8x128xbf16>
    %16 = arith.truncf %1 : vector<192x8xf32> to vector<192x8xbf16>
    %cst_15 = arith.constant dense<0.000000e+00> : vector<192x128xf32>
    %17 = tpu.matmul %16, %15, %cst_15 {dimension_numbers = #tpu.dot_dimension_numbers<[1], [0], [0], [1], [0, 0, 1, 1], [], []>} : vector<192x8xbf16>, vector<8x128xbf16>, vector<192x128xf32> -> vector<192x128xf32>
    %18 = vector.shape_cast %17 : vector<192x128xf32> to vector<8x24x128xf32>
    %19 = vector.shape_cast %8 : vector<24x128xf32> to vector<1x24x128xf32>
    %20 = vector.broadcast %19 : vector<1x24x128xf32> to vector<8x24x128xf32>
    %21 = arith.addf %18, %20 : vector<8x24x128xf32>
    %cst_16 = arith.constant 0.000000e+00 : f32
    %22 = vector.broadcast %cst_16 : f32 to vector<8x24x128xf32>
    %23 = arith.cmpf ogt, %21, %22 : vector<8x24x128xf32>
    %cst_17 = arith.constant 0.000000e+00 : f32
    %24 = vector.broadcast %cst_17 : f32 to vector<8x24x128xf32>
    %25 = arith.minimumf %21, %24 : vector<8x24x128xf32>
    %26 = math.exp %25 : vector<8x24x128xf32>
    %cst_18 = arith.constant 1.000000e+00 : f32
    %27 = vector.broadcast %cst_18 : f32 to vector<8x24x128xf32>
    %28 = arith.subf %26, %27 : vector<8x24x128xf32>
    %29 = arith.select %23, %21, %28 : vector<8x24x128xi1>, vector<8x24x128xf32>
    %30 = vector.shape_cast %29 : vector<8x24x128xf32> to vector<192x128xf32>
    %c0_19 = arith.constant 0 : index
    %c0_20 = arith.constant 0 : index
    %31 = vector.load %arg6[%c0_19, %c0_20] : memref<128x8xbf16, #tpu.memory_space<vmem>>, vector<128x8xbf16>
    %32 = arith.truncf %30 : vector<192x128xf32> to vector<192x128xbf16>
    %cst_21 = arith.constant dense<0.000000e+00> : vector<192x8xf32>
    %33 = tpu.matmul %32, %31, %cst_21 {dimension_numbers = #tpu.dot_dimension_numbers<[1], [0], [0], [1], [0, 0, 1, 1], [], []>} : vector<192x128xbf16>, vector<128x8xbf16>, vector<192x8xf32> -> vector<192x8xf32>
    %c0_22 = arith.constant 0 : index
    %c0_23 = arith.constant 0 : index
    %34 = vector.load %arg7[%c0_22, %c0_23] : memref<1x8xf32, #tpu.memory_space<vmem>>, vector<1x8xf32>
    %35 = vector.broadcast %34 : vector<1x8xf32> to vector<192x8xf32>
    %36 = arith.addf %33, %35 : vector<192x8xf32>
    %cst_24 = arith.constant dense<0xFF800000> : vector<192xf32>
    %37 = vector.multi_reduction <maximumf>, %36, %cst_24 [1] : vector<192x8xf32> to vector<192xf32>
    %cst_25 = arith.constant 0xFF800000 : f32
    %38 = vector.broadcast %cst_25 : f32 to vector<192xf32>
    %39 = arith.maximumf %38, %37 : vector<192xf32>
    %40 = vector.shape_cast %39 : vector<192xf32> to vector<192x1xf32>
    %41 = vector.broadcast %40 : vector<192x1xf32> to vector<192x8xf32>
    %42 = arith.subf %36, %41 : vector<192x8xf32>
    %43 = math.exp %42 : vector<192x8xf32>
    %cst_26 = arith.constant dense<0.000000e+00> : vector<192xf32>
    %44 = vector.multi_reduction <add>, %43, %cst_26 [1] : vector<192x8xf32> to vector<192xf32>
    %45 = vector.shape_cast %44 : vector<192xf32> to vector<192x1xf32>
    %46 = vector.broadcast %45 : vector<192x1xf32> to vector<192x8xf32>
    %47 = arith.divf %43, %46 : vector<192x8xf32>
    %48 = arith.mulf %47, %1 : vector<192x8xf32>
    %49 = tpu.concatenate %48, %47 in 1 : vector<192x8xf32>, vector<192x8xf32> -> vector<192x16xf32>
    %c0_27 = arith.constant 0 : index
    %c0_28 = arith.constant 0 : index
    %50 = vector.load %arg8[%c0_27, %c0_28] : memref<16x128xbf16, #tpu.memory_space<vmem>>, vector<16x128xbf16>
    %51 = arith.truncf %49 : vector<192x16xf32> to vector<192x16xbf16>
    %cst_29 = arith.constant dense<0.000000e+00> : vector<192x128xf32>
    %52 = tpu.matmul %51, %50, %cst_29 {dimension_numbers = #tpu.dot_dimension_numbers<[1], [0], [0], [1], [0, 0, 1, 1], [], []>} : vector<192x16xbf16>, vector<16x128xbf16>, vector<192x128xf32> -> vector<192x128xf32>
    %53 = vector.shape_cast %52 : vector<192x128xf32> to vector<8x24x128xf32>
    %c0_30 = arith.constant 0 : index
    %c0_31 = arith.constant 0 : index
    %c0_32 = arith.constant 0 : index
    %54 = vector.load %arg31[%c0_30, %c0_31, %c0_32] : memref<8x24x128xf32, #tpu.memory_space<vmem>>, vector<8x24x128xf32>
    tpu.vector_store %arg31[%c0_30, %c0_31, %c0_32], %53 {strides = array<i32>} : memref<8x24x128xf32, #tpu.memory_space<vmem>>, vector<8x24x128xf32>,
    %c0_33 = arith.constant 0 : index
    %c0_34 = arith.constant 0 : index
    %55 = vector.load %arg9[%c0_33, %c0_34] : memref<6x128xbf16, #tpu.memory_space<vmem>>, vector<6x128xbf16>
    %56 = arith.truncf %2 : vector<24x6xf32> to vector<24x6xbf16>
    %cst_35 = arith.constant dense<0.000000e+00> : vector<24x128xf32>
    %57 = tpu.matmul %56, %55, %cst_35 {dimension_numbers = #tpu.dot_dimension_numbers<[1], [0], [0], [1], [0, 0, 1, 1], [], []>} : vector<24x6xbf16>, vector<6x128xbf16>, vector<24x128xf32> -> vector<24x128xf32>
    %c0_36 = arith.constant 0 : index
    %c0_37 = arith.constant 0 : index
    %58 = vector.load %arg10[%c0_36, %c0_37] : memref<1x128xf32, #tpu.memory_space<vmem>>, vector<1x128xf32>
    %59 = vector.broadcast %58 : vector<1x128xf32> to vector<24x128xf32>
    %60 = arith.addf %57, %59 : vector<24x128xf32>
    %cst_38 = arith.constant 0.000000e+00 : f32
    %61 = vector.broadcast %cst_38 : f32 to vector<24x128xf32>
    %62 = arith.cmpf ogt, %60, %61 : vector<24x128xf32>
    %cst_39 = arith.constant 0.000000e+00 : f32
    %63 = vector.broadcast %cst_39 : f32 to vector<24x128xf32>
    %64 = arith.minimumf %60, %63 : vector<24x128xf32>
    %65 = math.exp %64 : vector<24x128xf32>
    %cst_40 = arith.constant 1.000000e+00 : f32
    %66 = vector.broadcast %cst_40 : f32 to vector<24x128xf32>
    %67 = arith.subf %65, %66 : vector<24x128xf32>
    %68 = arith.select %62, %60, %67 : vector<24x128xi1>, vector<24x128xf32>
    %c0_41 = arith.constant 0 : index
    %c0_42 = arith.constant 0 : index
    %69 = vector.load %arg11[%c0_41, %c0_42] : memref<128x128xbf16, #tpu.memory_space<vmem>>, vector<128x128xbf16>
    %70 = arith.truncf %68 : vector<24x128xf32> to vector<24x128xbf16>
    %cst_43 = arith.constant dense<0.000000e+00> : vector<24x128xf32>
    %71 = tpu.matmul %70, %69, %cst_43 {dimension_numbers = #tpu.dot_dimension_numbers<[1], [0], [0], [1], [0, 0, 1, 1], [], []>} : vector<24x128xbf16>, vector<128x128xbf16>, vector<24x128xf32> -> vector<24x128xf32>
    %c0_44 = arith.constant 0 : index
    %c0_45 = arith.constant 0 : index
    %72 = vector.load %arg12[%c0_44, %c0_45] : memref<1x128xf32, #tpu.memory_space<vmem>>, vector<1x128xf32>
    %73 = vector.broadcast %72 : vector<1x128xf32> to vector<24x128xf32>
    %74 = arith.addf %71, %73 : vector<24x128xf32>
    %c0_46 = arith.constant 0 : index
    %c0_47 = arith.constant 0 : index
    %75 = vector.load %arg33[%c0_46, %c0_47] : memref<24x128xf32, #tpu.memory_space<vmem>>, vector<24x128xf32>
    tpu.vector_store %arg33[%c0_46, %c0_47], %74 {strides = array<i32>} : memref<24x128xf32, #tpu.memory_space<vmem>>, vector<24x128xf32>,
    %c0_48 = arith.constant 0 : index
    %c0_49 = arith.constant 0 : index
    %76 = vector.load %arg13[%c0_48, %c0_49] : memref<6x128xbf16, #tpu.memory_space<vmem>>, vector<6x128xbf16>
    %77 = arith.truncf %2 : vector<24x6xf32> to vector<24x6xbf16>
    %cst_50 = arith.constant dense<0.000000e+00> : vector<24x128xf32>
    %78 = tpu.matmul %77, %76, %cst_50 {dimension_numbers = #tpu.dot_dimension_numbers<[1], [0], [0], [1], [0, 0, 1, 1], [], []>} : vector<24x6xbf16>, vector<6x128xbf16>, vector<24x128xf32> -> vector<24x128xf32>
    %c0_51 = arith.constant 0 : index
    %c0_52 = arith.constant 0 : index
    %79 = vector.load %arg14[%c0_51, %c0_52] : memref<1x128xf32, #tpu.memory_space<vmem>>, vector<1x128xf32>
    %80 = vector.broadcast %79 : vector<1x128xf32> to vector<24x128xf32>
    %81 = arith.addf %78, %80 : vector<24x128xf32>
    %cst_53 = arith.constant 0.000000e+00 : f32
    %82 = vector.broadcast %cst_53 : f32 to vector<24x128xf32>
    %83 = arith.cmpf ogt, %81, %82 : vector<24x128xf32>
    %cst_54 = arith.constant 0.000000e+00 : f32
    %84 = vector.broadcast %cst_54 : f32 to vector<24x128xf32>
    %85 = arith.minimumf %81, %84 : vector<24x128xf32>
    %86 = math.exp %85 : vector<24x128xf32>
    %cst_55 = arith.constant 1.000000e+00 : f32
    %87 = vector.broadcast %cst_55 : f32 to vector<24x128xf32>
    %88 = arith.subf %86, %87 : vector<24x128xf32>
    %89 = arith.select %83, %81, %88 : vector<24x128xi1>, vector<24x128xf32>
    %c0_56 = arith.constant 0 : index
    %c0_57 = arith.constant 0 : index
    %90 = vector.load %arg15[%c0_56, %c0_57] : memref<128x128xbf16, #tpu.memory_space<vmem>>, vector<128x128xbf16>
    %91 = arith.truncf %89 : vector<24x128xf32> to vector<24x128xbf16>
    %cst_58 = arith.constant dense<0.000000e+00> : vector<24x128xf32>
    %92 = tpu.matmul %91, %90, %cst_58 {dimension_numbers = #tpu.dot_dimension_numbers<[1], [0], [0], [1], [0, 0, 1, 1], [], []>} : vector<24x128xbf16>, vector<128x128xbf16>, vector<24x128xf32> -> vector<24x128xf32>
    %c0_59 = arith.constant 0 : index
    %c0_60 = arith.constant 0 : index
    %93 = vector.load %arg16[%c0_59, %c0_60] : memref<1x128xf32, #tpu.memory_space<vmem>>, vector<1x128xf32>
    %94 = vector.broadcast %93 : vector<1x128xf32> to vector<24x128xf32>
    %95 = arith.addf %92, %94 : vector<24x128xf32>
    %c0_61 = arith.constant 0 : index
    %c0_62 = arith.constant 0 : index
    %96 = vector.load %arg34[%c0_61, %c0_62] : memref<24x128xf32, #tpu.memory_space<vmem>>, vector<24x128xf32>
    tpu.vector_store %arg34[%c0_61, %c0_62], %95 {strides = array<i32>} : memref<24x128xf32, #tpu.memory_space<vmem>>, vector<24x128xf32>,
    %c0_63 = arith.constant 0 : index
    %c0_64 = arith.constant 0 : index
    %97 = vector.load %arg17[%c0_63, %c0_64] : memref<128x512xbf16, #tpu.memory_space<vmem>>, vector<128x512xbf16>
    %98 = arith.truncf %52 : vector<192x128xf32> to vector<192x128xbf16>
    %cst_65 = arith.constant dense<0.000000e+00> : vector<192x512xf32>
    %99 = tpu.matmul %98, %97, %cst_65 {dimension_numbers = #tpu.dot_dimension_numbers<[1], [0], [0], [1], [0, 0, 1, 1], [], []>} : vector<192x128xbf16>, vector<128x512xbf16>, vector<192x512xf32> -> vector<192x512xf32>
    %c0_66 = arith.constant 0 : index
    %c0_67 = arith.constant 0 : index
    %100 = vector.load %arg19[%c0_66, %c0_67] : memref<1x512xf32, #tpu.memory_space<vmem>>, vector<1x512xf32>
    %101 = vector.broadcast %100 : vector<1x512xf32> to vector<192x512xf32>
    %102 = arith.addf %99, %101 : vector<192x512xf32>
    %103 = vector.shape_cast %102 : vector<192x512xf32> to vector<8x24x512xf32>
    %104 = arith.truncf %103 : vector<8x24x512xf32> to vector<8x24x512xbf16>
    %c0_68 = arith.constant 0 : index
    %c0_69 = arith.constant 0 : index
    %c0_70 = arith.constant 0 : index
    %105 = vector.load %arg32[%c0_68, %c0_69, %c0_70] : memref<8x24x512xbf16, #tpu.memory_space<vmem>>, vector<8x24x512xbf16>
    tpu.vector_store %arg32[%c0_68, %c0_69, %c0_70], %104 {strides = array<i32>} : memref<8x24x512xbf16, #tpu.memory_space<vmem>>, vector<8x24x512xbf16>,
    %c0_71 = arith.constant 0 : index
    %c0_72 = arith.constant 0 : index
    %106 = vector.load %arg18[%c0_71, %c0_72] : memref<128x512xbf16, #tpu.memory_space<vmem>>, vector<128x512xbf16>
    %c0_73 = arith.constant 0 : index
    %c0_74 = arith.constant 0 : index
    %107 = vector.load %arg33[%c0_73, %c0_74] : memref<24x128xf32, #tpu.memory_space<vmem>>, vector<24x128xf32>
    %c0_75 = arith.constant 0 : index
    %c0_76 = arith.constant 0 : index
    %108 = vector.load %arg34[%c0_75, %c0_76] : memref<24x128xf32, #tpu.memory_space<vmem>>, vector<24x128xf32>
    %c0_77 = arith.constant 0 : index
    %c0_78 = arith.constant 0 : index
    %c0_79 = arith.constant 0 : index
    %109 = vector.load %arg32[%c0_77, %c0_78, %c0_79] : memref<8x24x512xbf16, #tpu.memory_space<vmem>>, vector<1x24x512xbf16>
    %110 = vector.shape_cast %109 : vector<1x24x512xbf16> to vector<24x512xbf16>
    %111 = arith.extf %110 : vector<24x512xbf16> to vector<24x512xf32>
    %112 = arith.truncf %107 : vector<24x128xf32> to vector<24x128xbf16>
    %cst_80 = arith.constant dense<0.000000e+00> : vector<24x512xf32>
    %113 = tpu.matmul %112, %106, %cst_80 {dimension_numbers = #tpu.dot_dimension_numbers<[1], [0], [0], [1], [0, 0, 1, 1], [], []>} : vector<24x128xbf16>, vector<128x512xbf16>, vector<24x512xf32> -> vector<24x512xf32>
    %114 = arith.addf %111, %113 : vector<24x512xf32>
    %115 = vector.extract_strided_slice %114 {offsets = [0, 0], sizes = [24, 128], strides = [1, 1]} : vector<24x512xf32> to vector<24x128xf32>
    %116 = arith.negf %115 : vector<24x128xf32>
    %117 = math.exp %116 : vector<24x128xf32>
    %cst_81 = arith.constant 1.000000e+00 : f32
    %118 = vector.broadcast %cst_81 : f32 to vector<24x128xf32>
    %119 = arith.addf %118, %117 : vector<24x128xf32>
    %120 = arith.divf %118, %119 : vector<24x128xf32>
    %121 = vector.extract_strided_slice %114 {offsets = [0, 128], sizes = [24, 128], strides = [1, 1]} : vector<24x512xf32> to vector<24x128xf32>
    %122 = arith.negf %121 : vector<24x128xf32>
    %123 = math.exp %122 : vector<24x128xf32>
    %cst_82 = arith.constant 1.000000e+00 : f32
    %124 = vector.broadcast %cst_82 : f32 to vector<24x128xf32>
    %125 = arith.addf %124, %123 : vector<24x128xf32>
    %126 = arith.divf %124, %125 : vector<24x128xf32>
    %127 = vector.extract_strided_slice %114 {offsets = [0, 256], sizes = [24, 128], strides = [1, 1]} : vector<24x512xf32> to vector<24x128xf32>
    %128 = math.tanh %127 : vector<24x128xf32>
    %129 = vector.extract_strided_slice %114 {offsets = [0, 384], sizes = [24, 128], strides = [1, 1]} : vector<24x512xf32> to vector<24x128xf32>
    %130 = arith.negf %129 : vector<24x128xf32>
    %131 = math.exp %130 : vector<24x128xf32>
    %cst_83 = arith.constant 1.000000e+00 : f32
    %132 = vector.broadcast %cst_83 : f32 to vector<24x128xf32>
    %133 = arith.addf %132, %131 : vector<24x128xf32>
    %134 = arith.divf %132, %133 : vector<24x128xf32>
    %135 = arith.mulf %126, %108 : vector<24x128xf32>
    %136 = arith.mulf %120, %128 : vector<24x128xf32>
    %137 = arith.addf %135, %136 : vector<24x128xf32>
    %138 = math.tanh %137 : vector<24x128xf32>
    %139 = arith.mulf %134, %138 : vector<24x128xf32>
    %c0_84 = arith.constant 0 : index
    %c0_85 = arith.constant 0 : index
    %140 = vector.load %arg33[%c0_84, %c0_85] : memref<24x128xf32, #tpu.memory_space<vmem>>, vector<24x128xf32>
    tpu.vector_store %arg33[%c0_84, %c0_85], %139 {strides = array<i32>} : memref<24x128xf32, #tpu.memory_space<vmem>>, vector<24x128xf32>,
    %c0_86 = arith.constant 0 : index
    %c0_87 = arith.constant 0 : index
    %141 = vector.load %arg34[%c0_86, %c0_87] : memref<24x128xf32, #tpu.memory_space<vmem>>, vector<24x128xf32>
    tpu.vector_store %arg34[%c0_86, %c0_87], %137 {strides = array<i32>} : memref<24x128xf32, #tpu.memory_space<vmem>>, vector<24x128xf32>,
    %c0_88 = arith.constant 0 : index
    %c0_89 = arith.constant 0 : index
    %c0_90 = arith.constant 0 : index
    %142 = vector.load %arg30[%c0_88, %c0_89, %c0_90] : memref<8x24x128xf32, #tpu.memory_space<vmem>>, vector<1x24x128xf32>
    %143 = vector.shape_cast %142 : vector<1x24x128xf32> to vector<24x128xf32>
    %144 = vector.shape_cast %139 : vector<24x128xf32> to vector<1x24x128xf32>
    tpu.vector_store %arg30[%c0_88, %c0_89, %c0_90], %144 {strides = array<i32>} : memref<8x24x128xf32, #tpu.memory_space<vmem>>, vector<1x24x128xf32>,
    %c0_91 = arith.constant 0 : index
    %c0_92 = arith.constant 0 : index
    %145 = vector.load %arg33[%c0_91, %c0_92] : memref<24x128xf32, #tpu.memory_space<vmem>>, vector<24x128xf32>
    %c0_93 = arith.constant 0 : index
    %c0_94 = arith.constant 0 : index
    %146 = vector.load %arg34[%c0_93, %c0_94] : memref<24x128xf32, #tpu.memory_space<vmem>>, vector<24x128xf32>
    %c1 = arith.constant 1 : index
    %c0_95 = arith.constant 0 : index
    %c0_96 = arith.constant 0 : index
    %147 = vector.load %arg32[%c1, %c0_95, %c0_96] : memref<8x24x512xbf16, #tpu.memory_space<vmem>>, vector<1x24x512xbf16>
    %148 = vector.shape_cast %147 : vector<1x24x512xbf16> to vector<24x512xbf16>
    %149 = arith.extf %148 : vector<24x512xbf16> to vector<24x512xf32>
    %150 = arith.truncf %145 : vector<24x128xf32> to vector<24x128xbf16>
    %cst_97 = arith.constant dense<0.000000e+00> : vector<24x512xf32>
    %151 = tpu.matmul %150, %106, %cst_97 {dimension_numbers = #tpu.dot_dimension_numbers<[1], [0], [0], [1], [0, 0, 1, 1], [], []>} : vector<24x128xbf16>, vector<128x512xbf16>, vector<24x512xf32> -> vector<24x512xf32>
    %152 = arith.addf %149, %151 : vector<24x512xf32>
    %153 = vector.extract_strided_slice %152 {offsets = [0, 0], sizes = [24, 128], strides = [1, 1]} : vector<24x512xf32> to vector<24x128xf32>
    %154 = arith.negf %153 : vector<24x128xf32>
    %155 = math.exp %154 : vector<24x128xf32>
    %cst_98 = arith.constant 1.000000e+00 : f32
    %156 = vector.broadcast %cst_98 : f32 to vector<24x128xf32>
    %157 = arith.addf %156, %155 : vector<24x128xf32>
    %158 = arith.divf %156, %157 : vector<24x128xf32>
    %159 = vector.extract_strided_slice %152 {offsets = [0, 128], sizes = [24, 128], strides = [1, 1]} : vector<24x512xf32> to vector<24x128xf32>
    %160 = arith.negf %159 : vector<24x128xf32>
    %161 = math.exp %160 : vector<24x128xf32>
    %cst_99 = arith.constant 1.000000e+00 : f32
    %162 = vector.broadcast %cst_99 : f32 to vector<24x128xf32>
    %163 = arith.addf %162, %161 : vector<24x128xf32>
    %164 = arith.divf %162, %163 : vector<24x128xf32>
    %165 = vector.extract_strided_slice %152 {offsets = [0, 256], sizes = [24, 128], strides = [1, 1]} : vector<24x512xf32> to vector<24x128xf32>
    %166 = math.tanh %165 : vector<24x128xf32>
    %167 = vector.extract_strided_slice %152 {offsets = [0, 384], sizes = [24, 128], strides = [1, 1]} : vector<24x512xf32> to vector<24x128xf32>
    %168 = arith.negf %167 : vector<24x128xf32>
    %169 = math.exp %168 : vector<24x128xf32>
    %cst_100 = arith.constant 1.000000e+00 : f32
    %170 = vector.broadcast %cst_100 : f32 to vector<24x128xf32>
    %171 = arith.addf %170, %169 : vector<24x128xf32>
    %172 = arith.divf %170, %171 : vector<24x128xf32>
    %173 = arith.mulf %164, %146 : vector<24x128xf32>
    %174 = arith.mulf %158, %166 : vector<24x128xf32>
    %175 = arith.addf %173, %174 : vector<24x128xf32>
    %176 = math.tanh %175 : vector<24x128xf32>
    %177 = arith.mulf %172, %176 : vector<24x128xf32>
    %c0_101 = arith.constant 0 : index
    %c0_102 = arith.constant 0 : index
    %178 = vector.load %arg33[%c0_101, %c0_102] : memref<24x128xf32, #tpu.memory_space<vmem>>, vector<24x128xf32>
    tpu.vector_store %arg33[%c0_101, %c0_102], %177 {strides = array<i32>} : memref<24x128xf32, #tpu.memory_space<vmem>>, vector<24x128xf32>,
    %c0_103 = arith.constant 0 : index
    %c0_104 = arith.constant 0 : index
    %179 = vector.load %arg34[%c0_103, %c0_104] : memref<24x128xf32, #tpu.memory_space<vmem>>, vector<24x128xf32>
    tpu.vector_store %arg34[%c0_103, %c0_104], %175 {strides = array<i32>} : memref<24x128xf32, #tpu.memory_space<vmem>>, vector<24x128xf32>,
    %c1_105 = arith.constant 1 : index
    %c0_106 = arith.constant 0 : index
    %c0_107 = arith.constant 0 : index
    %180 = vector.load %arg30[%c1_105, %c0_106, %c0_107] : memref<8x24x128xf32, #tpu.memory_space<vmem>>, vector<1x24x128xf32>
    %181 = vector.shape_cast %180 : vector<1x24x128xf32> to vector<24x128xf32>
    %182 = vector.shape_cast %177 : vector<24x128xf32> to vector<1x24x128xf32>
    tpu.vector_store %arg30[%c1_105, %c0_106, %c0_107], %182 {strides = array<i32>} : memref<8x24x128xf32, #tpu.memory_space<vmem>>, vector<1x24x128xf32>,
    %c0_108 = arith.constant 0 : index
    %c0_109 = arith.constant 0 : index
    %183 = vector.load %arg33[%c0_108, %c0_109] : memref<24x128xf32, #tpu.memory_space<vmem>>, vector<24x128xf32>
    %c0_110 = arith.constant 0 : index
    %c0_111 = arith.constant 0 : index
    %184 = vector.load %arg34[%c0_110, %c0_111] : memref<24x128xf32, #tpu.memory_space<vmem>>, vector<24x128xf32>
    %c2 = arith.constant 2 : index
    %c0_112 = arith.constant 0 : index
    %c0_113 = arith.constant 0 : index
    %185 = vector.load %arg32[%c2, %c0_112, %c0_113] : memref<8x24x512xbf16, #tpu.memory_space<vmem>>, vector<1x24x512xbf16>
    %186 = vector.shape_cast %185 : vector<1x24x512xbf16> to vector<24x512xbf16>
    %187 = arith.extf %186 : vector<24x512xbf16> to vector<24x512xf32>
    %188 = arith.truncf %183 : vector<24x128xf32> to vector<24x128xbf16>
    %cst_114 = arith.constant dense<0.000000e+00> : vector<24x512xf32>
    %189 = tpu.matmul %188, %106, %cst_114 {dimension_numbers = #tpu.dot_dimension_numbers<[1], [0], [0], [1], [0, 0, 1, 1], [], []>} : vector<24x128xbf16>, vector<128x512xbf16>, vector<24x512xf32> -> vector<24x512xf32>
    %190 = arith.addf %187, %189 : vector<24x512xf32>
    %191 = vector.extract_strided_slice %190 {offsets = [0, 0], sizes = [24, 128], strides = [1, 1]} : vector<24x512xf32> to vector<24x128xf32>
    %192 = arith.negf %191 : vector<24x128xf32>
    %193 = math.exp %192 : vector<24x128xf32>
    %cst_115 = arith.constant 1.000000e+00 : f32
    %194 = vector.broadcast %cst_115 : f32 to vector<24x128xf32>
    %195 = arith.addf %194, %193 : vector<24x128xf32>
    %196 = arith.divf %194, %195 : vector<24x128xf32>
    %197 = vector.extract_strided_slice %190 {offsets = [0, 128], sizes = [24, 128], strides = [1, 1]} : vector<24x512xf32> to vector<24x128xf32>
    %198 = arith.negf %197 : vector<24x128xf32>
    %199 = math.exp %198 : vector<24x128xf32>
    %cst_116 = arith.constant 1.000000e+00 : f32
    %200 = vector.broadcast %cst_116 : f32 to vector<24x128xf32>
    %201 = arith.addf %200, %199 : vector<24x128xf32>
    %202 = arith.divf %200, %201 : vector<24x128xf32>
    %203 = vector.extract_strided_slice %190 {offsets = [0, 256], sizes = [24, 128], strides = [1, 1]} : vector<24x512xf32> to vector<24x128xf32>
    %204 = math.tanh %203 : vector<24x128xf32>
    %205 = vector.extract_strided_slice %190 {offsets = [0, 384], sizes = [24, 128], strides = [1, 1]} : vector<24x512xf32> to vector<24x128xf32>
    %206 = arith.negf %205 : vector<24x128xf32>
    %207 = math.exp %206 : vector<24x128xf32>
    %cst_117 = arith.constant 1.000000e+00 : f32
    %208 = vector.broadcast %cst_117 : f32 to vector<24x128xf32>
    %209 = arith.addf %208, %207 : vector<24x128xf32>
    %210 = arith.divf %208, %209 : vector<24x128xf32>
    %211 = arith.mulf %202, %184 : vector<24x128xf32>
    %212 = arith.mulf %196, %204 : vector<24x128xf32>
    %213 = arith.addf %211, %212 : vector<24x128xf32>
    %214 = math.tanh %213 : vector<24x128xf32>
    %215 = arith.mulf %210, %214 : vector<24x128xf32>
    %c0_118 = arith.constant 0 : index
    %c0_119 = arith.constant 0 : index
    %216 = vector.load %arg33[%c0_118, %c0_119] : memref<24x128xf32, #tpu.memory_space<vmem>>, vector<24x128xf32>
    tpu.vector_store %arg33[%c0_118, %c0_119], %215 {strides = array<i32>} : memref<24x128xf32, #tpu.memory_space<vmem>>, vector<24x128xf32>,
    %c0_120 = arith.constant 0 : index
    %c0_121 = arith.constant 0 : index
    %217 = vector.load %arg34[%c0_120, %c0_121] : memref<24x128xf32, #tpu.memory_space<vmem>>, vector<24x128xf32>
    tpu.vector_store %arg34[%c0_120, %c0_121], %213 {strides = array<i32>} : memref<24x128xf32, #tpu.memory_space<vmem>>, vector<24x128xf32>,
    %c2_122 = arith.constant 2 : index
    %c0_123 = arith.constant 0 : index
    %c0_124 = arith.constant 0 : index
    %218 = vector.load %arg30[%c2_122, %c0_123, %c0_124] : memref<8x24x128xf32, #tpu.memory_space<vmem>>, vector<1x24x128xf32>
    %219 = vector.shape_cast %218 : vector<1x24x128xf32> to vector<24x128xf32>
    %220 = vector.shape_cast %215 : vector<24x128xf32> to vector<1x24x128xf32>
    tpu.vector_store %arg30[%c2_122, %c0_123, %c0_124], %220 {strides = array<i32>} : memref<8x24x128xf32, #tpu.memory_space<vmem>>, vector<1x24x128xf32>,
    %c0_125 = arith.constant 0 : index
    %c0_126 = arith.constant 0 : index
    %221 = vector.load %arg33[%c0_125, %c0_126] : memref<24x128xf32, #tpu.memory_space<vmem>>, vector<24x128xf32>
    %c0_127 = arith.constant 0 : index
    %c0_128 = arith.constant 0 : index
    %222 = vector.load %arg34[%c0_127, %c0_128] : memref<24x128xf32, #tpu.memory_space<vmem>>, vector<24x128xf32>
    %c3 = arith.constant 3 : index
    %c0_129 = arith.constant 0 : index
    %c0_130 = arith.constant 0 : index
    %223 = vector.load %arg32[%c3, %c0_129, %c0_130] : memref<8x24x512xbf16, #tpu.memory_space<vmem>>, vector<1x24x512xbf16>
    %224 = vector.shape_cast %223 : vector<1x24x512xbf16> to vector<24x512xbf16>
    %225 = arith.extf %224 : vector<24x512xbf16> to vector<24x512xf32>
    %226 = arith.truncf %221 : vector<24x128xf32> to vector<24x128xbf16>
    %cst_131 = arith.constant dense<0.000000e+00> : vector<24x512xf32>
    %227 = tpu.matmul %226, %106, %cst_131 {dimension_numbers = #tpu.dot_dimension_numbers<[1], [0], [0], [1], [0, 0, 1, 1], [], []>} : vector<24x128xbf16>, vector<128x512xbf16>, vector<24x512xf32> -> vector<24x512xf32>
    %228 = arith.addf %225, %227 : vector<24x512xf32>
    %229 = vector.extract_strided_slice %228 {offsets = [0, 0], sizes = [24, 128], strides = [1, 1]} : vector<24x512xf32> to vector<24x128xf32>
    %230 = arith.negf %229 : vector<24x128xf32>
    %231 = math.exp %230 : vector<24x128xf32>
    %cst_132 = arith.constant 1.000000e+00 : f32
    %232 = vector.broadcast %cst_132 : f32 to vector<24x128xf32>
    %233 = arith.addf %232, %231 : vector<24x128xf32>
    %234 = arith.divf %232, %233 : vector<24x128xf32>
    %235 = vector.extract_strided_slice %228 {offsets = [0, 128], sizes = [24, 128], strides = [1, 1]} : vector<24x512xf32> to vector<24x128xf32>
    %236 = arith.negf %235 : vector<24x128xf32>
    %237 = math.exp %236 : vector<24x128xf32>
    %cst_133 = arith.constant 1.000000e+00 : f32
    %238 = vector.broadcast %cst_133 : f32 to vector<24x128xf32>
    %239 = arith.addf %238, %237 : vector<24x128xf32>
    %240 = arith.divf %238, %239 : vector<24x128xf32>
    %241 = vector.extract_strided_slice %228 {offsets = [0, 256], sizes = [24, 128], strides = [1, 1]} : vector<24x512xf32> to vector<24x128xf32>
    %242 = math.tanh %241 : vector<24x128xf32>
    %243 = vector.extract_strided_slice %228 {offsets = [0, 384], sizes = [24, 128], strides = [1, 1]} : vector<24x512xf32> to vector<24x128xf32>
    %244 = arith.negf %243 : vector<24x128xf32>
    %245 = math.exp %244 : vector<24x128xf32>
    %cst_134 = arith.constant 1.000000e+00 : f32
    %246 = vector.broadcast %cst_134 : f32 to vector<24x128xf32>
    %247 = arith.addf %246, %245 : vector<24x128xf32>
    %248 = arith.divf %246, %247 : vector<24x128xf32>
    %249 = arith.mulf %240, %222 : vector<24x128xf32>
    %250 = arith.mulf %234, %242 : vector<24x128xf32>
    %251 = arith.addf %249, %250 : vector<24x128xf32>
    %252 = math.tanh %251 : vector<24x128xf32>
    %253 = arith.mulf %248, %252 : vector<24x128xf32>
    %c0_135 = arith.constant 0 : index
    %c0_136 = arith.constant 0 : index
    %254 = vector.load %arg33[%c0_135, %c0_136] : memref<24x128xf32, #tpu.memory_space<vmem>>, vector<24x128xf32>
    tpu.vector_store %arg33[%c0_135, %c0_136], %253 {strides = array<i32>} : memref<24x128xf32, #tpu.memory_space<vmem>>, vector<24x128xf32>,
    %c0_137 = arith.constant 0 : index
    %c0_138 = arith.constant 0 : index
    %255 = vector.load %arg34[%c0_137, %c0_138] : memref<24x128xf32, #tpu.memory_space<vmem>>, vector<24x128xf32>
    tpu.vector_store %arg34[%c0_137, %c0_138], %251 {strides = array<i32>} : memref<24x128xf32, #tpu.memory_space<vmem>>, vector<24x128xf32>,
    %c3_139 = arith.constant 3 : index
    %c0_140 = arith.constant 0 : index
    %c0_141 = arith.constant 0 : index
    %256 = vector.load %arg30[%c3_139, %c0_140, %c0_141] : memref<8x24x128xf32, #tpu.memory_space<vmem>>, vector<1x24x128xf32>
    %257 = vector.shape_cast %256 : vector<1x24x128xf32> to vector<24x128xf32>
    %258 = vector.shape_cast %253 : vector<24x128xf32> to vector<1x24x128xf32>
    tpu.vector_store %arg30[%c3_139, %c0_140, %c0_141], %258 {strides = array<i32>} : memref<8x24x128xf32, #tpu.memory_space<vmem>>, vector<1x24x128xf32>,
    %c0_142 = arith.constant 0 : index
    %c0_143 = arith.constant 0 : index
    %259 = vector.load %arg33[%c0_142, %c0_143] : memref<24x128xf32, #tpu.memory_space<vmem>>, vector<24x128xf32>
    %c0_144 = arith.constant 0 : index
    %c0_145 = arith.constant 0 : index
    %260 = vector.load %arg34[%c0_144, %c0_145] : memref<24x128xf32, #tpu.memory_space<vmem>>, vector<24x128xf32>
    %c4 = arith.constant 4 : index
    %c0_146 = arith.constant 0 : index
    %c0_147 = arith.constant 0 : index
    %261 = vector.load %arg32[%c4, %c0_146, %c0_147] : memref<8x24x512xbf16, #tpu.memory_space<vmem>>, vector<1x24x512xbf16>
    %262 = vector.shape_cast %261 : vector<1x24x512xbf16> to vector<24x512xbf16>
    %263 = arith.extf %262 : vector<24x512xbf16> to vector<24x512xf32>
    %264 = arith.truncf %259 : vector<24x128xf32> to vector<24x128xbf16>
    %cst_148 = arith.constant dense<0.000000e+00> : vector<24x512xf32>
    %265 = tpu.matmul %264, %106, %cst_148 {dimension_numbers = #tpu.dot_dimension_numbers<[1], [0], [0], [1], [0, 0, 1, 1], [], []>} : vector<24x128xbf16>, vector<128x512xbf16>, vector<24x512xf32> -> vector<24x512xf32>
    %266 = arith.addf %263, %265 : vector<24x512xf32>
    %267 = vector.extract_strided_slice %266 {offsets = [0, 0], sizes = [24, 128], strides = [1, 1]} : vector<24x512xf32> to vector<24x128xf32>
    %268 = arith.negf %267 : vector<24x128xf32>
    %269 = math.exp %268 : vector<24x128xf32>
    %cst_149 = arith.constant 1.000000e+00 : f32
    %270 = vector.broadcast %cst_149 : f32 to vector<24x128xf32>
    %271 = arith.addf %270, %269 : vector<24x128xf32>
    %272 = arith.divf %270, %271 : vector<24x128xf32>
    %273 = vector.extract_strided_slice %266 {offsets = [0, 128], sizes = [24, 128], strides = [1, 1]} : vector<24x512xf32> to vector<24x128xf32>
    %274 = arith.negf %273 : vector<24x128xf32>
    %275 = math.exp %274 : vector<24x128xf32>
    %cst_150 = arith.constant 1.000000e+00 : f32
    %276 = vector.broadcast %cst_150 : f32 to vector<24x128xf32>
    %277 = arith.addf %276, %275 : vector<24x128xf32>
    %278 = arith.divf %276, %277 : vector<24x128xf32>
    %279 = vector.extract_strided_slice %266 {offsets = [0, 256], sizes = [24, 128], strides = [1, 1]} : vector<24x512xf32> to vector<24x128xf32>
    %280 = math.tanh %279 : vector<24x128xf32>
    %281 = vector.extract_strided_slice %266 {offsets = [0, 384], sizes = [24, 128], strides = [1, 1]} : vector<24x512xf32> to vector<24x128xf32>
    %282 = arith.negf %281 : vector<24x128xf32>
    %283 = math.exp %282 : vector<24x128xf32>
    %cst_151 = arith.constant 1.000000e+00 : f32
    %284 = vector.broadcast %cst_151 : f32 to vector<24x128xf32>
    %285 = arith.addf %284, %283 : vector<24x128xf32>
    %286 = arith.divf %284, %285 : vector<24x128xf32>
    %287 = arith.mulf %278, %260 : vector<24x128xf32>
    %288 = arith.mulf %272, %280 : vector<24x128xf32>
    %289 = arith.addf %287, %288 : vector<24x128xf32>
    %290 = math.tanh %289 : vector<24x128xf32>
    %291 = arith.mulf %286, %290 : vector<24x128xf32>
    %c0_152 = arith.constant 0 : index
    %c0_153 = arith.constant 0 : index
    %292 = vector.load %arg33[%c0_152, %c0_153] : memref<24x128xf32, #tpu.memory_space<vmem>>, vector<24x128xf32>
    tpu.vector_store %arg33[%c0_152, %c0_153], %291 {strides = array<i32>} : memref<24x128xf32, #tpu.memory_space<vmem>>, vector<24x128xf32>,
    %c0_154 = arith.constant 0 : index
    %c0_155 = arith.constant 0 : index
    %293 = vector.load %arg34[%c0_154, %c0_155] : memref<24x128xf32, #tpu.memory_space<vmem>>, vector<24x128xf32>
    tpu.vector_store %arg34[%c0_154, %c0_155], %289 {strides = array<i32>} : memref<24x128xf32, #tpu.memory_space<vmem>>, vector<24x128xf32>,
    %c4_156 = arith.constant 4 : index
    %c0_157 = arith.constant 0 : index
    %c0_158 = arith.constant 0 : index
    %294 = vector.load %arg30[%c4_156, %c0_157, %c0_158] : memref<8x24x128xf32, #tpu.memory_space<vmem>>, vector<1x24x128xf32>
    %295 = vector.shape_cast %294 : vector<1x24x128xf32> to vector<24x128xf32>
    %296 = vector.shape_cast %291 : vector<24x128xf32> to vector<1x24x128xf32>
    tpu.vector_store %arg30[%c4_156, %c0_157, %c0_158], %296 {strides = array<i32>} : memref<8x24x128xf32, #tpu.memory_space<vmem>>, vector<1x24x128xf32>,
    %c0_159 = arith.constant 0 : index
    %c0_160 = arith.constant 0 : index
    %297 = vector.load %arg33[%c0_159, %c0_160] : memref<24x128xf32, #tpu.memory_space<vmem>>, vector<24x128xf32>
    %c0_161 = arith.constant 0 : index
    %c0_162 = arith.constant 0 : index
    %298 = vector.load %arg34[%c0_161, %c0_162] : memref<24x128xf32, #tpu.memory_space<vmem>>, vector<24x128xf32>
    %c5 = arith.constant 5 : index
    %c0_163 = arith.constant 0 : index
    %c0_164 = arith.constant 0 : index
    %299 = vector.load %arg32[%c5, %c0_163, %c0_164] : memref<8x24x512xbf16, #tpu.memory_space<vmem>>, vector<1x24x512xbf16>
    %300 = vector.shape_cast %299 : vector<1x24x512xbf16> to vector<24x512xbf16>
    %301 = arith.extf %300 : vector<24x512xbf16> to vector<24x512xf32>
    %302 = arith.truncf %297 : vector<24x128xf32> to vector<24x128xbf16>
    %cst_165 = arith.constant dense<0.000000e+00> : vector<24x512xf32>
    %303 = tpu.matmul %302, %106, %cst_165 {dimension_numbers = #tpu.dot_dimension_numbers<[1], [0], [0], [1], [0, 0, 1, 1], [], []>} : vector<24x128xbf16>, vector<128x512xbf16>, vector<24x512xf32> -> vector<24x512xf32>
    %304 = arith.addf %301, %303 : vector<24x512xf32>
    %305 = vector.extract_strided_slice %304 {offsets = [0, 0], sizes = [24, 128], strides = [1, 1]} : vector<24x512xf32> to vector<24x128xf32>
    %306 = arith.negf %305 : vector<24x128xf32>
    %307 = math.exp %306 : vector<24x128xf32>
    %cst_166 = arith.constant 1.000000e+00 : f32
    %308 = vector.broadcast %cst_166 : f32 to vector<24x128xf32>
    %309 = arith.addf %308, %307 : vector<24x128xf32>
    %310 = arith.divf %308, %309 : vector<24x128xf32>
    %311 = vector.extract_strided_slice %304 {offsets = [0, 128], sizes = [24, 128], strides = [1, 1]} : vector<24x512xf32> to vector<24x128xf32>
    %312 = arith.negf %311 : vector<24x128xf32>
    %313 = math.exp %312 : vector<24x128xf32>
    %cst_167 = arith.constant 1.000000e+00 : f32
    %314 = vector.broadcast %cst_167 : f32 to vector<24x128xf32>
    %315 = arith.addf %314, %313 : vector<24x128xf32>
    %316 = arith.divf %314, %315 : vector<24x128xf32>
    %317 = vector.extract_strided_slice %304 {offsets = [0, 256], sizes = [24, 128], strides = [1, 1]} : vector<24x512xf32> to vector<24x128xf32>
    %318 = math.tanh %317 : vector<24x128xf32>
    %319 = vector.extract_strided_slice %304 {offsets = [0, 384], sizes = [24, 128], strides = [1, 1]} : vector<24x512xf32> to vector<24x128xf32>
    %320 = arith.negf %319 : vector<24x128xf32>
    %321 = math.exp %320 : vector<24x128xf32>
    %cst_168 = arith.constant 1.000000e+00 : f32
    %322 = vector.broadcast %cst_168 : f32 to vector<24x128xf32>
    %323 = arith.addf %322, %321 : vector<24x128xf32>
    %324 = arith.divf %322, %323 : vector<24x128xf32>
    %325 = arith.mulf %316, %298 : vector<24x128xf32>
    %326 = arith.mulf %310, %318 : vector<24x128xf32>
    %327 = arith.addf %325, %326 : vector<24x128xf32>
    %328 = math.tanh %327 : vector<24x128xf32>
    %329 = arith.mulf %324, %328 : vector<24x128xf32>
    %c0_169 = arith.constant 0 : index
    %c0_170 = arith.constant 0 : index
    %330 = vector.load %arg33[%c0_169, %c0_170] : memref<24x128xf32, #tpu.memory_space<vmem>>, vector<24x128xf32>
    tpu.vector_store %arg33[%c0_169, %c0_170], %329 {strides = array<i32>} : memref<24x128xf32, #tpu.memory_space<vmem>>, vector<24x128xf32>,
    %c0_171 = arith.constant 0 : index
    %c0_172 = arith.constant 0 : index
    %331 = vector.load %arg34[%c0_171, %c0_172] : memref<24x128xf32, #tpu.memory_space<vmem>>, vector<24x128xf32>
    tpu.vector_store %arg34[%c0_171, %c0_172], %327 {strides = array<i32>} : memref<24x128xf32, #tpu.memory_space<vmem>>, vector<24x128xf32>,
    %c5_173 = arith.constant 5 : index
    %c0_174 = arith.constant 0 : index
    %c0_175 = arith.constant 0 : index
    %332 = vector.load %arg30[%c5_173, %c0_174, %c0_175] : memref<8x24x128xf32, #tpu.memory_space<vmem>>, vector<1x24x128xf32>
    %333 = vector.shape_cast %332 : vector<1x24x128xf32> to vector<24x128xf32>
    %334 = vector.shape_cast %329 : vector<24x128xf32> to vector<1x24x128xf32>
    tpu.vector_store %arg30[%c5_173, %c0_174, %c0_175], %334 {strides = array<i32>} : memref<8x24x128xf32, #tpu.memory_space<vmem>>, vector<1x24x128xf32>,
    %c0_176 = arith.constant 0 : index
    %c0_177 = arith.constant 0 : index
    %335 = vector.load %arg33[%c0_176, %c0_177] : memref<24x128xf32, #tpu.memory_space<vmem>>, vector<24x128xf32>
    %c0_178 = arith.constant 0 : index
    %c0_179 = arith.constant 0 : index
    %336 = vector.load %arg34[%c0_178, %c0_179] : memref<24x128xf32, #tpu.memory_space<vmem>>, vector<24x128xf32>
    %c6 = arith.constant 6 : index
    %c0_180 = arith.constant 0 : index
    %c0_181 = arith.constant 0 : index
    %337 = vector.load %arg32[%c6, %c0_180, %c0_181] : memref<8x24x512xbf16, #tpu.memory_space<vmem>>, vector<1x24x512xbf16>
    %338 = vector.shape_cast %337 : vector<1x24x512xbf16> to vector<24x512xbf16>
    %339 = arith.extf %338 : vector<24x512xbf16> to vector<24x512xf32>
    %340 = arith.truncf %335 : vector<24x128xf32> to vector<24x128xbf16>
    %cst_182 = arith.constant dense<0.000000e+00> : vector<24x512xf32>
    %341 = tpu.matmul %340, %106, %cst_182 {dimension_numbers = #tpu.dot_dimension_numbers<[1], [0], [0], [1], [0, 0, 1, 1], [], []>} : vector<24x128xbf16>, vector<128x512xbf16>, vector<24x512xf32> -> vector<24x512xf32>
    %342 = arith.addf %339, %341 : vector<24x512xf32>
    %343 = vector.extract_strided_slice %342 {offsets = [0, 0], sizes = [24, 128], strides = [1, 1]} : vector<24x512xf32> to vector<24x128xf32>
    %344 = arith.negf %343 : vector<24x128xf32>
    %345 = math.exp %344 : vector<24x128xf32>
    %cst_183 = arith.constant 1.000000e+00 : f32
    %346 = vector.broadcast %cst_183 : f32 to vector<24x128xf32>
    %347 = arith.addf %346, %345 : vector<24x128xf32>
    %348 = arith.divf %346, %347 : vector<24x128xf32>
    %349 = vector.extract_strided_slice %342 {offsets = [0, 128], sizes = [24, 128], strides = [1, 1]} : vector<24x512xf32> to vector<24x128xf32>
    %350 = arith.negf %349 : vector<24x128xf32>
    %351 = math.exp %350 : vector<24x128xf32>
    %cst_184 = arith.constant 1.000000e+00 : f32
    %352 = vector.broadcast %cst_184 : f32 to vector<24x128xf32>
    %353 = arith.addf %352, %351 : vector<24x128xf32>
    %354 = arith.divf %352, %353 : vector<24x128xf32>
    %355 = vector.extract_strided_slice %342 {offsets = [0, 256], sizes = [24, 128], strides = [1, 1]} : vector<24x512xf32> to vector<24x128xf32>
    %356 = math.tanh %355 : vector<24x128xf32>
    %357 = vector.extract_strided_slice %342 {offsets = [0, 384], sizes = [24, 128], strides = [1, 1]} : vector<24x512xf32> to vector<24x128xf32>
    %358 = arith.negf %357 : vector<24x128xf32>
    %359 = math.exp %358 : vector<24x128xf32>
    %cst_185 = arith.constant 1.000000e+00 : f32
    %360 = vector.broadcast %cst_185 : f32 to vector<24x128xf32>
    %361 = arith.addf %360, %359 : vector<24x128xf32>
    %362 = arith.divf %360, %361 : vector<24x128xf32>
    %363 = arith.mulf %354, %336 : vector<24x128xf32>
    %364 = arith.mulf %348, %356 : vector<24x128xf32>
    %365 = arith.addf %363, %364 : vector<24x128xf32>
    %366 = math.tanh %365 : vector<24x128xf32>
    %367 = arith.mulf %362, %366 : vector<24x128xf32>
    %c0_186 = arith.constant 0 : index
    %c0_187 = arith.constant 0 : index
    %368 = vector.load %arg33[%c0_186, %c0_187] : memref<24x128xf32, #tpu.memory_space<vmem>>, vector<24x128xf32>
    tpu.vector_store %arg33[%c0_186, %c0_187], %367 {strides = array<i32>} : memref<24x128xf32, #tpu.memory_space<vmem>>, vector<24x128xf32>,
    %c0_188 = arith.constant 0 : index
    %c0_189 = arith.constant 0 : index
    %369 = vector.load %arg34[%c0_188, %c0_189] : memref<24x128xf32, #tpu.memory_space<vmem>>, vector<24x128xf32>
    tpu.vector_store %arg34[%c0_188, %c0_189], %365 {strides = array<i32>} : memref<24x128xf32, #tpu.memory_space<vmem>>, vector<24x128xf32>,
    %c6_190 = arith.constant 6 : index
    %c0_191 = arith.constant 0 : index
    %c0_192 = arith.constant 0 : index
    %370 = vector.load %arg30[%c6_190, %c0_191, %c0_192] : memref<8x24x128xf32, #tpu.memory_space<vmem>>, vector<1x24x128xf32>
    %371 = vector.shape_cast %370 : vector<1x24x128xf32> to vector<24x128xf32>
    %372 = vector.shape_cast %367 : vector<24x128xf32> to vector<1x24x128xf32>
    tpu.vector_store %arg30[%c6_190, %c0_191, %c0_192], %372 {strides = array<i32>} : memref<8x24x128xf32, #tpu.memory_space<vmem>>, vector<1x24x128xf32>,
    %c0_193 = arith.constant 0 : index
    %c0_194 = arith.constant 0 : index
    %373 = vector.load %arg33[%c0_193, %c0_194] : memref<24x128xf32, #tpu.memory_space<vmem>>, vector<24x128xf32>
    %c0_195 = arith.constant 0 : index
    %c0_196 = arith.constant 0 : index
    %374 = vector.load %arg34[%c0_195, %c0_196] : memref<24x128xf32, #tpu.memory_space<vmem>>, vector<24x128xf32>
    %c7 = arith.constant 7 : index
    %c0_197 = arith.constant 0 : index
    %c0_198 = arith.constant 0 : index
    %375 = vector.load %arg32[%c7, %c0_197, %c0_198] : memref<8x24x512xbf16, #tpu.memory_space<vmem>>, vector<1x24x512xbf16>
    %376 = vector.shape_cast %375 : vector<1x24x512xbf16> to vector<24x512xbf16>
    %377 = arith.extf %376 : vector<24x512xbf16> to vector<24x512xf32>
    %378 = arith.truncf %373 : vector<24x128xf32> to vector<24x128xbf16>
    %cst_199 = arith.constant dense<0.000000e+00> : vector<24x512xf32>
    %379 = tpu.matmul %378, %106, %cst_199 {dimension_numbers = #tpu.dot_dimension_numbers<[1], [0], [0], [1], [0, 0, 1, 1], [], []>} : vector<24x128xbf16>, vector<128x512xbf16>, vector<24x512xf32> -> vector<24x512xf32>
    %380 = arith.addf %377, %379 : vector<24x512xf32>
    %381 = vector.extract_strided_slice %380 {offsets = [0, 0], sizes = [24, 128], strides = [1, 1]} : vector<24x512xf32> to vector<24x128xf32>
    %382 = arith.negf %381 : vector<24x128xf32>
    %383 = math.exp %382 : vector<24x128xf32>
    %cst_200 = arith.constant 1.000000e+00 : f32
    %384 = vector.broadcast %cst_200 : f32 to vector<24x128xf32>
    %385 = arith.addf %384, %383 : vector<24x128xf32>
    %386 = arith.divf %384, %385 : vector<24x128xf32>
    %387 = vector.extract_strided_slice %380 {offsets = [0, 128], sizes = [24, 128], strides = [1, 1]} : vector<24x512xf32> to vector<24x128xf32>
    %388 = arith.negf %387 : vector<24x128xf32>
    %389 = math.exp %388 : vector<24x128xf32>
    %cst_201 = arith.constant 1.000000e+00 : f32
    %390 = vector.broadcast %cst_201 : f32 to vector<24x128xf32>
    %391 = arith.addf %390, %389 : vector<24x128xf32>
    %392 = arith.divf %390, %391 : vector<24x128xf32>
    %393 = vector.extract_strided_slice %380 {offsets = [0, 256], sizes = [24, 128], strides = [1, 1]} : vector<24x512xf32> to vector<24x128xf32>
    %394 = math.tanh %393 : vector<24x128xf32>
    %395 = vector.extract_strided_slice %380 {offsets = [0, 384], sizes = [24, 128], strides = [1, 1]} : vector<24x512xf32> to vector<24x128xf32>
    %396 = arith.negf %395 : vector<24x128xf32>
    %397 = math.exp %396 : vector<24x128xf32>
    %cst_202 = arith.constant 1.000000e+00 : f32
    %398 = vector.broadcast %cst_202 : f32 to vector<24x128xf32>
    %399 = arith.addf %398, %397 : vector<24x128xf32>
    %400 = arith.divf %398, %399 : vector<24x128xf32>
    %401 = arith.mulf %392, %374 : vector<24x128xf32>
    %402 = arith.mulf %386, %394 : vector<24x128xf32>
    %403 = arith.addf %401, %402 : vector<24x128xf32>
    %404 = math.tanh %403 : vector<24x128xf32>
    %405 = arith.mulf %400, %404 : vector<24x128xf32>
    %c0_203 = arith.constant 0 : index
    %c0_204 = arith.constant 0 : index
    %406 = vector.load %arg33[%c0_203, %c0_204] : memref<24x128xf32, #tpu.memory_space<vmem>>, vector<24x128xf32>
    tpu.vector_store %arg33[%c0_203, %c0_204], %405 {strides = array<i32>} : memref<24x128xf32, #tpu.memory_space<vmem>>, vector<24x128xf32>,
    %c0_205 = arith.constant 0 : index
    %c0_206 = arith.constant 0 : index
    %407 = vector.load %arg34[%c0_205, %c0_206] : memref<24x128xf32, #tpu.memory_space<vmem>>, vector<24x128xf32>
    tpu.vector_store %arg34[%c0_205, %c0_206], %403 {strides = array<i32>} : memref<24x128xf32, #tpu.memory_space<vmem>>, vector<24x128xf32>,
    %c7_207 = arith.constant 7 : index
    %c0_208 = arith.constant 0 : index
    %c0_209 = arith.constant 0 : index
    %408 = vector.load %arg30[%c7_207, %c0_208, %c0_209] : memref<8x24x128xf32, #tpu.memory_space<vmem>>, vector<1x24x128xf32>
    %409 = vector.shape_cast %408 : vector<1x24x128xf32> to vector<24x128xf32>
    %410 = vector.shape_cast %405 : vector<24x128xf32> to vector<1x24x128xf32>
    tpu.vector_store %arg30[%c7_207, %c0_208, %c0_209], %410 {strides = array<i32>} : memref<8x24x128xf32, #tpu.memory_space<vmem>>, vector<1x24x128xf32>,
    %c0_210 = arith.constant 0 : index
    %c0_211 = arith.constant 0 : index
    %c0_212 = arith.constant 0 : index
    %411 = vector.load %arg30[%c0_210, %c0_211, %c0_212] : memref<8x24x128xf32, #tpu.memory_space<vmem>>, vector<8x24x128xf32>
    %c0_213 = arith.constant 0 : index
    %c0_214 = arith.constant 0 : index
    %c0_215 = arith.constant 0 : index
    %412 = vector.load %arg31[%c0_213, %c0_214, %c0_215] : memref<8x24x128xf32, #tpu.memory_space<vmem>>, vector<8x24x128xf32>
    %413 = arith.addf %411, %412 : vector<8x24x128xf32>
    %c0_216 = arith.constant 0 : index
    %c0_217 = arith.constant 0 : index
    %414 = vector.load %arg20[%c0_216, %c0_217] : memref<1x128xf32, #tpu.memory_space<vmem>>, vector<1x128xf32>
    %c0_218 = arith.constant 0 : index
    %c0_219 = arith.constant 0 : index
    %415 = vector.load %arg21[%c0_218, %c0_219] : memref<1x128xf32, #tpu.memory_space<vmem>>, vector<1x128xf32>
    %cst_220 = arith.constant dense<0.000000e+00> : vector<8x24xf32>
    %416 = vector.multi_reduction <add>, %413, %cst_220 [2] : vector<8x24x128xf32> to vector<8x24xf32>
    %417 = vector.shape_cast %416 : vector<8x24xf32> to vector<8x24x1xf32>
    %cst_221 = arith.constant 1.280000e+02 : f32
    %418 = vector.broadcast %cst_221 : f32 to vector<8x24x1xf32>
    %419 = arith.divf %417, %418 : vector<8x24x1xf32>
    %420 = vector.broadcast %419 : vector<8x24x1xf32> to vector<8x24x128xf32>
    %421 = arith.subf %413, %420 : vector<8x24x128xf32>
    %422 = arith.mulf %421, %421 : vector<8x24x128xf32>
    %cst_222 = arith.constant dense<0.000000e+00> : vector<8x24xf32>
    %423 = vector.multi_reduction <add>, %422, %cst_222 [2] : vector<8x24x128xf32> to vector<8x24xf32>
    %424 = vector.shape_cast %423 : vector<8x24xf32> to vector<8x24x1xf32>
    %cst_223 = arith.constant 1.280000e+02 : f32
    %425 = vector.broadcast %cst_223 : f32 to vector<8x24x1xf32>
    %426 = arith.divf %424, %425 : vector<8x24x1xf32>
    %427 = vector.broadcast %419 : vector<8x24x1xf32> to vector<8x24x128xf32>
    %428 = arith.subf %413, %427 : vector<8x24x128xf32>
    %cst_224 = arith.constant 9.99999974E-6 : f32
    %429 = vector.broadcast %cst_224 : f32 to vector<8x24x1xf32>
    %430 = arith.addf %426, %429 : vector<8x24x1xf32>
    %431 = math.rsqrt %430 : vector<8x24x1xf32>
    %432 = vector.broadcast %431 : vector<8x24x1xf32> to vector<8x24x128xf32>
    %433 = arith.mulf %428, %432 : vector<8x24x128xf32>
    %434 = vector.shape_cast %414 : vector<1x128xf32> to vector<1x1x128xf32>
    %435 = vector.broadcast %434 : vector<1x1x128xf32> to vector<8x24x128xf32>
    %436 = arith.mulf %433, %435 : vector<8x24x128xf32>
    %437 = vector.shape_cast %415 : vector<1x128xf32> to vector<1x1x128xf32>
    %438 = vector.broadcast %437 : vector<1x1x128xf32> to vector<8x24x128xf32>
    %439 = arith.addf %436, %438 : vector<8x24x128xf32>
    %440 = vector.shape_cast %439 : vector<8x24x128xf32> to vector<192x128xf32>
    %c0_225 = arith.constant 0 : index
    %c0_226 = arith.constant 0 : index
    %441 = vector.load %arg22[%c0_225, %c0_226] : memref<128x128xbf16, #tpu.memory_space<vmem>>, vector<128x128xbf16>
    %442 = arith.truncf %440 : vector<192x128xf32> to vector<192x128xbf16>
    %cst_227 = arith.constant dense<0.000000e+00> : vector<192x128xf32>
    %443 = tpu.matmul %442, %441, %cst_227 {dimension_numbers = #tpu.dot_dimension_numbers<[1], [0], [0], [1], [0, 0, 1, 1], [], []>} : vector<192x128xbf16>, vector<128x128xbf16>, vector<192x128xf32> -> vector<192x128xf32>
    %c0_228 = arith.constant 0 : index
    %c0_229 = arith.constant 0 : index
    %444 = vector.load %arg23[%c0_228, %c0_229] : memref<1x128xf32, #tpu.memory_space<vmem>>, vector<1x128xf32>
    %445 = vector.broadcast %444 : vector<1x128xf32> to vector<192x128xf32>
    %446 = arith.addf %443, %445 : vector<192x128xf32>
    %447 = vector.shape_cast %446 : vector<192x128xf32> to vector<8x24x128xf32>
    %448 = vector.shape_cast %14 : vector<24x128xf32> to vector<1x24x128xf32>
    %449 = vector.broadcast %448 : vector<1x24x128xf32> to vector<8x24x128xf32>
    %450 = arith.addf %447, %449 : vector<8x24x128xf32>
    %cst_230 = arith.constant 0.000000e+00 : f32
    %451 = vector.broadcast %cst_230 : f32 to vector<8x24x128xf32>
    %452 = arith.cmpf ogt, %450, %451 : vector<8x24x128xf32>
    %cst_231 = arith.constant 0.000000e+00 : f32
    %453 = vector.broadcast %cst_231 : f32 to vector<8x24x128xf32>
    %454 = arith.minimumf %450, %453 : vector<8x24x128xf32>
    %455 = math.exp %454 : vector<8x24x128xf32>
    %cst_232 = arith.constant 1.000000e+00 : f32
    %456 = vector.broadcast %cst_232 : f32 to vector<8x24x128xf32>
    %457 = arith.subf %455, %456 : vector<8x24x128xf32>
    %458 = arith.select %452, %450, %457 : vector<8x24x128xi1>, vector<8x24x128xf32>
    %459 = vector.shape_cast %458 : vector<8x24x128xf32> to vector<192x128xf32>
    %c0_233 = arith.constant 0 : index
    %c0_234 = arith.constant 0 : index
    %460 = vector.load %arg26[%c0_233, %c0_234] : memref<128x128xbf16, #tpu.memory_space<vmem>>, vector<128x128xbf16>
    %461 = arith.truncf %459 : vector<192x128xf32> to vector<192x128xbf16>
    %cst_235 = arith.constant dense<0.000000e+00> : vector<192x128xf32>
    %462 = tpu.matmul %461, %460, %cst_235 {dimension_numbers = #tpu.dot_dimension_numbers<[1], [0], [0], [1], [0, 0, 1, 1], [], []>} : vector<192x128xbf16>, vector<128x128xbf16>, vector<192x128xf32> -> vector<192x128xf32>
    %c0_236 = arith.constant 0 : index
    %c0_237 = arith.constant 0 : index
    %463 = vector.load %arg27[%c0_236, %c0_237] : memref<1x128xf32, #tpu.memory_space<vmem>>, vector<1x128xf32>
    %464 = vector.broadcast %463 : vector<1x128xf32> to vector<192x128xf32>
    %465 = arith.addf %462, %464 : vector<192x128xf32>
    %466 = vector.shape_cast %465 : vector<192x128xf32> to vector<8x24x128xf32>
    %467 = arith.addf %466, %439 : vector<8x24x128xf32>
    %c0_238 = arith.constant 0 : index
    %c0_239 = arith.constant 0 : index
    %468 = vector.load %arg28[%c0_238, %c0_239] : memref<1x128xf32, #tpu.memory_space<vmem>>, vector<1x128xf32>
    %c0_240 = arith.constant 0 : index
    %c0_241 = arith.constant 0 : index
    %469 = vector.load %arg29[%c0_240, %c0_241] : memref<1x128xf32, #tpu.memory_space<vmem>>, vector<1x128xf32>
    %cst_242 = arith.constant dense<0.000000e+00> : vector<8x24xf32>
    %470 = vector.multi_reduction <add>, %467, %cst_242 [2] : vector<8x24x128xf32> to vector<8x24xf32>
    %471 = vector.shape_cast %470 : vector<8x24xf32> to vector<8x24x1xf32>
    %cst_243 = arith.constant 1.280000e+02 : f32
    %472 = vector.broadcast %cst_243 : f32 to vector<8x24x1xf32>
    %473 = arith.divf %471, %472 : vector<8x24x1xf32>
    %474 = vector.broadcast %473 : vector<8x24x1xf32> to vector<8x24x128xf32>
    %475 = arith.subf %467, %474 : vector<8x24x128xf32>
    %476 = arith.mulf %475, %475 : vector<8x24x128xf32>
    %cst_244 = arith.constant dense<0.000000e+00> : vector<8x24xf32>
    %477 = vector.multi_reduction <add>, %476, %cst_244 [2] : vector<8x24x128xf32> to vector<8x24xf32>
    %478 = vector.shape_cast %477 : vector<8x24xf32> to vector<8x24x1xf32>
    %cst_245 = arith.constant 1.280000e+02 : f32
    %479 = vector.broadcast %cst_245 : f32 to vector<8x24x1xf32>
    %480 = arith.divf %478, %479 : vector<8x24x1xf32>
    %481 = vector.broadcast %473 : vector<8x24x1xf32> to vector<8x24x128xf32>
    %482 = arith.subf %467, %481 : vector<8x24x128xf32>
    %cst_246 = arith.constant 9.99999974E-6 : f32
    %483 = vector.broadcast %cst_246 : f32 to vector<8x24x1xf32>
    %484 = arith.addf %480, %483 : vector<8x24x1xf32>
    %485 = math.rsqrt %484 : vector<8x24x1xf32>
    %486 = vector.broadcast %485 : vector<8x24x1xf32> to vector<8x24x128xf32>
    %487 = arith.mulf %482, %486 : vector<8x24x128xf32>
    %488 = vector.shape_cast %468 : vector<1x128xf32> to vector<1x1x128xf32>
    %489 = vector.broadcast %488 : vector<1x1x128xf32> to vector<8x24x128xf32>
    %490 = arith.mulf %487, %489 : vector<8x24x128xf32>
    %491 = vector.shape_cast %469 : vector<1x128xf32> to vector<1x1x128xf32>
    %492 = vector.broadcast %491 : vector<1x1x128xf32> to vector<8x24x128xf32>
    %493 = arith.addf %490, %492 : vector<8x24x128xf32>
    %c0_247 = arith.constant 0 : index
    %c0_248 = arith.constant 0 : index
    %c0_249 = arith.constant 0 : index
    %494 = vector.load %arg30[%c0_247, %c0_248, %c0_249] : memref<8x24x128xf32, #tpu.memory_space<vmem>>, vector<8x24x128xf32>
    tpu.vector_store %arg30[%c0_247, %c0_248, %c0_249], %493 {strides = array<i32>} : memref<8x24x128xf32, #tpu.memory_space<vmem>>, vector<8x24x128xf32>,
    return
  }
  func.func @transform_0(%arg0: i32) -> (i32, i32, i32) {
    %c0_i32 = arith.constant 0 : i32
    %c0_i32_0 = arith.constant 0 : i32
    %c0_i32_1 = arith.constant 0 : i32
    return %c0_i32, %arg0, %c0_i32_0 : i32, i32, i32
  }
  func.func @transform_1(%arg0: i32) -> (i32, i32) {
    %c0_i32 = arith.constant 0 : i32
    %c0_i32_0 = arith.constant 0 : i32
    return %arg0, %c0_i32 : i32, i32
  }
  func.func @transform_2(%arg0: i32) -> (i32, i32) {
    %c0_i32 = arith.constant 0 : i32
    %c0_i32_0 = arith.constant 0 : i32
    %c0_i32_1 = arith.constant 0 : i32
    return %c0_i32, %c0_i32_0 : i32, i32
  }
  func.func @transform_3(%arg0: i32) -> (i32, i32) {
    %c0_i32 = arith.constant 0 : i32
    %c0_i32_0 = arith.constant 0 : i32
    %c0_i32_1 = arith.constant 0 : i32
    return %c0_i32, %c0_i32_0 : i32, i32
  }
  func.func @transform_4(%arg0: i32) -> (i32, i32) {
    %c0_i32 = arith.constant 0 : i32
    %c0_i32_0 = arith.constant 0 : i32
    %c0_i32_1 = arith.constant 0 : i32
    return %c0_i32, %c0_i32_0 : i32, i32
  }
  func.func @transform_5(%arg0: i32) -> (i32, i32) {
    %c0_i32 = arith.constant 0 : i32
    %c0_i32_0 = arith.constant 0 : i32
    %c0_i32_1 = arith.constant 0 : i32
    return %c0_i32, %c0_i32_0 : i32, i32
  }
  func.func @transform_6(%arg0: i32) -> (i32, i32) {
    %c0_i32 = arith.constant 0 : i32
    %c0_i32_0 = arith.constant 0 : i32
    %c0_i32_1 = arith.constant 0 : i32
    return %c0_i32, %c0_i32_0 : i32, i32
  }
  func.func @transform_7(%arg0: i32) -> (i32, i32) {
    %c0_i32 = arith.constant 0 : i32
    %c0_i32_0 = arith.constant 0 : i32
    %c0_i32_1 = arith.constant 0 : i32
    return %c0_i32, %c0_i32_0 : i32, i32
  }
  func.func @transform_8(%arg0: i32) -> (i32, i32) {
    %c0_i32 = arith.constant 0 : i32
    %c0_i32_0 = arith.constant 0 : i32
    %c0_i32_1 = arith.constant 0 : i32
    return %c0_i32, %c0_i32_0 : i32, i32
  }
  func.func @transform_9(%arg0: i32) -> (i32, i32) {
    %c0_i32 = arith.constant 0 : i32
    %c0_i32_0 = arith.constant 0 : i32
    %c0_i32_1 = arith.constant 0 : i32
    return %c0_i32, %c0_i32_0 : i32, i32
  }
  func.func @transform_10(%arg0: i32) -> (i32, i32) {
    %c0_i32 = arith.constant 0 : i32
    %c0_i32_0 = arith.constant 0 : i32
    %c0_i32_1 = arith.constant 0 : i32
    return %c0_i32, %c0_i32_0 : i32, i32
  }
  func.func @transform_11(%arg0: i32) -> (i32, i32) {
    %c0_i32 = arith.constant 0 : i32
    %c0_i32_0 = arith.constant 0 : i32
    %c0_i32_1 = arith.constant 0 : i32
    return %c0_i32, %c0_i32_0 : i32, i32
  }
  func.func @transform_12(%arg0: i32) -> (i32, i32) {
    %c0_i32 = arith.constant 0 : i32
    %c0_i32_0 = arith.constant 0 : i32
    %c0_i32_1 = arith.constant 0 : i32
    return %c0_i32, %c0_i32_0 : i32, i32
  }
  func.func @transform_13(%arg0: i32) -> (i32, i32) {
    %c0_i32 = arith.constant 0 : i32
    %c0_i32_0 = arith.constant 0 : i32
    %c0_i32_1 = arith.constant 0 : i32
    return %c0_i32, %c0_i32_0 : i32, i32
  }
  func.func @transform_14(%arg0: i32) -> (i32, i32) {
    %c0_i32 = arith.constant 0 : i32
    %c0_i32_0 = arith.constant 0 : i32
    %c0_i32_1 = arith.constant 0 : i32
    return %c0_i32, %c0_i32_0 : i32, i32
  }
  func.func @transform_15(%arg0: i32) -> (i32, i32) {
    %c0_i32 = arith.constant 0 : i32
    %c0_i32_0 = arith.constant 0 : i32
    %c0_i32_1 = arith.constant 0 : i32
    return %c0_i32, %c0_i32_0 : i32, i32
  }
  func.func @transform_16(%arg0: i32) -> (i32, i32) {
    %c0_i32 = arith.constant 0 : i32
    %c0_i32_0 = arith.constant 0 : i32
    %c0_i32_1 = arith.constant 0 : i32
    return %c0_i32, %c0_i32_0 : i32, i32
  }
  func.func @transform_17(%arg0: i32) -> (i32, i32) {
    %c0_i32 = arith.constant 0 : i32
    %c0_i32_0 = arith.constant 0 : i32
    %c0_i32_1 = arith.constant 0 : i32
    return %c0_i32, %c0_i32_0 : i32, i32
  }
  func.func @transform_18(%arg0: i32) -> (i32, i32) {
    %c0_i32 = arith.constant 0 : i32
    %c0_i32_0 = arith.constant 0 : i32
    %c0_i32_1 = arith.constant 0 : i32
    return %c0_i32, %c0_i32_0 : i32, i32
  }
  func.func @transform_19(%arg0: i32) -> (i32, i32) {
    %c0_i32 = arith.constant 0 : i32
    %c0_i32_0 = arith.constant 0 : i32
    %c0_i32_1 = arith.constant 0 : i32
    return %c0_i32, %c0_i32_0 : i32, i32
  }
  func.func @transform_20(%arg0: i32) -> (i32, i32) {
    %c0_i32 = arith.constant 0 : i32
    %c0_i32_0 = arith.constant 0 : i32
    %c0_i32_1 = arith.constant 0 : i32
    return %c0_i32, %c0_i32_0 : i32, i32
  }
  func.func @transform_21(%arg0: i32) -> (i32, i32) {
    %c0_i32 = arith.constant 0 : i32
    %c0_i32_0 = arith.constant 0 : i32
    %c0_i32_1 = arith.constant 0 : i32
    return %c0_i32, %c0_i32_0 : i32, i32
  }
  func.func @transform_22(%arg0: i32) -> (i32, i32) {
    %c0_i32 = arith.constant 0 : i32
    %c0_i32_0 = arith.constant 0 : i32
    %c0_i32_1 = arith.constant 0 : i32
    return %c0_i32, %c0_i32_0 : i32, i32
  }
  func.func @transform_23(%arg0: i32) -> (i32, i32) {
    %c0_i32 = arith.constant 0 : i32
    %c0_i32_0 = arith.constant 0 : i32
    %c0_i32_1 = arith.constant 0 : i32
    return %c0_i32, %c0_i32_0 : i32, i32
  }
  func.func @transform_24(%arg0: i32) -> (i32, i32) {
    %c0_i32 = arith.constant 0 : i32
    %c0_i32_0 = arith.constant 0 : i32
    %c0_i32_1 = arith.constant 0 : i32
    return %c0_i32, %c0_i32_0 : i32, i32
  }
  func.func @transform_25(%arg0: i32) -> (i32, i32) {
    %c0_i32 = arith.constant 0 : i32
    %c0_i32_0 = arith.constant 0 : i32
    %c0_i32_1 = arith.constant 0 : i32
    return %c0_i32, %c0_i32_0 : i32, i32
  }
  func.func @transform_26(%arg0: i32) -> (i32, i32) {
    %c0_i32 = arith.constant 0 : i32
    %c0_i32_0 = arith.constant 0 : i32
    %c0_i32_1 = arith.constant 0 : i32
    return %c0_i32, %c0_i32_0 : i32, i32
  }
  func.func @transform_27(%arg0: i32) -> (i32, i32) {
    %c0_i32 = arith.constant 0 : i32
    %c0_i32_0 = arith.constant 0 : i32
    %c0_i32_1 = arith.constant 0 : i32
    return %c0_i32, %c0_i32_0 : i32, i32
  }
  func.func @transform_28(%arg0: i32) -> (i32, i32) {
    %c0_i32 = arith.constant 0 : i32
    %c0_i32_0 = arith.constant 0 : i32
    %c0_i32_1 = arith.constant 0 : i32
    return %c0_i32, %c0_i32_0 : i32, i32
  }
  func.func @transform_29(%arg0: i32) -> (i32, i32, i32) {
    %c0_i32 = arith.constant 0 : i32
    %c0_i32_0 = arith.constant 0 : i32
    %c0_i32_1 = arith.constant 0 : i32
    return %c0_i32, %arg0, %c0_i32_0 : i32, i32, i32
  }
}

</mosaic_0001>

<llo_original>
// kernel: temporal_block_forward.1
$region0: #{temporal_block_forward.1}
  #allocation0 [shape = 'u32[]', space=smem, size = 0x4, offset = 0x4, fixed_abs, tag = 'smem constant byte address 0x4 - core index']
  #allocation1 [shape = 'u32[144,128]{1,0:T(1,128)}', space=vmem, size = 0x12000, scoped, tag = 'internal scratch']
  #allocation2 [shape = 'f32[8,24,128]{2,1,0:T(8,128)}', space=vmem, size = 0x18000, scoped, tag = 'scratch operand']
  #allocation3 [shape = 'bf16[8,24,512]{2,1,0:T(8,128)(2,1)}', space=vmem, size = 0x30000, scoped, tag = 'scratch operand']
  #allocation4 [shape = 'f32[24,128]{1,0:T(8,128)}', space=vmem, size = 0x3000, scoped, tag = 'scratch operand']
  #allocation5 [shape = 'f32[24,128]{1,0:T(8,128)}', space=vmem, size = 0x3000, scoped, tag = 'scratch operand']
  %s0 = inlined_call_operand.smem [shape: u32[30], index: -1, kind: input, shape index: {}]
  %s1 = sld [smem:[%s0]]
  %s2 = scalar_lea.smem %s0, 1
  %s3 = sld [smem:[%s2]]
  %s4 = scalar_lea.smem %s0, 2
  %s5 = sld [smem:[%s4]]
  %s6 = scalar_lea.smem %s0, 3
  %s7 = sld [smem:[%s6]]
  %s8 = scalar_lea.smem %s0, 4
  %s9 = sld [smem:[%s8]]
  %s10 = scalar_lea.smem %s0, 5
  %s11 = sld [smem:[%s10]]
  %s12 = scalar_lea.smem %s0, 6
  %s13 = sld [smem:[%s12]]
  %s14 = scalar_lea.smem %s0, 7
  %s15 = sld [smem:[%s14]]
  %s16 = scalar_lea.smem %s0, 8
  %s17 = sld [smem:[%s16]]
  %s18 = scalar_lea.smem %s0, 9
  %s19 = sld [smem:[%s18]]
  %s20 = scalar_lea.smem %s0, 10
  %s21 = sld [smem:[%s20]]
  %s22 = scalar_lea.smem %s0, 11
  %s23 = sld [smem:[%s22]]
  %s24 = scalar_lea.smem %s0, 12
  %s25 = sld [smem:[%s24]]
  %s26 = scalar_lea.smem %s0, 13
  %s27 = sld [smem:[%s26]]
  %s28 = scalar_lea.smem %s0, 14
  %s29 = sld [smem:[%s28]]
  %s30 = scalar_lea.smem %s0, 15
  %s31 = sld [smem:[%s30]]
  %s32 = scalar_lea.smem %s0, 16
  %s33 = sld [smem:[%s32]]
  %s34 = scalar_lea.smem %s0, 17
  %s35 = sld [smem:[%s34]]
  %s36 = scalar_lea.smem %s0, 18
  %s37 = sld [smem:[%s36]]
  %s38 = scalar_lea.smem %s0, 19
  %s39 = sld [smem:[%s38]]
  %s40 = scalar_lea.smem %s0, 20
  %s41 = sld [smem:[%s40]]
  %s42 = scalar_lea.smem %s0, 21
  %s43 = sld [smem:[%s42]]
  %s44 = scalar_lea.smem %s0, 22
  %s45 = sld [smem:[%s44]]
  %s46 = scalar_lea.smem %s0, 23
  %s47 = sld [smem:[%s46]]
  %s48 = scalar_lea.smem %s0, 24
  %s49 = sld [smem:[%s48]]
  %s50 = scalar_lea.smem %s0, 25
  %s51 = sld [smem:[%s50]]
  %s52 = scalar_lea.smem %s0, 26
  %s53 = sld [smem:[%s52]]
  %s54 = scalar_lea.smem %s0, 27
  %s55 = sld [smem:[%s54]]
  %s56 = scalar_lea.smem %s0, 28
  %s57 = sld [smem:[%s56]]
  %s58 = scalar_lea.smem %s0, 29
  %s59 = sld [smem:[%s58]]
  %s60 = sld [smem:[#allocation0]]
  $region221: #{temporal_block_forward.1} parent=0
    _
  %s62 = ssub.s32 1, %s60
  %s63 = scalar_select 0, %s62, %s60
  $region1: #{temporal_block_forward.1} parent=0
    #allocation6 [shape = 'u8[196608]{0}', space=vmem, size = 0x30000, scoped, tag = 'input window, operand 0']
    #allocation7 [shape = 'u8[196608]{0}', space=vmem, size = 0x30000, scoped, tag = 'output window, operand 0']
    loop: start=0, step=1, limit=4
    $region2: #{temporal_block_forward.1} parent=1 // loop_pre_header
      _
    $region3: #{temporal_block_forward.1} parent=1 // loop_header
      %s65 = sphi 0, %s69
      %p66 = scmp.ge.s32.totalorder %s65, 4
      %s75 = sphi 0, %s77
      %s78 = sphi 0, %s75
      %s79 = sphi 0, %s78
      %s95 = sphi 0, %s79
      %s101 = sphi 0, %s103
      %s104 = sphi 0, %s101
      %s105 = sphi 0, %s104
      %s121 = sphi 0, %s105
      %s125 = sphi 0, %s125
      %s127 = sphi 0, %s125
      %s128 = sphi 0, %s127
      %s142 = sphi 0, %s128
      %s146 = sphi 0, %s146
      %s148 = sphi 0, %s146
      %s149 = sphi 0, %s148
      %s163 = sphi 0, %s149
      %s167 = sphi 0, %s167
      %s169 = sphi 0, %s167
      %s170 = sphi 0, %s169
      %s184 = sphi 0, %s170
      %s188 = sphi 0, %s188
      %s190 = sphi 0, %s188
      %s191 = sphi 0, %s190
      %s205 = sphi 0, %s191
      %s209 = sphi 0, %s209
      %s211 = sphi 0, %s209
      %s212 = sphi 0, %s211
      %s226 = sphi 0, %s212
      %s230 = sphi 0, %s230
      %s232 = sphi 0, %s230
      %s233 = sphi 0, %s232
      %s247 = sphi 0, %s233
      %s251 = sphi 0, %s251
      %s253 = sphi 0, %s251
      %s254 = sphi 0, %s253
      %s268 = sphi 0, %s254
      %s272 = sphi 0, %s272
      %s274 = sphi 0, %s272
      %s275 = sphi 0, %s274
      %s289 = sphi 0, %s275
      %s293 = sphi 0, %s293
      %s295 = sphi 0, %s293
      %s296 = sphi 0, %s295
      %s310 = sphi 0, %s296
      %s314 = sphi 0, %s314
      %s316 = sphi 0, %s314
      %s317 = sphi 0, %s316
      %s331 = sphi 0, %s317
      %s335 = sphi 0, %s335
      %s337 = sphi 0, %s335
      %s338 = sphi 0, %s337
      %s352 = sphi 0, %s338
      %s356 = sphi 0, %s356
      %s358 = sphi 0, %s356
      %s359 = sphi 0, %s358
      %s373 = sphi 0, %s359
      %s377 = sphi 0, %s377
      %s379 = sphi 0, %s377
      %s380 = sphi 0, %s379
      %s394 = sphi 0, %s380
      %s398 = sphi 0, %s398
      %s400 = sphi 0, %s398
      %s401 = sphi 0, %s400
      %s415 = sphi 0, %s401
      %s419 = sphi 0, %s419
      %s421 = sphi 0, %s419
      %s422 = sphi 0, %s421
      %s436 = sphi 0, %s422
      %s440 = sphi 0, %s440
      %s442 = sphi 0, %s440
      %s443 = sphi 0, %s442
      %s457 = sphi 0, %s443
      %s461 = sphi 0, %s461
      %s463 = sphi 0, %s461
      %s464 = sphi 0, %s463
      %s478 = sphi 0, %s464
      %s482 = sphi 0, %s482
      %s484 = sphi 0, %s482
      %s485 = sphi 0, %s484
      %s499 = sphi 0, %s485
      %s503 = sphi 0, %s503
      %s505 = sphi 0, %s503
      %s506 = sphi 0, %s505
      %s520 = sphi 0, %s506
      %s524 = sphi 0, %s524
      %s526 = sphi 0, %s524
      %s527 = sphi 0, %s526
      %s541 = sphi 0, %s527
      %s545 = sphi 0, %s545
      %s547 = sphi 0, %s545
      %s548 = sphi 0, %s547
      %s562 = sphi 0, %s548
      %s566 = sphi 0, %s566
      %s568 = sphi 0, %s566
      %s569 = sphi 0, %s568
      %s583 = sphi 0, %s569
      %s587 = sphi 0, %s587
      %s589 = sphi 0, %s587
      %s590 = sphi 0, %s589
      %s604 = sphi 0, %s590
      %s608 = sphi 0, %s608
      %s610 = sphi 0, %s608
      %s611 = sphi 0, %s610
      %s625 = sphi 0, %s611
      %s629 = sphi 0, %s629
      %s631 = sphi 0, %s629
      %s632 = sphi 0, %s631
      %s646 = sphi 0, %s632
      %s650 = sphi 0, %s650
      %s652 = sphi 0, %s650
      %s653 = sphi 0, %s652
      %s667 = sphi 0, %s653
      %s671 = sphi 0, %s671
      %s673 = sphi 0, %s671
      %s674 = sphi 0, %s673
      %s688 = sphi 0, %s674
      %s694 = sphi 0, %s696
      %s697 = sphi 0, %s694
      %s698 = sphi 0, %s697
      %s714 = sphi 0, %s698
    $region4: #{temporal_block_forward.1} parent=1 // loop_header_branch
      %68 = sbr.rel (%p66) target = $region8
    $region5: #{temporal_block_forward.1} parent=1 // loop_body
      %s70 = ssub.s32 %s65, 1
      %s71 = ssub.s32 %s65, 2
      %s72 = sadd.s32 %s65, 1
      %s73 = ssub.s32 %s65, %s72
      %p74 = scmp.eq.s32.totalorder %s73, 0
      %s76 = sadd.s32 %s75, 1
      %s77 = scalar_select %p74, %s75, %s76
      %p80 = pneg %p74
      %p81 = scmp.eq.s32.totalorder %s65, 1
      %p82 = por %p80, %p81
      %p83 = scmp.ne.s32.totalorder %s75, %s78
      %p84 = scmp.eq.s32.totalorder %s65, 0
      %p85 = por %p83, %p84
      %p86 = scmp.ne.s32.totalorder %s75, %s78
      %p87 = scmp.eq.s32.totalorder %s70, 1
      %p88 = por %p86, %p87
      %p89 = scmp.ne.s32.totalorder %s78, %s79
      %p90 = scmp.eq.s32.totalorder %s70, 0
      %p91 = por %p89, %p90
      %p92 = scmp.ne.s32.totalorder %s78, %s79
      %p93 = scmp.eq.s32.totalorder %s71, 1
      %p94 = por %p92, %p93
      %p96 = scmp.ne.s32.totalorder %s79, %s95
      %p97 = scmp.eq.s32.totalorder %s71, 0
      %p98 = por %p96, %p97
      %s99 = ssub.s32 %s65, %s72
      %p100 = scmp.eq.s32.totalorder %s99, 0
      %s102 = sadd.s32 %s101, 1
      %s103 = scalar_select %p100, %s101, %s102
      %p106 = pneg %p100
      %p107 = scmp.eq.s32.totalorder %s65, 1
      %p108 = por %p106, %p107
      %p109 = scmp.ne.s32.totalorder %s101, %s104
      %p110 = scmp.eq.s32.totalorder %s65, 0
      %p111 = por %p109, %p110
      %p112 = scmp.ne.s32.totalorder %s101, %s104
      %p113 = scmp.eq.s32.totalorder %s70, 1
      %p114 = por %p112, %p113
      %p115 = scmp.ne.s32.totalorder %s104, %s105
      %p116 = scmp.eq.s32.totalorder %s70, 0
      %p117 = por %p115, %p116
      %p118 = scmp.ne.s32.totalorder %s104, %s105
      %p119 = scmp.eq.s32.totalorder %s71, 1
      %p120 = por %p118, %p119
      %p122 = scmp.ne.s32.totalorder %s105, %s121
      %p123 = scmp.eq.s32.totalorder %s71, 0
      %p124 = por %p122, %p123
      %s126 = sadd.s32 %s125, 1
      %p129 = scmp.eq.s32.totalorder %s65, 1
      %p130 = scmp.ne.s32.totalorder %s125, %s127
      %p131 = scmp.eq.s32.totalorder %s65, 0
      %p132 = por %p130, %p131
      %p133 = scmp.ne.s32.totalorder %s125, %s127
      %p134 = scmp.eq.s32.totalorder %s70, 1
      %p135 = por %p133, %p134
      %p136 = scmp.ne.s32.totalorder %s127, %s128
      %p137 = scmp.eq.s32.totalorder %s70, 0
      %p138 = por %p136, %p137
      %p139 = scmp.ne.s32.totalorder %s127, %s128
      %p140 = scmp.eq.s32.totalorder %s71, 1
      %p141 = por %p139, %p140
      %p143 = scmp.ne.s32.totalorder %s128, %s142
      %p144 = scmp.eq.s32.totalorder %s71, 0
      %p145 = por %p143, %p144
      %s147 = sadd.s32 %s146, 1
      %p150 = scmp.eq.s32.totalorder %s65, 1
      %p151 = scmp.ne.s32.totalorder %s146, %s148
      %p152 = scmp.eq.s32.totalorder %s65, 0
      %p153 = por %p151, %p152
      %p154 = scmp.ne.s32.totalorder %s146, %s148
      %p155 = scmp.eq.s32.totalorder %s70, 1
      %p156 = por %p154, %p155
      %p157 = scmp.ne.s32.totalorder %s148, %s149
      %p158 = scmp.eq.s32.totalorder %s70, 0
      %p159 = por %p157, %p158
      %p160 = scmp.ne.s32.totalorder %s148, %s149
      %p161 = scmp.eq.s32.totalorder %s71, 1
      %p162 = por %p160, %p161
      %p164 = scmp.ne.s32.totalorder %s149, %s163
      %p165 = scmp.eq.s32.totalorder %s71, 0
      %p166 = por %p164, %p165
      %s168 = sadd.s32 %s167, 1
      %p171 = scmp.eq.s32.totalorder %s65, 1
      %p172 = scmp.ne.s32.totalorder %s167, %s169
      %p173 = scmp.eq.s32.totalorder %s65, 0
      %p174 = por %p172, %p173
      %p175 = scmp.ne.s32.totalorder %s167, %s169
      %p176 = scmp.eq.s32.totalorder %s70, 1
      %p177 = por %p175, %p176
      %p178 = scmp.ne.s32.totalorder %s169, %s170
      %p179 = scmp.eq.s32.totalorder %s70, 0
      %p180 = por %p178, %p179
      %p181 = scmp.ne.s32.totalorder %s169, %s170
      %p182 = scmp.eq.s32.totalorder %s71, 1
      %p183 = por %p181, %p182
      %p185 = scmp.ne.s32.totalorder %s170, %s184
      %p186 = scmp.eq.s32.totalorder %s71, 0
      %p187 = por %p185, %p186
      %s189 = sadd.s32 %s188, 1
      %p192 = scmp.eq.s32.totalorder %s65, 1
      %p193 = scmp.ne.s32.totalorder %s188, %s190
      %p194 = scmp.eq.s32.totalorder %s65, 0
      %p195 = por %p193, %p194
      %p196 = scmp.ne.s32.totalorder %s188, %s190
      %p197 = scmp.eq.s32.totalorder %s70, 1
      %p198 = por %p196, %p197
      %p199 = scmp.ne.s32.totalorder %s190, %s191
      %p200 = scmp.eq.s32.totalorder %s70, 0
      %p201 = por %p199, %p200
      %p202 = scmp.ne.s32.totalorder %s190, %s191
      %p203 = scmp.eq.s32.totalorder %s71, 1
      %p204 = por %p202, %p203
      %p206 = scmp.ne.s32.totalorder %s191, %s205
      %p207 = scmp.eq.s32.totalorder %s71, 0
      %p208 = por %p206, %p207
      %s210 = sadd.s32 %s209, 1
      %p213 = scmp.eq.s32.totalorder %s65, 1
      %p214 = scmp.ne.s32.totalorder %s209, %s211
      %p215 = scmp.eq.s32.totalorder %s65, 0
      %p216 = por %p214, %p215
      %p217 = scmp.ne.s32.totalorder %s209, %s211
      %p218 = scmp.eq.s32.totalorder %s70, 1
      %p219 = por %p217, %p218
      %p220 = scmp.ne.s32.totalorder %s211, %s212
      %p221 = scmp.eq.s32.totalorder %s70, 0
      %p222 = por %p220, %p221
      %p223 = scmp.ne.s32.totalorder %s211, %s212
      %p224 = scmp.eq.s32.totalorder %s71, 1
      %p225 = por %p223, %p224
      %p227 = scmp.ne.s32.totalorder %s212, %s226
      %p228 = scmp.eq.s32.totalorder %s71, 0
      %p229 = por %p227, %p228
      %s231 = sadd.s32 %s230, 1
      %p234 = scmp.eq.s32.totalorder %s65, 1
      %p235 = scmp.ne.s32.totalorder %s230, %s232
      %p236 = scmp.eq.s32.totalorder %s65, 0
      %p237 = por %p235, %p236
      %p238 = scmp.ne.s32.totalorder %s230, %s232
      %p239 = scmp.eq.s32.totalorder %s70, 1
      %p240 = por %p238, %p239
      %p241 = scmp.ne.s32.totalorder %s232, %s233
      %p242 = scmp.eq.s32.totalorder %s70, 0
      %p243 = por %p241, %p242
      %p244 = scmp.ne.s32.totalorder %s232, %s233
      %p245 = scmp.eq.s32.totalorder %s71, 1
      %p246 = por %p244, %p245
      %p248 = scmp.ne.s32.totalorder %s233, %s247
      %p249 = scmp.eq.s32.totalorder %s71, 0
      %p250 = por %p248, %p249
      %s252 = sadd.s32 %s251, 1
      %p255 = scmp.eq.s32.totalorder %s65, 1
      %p256 = scmp.ne.s32.totalorder %s251, %s253
      %p257 = scmp.eq.s32.totalorder %s65, 0
      %p258 = por %p256, %p257
      %p259 = scmp.ne.s32.totalorder %s251, %s253
      %p260 = scmp.eq.s32.totalorder %s70, 1
      %p261 = por %p259, %p260
      %p262 = scmp.ne.s32.totalorder %s253, %s254
      %p263 = scmp.eq.s32.totalorder %s70, 0
      %p264 = por %p262, %p263
      %p265 = scmp.ne.s32.totalorder %s253, %s254
      %p266 = scmp.eq.s32.totalorder %s71, 1
      %p267 = por %p265, %p266
      %p269 = scmp.ne.s32.totalorder %s254, %s268
      %p270 = scmp.eq.s32.totalorder %s71, 0
      %p271 = por %p269, %p270
      %s273 = sadd.s32 %s272, 1
      %p276 = scmp.eq.s32.totalorder %s65, 1
      %p277 = scmp.ne.s32.totalorder %s272, %s274
      %p278 = scmp.eq.s32.totalorder %s65, 0
      %p279 = por %p277, %p278
      %p280 = scmp.ne.s32.totalorder %s272, %s274
      %p281 = scmp.eq.s32.totalorder %s70, 1
      %p282 = por %p280, %p281
      %p283 = scmp.ne.s32.totalorder %s274, %s275
      %p284 = scmp.eq.s32.totalorder %s70, 0
      %p285 = por %p283, %p284
      %p286 = scmp.ne.s32.totalorder %s274, %s275
      %p287 = scmp.eq.s32.totalorder %s71, 1
      %p288 = por %p286, %p287
      %p290 = scmp.ne.s32.totalorder %s275, %s289
      %p291 = scmp.eq.s32.totalorder %s71, 0
      %p292 = por %p290, %p291
      %s294 = sadd.s32 %s293, 1
      %p297 = scmp.eq.s32.totalorder %s65, 1
      %p298 = scmp.ne.s32.totalorder %s293, %s295
      %p299 = scmp.eq.s32.totalorder %s65, 0
      %p300 = por %p298, %p299
      %p301 = scmp.ne.s32.totalorder %s293, %s295
      %p302 = scmp.eq.s32.totalorder %s70, 1
      %p303 = por %p301, %p302
      %p304 = scmp.ne.s32.totalorder %s295, %s296
      %p305 = scmp.eq.s32.totalorder %s70, 0
      %p306 = por %p304, %p305
      %p307 = scmp.ne.s32.totalorder %s295, %s296
      %p308 = scmp.eq.s32.totalorder %s71, 1
      %p309 = por %p307, %p308
      %p311 = scmp.ne.s32.totalorder %s296, %s310
      %p312 = scmp.eq.s32.totalorder %s71, 0
      %p313 = por %p311, %p312
      %s315 = sadd.s32 %s314, 1
      %p318 = scmp.eq.s32.totalorder %s65, 1
      %p319 = scmp.ne.s32.totalorder %s314, %s316
      %p320 = scmp.eq.s32.totalorder %s65, 0
      %p321 = por %p319, %p320
      %p322 = scmp.ne.s32.totalorder %s314, %s316
      %p323 = scmp.eq.s32.totalorder %s70, 1
      %p324 = por %p322, %p323
      %p325 = scmp.ne.s32.totalorder %s316, %s317
      %p326 = scmp.eq.s32.totalorder %s70, 0
      %p327 = por %p325, %p326
      %p328 = scmp.ne.s32.totalorder %s316, %s317
      %p329 = scmp.eq.s32.totalorder %s71, 1
      %p330 = por %p328, %p329
      %p332 = scmp.ne.s32.totalorder %s317, %s331
      %p333 = scmp.eq.s32.totalorder %s71, 0
      %p334 = por %p332, %p333
      %s336 = sadd.s32 %s335, 1
      %p339 = scmp.eq.s32.totalorder %s65, 1
      %p340 = scmp.ne.s32.totalorder %s335, %s337
      %p341 = scmp.eq.s32.totalorder %s65, 0
      %p342 = por %p340, %p341
      %p343 = scmp.ne.s32.totalorder %s335, %s337
      %p344 = scmp.eq.s32.totalorder %s70, 1
      %p345 = por %p343, %p344
      %p346 = scmp.ne.s32.totalorder %s337, %s338
      %p347 = scmp.eq.s32.totalorder %s70, 0
      %p348 = por %p346, %p347
      %p349 = scmp.ne.s32.totalorder %s337, %s338
      %p350 = scmp.eq.s32.totalorder %s71, 1
      %p351 = por %p349, %p350
      %p353 = scmp.ne.s32.totalorder %s338, %s352
      %p354 = scmp.eq.s32.totalorder %s71, 0
      %p355 = por %p353, %p354
      %s357 = sadd.s32 %s356, 1
      %p360 = scmp.eq.s32.totalorder %s65, 1
      %p361 = scmp.ne.s32.totalorder %s356, %s358
      %p362 = scmp.eq.s32.totalorder %s65, 0
      %p363 = por %p361, %p362
      %p364 = scmp.ne.s32.totalorder %s356, %s358
      %p365 = scmp.eq.s32.totalorder %s70, 1
      %p366 = por %p364, %p365
      %p367 = scmp.ne.s32.totalorder %s358, %s359
      %p368 = scmp.eq.s32.totalorder %s70, 0
      %p369 = por %p367, %p368
      %p370 = scmp.ne.s32.totalorder %s358, %s359
      %p371 = scmp.eq.s32.totalorder %s71, 1
      %p372 = por %p370, %p371
      %p374 = scmp.ne.s32.totalorder %s359, %s373
      %p375 = scmp.eq.s32.totalorder %s71, 0
      %p376 = por %p374, %p375
      %s378 = sadd.s32 %s377, 1
      %p381 = scmp.eq.s32.totalorder %s65, 1
      %p382 = scmp.ne.s32.totalorder %s377, %s379
      %p383 = scmp.eq.s32.totalorder %s65, 0
      %p384 = por %p382, %p383
      %p385 = scmp.ne.s32.totalorder %s377, %s379
      %p386 = scmp.eq.s32.totalorder %s70, 1
      %p387 = por %p385, %p386
      %p388 = scmp.ne.s32.totalorder %s379, %s380
      %p389 = scmp.eq.s32.totalorder %s70, 0
      %p390 = por %p388, %p389
      %p391 = scmp.ne.s32.totalorder %s379, %s380
      %p392 = scmp.eq.s32.totalorder %s71, 1
      %p393 = por %p391, %p392
      %p395 = scmp.ne.s32.totalorder %s380, %s394
      %p396 = scmp.eq.s32.totalorder %s71, 0
      %p397 = por %p395, %p396
      %s399 = sadd.s32 %s398, 1
      %p402 = scmp.eq.s32.totalorder %s65, 1
      %p403 = scmp.ne.s32.totalorder %s398, %s400
      %p404 = scmp.eq.s32.totalorder %s65, 0
      %p405 = por %p403, %p404
      %p406 = scmp.ne.s32.totalorder %s398, %s400
      %p407 = scmp.eq.s32.totalorder %s70, 1
      %p408 = por %p406, %p407
      %p409 = scmp.ne.s32.totalorder %s400, %s401
      %p410 = scmp.eq.s32.totalorder %s70, 0
      %p411 = por %p409, %p410
      %p412 = scmp.ne.s32.totalorder %s400, %s401
      %p413 = scmp.eq.s32.totalorder %s71, 1
      %p414 = por %p412, %p413
      %p416 = scmp.ne.s32.totalorder %s401, %s415
      %p417 = scmp.eq.s32.totalorder %s71, 0
      %p418 = por %p416, %p417
      %s420 = sadd.s32 %s419, 1
      %p423 = scmp.eq.s32.totalorder %s65, 1
      %p424 = scmp.ne.s32.totalorder %s419, %s421
      %p425 = scmp.eq.s32.totalorder %s65, 0
      %p426 = por %p424, %p425
      %p427 = scmp.ne.s32.totalorder %s419, %s421
      %p428 = scmp.eq.s32.totalorder %s70, 1
      %p429 = por %p427, %p428
      %p430 = scmp.ne.s32.totalorder %s421, %s422
      %p431 = scmp.eq.s32.totalorder %s70, 0
      %p432 = por %p430, %p431
      %p433 = scmp.ne.s32.totalorder %s421, %s422
      %p434 = scmp.eq.s32.totalorder %s71, 1
      %p435 = por %p433, %p434
      %p437 = scmp.ne.s32.totalorder %s422, %s436
      %p438 = scmp.eq.s32.totalorder %s71, 0
      %p439 = por %p437, %p438
      %s441 = sadd.s32 %s440, 1
      %p444 = scmp.eq.s32.totalorder %s65, 1
      %p445 = scmp.ne.s32.totalorder %s440, %s442
      %p446 = scmp.eq.s32.totalorder %s65, 0
      %p447 = por %p445, %p446
      %p448 = scmp.ne.s32.totalorder %s440, %s442
      %p449 = scmp.eq.s32.totalorder %s70, 1
      %p450 = por %p448, %p449
      %p451 = scmp.ne.s32.totalorder %s442, %s443
      %p452 = scmp.eq.s32.totalorder %s70, 0
      %p453 = por %p451, %p452
      %p454 = scmp.ne.s32.totalorder %s442, %s443
      %p455 = scmp.eq.s32.totalorder %s71, 1
      %p456 = por %p454, %p455
      %p458 = scmp.ne.s32.totalorder %s443, %s457
      %p459 = scmp.eq.s32.totalorder %s71, 0
      %p460 = por %p458, %p459
      %s462 = sadd.s32 %s461, 1
      %p465 = scmp.eq.s32.totalorder %s65, 1
      %p466 = scmp.ne.s32.totalorder %s461, %s463
      %p467 = scmp.eq.s32.totalorder %s65, 0
      %p468 = por %p466, %p467
      %p469 = scmp.ne.s32.totalorder %s461, %s463
      %p470 = scmp.eq.s32.totalorder %s70, 1
      %p471 = por %p469, %p470
      %p472 = scmp.ne.s32.totalorder %s463, %s464
      %p473 = scmp.eq.s32.totalorder %s70, 0
      %p474 = por %p472, %p473
      %p475 = scmp.ne.s32.totalorder %s463, %s464
      %p476 = scmp.eq.s32.totalorder %s71, 1
      %p477 = por %p475, %p476
      %p479 = scmp.ne.s32.totalorder %s464, %s478
      %p480 = scmp.eq.s32.totalorder %s71, 0
      %p481 = por %p479, %p480
      %s483 = sadd.s32 %s482, 1
      %p486 = scmp.eq.s32.totalorder %s65, 1
      %p487 = scmp.ne.s32.totalorder %s482, %s484
      %p488 = scmp.eq.s32.totalorder %s65, 0
      %p489 = por %p487, %p488
      %p490 = scmp.ne.s32.totalorder %s482, %s484
      %p491 = scmp.eq.s32.totalorder %s70, 1
      %p492 = por %p490, %p491
      %p493 = scmp.ne.s32.totalorder %s484, %s485
      %p494 = scmp.eq.s32.totalorder %s70, 0
      %p495 = por %p493, %p494
      %p496 = scmp.ne.s32.totalorder %s484, %s485
      %p497 = scmp.eq.s32.totalorder %s71, 1
      %p498 = por %p496, %p497
      %p500 = scmp.ne.s32.totalorder %s485, %s499
      %p501 = scmp.eq.s32.totalorder %s71, 0
      %p502 = por %p500, %p501
      %s504 = sadd.s32 %s503, 1
      %p507 = scmp.eq.s32.totalorder %s65, 1
      %p508 = scmp.ne.s32.totalorder %s503, %s505
      %p509 = scmp.eq.s32.totalorder %s65, 0
      %p510 = por %p508, %p509
      %p511 = scmp.ne.s32.totalorder %s503, %s505
      %p512 = scmp.eq.s32.totalorder %s70, 1
      %p513 = por %p511, %p512
      %p514 = scmp.ne.s32.totalorder %s505, %s506
      %p515 = scmp.eq.s32.totalorder %s70, 0
      %p516 = por %p514, %p515
      %p517 = scmp.ne.s32.totalorder %s505, %s506
      %p518 = scmp.eq.s32.totalorder %s71, 1
      %p519 = por %p517, %p518
      %p521 = scmp.ne.s32.totalorder %s506, %s520
      %p522 = scmp.eq.s32.totalorder %s71, 0
      %p523 = por %p521, %p522
      %s525 = sadd.s32 %s524, 1
      %p528 = scmp.eq.s32.totalorder %s65, 1
      %p529 = scmp.ne.s32.totalorder %s524, %s526
      %p530 = scmp.eq.s32.totalorder %s65, 0
      %p531 = por %p529, %p530
      %p532 = scmp.ne.s32.totalorder %s524, %s526
      %p533 = scmp.eq.s32.totalorder %s70, 1
      %p534 = por %p532, %p533
      %p535 = scmp.ne.s32.totalorder %s526, %s527
      %p536 = scmp.eq.s32.totalorder %s70, 0
      %p537 = por %p535, %p536
      %p538 = scmp.ne.s32.totalorder %s526, %s527
      %p539 = scmp.eq.s32.totalorder %s71, 1
      %p540 = por %p538, %p539
      %p542 = scmp.ne.s32.totalorder %s527, %s541
      %p543 = scmp.eq.s32.totalorder %s71, 0
      %p544 = por %p542, %p543
      %s546 = sadd.s32 %s545, 1
      %p549 = scmp.eq.s32.totalorder %s65, 1
      %p550 = scmp.ne.s32.totalorder %s545, %s547
      %p551 = scmp.eq.s32.totalorder %s65, 0
      %p552 = por %p550, %p551
      %p553 = scmp.ne.s32.totalorder %s545, %s547
      %p554 = scmp.eq.s32.totalorder %s70, 1
      %p555 = por %p553, %p554
      %p556 = scmp.ne.s32.totalorder %s547, %s548
      %p557 = scmp.eq.s32.totalorder %s70, 0
      %p558 = por %p556, %p557
      %p559 = scmp.ne.s32.totalorder %s547, %s548
      %p560 = scmp.eq.s32.totalorder %s71, 1
      %p561 = por %p559, %p560
      %p563 = scmp.ne.s32.totalorder %s548, %s562
      %p564 = scmp.eq.s32.totalorder %s71, 0
      %p565 = por %p563, %p564
      %s567 = sadd.s32 %s566, 1
      %p570 = scmp.eq.s32.totalorder %s65, 1
      %p571 = scmp.ne.s32.totalorder %s566, %s568
      %p572 = scmp.eq.s32.totalorder %s65, 0
      %p573 = por %p571, %p572
      %p574 = scmp.ne.s32.totalorder %s566, %s568
      %p575 = scmp.eq.s32.totalorder %s70, 1
      %p576 = por %p574, %p575
      %p577 = scmp.ne.s32.totalorder %s568, %s569
      %p578 = scmp.eq.s32.totalorder %s70, 0
      %p579 = por %p577, %p578
      %p580 = scmp.ne.s32.totalorder %s568, %s569
      %p581 = scmp.eq.s32.totalorder %s71, 1
      %p582 = por %p580, %p581
      %p584 = scmp.ne.s32.totalorder %s569, %s583
      %p585 = scmp.eq.s32.totalorder %s71, 0
      %p586 = por %p584, %p585
      %s588 = sadd.s32 %s587, 1
      %p591 = scmp.eq.s32.totalorder %s65, 1
      %p592 = scmp.ne.s32.totalorder %s587, %s589
      %p593 = scmp.eq.s32.totalorder %s65, 0
      %p594 = por %p592, %p593
      %p595 = scmp.ne.s32.totalorder %s587, %s589
      %p596 = scmp.eq.s32.totalorder %s70, 1
      %p597 = por %p595, %p596
      %p598 = scmp.ne.s32.totalorder %s589, %s590
      %p599 = scmp.eq.s32.totalorder %s70, 0
      %p600 = por %p598, %p599
      %p601 = scmp.ne.s32.totalorder %s589, %s590
      %p602 = scmp.eq.s32.totalorder %s71, 1
      %p603 = por %p601, %p602
      %p605 = scmp.ne.s32.totalorder %s590, %s604
      %p606 = scmp.eq.s32.totalorder %s71, 0
      %p607 = por %p605, %p606
      %s609 = sadd.s32 %s608, 1
      %p612 = scmp.eq.s32.totalorder %s65, 1
      %p613 = scmp.ne.s32.totalorder %s608, %s610
      %p614 = scmp.eq.s32.totalorder %s65, 0
      %p615 = por %p613, %p614
      %p616 = scmp.ne.s32.totalorder %s608, %s610
      %p617 = scmp.eq.s32.totalorder %s70, 1
      %p618 = por %p616, %p617
      %p619 = scmp.ne.s32.totalorder %s610, %s611
      %p620 = scmp.eq.s32.totalorder %s70, 0
      %p621 = por %p619, %p620
      %p622 = scmp.ne.s32.totalorder %s610, %s611
      %p623 = scmp.eq.s32.totalorder %s71, 1
      %p624 = por %p622, %p623
      %p626 = scmp.ne.s32.totalorder %s611, %s625
      %p627 = scmp.eq.s32.totalorder %s71, 0
      %p628 = por %p626, %p627
      %s630 = sadd.s32 %s629, 1
      %p633 = scmp.eq.s32.totalorder %s65, 1
      %p634 = scmp.ne.s32.totalorder %s629, %s631
      %p635 = scmp.eq.s32.totalorder %s65, 0
      %p636 = por %p634, %p635
      %p637 = scmp.ne.s32.totalorder %s629, %s631
      %p638 = scmp.eq.s32.totalorder %s70, 1
      %p639 = por %p637, %p638
      %p640 = scmp.ne.s32.totalorder %s631, %s632
      %p641 = scmp.eq.s32.totalorder %s70, 0
      %p642 = por %p640, %p641
      %p643 = scmp.ne.s32.totalorder %s631, %s632
      %p644 = scmp.eq.s32.totalorder %s71, 1
      %p645 = por %p643, %p644
      %p647 = scmp.ne.s32.totalorder %s632, %s646
      %p648 = scmp.eq.s32.totalorder %s71, 0
      %p649 = por %p647, %p648
      %s651 = sadd.s32 %s650, 1
      %p654 = scmp.eq.s32.totalorder %s65, 1
      %p655 = scmp.ne.s32.totalorder %s650, %s652
      %p656 = scmp.eq.s32.totalorder %s65, 0
      %p657 = por %p655, %p656
      %p658 = scmp.ne.s32.totalorder %s650, %s652
      %p659 = scmp.eq.s32.totalorder %s70, 1
      %p660 = por %p658, %p659
      %p661 = scmp.ne.s32.totalorder %s652, %s653
      %p662 = scmp.eq.s32.totalorder %s70, 0
      %p663 = por %p661, %p662
      %p664 = scmp.ne.s32.totalorder %s652, %s653
      %p665 = scmp.eq.s32.totalorder %s71, 1
      %p666 = por %p664, %p665
      %p668 = scmp.ne.s32.totalorder %s653, %s667
      %p669 = scmp.eq.s32.totalorder %s71, 0
      %p670 = por %p668, %p669
      %s672 = sadd.s32 %s671, 1
      %p675 = scmp.eq.s32.totalorder %s65, 1
      %p676 = scmp.ne.s32.totalorder %s671, %s673
      %p677 = scmp.eq.s32.totalorder %s65, 0
      %p678 = por %p676, %p677
      %p679 = scmp.ne.s32.totalorder %s671, %s673
      %p680 = scmp.eq.s32.totalorder %s70, 1
      %p681 = por %p679, %p680
      %p682 = scmp.ne.s32.totalorder %s673, %s674
      %p683 = scmp.eq.s32.totalorder %s70, 0
      %p684 = por %p682, %p683
      %p685 = scmp.ne.s32.totalorder %s673, %s674
      %p686 = scmp.eq.s32.totalorder %s71, 1
      %p687 = por %p685, %p686
      %p689 = scmp.ne.s32.totalorder %s674, %s688
      %p690 = scmp.eq.s32.totalorder %s71, 0
      %p691 = por %p689, %p690
      %s692 = ssub.s32 %s65, %s72
      %p693 = scmp.eq.s32.totalorder %s692, 0
      %s695 = sadd.s32 %s694, 1
      %s696 = scalar_select %p693, %s694, %s695
      %p699 = pneg %p693
      %p700 = scmp.eq.s32.totalorder %s65, 1
      %p701 = por %p699, %p700
      %p702 = scmp.ne.s32.totalorder %s694, %s697
      %p703 = scmp.eq.s32.totalorder %s65, 0
      %p704 = por %p702, %p703
      %p705 = scmp.ne.s32.totalorder %s694, %s697
      %p706 = scmp.eq.s32.totalorder %s70, 1
      %p707 = por %p705, %p706
      %p708 = scmp.ne.s32.totalorder %s697, %s698
      %p709 = scmp.eq.s32.totalorder %s70, 0
      %p710 = por %p708, %p709
      %p711 = scmp.ne.s32.totalorder %s697, %s698
      %p712 = scmp.eq.s32.totalorder %s71, 1
      %p713 = por %p711, %p712
      %p715 = scmp.ne.s32.totalorder %s698, %s714
      %p716 = scmp.eq.s32.totalorder %s71, 0
      %p717 = por %p715, %p716
      %p718 = scmp.le.s32.totalorder 1, %s65
      %p719 = scmp.lt.s32.totalorder %s65, 3
      %p720 = pnand %p718, %p719
      %p721 = pneg %p720
      // Predicated region
      $region9: #{temporal_block_forward.1} parent=5 // pred_check
        _
      $region10: #{temporal_block_forward.1} parent=5 // pred_check_branch
        %723 = sbr.rel (%p720) target = $region12
      $region11: #{temporal_block_forward.1} parent=5 // pred_region
        %s724 = ssub.s32 %s65, 1
        // Predicated region
        $region13: #{temporal_block_forward.1} parent=11 // pred_check
          %p725 = pneg %p138
        $region14: #{temporal_block_forward.1} parent=11 // pred_check_branch
          %727 = sbr.rel (%p725) target = $region16
        $region15: #{temporal_block_forward.1} parent=11 // pred_region
          _
        $region16: #{temporal_block_forward.1} parent=11 // pred_fallthru
          _
        // Predicated region
        $region17: #{temporal_block_forward.1} parent=11 // pred_check
          %p728 = pneg %p159
        $region18: #{temporal_block_forward.1} parent=11 // pred_check_branch
          %730 = sbr.rel (%p728) target = $region20
        $region19: #{temporal_block_forward.1} parent=11 // pred_region
          _
        $region20: #{temporal_block_forward.1} parent=11 // pred_fallthru
          _
        // Predicated region
        $region21: #{temporal_block_forward.1} parent=11 // pred_check
          %p731 = pneg %p180
        $region22: #{temporal_block_forward.1} parent=11 // pred_check_branch
          %733 = sbr.rel (%p731) target = $region24
        $region23: #{temporal_block_forward.1} parent=11 // pred_region
          _
        $region24: #{temporal_block_forward.1} parent=11 // pred_fallthru
          _
        // Predicated region
        $region25: #{temporal_block_forward.1} parent=11 // pred_check
          %p734 = pneg %p201
        $region26: #{temporal_block_forward.1} parent=11 // pred_check_branch
          %736 = sbr.rel (%p734) target = $region28
        $region27: #{temporal_block_forward.1} parent=11 // pred_region
          _
        $region28: #{temporal_block_forward.1} parent=11 // pred_fallthru
          _
        // Predicated region
        $region29: #{temporal_block_forward.1} parent=11 // pred_check
          %p737 = pneg %p222
        $region30: #{temporal_block_forward.1} parent=11 // pred_check_branch
          %739 = sbr.rel (%p737) target = $region32
        $region31: #{temporal_block_forward.1} parent=11 // pred_region
          _
        $region32: #{temporal_block_forward.1} parent=11 // pred_fallthru
          _
        // Predicated region
        $region33: #{temporal_block_forward.1} parent=11 // pred_check
          %p740 = pneg %p243
        $region34: #{temporal_block_forward.1} parent=11 // pred_check_branch
          %742 = sbr.rel (%p740) target = $region36
        $region35: #{temporal_block_forward.1} parent=11 // pred_region
          _
        $region36: #{temporal_block_forward.1} parent=11 // pred_fallthru
          _
        // Predicated region
        $region37: #{temporal_block_forward.1} parent=11 // pred_check
          %p743 = pneg %p264
        $region38: #{temporal_block_forward.1} parent=11 // pred_check_branch
          %745 = sbr.rel (%p743) target = $region40
        $region39: #{temporal_block_forward.1} parent=11 // pred_region
          _
        $region40: #{temporal_block_forward.1} parent=11 // pred_fallthru
          _
        // Predicated region
        $region41: #{temporal_block_forward.1} parent=11 // pred_check
          %p746 = pneg %p285
        $region42: #{temporal_block_forward.1} parent=11 // pred_check_branch
          %748 = sbr.rel (%p746) target = $region44
        $region43: #{temporal_block_forward.1} parent=11 // pred_region
          _
        $region44: #{temporal_block_forward.1} parent=11 // pred_fallthru
          _
        // Predicated region
        $region45: #{temporal_block_forward.1} parent=11 // pred_check
          %p749 = pneg %p306
        $region46: #{temporal_block_forward.1} parent=11 // pred_check_branch
          %751 = sbr.rel (%p749) target = $region48
        $region47: #{temporal_block_forward.1} parent=11 // pred_region
          _
        $region48: #{temporal_block_forward.1} parent=11 // pred_fallthru
          _
        // Predicated region
        $region49: #{temporal_block_forward.1} parent=11 // pred_check
          %p752 = pneg %p327
        $region50: #{temporal_block_forward.1} parent=11 // pred_check_branch
          %754 = sbr.rel (%p752) target = $region52
        $region51: #{temporal_block_forward.1} parent=11 // pred_region
          _
        $region52: #{temporal_block_forward.1} parent=11 // pred_fallthru
          _
        // Predicated region
        $region53: #{temporal_block_forward.1} parent=11 // pred_check
          %p755 = pneg %p348
        $region54: #{temporal_block_forward.1} parent=11 // pred_check_branch
          %757 = sbr.rel (%p755) target = $region56
        $region55: #{temporal_block_forward.1} parent=11 // pred_region
          _
        $region56: #{temporal_block_forward.1} parent=11 // pred_fallthru
          _
        // Predicated region
        $region57: #{temporal_block_forward.1} parent=11 // pred_check
          %p758 = pneg %p369
        $region58: #{temporal_block_forward.1} parent=11 // pred_check_branch
          %760 = sbr.rel (%p758) target = $region60
        $region59: #{temporal_block_forward.1} parent=11 // pred_region
          _
        $region60: #{temporal_block_forward.1} parent=11 // pred_fallthru
          _
        // Predicated region
        $region61: #{temporal_block_forward.1} parent=11 // pred_check
          %p761 = pneg %p390
        $region62: #{temporal_block_forward.1} parent=11 // pred_check_branch
          %763 = sbr.rel (%p761) target = $region64
        $region63: #{temporal_block_forward.1} parent=11 // pred_region
          _
        $region64: #{temporal_block_forward.1} parent=11 // pred_fallthru
          _
        // Predicated region
        $region65: #{temporal_block_forward.1} parent=11 // pred_check
          %p764 = pneg %p411
        $region66: #{temporal_block_forward.1} parent=11 // pred_check_branch
          %766 = sbr.rel (%p764) target = $region68
        $region67: #{temporal_block_forward.1} parent=11 // pred_region
          _
        $region68: #{temporal_block_forward.1} parent=11 // pred_fallthru
          _
        // Predicated region
        $region69: #{temporal_block_forward.1} parent=11 // pred_check
          %p767 = pneg %p432
        $region70: #{temporal_block_forward.1} parent=11 // pred_check_branch
          %769 = sbr.rel (%p767) target = $region72
        $region71: #{temporal_block_forward.1} parent=11 // pred_region
          _
        $region72: #{temporal_block_forward.1} parent=11 // pred_fallthru
          _
        // Predicated region
        $region73: #{temporal_block_forward.1} parent=11 // pred_check
          %p770 = pneg %p453
        $region74: #{temporal_block_forward.1} parent=11 // pred_check_branch
          %772 = sbr.rel (%p770) target = $region76
        $region75: #{temporal_block_forward.1} parent=11 // pred_region
          _
        $region76: #{temporal_block_forward.1} parent=11 // pred_fallthru
          _
        // Predicated region
        $region77: #{temporal_block_forward.1} parent=11 // pred_check
          %p773 = pneg %p474
        $region78: #{temporal_block_forward.1} parent=11 // pred_check_branch
          %775 = sbr.rel (%p773) target = $region80
        $region79: #{temporal_block_forward.1} parent=11 // pred_region
          _
        $region80: #{temporal_block_forward.1} parent=11 // pred_fallthru
          _
        // Predicated region
        $region81: #{temporal_block_forward.1} parent=11 // pred_check
          %p776 = pneg %p495
        $region82: #{temporal_block_forward.1} parent=11 // pred_check_branch
          %778 = sbr.rel (%p776) target = $region84
        $region83: #{temporal_block_forward.1} parent=11 // pred_region
          _
        $region84: #{temporal_block_forward.1} parent=11 // pred_fallthru
          _
        // Predicated region
        $region85: #{temporal_block_forward.1} parent=11 // pred_check
          %p779 = pneg %p516
        $region86: #{temporal_block_forward.1} parent=11 // pred_check_branch
          %781 = sbr.rel (%p779) target = $region88
        $region87: #{temporal_block_forward.1} parent=11 // pred_region
          _
        $region88: #{temporal_block_forward.1} parent=11 // pred_fallthru
          _
        // Predicated region
        $region89: #{temporal_block_forward.1} parent=11 // pred_check
          %p782 = pneg %p537
        $region90: #{temporal_block_forward.1} parent=11 // pred_check_branch
          %784 = sbr.rel (%p782) target = $region92
        $region91: #{temporal_block_forward.1} parent=11 // pred_region
          _
        $region92: #{temporal_block_forward.1} parent=11 // pred_fallthru
          _
        // Predicated region
        $region93: #{temporal_block_forward.1} parent=11 // pred_check
          %p785 = pneg %p558
        $region94: #{temporal_block_forward.1} parent=11 // pred_check_branch
          %787 = sbr.rel (%p785) target = $region96
        $region95: #{temporal_block_forward.1} parent=11 // pred_region
          _
        $region96: #{temporal_block_forward.1} parent=11 // pred_fallthru
          _
        // Predicated region
        $region97: #{temporal_block_forward.1} parent=11 // pred_check
          %p788 = pneg %p579
        $region98: #{temporal_block_forward.1} parent=11 // pred_check_branch
          %790 = sbr.rel (%p788) target = $region100
        $region99: #{temporal_block_forward.1} parent=11 // pred_region
          _
        $region100: #{temporal_block_forward.1} parent=11 // pred_fallthru
          _
        // Predicated region
        $region101: #{temporal_block_forward.1} parent=11 // pred_check
          %p791 = pneg %p600
        $region102: #{temporal_block_forward.1} parent=11 // pred_check_branch
          %793 = sbr.rel (%p791) target = $region104
        $region103: #{temporal_block_forward.1} parent=11 // pred_region
          _
        $region104: #{temporal_block_forward.1} parent=11 // pred_fallthru
          _
        // Predicated region
        $region105: #{temporal_block_forward.1} parent=11 // pred_check
          %p794 = pneg %p621
        $region106: #{temporal_block_forward.1} parent=11 // pred_check_branch
          %796 = sbr.rel (%p794) target = $region108
        $region107: #{temporal_block_forward.1} parent=11 // pred_region
          _
        $region108: #{temporal_block_forward.1} parent=11 // pred_fallthru
          _
        // Predicated region
        $region109: #{temporal_block_forward.1} parent=11 // pred_check
          %p797 = pneg %p642
        $region110: #{temporal_block_forward.1} parent=11 // pred_check_branch
          %799 = sbr.rel (%p797) target = $region112
        $region111: #{temporal_block_forward.1} parent=11 // pred_region
          _
        $region112: #{temporal_block_forward.1} parent=11 // pred_fallthru
          _
        // Predicated region
        $region113: #{temporal_block_forward.1} parent=11 // pred_check
          %p800 = pneg %p663
        $region114: #{temporal_block_forward.1} parent=11 // pred_check_branch
          %802 = sbr.rel (%p800) target = $region116
        $region115: #{temporal_block_forward.1} parent=11 // pred_region
          _
        $region116: #{temporal_block_forward.1} parent=11 // pred_fallthru
          _
        // Predicated region
        $region117: #{temporal_block_forward.1} parent=11 // pred_check
          %p803 = pneg %p684
        $region118: #{temporal_block_forward.1} parent=11 // pred_check_branch
          %805 = sbr.rel (%p803) target = $region120
        $region119: #{temporal_block_forward.1} parent=11 // pred_region
          _
        $region120: #{temporal_block_forward.1} parent=11 // pred_fallthru
          _
      $region12: #{temporal_block_forward.1} parent=5 // pred_fallthru
        _
      %p806 = scmp.lt.s32.totalorder %s65, 2
      // Predicated region
      $region121: #{temporal_block_forward.1} parent=5 // pred_check
        %p807 = pneg %p806
      $region122: #{temporal_block_forward.1} parent=5 // pred_check_branch
        %809 = sbr.rel (%p807) target = $region124
      $region123: #{temporal_block_forward.1} parent=5 // pred_region
        // Predicated region
        $region125: #{temporal_block_forward.1} parent=123 // pred_check
          %p810 = pneg %p85
        $region126: #{temporal_block_forward.1} parent=123 // pred_check_branch
          %812 = sbr.rel (%p810) target = $region128
        $region127: #{temporal_block_forward.1} parent=123 // pred_region
          %s813 = sand.u32 %s75, 1
          %s814 = sand.u32 %s75, 1
          %s815 = smul.addr %s814, 192
          %s816 = scalar_lea.vmem [#allocation6], %s815
          %s817 = smul.u32 3, %s65
          %s818 = smul.addr %s817, 8
          %s819 = scalar_lea.vmem %s1, %s818
          // Predicated region
          $region129: #{temporal_block_forward.1} parent=127 // pred_check
            _
          $region130: #{temporal_block_forward.1} parent=127 // pred_check_branch
            %821 = sbr.rel (0) target = $region132
          $region131: #{temporal_block_forward.1} parent=127 // pred_region
            // Predicated region
            $region133: #{temporal_block_forward.1} parent=131 // pred_check
              _
            $region134: #{temporal_block_forward.1} parent=131 // pred_check_branch
              %823 = sbr.rel (0) target = $region136
            $region135: #{temporal_block_forward.1} parent=131 // pred_region
              // Predicated region
              $region148: #{temporal_block_forward.1} parent=135 // pred_check
                _
              $region149: #{temporal_block_forward.1} parent=135 // pred_check_branch
                %884 = sbr.rel (0) target = $region151
              $region150: #{temporal_block_forward.1} parent=135 // pred_region
                loop: start=0, step=1, limit=1
                $region152: #{temporal_block_forward.1} parent=150 // loop_pre_header
                  _
                $region153: #{temporal_block_forward.1} parent=150 // loop_header
                  %s886 = sphi 0, %s890
                  %p887 = scmp.ge.s32.totalorder %s886, 1
                  %s891 = sphi %s819, %s819
                  %s892 = sphi %s816, %s816
                $region154: #{temporal_block_forward.1} parent=150 // loop_header_branch
                  %889 = sbr.rel (%p887) target = $region158
                $region155: #{temporal_block_forward.1} parent=150 // loop_body
                  %v893 = vld [vmem:[%s891] sm:$0xff]
                  %894 = vst [vmem:[%s892] sm:$0xff] %v893
                  %v895 = vld [vmem:[%s891 + $0x8] sm:$0xff]
                  %896 = vst [vmem:[%s892 + $0x8] sm:$0xff] %v895
                  %v897 = vld [vmem:[%s891 + $0x10] sm:$0xff]
                  %898 = vst [vmem:[%s892 + $0x10] sm:$0xff] %v897
                  %v899 = vld [vmem:[%s891 + $0x30] sm:$0xff]
                  %900 = vst [vmem:[%s892 + $0x18] sm:$0xff] %v899
                  %v901 = vld [vmem:[%s891 + $0x38] sm:$0xff]
                  %902 = vst [vmem:[%s892 + $0x20] sm:$0xff] %v901
                  %v903 = vld [vmem:[%s891 + $0x40] sm:$0xff]
                  %904 = vst [vmem:[%s892 + $0x28] sm:$0xff] %v903
                  %v905 = vld [vmem:[%s891 + $0x60] sm:$0xff]
                  %906 = vst [vmem:[%s892 + $0x30] sm:$0xff] %v905
                  %v907 = vld [vmem:[%s891 + $0x68] sm:$0xff]
                  %908 = vst [vmem:[%s892 + $0x38] sm:$0xff] %v907
                  %v909 = vld [vmem:[%s891 + $0x70] sm:$0xff]
                  %910 = vst [vmem:[%s892 + $0x40] sm:$0xff] %v909
                  %v911 = vld [vmem:[%s891 + $0x90] sm:$0xff]
                  %912 = vst [vmem:[%s892 + $0x48] sm:$0xff] %v911
                  %v913 = vld [vmem:[%s891 + $0x98] sm:$0xff]
                  %914 = vst [vmem:[%s892 + $0x50] sm:$0xff] %v913
                  %v915 = vld [vmem:[%s891 + $0xa0] sm:$0xff]
                  %916 = vst [vmem:[%s892 + $0x58] sm:$0xff] %v915
                  %v917 = vld [vmem:[%s891 + $0xc0] sm:$0xff]
                  %918 = vst [vmem:[%s892 + $0x60] sm:$0xff] %v917
                  %v919 = vld [vmem:[%s891 + $0xc8] sm:$0xff]
                  %920 = vst [vmem:[%s892 + $0x68] sm:$0xff] %v919
                  %v921 = vld [vmem:[%s891 + $0xd0] sm:$0xff]
                  %922 = vst [vmem:[%s892 + $0x70] sm:$0xff] %v921
                  %v923 = vld [vmem:[%s891 + $0xf0] sm:$0xff]
                  %924 = vst [vmem:[%s892 + $0x78] sm:$0xff] %v923
                  %v925 = vld [vmem:[%s891 + $0xf8] sm:$0xff]
                  %926 = vst [vmem:[%s892 + $0x80] sm:$0xff] %v925
                  %v927 = vld [vmem:[%s891 + $0x100] sm:$0xff]
                  %928 = vst [vmem:[%s892 + $0x88] sm:$0xff] %v927
                  %v929 = vld [vmem:[%s891 + $0x120] sm:$0xff]
                  %930 = vst [vmem:[%s892 + $0x90] sm:$0xff] %v929
                  %v931 = vld [vmem:[%s891 + $0x128] sm:$0xff]
                  %932 = vst [vmem:[%s892 + $0x98] sm:$0xff] %v931
                  %v933 = vld [vmem:[%s891 + $0x130] sm:$0xff]
                  %934 = vst [vmem:[%s892 + $0xa0] sm:$0xff] %v933
                  %v935 = vld [vmem:[%s891 + $0x150] sm:$0xff]
                  %936 = vst [vmem:[%s892 + $0xa8] sm:$0xff] %v935
                  %v937 = vld [vmem:[%s891 + $0x158] sm:$0xff]
                  %938 = vst [vmem:[%s892 + $0xb0] sm:$0xff] %v937
                  %v939 = vld [vmem:[%s891 + $0x160] sm:$0xff]
                  %940 = vst [vmem:[%s892 + $0xb8] sm:$0xff] %v939
                $region156: #{temporal_block_forward.1} parent=150 // loop_footer
                  %s890 = sadd.s32 1, %s886
                $region157: #{temporal_block_forward.1} parent=150 // loop_footer_branch
                  %885 = sbr.rel target = $region153
                $region158: #{temporal_block_forward.1} parent=150 // loop_exit
                  _
              $region151: #{temporal_block_forward.1} parent=135 // pred_fallthru
                _
              // Predicated region
              $region159: #{temporal_block_forward.1} parent=135 // pred_check
                _
              $region160: #{temporal_block_forward.1} parent=135 // pred_check_branch
                %942 = sbr.rel target = $region162
              $region161: #{temporal_block_forward.1} parent=135 // pred_region
                _
              $region162: #{temporal_block_forward.1} parent=135 // pred_fallthru
                _
            $region136: #{temporal_block_forward.1} parent=131 // pred_fallthru
              _
            // Predicated region
            $region137: #{temporal_block_forward.1} parent=131 // pred_check
              _
            $region138: #{temporal_block_forward.1} parent=131 // pred_check_branch
              %825 = sbr.rel target = $region140
            $region139: #{temporal_block_forward.1} parent=131 // pred_region
              loop: start=0, step=1, limit=1
              $region141: #{temporal_block_forward.1} parent=139 // loop_pre_header
                _
              $region142: #{temporal_block_forward.1} parent=139 // loop_header
                %s828 = sphi 0, %s832
                %p829 = scmp.ge.s32.totalorder %s828, 1
                %s833 = sphi %s819, %s819
                %s834 = sphi %s816, %s816
              $region143: #{temporal_block_forward.1} parent=139 // loop_header_branch
                %831 = sbr.rel (%p829) target = $region147
              $region144: #{temporal_block_forward.1} parent=139 // loop_body
                %v835 = vld [vmem:[%s833] sm:$0xff]
                %836 = vst [vmem:[%s834] sm:$0xff] %v835
                %v837 = vld [vmem:[%s833 + $0x8] sm:$0xff]
                %838 = vst [vmem:[%s834 + $0x8] sm:$0xff] %v837
                %v839 = vld [vmem:[%s833 + $0x10] sm:$0xff]
                %840 = vst [vmem:[%s834 + $0x10] sm:$0xff] %v839
                %v841 = vld [vmem:[%s833 + $0x30] sm:$0xff]
                %842 = vst [vmem:[%s834 + $0x18] sm:$0xff] %v841
                %v843 = vld [vmem:[%s833 + $0x38] sm:$0xff]
                %844 = vst [vmem:[%s834 + $0x20] sm:$0xff] %v843
                %v845 = vld [vmem:[%s833 + $0x40] sm:$0xff]
                %846 = vst [vmem:[%s834 + $0x28] sm:$0xff] %v845
                %v847 = vld [vmem:[%s833 + $0x60] sm:$0xff]
                %848 = vst [vmem:[%s834 + $0x30] sm:$0xff] %v847
                %v849 = vld [vmem:[%s833 + $0x68] sm:$0xff]
                %850 = vst [vmem:[%s834 + $0x38] sm:$0xff] %v849
                %v851 = vld [vmem:[%s833 + $0x70] sm:$0xff]
                %852 = vst [vmem:[%s834 + $0x40] sm:$0xff] %v851
                %v853 = vld [vmem:[%s833 + $0x90] sm:$0xff]
                %854 = vst [vmem:[%s834 + $0x48] sm:$0xff] %v853
                %v855 = vld [vmem:[%s833 + $0x98] sm:$0xff]
                %856 = vst [vmem:[%s834 + $0x50] sm:$0xff] %v855
                %v857 = vld [vmem:[%s833 + $0xa0] sm:$0xff]
                %858 = vst [vmem:[%s834 + $0x58] sm:$0xff] %v857
                %v859 = vld [vmem:[%s833 + $0xc0] sm:$0xff]
                %860 = vst [vmem:[%s834 + $0x60] sm:$0xff] %v859
                %v861 = vld [vmem:[%s833 + $0xc8] sm:$0xff]
                %862 = vst [vmem:[%s834 + $0x68] sm:$0xff] %v861
                %v863 = vld [vmem:[%s833 + $0xd0] sm:$0xff]
                %864 = vst [vmem:[%s834 + $0x70] sm:$0xff] %v863
                %v865 = vld [vmem:[%s833 + $0xf0] sm:$0xff]
                %866 = vst [vmem:[%s834 + $0x78] sm:$0xff] %v865
                %v867 = vld [vmem:[%s833 + $0xf8] sm:$0xff]
                %868 = vst [vmem:[%s834 + $0x80] sm:$0xff] %v867
                %v869 = vld [vmem:[%s833 + $0x100] sm:$0xff]
                %870 = vst [vmem:[%s834 + $0x88] sm:$0xff] %v869
                %v871 = vld [vmem:[%s833 + $0x120] sm:$0xff]
                %872 = vst [vmem:[%s834 + $0x90] sm:$0xff] %v871
                %v873 = vld [vmem:[%s833 + $0x128] sm:$0xff]
                %874 = vst [vmem:[%s834 + $0x98] sm:$0xff] %v873
                %v875 = vld [vmem:[%s833 + $0x130] sm:$0xff]
                %876 = vst [vmem:[%s834 + $0xa0] sm:$0xff] %v875
                %v877 = vld [vmem:[%s833 + $0x150] sm:$0xff]
                %878 = vst [vmem:[%s834 + $0xa8] sm:$0xff] %v877
                %v879 = vld [vmem:[%s833 + $0x158] sm:$0xff]
                %880 = vst [vmem:[%s834 + $0xb0] sm:$0xff] %v879
                %v881 = vld [vmem:[%s833 + $0x160] sm:$0xff]
                %882 = vst [vmem:[%s834 + $0xb8] sm:$0xff] %v881
              $region145: #{temporal_block_forward.1} parent=139 // loop_footer
                %s832 = sadd.s32 1, %s828
              $region146: #{temporal_block_forward.1} parent=139 // loop_footer_branch
                %827 = sbr.rel target = $region142
              $region147: #{temporal_block_forward.1} parent=139 // loop_exit
                _
            $region140: #{temporal_block_forward.1} parent=131 // pred_fallthru
              _
          $region132: #{temporal_block_forward.1} parent=127 // pred_fallthru
            _
          %943 = vnop
        $region128: #{temporal_block_forward.1} parent=123 // pred_fallthru
          _
        // Predicated region
        $region163: #{temporal_block_forward.1} parent=123 // pred_check
          %p944 = pneg %p111
        $region164: #{temporal_block_forward.1} parent=123 // pred_check_branch
          %946 = sbr.rel (%p944) target = $region166
        $region165: #{temporal_block_forward.1} parent=123 // pred_region
          %s947 = smul.u32 3, %s65
          %p948 = scmp.lt.s32.totalorder %s947, 5
          %s949 = scalar_select %p948, %s947, 5
          %s950 = smul.addr %s949, 8
          %s951 = scalar_lea.vmem %s3, %s950
          %s952 = smul.u32 3, %s65
        $region166: #{temporal_block_forward.1} parent=123 // pred_fallthru
          _
      $region124: #{temporal_block_forward.1} parent=5 // pred_fallthru
        _
      %p953 = scmp.le.s32.totalorder 1, %s65
      %p954 = scmp.lt.s32.totalorder %s65, 3
      %p955 = pnand %p953, %p954
      %p956 = pneg %p955
      // Predicated region
      $region167: #{temporal_block_forward.1} parent=5 // pred_check
        _
      $region168: #{temporal_block_forward.1} parent=5 // pred_check_branch
        %958 = sbr.rel (%p955) target = $region170
      $region169: #{temporal_block_forward.1} parent=5 // pred_region
        %s959 = ssub.s32 %s65, 1
        %s960 = sand.u32 %s78, 1
        %s961 = sand.u32 %s78, 1
        %s962 = smul.addr %s961, 192
        %s963 = scalar_lea.vmem [#allocation6], %s962
        // Predicated region
        $region171: #{temporal_block_forward.1} parent=169 // pred_check
          %p964 = pneg %p91
        $region172: #{temporal_block_forward.1} parent=169 // pred_check_branch
          %966 = sbr.rel (%p964) target = $region174
        $region173: #{temporal_block_forward.1} parent=169 // pred_region
          _
        $region174: #{temporal_block_forward.1} parent=169 // pred_fallthru
          _
        %s967 = sand.u32 %s78, 1
        %s968 = sand.u32 %s78, 1
        %s969 = smul.addr %s968, 192
        %s970 = scalar_lea.vmem [#allocation6], %s969
        %p971 = pneg %p91
        %p972 = pneg %p88
        %s973 = smul.u32 3, %s70
        %p974 = scmp.lt.s32.totalorder %s973, 5
        %s975 = scalar_select %p974, %s973, 5
        %s976 = smul.addr %s975, 8
        %s977 = scalar_lea.vmem %s3, %s976
        %p978 = pneg %p117
        %p979 = pneg %p114
        %p980 = pneg %p138
        %p981 = pneg %p135
        %p982 = pneg %p159
        %p983 = pneg %p156
        %p984 = pneg %p180
        %p985 = pneg %p177
        %p986 = pneg %p201
        %p987 = pneg %p198
        %p988 = pneg %p222
        %p989 = pneg %p219
        %p990 = pneg %p243
        %p991 = pneg %p240
        %p992 = pneg %p264
        %p993 = pneg %p261
        %p994 = pneg %p285
        %p995 = pneg %p282
        %p996 = pneg %p306
        %p997 = pneg %p303
        %p998 = pneg %p327
        %p999 = pneg %p324
        %p1000 = pneg %p348
        %p1001 = pneg %p345
        %p1002 = pneg %p369
        %p1003 = pneg %p366
        %p1004 = pneg %p390
        %p1005 = pneg %p387
        %p1006 = pneg %p411
        %p1007 = pneg %p408
        %p1008 = pneg %p432
        %p1009 = pneg %p429
        %p1010 = pneg %p453
        %p1011 = pneg %p450
        %p1012 = pneg %p474
        %p1013 = pneg %p471
        %p1014 = pneg %p495
        %p1015 = pneg %p492
        %p1016 = pneg %p516
        %p1017 = pneg %p513
        %p1018 = pneg %p537
        %p1019 = pneg %p534
        %p1020 = pneg %p558
        %p1021 = pneg %p555
        %p1022 = pneg %p579
        %p1023 = pneg %p576
        %p1024 = pneg %p600
        %p1025 = pneg %p597
        %p1026 = pneg %p621
        %p1027 = pneg %p618
        %p1028 = pneg %p642
        %p1029 = pneg %p639
        %p1030 = pneg %p663
        %p1031 = pneg %p660
        %p1032 = pneg %p684
        %p1033 = pneg %p681
        %p1034 = pneg %p710
        %p1035 = pneg %p707
        %s1036 = sand.u32 %s697, 1
        %s1037 = sand.u32 %s697, 1
        %s1038 = smul.addr %s1037, 192
        %s1039 = scalar_lea.vmem [#allocation7], %s1038
        %s1040 = smul.u32 3, %s70
        %s1041 = smul.u32 3, %s70
        %p1042 = scmp.lt.s32.totalorder %s1041, 5
        %s1043 = scalar_select %p1042, %s1041, 5
        %s1044 = smul.addr %s1043, 8
        %s1045 = scalar_lea.vmem %s3, %s1044
        %s1046 = smul.u32 3, %s70
        %s1047 = smul.u32 3, %s70
        %v1049 = vld [vmem:[%s963] sm:$0xff]
        %v1050 = vld [vmem:[%s963 + $0x8] sm:$0xff]
        %v1051 = vld [vmem:[%s963 + $0x10] sm:$0xff]
        %v1052 = vld [vmem:[%s963 + $0x18] sm:$0xff]
        %v1053 = vld [vmem:[%s963 + $0x20] sm:$0xff]
        %v1054 = vld [vmem:[%s963 + $0x28] sm:$0xff]
        %v1055 = vld [vmem:[%s963 + $0x30] sm:$0xff]
        %v1056 = vld [vmem:[%s963 + $0x38] sm:$0xff]
        %v1057 = vld [vmem:[%s963 + $0x40] sm:$0xff]
        %v1058 = vld [vmem:[%s963 + $0x48] sm:$0xff]
        %v1059 = vld [vmem:[%s963 + $0x50] sm:$0xff]
        %v1060 = vld [vmem:[%s963 + $0x58] sm:$0xff]
        %v1061 = vld [vmem:[%s963 + $0x60] sm:$0xff]
        %v1062 = vld [vmem:[%s963 + $0x68] sm:$0xff]
        %v1063 = vld [vmem:[%s963 + $0x70] sm:$0xff]
        %v1064 = vld [vmem:[%s963 + $0x78] sm:$0xff]
        %v1065 = vld [vmem:[%s963 + $0x80] sm:$0xff]
        %v1066 = vld [vmem:[%s963 + $0x88] sm:$0xff]
        %v1067 = vld [vmem:[%s963 + $0x90] sm:$0xff]
        %v1068 = vld [vmem:[%s963 + $0x98] sm:$0xff]
        %v1069 = vld [vmem:[%s963 + $0xa0] sm:$0xff]
        %v1070 = vld [vmem:[%s963 + $0xa8] sm:$0xff]
        %v1071 = vld [vmem:[%s963 + $0xb0] sm:$0xff]
        %v1072 = vld [vmem:[%s963 + $0xb8] sm:$0xff]
        %v1073 = vld [vmem:[%s1045] sm:$0xff]
        %v1074 = vld [vmem:[%s1045 + $0x8] sm:$0xff]
        %v1075 = vld [vmem:[%s1045 + $0x10] sm:$0xff]
        %v1076 = vld [vmem:[%s7] sm:$0x7]
        %v1077 = vpack.c.bf16 %v1074, %v1073
        %v1078 = vpack.c.bf16 %v1075, %v1075
        %v1079 = vld [vmem:[%s9] sm:$0x1]
        %v1081 = vlaneseq
        %v1082 = vshrl.u32 %v1081, 7
        %v1083 = vsub.s32 0, %v1082
        %v1084 = vrot.slane %v1079, %v1083
        %vm1086 = vcmask 48128
        %v1088 = vsel %vm1086, %v1077, 0
        %v1091 = vsel %vm1086, %v1078, 0
        %vm1093 = vcmask 1042432
        %v1095 = vsel %vm1093, %v1076, 0
        %1097 = vmatprep.subr.bf16.mxu0 0
        %1098 = vmatpush1.bf16.msra.mxu0 %v1095
        %1099 = vmatprep.subr.bf16.mxu0 0
        %1100 = vmatpush1.bf16.msra.mxu0 0
        %1101 = vmatprep.subr.bf16.mxu0 0
        %1102 = vmatpush1.bf16.msra.mxu0 0
        %1103 = vmatprep.subr.bf16.mxu0 0
        %1104 = vmatpush1.bf16.msra.mxu0 0
        %1105 = vmatprep.subr.bf16.mxu0 0
        %1106 = vmatpush1.bf16.msra.mxu0 0
        %1107 = vmatprep.subr.bf16.mxu0 0
        %1108 = vmatpush1.bf16.msra.mxu0 0
        %1109 = vmatprep.subr.bf16.mxu0 0
        %1110 = vmatpush1.bf16.msra.mxu0 0
        %1111 = vmatprep.subr.bf16.mxu0 0
        %1112 = vmatpush1.bf16.msra.mxu0 0
        %1113 = vmatprep.subr.bf16.mxu0 0
        %1114 = vmatpush1.bf16.msra.mxu0 0
        %1115 = vmatprep.subr.bf16.mxu0 0
        %1116 = vmatpush1.bf16.msra.mxu0 0
        %1117 = vmatprep.subr.bf16.mxu0 0
        %1118 = vmatpush1.bf16.msra.mxu0 0
        %1119 = vmatprep.subr.bf16.mxu0 0
        %1120 = vmatpush1.bf16.msra.mxu0 0
        %1121 = vmatprep.subr.bf16.mxu0 0
        %1122 = vmatpush1.bf16.msra.mxu0 0
        %1123 = vmatprep.subr.bf16.mxu0 0
        %1124 = vmatpush1.bf16.msra.mxu0 0
        %1125 = vmatprep.subr.bf16.mxu0 0
        %1126 = vmatpush1.bf16.msra.mxu0 0
        %1127 = vmatprep.subr.bf16.mxu0 0
        %1128 = vmatpush1.bf16.msra.mxu0 0
        %1129 = vmatprep.mubr.bf16.mxu0 0
        %1130 = vmatmul.mubr.bf16.gmra.mrb[0].mxu0 %v1088
        %v1131 = vpop.f32.mrb[0].mxu0
        %v1132 = vadd.f32 %v1084, %v1131
        %v1133 = vpop.f32.mrb[0].mxu0
        %v1134 = vpop.f32.mrb[0].mxu0
        %v1135 = vadd.f32 %v1084, %v1134
        %v1136 = vpop.f32.mrb[0].mxu0
        %1137 = vmatprep.mubr.bf16.mxu0 0
        %1138 = vmatmul.mubr.bf16.gmra.mrb[0].mxu0 %v1091
        %v1139 = vpop.f32.mrb[0].mxu0
        %v1140 = vadd.f32 %v1084, %v1139
        %v1141 = vpop.f32.mrb[0].mxu0
        %v1142 = vpop.f32.mrb[0].mxu0
        %v1143 = vpop.f32.mrb[0].mxu0
        %1144 = vdwg.mxu0
        %v1145 = vld [vmem:[%s47] sm:$0x7]
        %v1146 = vld [vmem:[%s49] sm:$0x1]
        %v1148 = vlaneseq
        %v1149 = vshrl.u32 %v1148, 7
        %v1150 = vsub.s32 0, %v1149
        %v1151 = vrot.slane %v1146, %v1150
        %v1154 = vsel %vm1093, %v1145, 0
        %1156 = vmatprep.subr.bf16.mxu0 0
        %1157 = vmatpush1.bf16.msra.mxu0 %v1154
        %1158 = vmatprep.subr.bf16.mxu0 0
        %1159 = vmatpush1.bf16.msra.mxu0 0
        %1160 = vmatprep.subr.bf16.mxu0 0
        %1161 = vmatpush1.bf16.msra.mxu0 0
        %1162 = vmatprep.subr.bf16.mxu0 0
        %1163 = vmatpush1.bf16.msra.mxu0 0
        %1164 = vmatprep.subr.bf16.mxu0 0
        %1165 = vmatpush1.bf16.msra.mxu0 0
        %1166 = vmatprep.subr.bf16.mxu0 0
        %1167 = vmatpush1.bf16.msra.mxu0 0
        %1168 = vmatprep.subr.bf16.mxu0 0
        %1169 = vmatpush1.bf16.msra.mxu0 0
        %1170 = vmatprep.subr.bf16.mxu0 0
        %1171 = vmatpush1.bf16.msra.mxu0 0
        %1172 = vmatprep.subr.bf16.mxu0 0
        %1173 = vmatpush1.bf16.msra.mxu0 0
        %1174 = vmatprep.subr.bf16.mxu0 0
        %1175 = vmatpush1.bf16.msra.mxu0 0
        %1176 = vmatprep.subr.bf16.mxu0 0
        %1177 = vmatpush1.bf16.msra.mxu0 0
        %1178 = vmatprep.subr.bf16.mxu0 0
        %1179 = vmatpush1.bf16.msra.mxu0 0
        %1180 = vmatprep.subr.bf16.mxu0 0
        %1181 = vmatpush1.bf16.msra.mxu0 0
        %1182 = vmatprep.subr.bf16.mxu0 0
        %1183 = vmatpush1.bf16.msra.mxu0 0
        %1184 = vmatprep.subr.bf16.mxu0 0
        %1185 = vmatpush1.bf16.msra.mxu0 0
        %1186 = vmatprep.subr.bf16.mxu0 0
        %1187 = vmatpush1.bf16.msra.mxu0 0
        %1188 = vmatprep.mubr.bf16.mxu0 0
        %1189 = vmatmul.mubr.bf16.gmra.mrb[0].mxu0 %v1088
        %v1190 = vpop.f32.mrb[0].mxu0
        %v1191 = vadd.f32 %v1151, %v1190
        %v1192 = vpop.f32.mrb[0].mxu0
        %v1193 = vpop.f32.mrb[0].mxu0
        %v1194 = vadd.f32 %v1151, %v1193
        %v1195 = vpop.f32.mrb[0].mxu0
        %1196 = vmatprep.mubr.bf16.mxu0 0
        %1197 = vmatmul.mubr.bf16.gmra.mrb[0].mxu0 %v1091
        %v1198 = vpop.f32.mrb[0].mxu0
        %v1199 = vadd.f32 %v1151, %v1198
        %v1200 = vpop.f32.mrb[0].mxu0
        %v1201 = vpop.f32.mrb[0].mxu0
        %v1202 = vpop.f32.mrb[0].mxu0
        %1203 = vdwg.mxu0
        %v1204 = vld [vmem:[%s5] sm:$0xf]
        %v1205 = vpack.c.bf16 %v1050, %v1049
        %v1206 = vpack.c.bf16 %v1052, %v1051
        %v1207 = vpack.c.bf16 %v1054, %v1053
        %v1208 = vpack.c.bf16 %v1056, %v1055
        %v1209 = vpack.c.bf16 %v1058, %v1057
        %v1210 = vpack.c.bf16 %v1060, %v1059
        %v1211 = vpack.c.bf16 %v1062, %v1061
        %v1212 = vpack.c.bf16 %v1064, %v1063
        %v1213 = vpack.c.bf16 %v1066, %v1065
        %v1214 = vpack.c.bf16 %v1068, %v1067
        %v1215 = vpack.c.bf16 %v1070, %v1069
        %v1216 = vpack.c.bf16 %v1072, %v1071
        %vm1217 = vcmask 64512
        %v1219 = vsel %vm1217, %v1205, 0
        %v1222 = vsel %vm1217, %v1206, 0
        %v1225 = vsel %vm1217, %v1207, 0
        %v1228 = vsel %vm1217, %v1208, 0
        %v1231 = vsel %vm1217, %v1209, 0
        %v1234 = vsel %vm1217, %v1210, 0
        %v1237 = vsel %vm1217, %v1211, 0
        %v1240 = vsel %vm1217, %v1212, 0
        %v1243 = vsel %vm1217, %v1213, 0
        %v1246 = vsel %vm1217, %v1214, 0
        %v1249 = vsel %vm1217, %v1215, 0
        %v1252 = vsel %vm1217, %v1216, 0
        %vm1254 = vcmask 1043456
        %v1256 = vsel %vm1254, %v1204, 0
        %1258 = vmatprep.subr.bf16.mxu0 0
        %1259 = vmatpush1.bf16.msra.mxu0 %v1256
        %1260 = vmatprep.subr.bf16.mxu0 0
        %1261 = vmatpush1.bf16.msra.mxu0 0
        %1262 = vmatprep.subr.bf16.mxu0 0
        %1263 = vmatpush1.bf16.msra.mxu0 0
        %1264 = vmatprep.subr.bf16.mxu0 0
        %1265 = vmatpush1.bf16.msra.mxu0 0
        %1266 = vmatprep.subr.bf16.mxu0 0
        %1267 = vmatpush1.bf16.msra.mxu0 0
        %1268 = vmatprep.subr.bf16.mxu0 0
        %1269 = vmatpush1.bf16.msra.mxu0 0
        %1270 = vmatprep.subr.bf16.mxu0 0
        %1271 = vmatpush1.bf16.msra.mxu0 0
        %1272 = vmatprep.subr.bf16.mxu0 0
        %1273 = vmatpush1.bf16.msra.mxu0 0
        %1274 = vmatprep.subr.bf16.mxu0 0
        %1275 = vmatpush1.bf16.msra.mxu0 0
        %1276 = vmatprep.subr.bf16.mxu0 0
        %1277 = vmatpush1.bf16.msra.mxu0 0
        %1278 = vmatprep.subr.bf16.mxu0 0
        %1279 = vmatpush1.bf16.msra.mxu0 0
        %1280 = vmatprep.subr.bf16.mxu0 0
        %1281 = vmatpush1.bf16.msra.mxu0 0
        %1282 = vmatprep.subr.bf16.mxu0 0
        %1283 = vmatpush1.bf16.msra.mxu0 0
        %1284 = vmatprep.subr.bf16.mxu0 0
        %1285 = vmatpush1.bf16.msra.mxu0 0
        %1286 = vmatprep.subr.bf16.mxu0 0
        %1287 = vmatpush1.bf16.msra.mxu0 0
        %1288 = vmatprep.subr.bf16.mxu0 0
        %1289 = vmatpush1.bf16.msra.mxu0 0
        %1290 = vmatprep.mubr.bf16.mxu0 0
        %1291 = vmatmul.mubr.bf16.gmra.mrb[0].mxu0 %v1219
        %v1292 = vpop.f32.mrb[0].mxu0
        %v1293 = vadd.f32 0.0, %v1292
        %v1294 = vpop.f32.mrb[0].mxu0
        %v1295 = vpop.f32.mrb[0].mxu0
        %v1296 = vadd.f32 0.0, %v1295
        %v1297 = vpop.f32.mrb[0].mxu0
        %1298 = vmatprep.mubr.bf16.mxu0 0
        %1299 = vmatmul.mubr.bf16.gmra.mrb[0].mxu0 %v1222
        %v1300 = vpop.f32.mrb[0].mxu0
        %v1301 = vadd.f32 0.0, %v1300
        %v1302 = vpop.f32.mrb[0].mxu0
        %v1303 = vpop.f32.mrb[0].mxu0
        %v1304 = vadd.f32 0.0, %v1303
        %v1305 = vpop.f32.mrb[0].mxu0
        %1306 = vmatprep.mubr.bf16.mxu0 0
        %1307 = vmatmul.mubr.bf16.gmra.mrb[0].mxu0 %v1225
        %v1308 = vpop.f32.mrb[0].mxu0
        %v1309 = vadd.f32 0.0, %v1308
        %v1310 = vpop.f32.mrb[0].mxu0
        %v1311 = vpop.f32.mrb[0].mxu0
        %v1312 = vadd.f32 0.0, %v1311
        %v1313 = vpop.f32.mrb[0].mxu0
        %1314 = vmatprep.mubr.bf16.mxu0 0
        %1315 = vmatmul.mubr.bf16.gmra.mrb[0].mxu0 %v1228
        %v1316 = vpop.f32.mrb[0].mxu0
        %v1317 = vadd.f32 0.0, %v1316
        %v1318 = vpop.f32.mrb[0].mxu0
        %v1319 = vpop.f32.mrb[0].mxu0
        %v1320 = vadd.f32 0.0, %v1319
        %v1321 = vpop.f32.mrb[0].mxu0
        %1322 = vmatprep.mubr.bf16.mxu0 0
        %1323 = vmatmul.mubr.bf16.gmra.mrb[0].mxu0 %v1231
        %v1324 = vpop.f32.mrb[0].mxu0
        %v1325 = vadd.f32 0.0, %v1324
        %v1326 = vpop.f32.mrb[0].mxu0
        %v1327 = vpop.f32.mrb[0].mxu0
        %v1328 = vadd.f32 0.0, %v1327
        %v1329 = vpop.f32.mrb[0].mxu0
        %1330 = vmatprep.mubr.bf16.mxu0 0
        %1331 = vmatmul.mubr.bf16.gmra.mrb[0].mxu0 %v1234
        %v1332 = vpop.f32.mrb[0].mxu0
        %v1333 = vadd.f32 0.0, %v1332
        %v1334 = vpop.f32.mrb[0].mxu0
        %v1335 = vpop.f32.mrb[0].mxu0
        %v1336 = vadd.f32 0.0, %v1335
        %v1337 = vpop.f32.mrb[0].mxu0
        %1338 = vmatprep.mubr.bf16.mxu0 0
        %1339 = vmatmul.mubr.bf16.gmra.mrb[0].mxu0 %v1237
        %v1340 = vpop.f32.mrb[0].mxu0
        %v1341 = vadd.f32 0.0, %v1340
        %v1342 = vpop.f32.mrb[0].mxu0
        %v1343 = vpop.f32.mrb[0].mxu0
        %v1344 = vadd.f32 0.0, %v1343
        %v1345 = vpop.f32.mrb[0].mxu0
        %1346 = vmatprep.mubr.bf16.mxu0 0
        %1347 = vmatmul.mubr.bf16.gmra.mrb[0].mxu0 %v1240
        %v1348 = vpop.f32.mrb[0].mxu0
        %v1349 = vadd.f32 0.0, %v1348
        %v1350 = vpop.f32.mrb[0].mxu0
        %v1351 = vpop.f32.mrb[0].mxu0
        %v1352 = vadd.f32 0.0, %v1351
        %v1353 = vpop.f32.mrb[0].mxu0
        %1354 = vmatprep.mubr.bf16.mxu0 0
        %1355 = vmatmul.mubr.bf16.gmra.mrb[0].mxu0 %v1243
        %v1356 = vpop.f32.mrb[0].mxu0
        %v1357 = vadd.f32 0.0, %v1356
        %v1358 = vpop.f32.mrb[0].mxu0
        %v1359 = vpop.f32.mrb[0].mxu0
        %v1360 = vadd.f32 0.0, %v1359
        %v1361 = vpop.f32.mrb[0].mxu0
        %1362 = vmatprep.mubr.bf16.mxu0 0
        %1363 = vmatmul.mubr.bf16.gmra.mrb[0].mxu0 %v1246
        %v1364 = vpop.f32.mrb[0].mxu0
        %v1365 = vadd.f32 0.0, %v1364
        %v1366 = vpop.f32.mrb[0].mxu0
        %v1367 = vpop.f32.mrb[0].mxu0
        %v1368 = vadd.f32 0.0, %v1367
        %v1369 = vpop.f32.mrb[0].mxu0
        %1370 = vmatprep.mubr.bf16.mxu0 0
        %1371 = vmatmul.mubr.bf16.gmra.mrb[0].mxu0 %v1249
        %v1372 = vpop.f32.mrb[0].mxu0
        %v1373 = vadd.f32 0.0, %v1372
        %v1374 = vpop.f32.mrb[0].mxu0
        %v1375 = vpop.f32.mrb[0].mxu0
        %v1376 = vadd.f32 0.0, %v1375
        %v1377 = vpop.f32.mrb[0].mxu0
        %1378 = vmatprep.mubr.bf16.mxu0 0
        %1379 = vmatmul.mubr.bf16.gmra.mrb[0].mxu0 %v1252
        %v1380 = vpop.f32.mrb[0].mxu0
        %v1381 = vadd.f32 0.0, %v1380
        %v1382 = vpop.f32.mrb[0].mxu0
        %v1383 = vpop.f32.mrb[0].mxu0
        %v1384 = vadd.f32 0.0, %v1383
        %v1385 = vpop.f32.mrb[0].mxu0
        %1386 = vdwg.mxu0
        %v1387 = vadd.f32 %v1293, %v1132
        %v1388 = vadd.f32 %v1296, %v1135
        %v1389 = vadd.f32 %v1301, %v1140
        %v1390 = vadd.f32 %v1304, %v1132
        %v1391 = vadd.f32 %v1309, %v1135
        %v1392 = vadd.f32 %v1312, %v1140
        %v1393 = vadd.f32 %v1317, %v1132
        %v1394 = vadd.f32 %v1320, %v1135
        %v1395 = vadd.f32 %v1325, %v1140
        %v1396 = vadd.f32 %v1328, %v1132
        %v1397 = vadd.f32 %v1333, %v1135
        %v1398 = vadd.f32 %v1336, %v1140
        %v1399 = vadd.f32 %v1341, %v1132
        %v1400 = vadd.f32 %v1344, %v1135
        %v1401 = vadd.f32 %v1349, %v1140
        %v1402 = vadd.f32 %v1352, %v1132
        %v1403 = vadd.f32 %v1357, %v1135
        %v1404 = vadd.f32 %v1360, %v1140
        %v1405 = vadd.f32 %v1365, %v1132
        %v1406 = vadd.f32 %v1368, %v1135
        %v1407 = vadd.f32 %v1373, %v1140
        %v1408 = vadd.f32 %v1376, %v1132
        %v1409 = vadd.f32 %v1381, %v1135
        %v1410 = vadd.f32 %v1384, %v1140
        %vm1411 = vcmp.gt.f32.partialorder %v1387, 0.0
        %vm1412 = vcmp.gt.f32.partialorder %v1388, 0.0
        %vm1413 = vcmp.gt.f32.partialorder %v1389, 0.0
        %vm1414 = vcmp.gt.f32.partialorder %v1390, 0.0
        %vm1415 = vcmp.gt.f32.partialorder %v1391, 0.0
        %vm1416 = vcmp.gt.f32.partialorder %v1392, 0.0
        %vm1417 = vcmp.gt.f32.partialorder %v1393, 0.0
        %vm1418 = vcmp.gt.f32.partialorder %v1394, 0.0
        %vm1419 = vcmp.gt.f32.partialorder %v1395, 0.0
        %vm1420 = vcmp.gt.f32.partialorder %v1396, 0.0
        %vm1421 = vcmp.gt.f32.partialorder %v1397, 0.0
        %vm1422 = vcmp.gt.f32.partialorder %v1398, 0.0
        %vm1423 = vcmp.gt.f32.partialorder %v1399, 0.0
        %vm1424 = vcmp.gt.f32.partialorder %v1400, 0.0
        %vm1425 = vcmp.gt.f32.partialorder %v1401, 0.0
        %vm1426 = vcmp.gt.f32.partialorder %v1402, 0.0
        %vm1427 = vcmp.gt.f32.partialorder %v1403, 0.0
        %vm1428 = vcmp.gt.f32.partialorder %v1404, 0.0
        %vm1429 = vcmp.gt.f32.partialorder %v1405, 0.0
        %vm1430 = vcmp.gt.f32.partialorder %v1406, 0.0
        %vm1431 = vcmp.gt.f32.partialorder %v1407, 0.0
        %vm1432 = vcmp.gt.f32.partialorder %v1408, 0.0
        %vm1433 = vcmp.gt.f32.partialorder %v1409, 0.0
        %vm1434 = vcmp.gt.f32.partialorder %v1410, 0.0
        %v1435 = vmin.f32 %v1387, 0.0
        %v1436 = vmin.f32 %v1388, 0.0
        %v1437 = vmin.f32 %v1389, 0.0
        %v1438 = vmin.f32 %v1390, 0.0
        %v1439 = vmin.f32 %v1391, 0.0
        %v1440 = vmin.f32 %v1392, 0.0
        %v1441 = vmin.f32 %v1393, 0.0
        %v1442 = vmin.f32 %v1394, 0.0
        %v1443 = vmin.f32 %v1395, 0.0
        %v1444 = vmin.f32 %v1396, 0.0
        %v1445 = vmin.f32 %v1397, 0.0
        %v1446 = vmin.f32 %v1398, 0.0
        %v1447 = vmin.f32 %v1399, 0.0
        %v1448 = vmin.f32 %v1400, 0.0
        %v1449 = vmin.f32 %v1401, 0.0
        %v1450 = vmin.f32 %v1402, 0.0
        %v1451 = vmin.f32 %v1403, 0.0
        %v1452 = vmin.f32 %v1404, 0.0
        %v1453 = vmin.f32 %v1405, 0.0
        %v1454 = vmin.f32 %v1406, 0.0
        %v1455 = vmin.f32 %v1407, 0.0
        %v1456 = vmin.f32 %v1408, 0.0
        %v1457 = vmin.f32 %v1409, 0.0
        %v1458 = vmin.f32 %v1410, 0.0
        %v1459 = vmul.f32 %v1435, 1.442695
        %v1460 = vpow.pop %v1459
        %v1461 = vmul.f32 %v1436, 1.442695
        %v1462 = vpow.pop %v1461
        %v1463 = vmul.f32 %v1437, 1.442695
        %v1464 = vpow.pop %v1463
        %v1465 = vmul.f32 %v1438, 1.442695
        %v1466 = vpow.pop %v1465
        %v1467 = vmul.f32 %v1439, 1.442695
        %v1468 = vpow.pop %v1467
        %v1469 = vmul.f32 %v1440, 1.442695
        %v1470 = vpow.pop %v1469
        %v1471 = vmul.f32 %v1441, 1.442695
        %v1472 = vpow.pop %v1471
        %v1473 = vmul.f32 %v1442, 1.442695
        %v1474 = vpow.pop %v1473
        %v1475 = vmul.f32 %v1443, 1.442695
        %v1476 = vpow.pop %v1475
        %v1477 = vmul.f32 %v1444, 1.442695
        %v1478 = vpow.pop %v1477
        %v1479 = vmul.f32 %v1445, 1.442695
        %v1480 = vpow.pop %v1479
        %v1481 = vmul.f32 %v1446, 1.442695
        %v1482 = vpow.pop %v1481
        %v1483 = vmul.f32 %v1447, 1.442695
        %v1484 = vpow.pop %v1483
        %v1485 = vmul.f32 %v1448, 1.442695
        %v1486 = vpow.pop %v1485
        %v1487 = vmul.f32 %v1449, 1.442695
        %v1488 = vpow.pop %v1487
        %v1489 = vmul.f32 %v1450, 1.442695
        %v1490 = vpow.pop %v1489
        %v1491 = vmul.f32 %v1451, 1.442695
        %v1492 = vpow.pop %v1491
        %v1493 = vmul.f32 %v1452, 1.442695
        %v1494 = vpow.pop %v1493
        %v1495 = vmul.f32 %v1453, 1.442695
        %v1496 = vpow.pop %v1495
        %v1497 = vmul.f32 %v1454, 1.442695
        %v1498 = vpow.pop %v1497
        %v1499 = vmul.f32 %v1455, 1.442695
        %v1500 = vpow.pop %v1499
        %v1501 = vmul.f32 %v1456, 1.442695
        %v1502 = vpow.pop %v1501
        %v1503 = vmul.f32 %v1457, 1.442695
        %v1504 = vpow.pop %v1503
        %v1505 = vmul.f32 %v1458, 1.442695
        %v1506 = vpow.pop %v1505
        %v1507 = vsub.f32 %v1460, 1.0
        %v1508 = vsub.f32 %v1462, 1.0
        %v1509 = vsub.f32 %v1464, 1.0
        %v1510 = vsub.f32 %v1466, 1.0
        %v1511 = vsub.f32 %v1468, 1.0
        %v1512 = vsub.f32 %v1470, 1.0
        %v1513 = vsub.f32 %v1472, 1.0
        %v1514 = vsub.f32 %v1474, 1.0
        %v1515 = vsub.f32 %v1476, 1.0
        %v1516 = vsub.f32 %v1478, 1.0
        %v1517 = vsub.f32 %v1480, 1.0
        %v1518 = vsub.f32 %v1482, 1.0
        %v1519 = vsub.f32 %v1484, 1.0
        %v1520 = vsub.f32 %v1486, 1.0
        %v1521 = vsub.f32 %v1488, 1.0
        %v1522 = vsub.f32 %v1490, 1.0
        %v1523 = vsub.f32 %v1492, 1.0
        %v1524 = vsub.f32 %v1494, 1.0
        %v1525 = vsub.f32 %v1496, 1.0
        %v1526 = vsub.f32 %v1498, 1.0
        %v1527 = vsub.f32 %v1500, 1.0
        %v1528 = vsub.f32 %v1502, 1.0
        %v1529 = vsub.f32 %v1504, 1.0
        %v1530 = vsub.f32 %v1506, 1.0
        %v1531 = vsel %vm1411, %v1387, %v1507
        %v1532 = vsel %vm1412, %v1388, %v1508
        %v1533 = vsel %vm1413, %v1389, %v1509
        %v1534 = vsel %vm1414, %v1390, %v1510
        %v1535 = vsel %vm1415, %v1391, %v1511
        %v1536 = vsel %vm1416, %v1392, %v1512
        %v1537 = vsel %vm1417, %v1393, %v1513
        %v1538 = vsel %vm1418, %v1394, %v1514
        %v1539 = vsel %vm1419, %v1395, %v1515
        %v1540 = vsel %vm1420, %v1396, %v1516
        %v1541 = vsel %vm1421, %v1397, %v1517
        %v1542 = vsel %vm1422, %v1398, %v1518
        %v1543 = vsel %vm1423, %v1399, %v1519
        %v1544 = vsel %vm1424, %v1400, %v1520
        %v1545 = vsel %vm1425, %v1401, %v1521
        %v1546 = vsel %vm1426, %v1402, %v1522
        %v1547 = vsel %vm1427, %v1403, %v1523
        %v1548 = vsel %vm1428, %v1404, %v1524
        %v1549 = vsel %vm1429, %v1405, %v1525
        %v1550 = vsel %vm1430, %v1406, %v1526
        %v1551 = vsel %vm1431, %v1407, %v1527
        %v1552 = vsel %vm1432, %v1408, %v1528
        %v1553 = vsel %vm1433, %v1409, %v1529
        %v1554 = vsel %vm1434, %v1410, %v1530
        %v1555 = vld [vmem:[%s11] sm:$0xf]
        %v1556 = vld [vmem:[%s11 + $0x4] sm:$0xf]
        %v1557 = vld [vmem:[%s11 + $0x8] sm:$0xf]
        %v1558 = vld [vmem:[%s11 + $0xc] sm:$0xf]
        %v1559 = vld [vmem:[%s11 + $0x10] sm:$0xf]
        %v1560 = vld [vmem:[%s11 + $0x14] sm:$0xf]
        %v1561 = vld [vmem:[%s11 + $0x18] sm:$0xf]
        %v1562 = vld [vmem:[%s11 + $0x1c] sm:$0xf]
        %v1563 = vld [vmem:[%s11 + $0x20] sm:$0xf]
        %v1564 = vld [vmem:[%s11 + $0x24] sm:$0xf]
        %v1565 = vld [vmem:[%s11 + $0x28] sm:$0xf]
        %v1566 = vld [vmem:[%s11 + $0x2c] sm:$0xf]
        %v1567 = vld [vmem:[%s11 + $0x30] sm:$0xf]
        %v1568 = vld [vmem:[%s11 + $0x34] sm:$0xf]
        %v1569 = vld [vmem:[%s11 + $0x38] sm:$0xf]
        %v1570 = vld [vmem:[%s11 + $0x3c] sm:$0xf]
        %v1571 = vpack.c.bf16 %v1532, %v1531
        %v1572 = vpack.c.bf16 %v1534, %v1533
        %v1573 = vpack.c.bf16 %v1536, %v1535
        %v1574 = vpack.c.bf16 %v1538, %v1537
        %v1575 = vpack.c.bf16 %v1540, %v1539
        %v1576 = vpack.c.bf16 %v1542, %v1541
        %v1577 = vpack.c.bf16 %v1544, %v1543
        %v1578 = vpack.c.bf16 %v1546, %v1545
        %v1579 = vpack.c.bf16 %v1548, %v1547
        %v1580 = vpack.c.bf16 %v1550, %v1549
        %v1581 = vpack.c.bf16 %v1552, %v1551
        %v1582 = vpack.c.bf16 %v1554, %v1553
        %v1583 = vld [vmem:[%s13] sm:$0x1]
        %v1585 = vlaneseq
        %v1586 = vshrl.u32 %v1585, 7
        %v1587 = vsub.s32 0, %v1586
        %v1588 = vrot.slane %v1583, %v1587
        %v1606 = vunpack.c.l.b16 %v1555
        %v1607 = vunpack.c.l.b16 %v1556
        %v1608 = vunpack.c.l.b16 %v1557
        %v1609 = vunpack.c.l.b16 %v1558
        %v1610 = vunpack.c.l.b16 %v1559
        %v1611 = vunpack.c.l.b16 %v1560
        %v1612 = vunpack.c.l.b16 %v1561
        %v1613 = vunpack.c.l.b16 %v1562
        %v1614 = vunpack.c.l.b16 %v1563
        %v1615 = vunpack.c.l.b16 %v1564
        %v1616 = vunpack.c.l.b16 %v1565
        %v1617 = vunpack.c.l.b16 %v1566
        %v1618 = vunpack.c.l.b16 %v1567
        %v1619 = vunpack.c.l.b16 %v1568
        %v1620 = vunpack.c.l.b16 %v1569
        %v1621 = vunpack.c.l.b16 %v1570
        %v1622 = vpack.c.b16 %v1607, %v1606
        %v1623 = vpack.c.b16 %v1609, %v1608
        %v1624 = vpack.c.b16 %v1611, %v1610
        %v1625 = vpack.c.b16 %v1613, %v1612
        %v1626 = vpack.c.b16 %v1615, %v1614
        %v1627 = vpack.c.b16 %v1617, %v1616
        %v1628 = vpack.c.b16 %v1619, %v1618
        %v1629 = vpack.c.b16 %v1621, %v1620
        %1638 = vmatprep.subr.bf16.mxu0 0
        %1639 = vmatpush1.bf16.msra.mxu0 %v1622
        %1640 = vmatprep.subr.bf16.mxu0 0
        %1641 = vmatpush1.bf16.msra.mxu0 %v1623
        %1642 = vmatprep.subr.bf16.mxu0 0
        %1643 = vmatpush1.bf16.msra.mxu0 %v1624
        %1644 = vmatprep.subr.bf16.mxu0 0
        %1645 = vmatpush1.bf16.msra.mxu0 %v1625
        %1646 = vmatprep.subr.bf16.mxu0 0
        %1647 = vmatpush1.bf16.msra.mxu0 %v1626
        %1648 = vmatprep.subr.bf16.mxu0 0
        %1649 = vmatpush1.bf16.msra.mxu0 %v1627
        %1650 = vmatprep.subr.bf16.mxu0 0
        %1651 = vmatpush1.bf16.msra.mxu0 %v1628
        %1652 = vmatprep.subr.bf16.mxu0 0
        %1653 = vmatpush1.bf16.msra.mxu0 %v1629
        %1654 = vmatprep.subr.bf16.mxu0 0
        %1655 = vmatpush1.bf16.msra.mxu0 0
        %1656 = vmatprep.subr.bf16.mxu0 0
        %1657 = vmatpush1.bf16.msra.mxu0 0
        %1658 = vmatprep.subr.bf16.mxu0 0
        %1659 = vmatpush1.bf16.msra.mxu0 0
        %1660 = vmatprep.subr.bf16.mxu0 0
        %1661 = vmatpush1.bf16.msra.mxu0 0
        %1662 = vmatprep.subr.bf16.mxu0 0
        %1663 = vmatpush1.bf16.msra.mxu0 0
        %1664 = vmatprep.subr.bf16.mxu0 0
        %1665 = vmatpush1.bf16.msra.mxu0 0
        %1666 = vmatprep.subr.bf16.mxu0 0
        %1667 = vmatpush1.bf16.msra.mxu0 0
        %1668 = vmatprep.subr.bf16.mxu0 0
        %1669 = vmatpush1.bf16.msra.mxu0 0
        %1670 = vmatprep.mubr.bf16.mxu0 0
        %1671 = vmatmul.mubr.bf16.gmra.mrb[0].mxu0 %v1571
        %v1672 = vpop.f32.mrb[0].mxu0
        %v1673 = vadd.f32 %v1588, %v1672
        %v1674 = vpop.f32.mrb[0].mxu0
        %v1675 = vpop.f32.mrb[0].mxu0
        %v1676 = vadd.f32 %v1588, %v1675
        %v1677 = vpop.f32.mrb[0].mxu0
        %1678 = vmatprep.mubr.bf16.mxu0 0
        %1679 = vmatmul.mubr.bf16.gmra.mrb[0].mxu0 %v1572
        %v1680 = vpop.f32.mrb[0].mxu0
        %v1681 = vadd.f32 %v1588, %v1680
        %v1682 = vpop.f32.mrb[0].mxu0
        %v1683 = vpop.f32.mrb[0].mxu0
        %v1684 = vadd.f32 %v1588, %v1683
        %v1685 = vpop.f32.mrb[0].mxu0
        %1686 = vmatprep.mubr.bf16.mxu0 0
        %1687 = vmatmul.mubr.bf16.gmra.mrb[0].mxu0 %v1573
        %v1688 = vpop.f32.mrb[0].mxu0
        %v1689 = vadd.f32 %v1588, %v1688
        %v1690 = vpop.f32.mrb[0].mxu0
        %v1691 = vpop.f32.mrb[0].mxu0
        %v1692 = vadd.f32 %v1588, %v1691
        %v1693 = vpop.f32.mrb[0].mxu0
        %1694 = vmatprep.mubr.bf16.mxu0 0
        %1695 = vmatmul.mubr.bf16.gmra.mrb[0].mxu0 %v1574
        %v1696 = vpop.f32.mrb[0].mxu0
        %v1697 = vadd.f32 %v1588, %v1696
        %v1698 = vpop.f32.mrb[0].mxu0
        %v1699 = vpop.f32.mrb[0].mxu0
        %v1700 = vadd.f32 %v1588, %v1699
        %v1701 = vpop.f32.mrb[0].mxu0
        %1702 = vmatprep.mubr.bf16.mxu0 0
        %1703 = vmatmul.mubr.bf16.gmra.mrb[0].mxu0 %v1575
        %v1704 = vpop.f32.mrb[0].mxu0
        %v1705 = vadd.f32 %v1588, %v1704
        %v1706 = vpop.f32.mrb[0].mxu0
        %v1707 = vpop.f32.mrb[0].mxu0
        %v1708 = vadd.f32 %v1588, %v1707
        %v1709 = vpop.f32.mrb[0].mxu0
        %1710 = vmatprep.mubr.bf16.mxu0 0
        %1711 = vmatmul.mubr.bf16.gmra.mrb[0].mxu0 %v1576
        %v1712 = vpop.f32.mrb[0].mxu0
        %v1713 = vadd.f32 %v1588, %v1712
        %v1714 = vpop.f32.mrb[0].mxu0
        %v1715 = vpop.f32.mrb[0].mxu0
        %v1716 = vadd.f32 %v1588, %v1715
        %v1717 = vpop.f32.mrb[0].mxu0
        %1718 = vmatprep.mubr.bf16.mxu0 0
        %1719 = vmatmul.mubr.bf16.gmra.mrb[0].mxu0 %v1577
        %v1720 = vpop.f32.mrb[0].mxu0
        %v1721 = vadd.f32 %v1588, %v1720
        %v1722 = vpop.f32.mrb[0].mxu0
        %v1723 = vpop.f32.mrb[0].mxu0
        %v1724 = vadd.f32 %v1588, %v1723
        %v1725 = vpop.f32.mrb[0].mxu0
        %1726 = vmatprep.mubr.bf16.mxu0 0
        %1727 = vmatmul.mubr.bf16.gmra.mrb[0].mxu0 %v1578
        %v1728 = vpop.f32.mrb[0].mxu0
        %v1729 = vadd.f32 %v1588, %v1728
        %v1730 = vpop.f32.mrb[0].mxu0
        %v1731 = vpop.f32.mrb[0].mxu0
        %v1732 = vadd.f32 %v1588, %v1731
        %v1733 = vpop.f32.mrb[0].mxu0
        %1734 = vmatprep.mubr.bf16.mxu0 0
        %1735 = vmatmul.mubr.bf16.gmra.mrb[0].mxu0 %v1579
        %v1736 = vpop.f32.mrb[0].mxu0
        %v1737 = vadd.f32 %v1588, %v1736
        %v1738 = vpop.f32.mrb[0].mxu0
        %v1739 = vpop.f32.mrb[0].mxu0
        %v1740 = vadd.f32 %v1588, %v1739
        %v1741 = vpop.f32.mrb[0].mxu0
        %1742 = vmatprep.mubr.bf16.mxu0 0
        %1743 = vmatmul.mubr.bf16.gmra.mrb[0].mxu0 %v1580
        %v1744 = vpop.f32.mrb[0].mxu0
        %v1745 = vadd.f32 %v1588, %v1744
        %v1746 = vpop.f32.mrb[0].mxu0
        %v1747 = vpop.f32.mrb[0].mxu0
        %v1748 = vadd.f32 %v1588, %v1747
        %v1749 = vpop.f32.mrb[0].mxu0
        %1750 = vmatprep.mubr.bf16.mxu0 0
        %1751 = vmatmul.mubr.bf16.gmra.mrb[0].mxu0 %v1581
        %v1752 = vpop.f32.mrb[0].mxu0
        %v1753 = vadd.f32 %v1588, %v1752
        %v1754 = vpop.f32.mrb[0].mxu0
        %v1755 = vpop.f32.mrb[0].mxu0
        %v1756 = vadd.f32 %v1588, %v1755
        %v1757 = vpop.f32.mrb[0].mxu0
        %1758 = vmatprep.mubr.bf16.mxu0 0
        %1759 = vmatmul.mubr.bf16.gmra.mrb[0].mxu0 %v1582
        %v1760 = vpop.f32.mrb[0].mxu0
        %v1761 = vadd.f32 %v1588, %v1760
        %v1762 = vpop.f32.mrb[0].mxu0
        %v1763 = vpop.f32.mrb[0].mxu0
        %v1764 = vadd.f32 %v1588, %v1763
        %v1765 = vpop.f32.mrb[0].mxu0
        %1766 = vdwg.mxu0
        %v1767 = vsel %vm1217, %v1673, -inf
        %1768 = vmax.xlane.f32.xlu0 %v1767
        %v1769 = vpop.xlane.xlu0 %1768
        %v1770 = vsel %vm1217, %v1676, -inf
        %1771 = vmax.xlane.f32.xlu0 %v1770
        %v1772 = vpop.xlane.xlu0 %1771
        %v1773 = vsel %vm1217, %v1681, -inf
        %1774 = vmax.xlane.f32.xlu0 %v1773
        %v1775 = vpop.xlane.xlu0 %1774
        %v1776 = vsel %vm1217, %v1684, -inf
        %1777 = vmax.xlane.f32.xlu0 %v1776
        %v1778 = vpop.xlane.xlu0 %1777
        %v1779 = vsel %vm1217, %v1689, -inf
        %1780 = vmax.xlane.f32.xlu0 %v1779
        %v1781 = vpop.xlane.xlu0 %1780
        %v1782 = vsel %vm1217, %v1692, -inf
        %1783 = vmax.xlane.f32.xlu0 %v1782
        %v1784 = vpop.xlane.xlu0 %1783
        %v1785 = vsel %vm1217, %v1697, -inf
        %1786 = vmax.xlane.f32.xlu0 %v1785
        %v1787 = vpop.xlane.xlu0 %1786
        %v1788 = vsel %vm1217, %v1700, -inf
        %1789 = vmax.xlane.f32.xlu0 %v1788
        %v1790 = vpop.xlane.xlu0 %1789
        %v1791 = vsel %vm1217, %v1705, -inf
        %1792 = vmax.xlane.f32.xlu0 %v1791
        %v1793 = vpop.xlane.xlu0 %1792
        %v1794 = vsel %vm1217, %v1708, -inf
        %1795 = vmax.xlane.f32.xlu0 %v1794
        %v1796 = vpop.xlane.xlu0 %1795
        %v1797 = vsel %vm1217, %v1713, -inf
        %1798 = vmax.xlane.f32.xlu0 %v1797
        %v1799 = vpop.xlane.xlu0 %1798
        %v1800 = vsel %vm1217, %v1716, -inf
        %1801 = vmax.xlane.f32.xlu0 %v1800
        %v1802 = vpop.xlane.xlu0 %1801
        %v1803 = vsel %vm1217, %v1721, -inf
        %1804 = vmax.xlane.f32.xlu0 %v1803
        %v1805 = vpop.xlane.xlu0 %1804
        %v1806 = vsel %vm1217, %v1724, -inf
        %1807 = vmax.xlane.f32.xlu0 %v1806
        %v1808 = vpop.xlane.xlu0 %1807
        %v1809 = vsel %vm1217, %v1729, -inf
        %1810 = vmax.xlane.f32.xlu0 %v1809
        %v1811 = vpop.xlane.xlu0 %1810
        %v1812 = vsel %vm1217, %v1732, -inf
        %1813 = vmax.xlane.f32.xlu0 %v1812
        %v1814 = vpop.xlane.xlu0 %1813
        %v1815 = vsel %vm1217, %v1737, -inf
        %1816 = vmax.xlane.f32.xlu0 %v1815
        %v1817 = vpop.xlane.xlu0 %1816
        %v1818 = vsel %vm1217, %v1740, -inf
        %1819 = vmax.xlane.f32.xlu0 %v1818
        %v1820 = vpop.xlane.xlu0 %1819
        %v1821 = vsel %vm1217, %v1745, -inf
        %1822 = vmax.xlane.f32.xlu0 %v1821
        %v1823 = vpop.xlane.xlu0 %1822
        %v1824 = vsel %vm1217, %v1748, -inf
        %1825 = vmax.xlane.f32.xlu0 %v1824
        %v1826 = vpop.xlane.xlu0 %1825
        %v1827 = vsel %vm1217, %v1753, -inf
        %1828 = vmax.xlane.f32.xlu0 %v1827
        %v1829 = vpop.xlane.xlu0 %1828
        %v1830 = vsel %vm1217, %v1756, -inf
        %1831 = vmax.xlane.f32.xlu0 %v1830
        %v1832 = vpop.xlane.xlu0 %1831
        %v1833 = vsel %vm1217, %v1761, -inf
        %1834 = vmax.xlane.f32.xlu0 %v1833
        %v1835 = vpop.xlane.xlu0 %1834
        %v1836 = vsel %vm1217, %v1764, -inf
        %1837 = vmax.xlane.f32.xlu0 %v1836
        %v1838 = vpop.xlane.xlu0 %1837
        %v1839 = vsub.f32 %v1673, %v1769
        %v1840 = vsub.f32 %v1676, %v1772
        %v1841 = vsub.f32 %v1681, %v1775
        %v1842 = vsub.f32 %v1684, %v1778
        %v1843 = vsub.f32 %v1689, %v1781
        %v1844 = vsub.f32 %v1692, %v1784
        %v1845 = vsub.f32 %v1697, %v1787
        %v1846 = vsub.f32 %v1700, %v1790
        %v1847 = vsub.f32 %v1705, %v1793
        %v1848 = vsub.f32 %v1708, %v1796
        %v1849 = vsub.f32 %v1713, %v1799
        %v1850 = vsub.f32 %v1716, %v1802
        %v1851 = vsub.f32 %v1721, %v1805
        %v1852 = vsub.f32 %v1724, %v1808
        %v1853 = vsub.f32 %v1729, %v1811
        %v1854 = vsub.f32 %v1732, %v1814
        %v1855 = vsub.f32 %v1737, %v1817
        %v1856 = vsub.f32 %v1740, %v1820
        %v1857 = vsub.f32 %v1745, %v1823
        %v1858 = vsub.f32 %v1748, %v1826
        %v1859 = vsub.f32 %v1753, %v1829
        %v1860 = vsub.f32 %v1756, %v1832
        %v1861 = vsub.f32 %v1761, %v1835
        %v1862 = vsub.f32 %v1764, %v1838
        %v1863 = vmul.f32 %v1839, 1.442695
        %v1864 = vpow.pop %v1863
        %v1865 = vmul.f32 %v1840, 1.442695
        %v1866 = vpow.pop %v1865
        %v1867 = vmul.f32 %v1841, 1.442695
        %v1868 = vpow.pop %v1867
        %v1869 = vmul.f32 %v1842, 1.442695
        %v1870 = vpow.pop %v1869
        %v1871 = vmul.f32 %v1843, 1.442695
        %v1872 = vpow.pop %v1871
        %v1873 = vmul.f32 %v1844, 1.442695
        %v1874 = vpow.pop %v1873
        %v1875 = vmul.f32 %v1845, 1.442695
        %v1876 = vpow.pop %v1875
        %v1877 = vmul.f32 %v1846, 1.442695
        %v1878 = vpow.pop %v1877
        %v1879 = vmul.f32 %v1847, 1.442695
        %v1880 = vpow.pop %v1879
        %v1881 = vmul.f32 %v1848, 1.442695
        %v1882 = vpow.pop %v1881
        %v1883 = vmul.f32 %v1849, 1.442695
        %v1884 = vpow.pop %v1883
        %v1885 = vmul.f32 %v1850, 1.442695
        %v1886 = vpow.pop %v1885
        %v1887 = vmul.f32 %v1851, 1.442695
        %v1888 = vpow.pop %v1887
        %v1889 = vmul.f32 %v1852, 1.442695
        %v1890 = vpow.pop %v1889
        %v1891 = vmul.f32 %v1853, 1.442695
        %v1892 = vpow.pop %v1891
        %v1893 = vmul.f32 %v1854, 1.442695
        %v1894 = vpow.pop %v1893
        %v1895 = vmul.f32 %v1855, 1.442695
        %v1896 = vpow.pop %v1895
        %v1897 = vmul.f32 %v1856, 1.442695
        %v1898 = vpow.pop %v1897
        %v1899 = vmul.f32 %v1857, 1.442695
        %v1900 = vpow.pop %v1899
        %v1901 = vmul.f32 %v1858, 1.442695
        %v1902 = vpow.pop %v1901
        %v1903 = vmul.f32 %v1859, 1.442695
        %v1904 = vpow.pop %v1903
        %v1905 = vmul.f32 %v1860, 1.442695
        %v1906 = vpow.pop %v1905
        %v1907 = vmul.f32 %v1861, 1.442695
        %v1908 = vpow.pop %v1907
        %v1909 = vmul.f32 %v1862, 1.442695
        %v1910 = vpow.pop %v1909
        %v1911 = vsel %vm1217, %v1864, 0.0
        %1912 = vadd.xlane.f32.xlu0 %v1911
        %v1913 = vpop.xlane.xlu0 %1912
        %v1914 = vsel %vm1217, %v1866, 0.0
        %1915 = vadd.xlane.f32.xlu0 %v1914
        %v1916 = vpop.xlane.xlu0 %1915
        %v1917 = vsel %vm1217, %v1868, 0.0
        %1918 = vadd.xlane.f32.xlu0 %v1917
        %v1919 = vpop.xlane.xlu0 %1918
        %v1920 = vsel %vm1217, %v1870, 0.0
        %1921 = vadd.xlane.f32.xlu0 %v1920
        %v1922 = vpop.xlane.xlu0 %1921
        %v1923 = vsel %vm1217, %v1872, 0.0
        %1924 = vadd.xlane.f32.xlu0 %v1923
        %v1925 = vpop.xlane.xlu0 %1924
        %v1926 = vsel %vm1217, %v1874, 0.0
        %1927 = vadd.xlane.f32.xlu0 %v1926
        %v1928 = vpop.xlane.xlu0 %1927
        %v1929 = vsel %vm1217, %v1876, 0.0
        %1930 = vadd.xlane.f32.xlu0 %v1929
        %v1931 = vpop.xlane.xlu0 %1930
        %v1932 = vsel %vm1217, %v1878, 0.0
        %1933 = vadd.xlane.f32.xlu0 %v1932
        %v1934 = vpop.xlane.xlu0 %1933
        %v1935 = vsel %vm1217, %v1880, 0.0
        %1936 = vadd.xlane.f32.xlu0 %v1935
        %v1937 = vpop.xlane.xlu0 %1936
        %v1938 = vsel %vm1217, %v1882, 0.0
        %1939 = vadd.xlane.f32.xlu0 %v1938
        %v1940 = vpop.xlane.xlu0 %1939
        %v1941 = vsel %vm1217, %v1884, 0.0
        %1942 = vadd.xlane.f32.xlu0 %v1941
        %v1943 = vpop.xlane.xlu0 %1942
        %v1944 = vsel %vm1217, %v1886, 0.0
        %1945 = vadd.xlane.f32.xlu0 %v1944
        %v1946 = vpop.xlane.xlu0 %1945
        %v1947 = vsel %vm1217, %v1888, 0.0
        %1948 = vadd.xlane.f32.xlu0 %v1947
        %v1949 = vpop.xlane.xlu0 %1948
        %v1950 = vsel %vm1217, %v1890, 0.0
        %1951 = vadd.xlane.f32.xlu0 %v1950
        %v1952 = vpop.xlane.xlu0 %1951
        %v1953 = vsel %vm1217, %v1892, 0.0
        %1954 = vadd.xlane.f32.xlu0 %v1953
        %v1955 = vpop.xlane.xlu0 %1954
        %v1956 = vsel %vm1217, %v1894, 0.0
        %1957 = vadd.xlane.f32.xlu0 %v1956
        %v1958 = vpop.xlane.xlu0 %1957
        %v1959 = vsel %vm1217, %v1896, 0.0
        %1960 = vadd.xlane.f32.xlu0 %v1959
        %v1961 = vpop.xlane.xlu0 %1960
        %v1962 = vsel %vm1217, %v1898, 0.0
        %1963 = vadd.xlane.f32.xlu0 %v1962
        %v1964 = vpop.xlane.xlu0 %1963
        %v1965 = vsel %vm1217, %v1900, 0.0
        %1966 = vadd.xlane.f32.xlu0 %v1965
        %v1967 = vpop.xlane.xlu0 %1966
        %v1968 = vsel %vm1217, %v1902, 0.0
        %1969 = vadd.xlane.f32.xlu0 %v1968
        %v1970 = vpop.xlane.xlu0 %1969
        %v1971 = vsel %vm1217, %v1904, 0.0
        %1972 = vadd.xlane.f32.xlu0 %v1971
        %v1973 = vpop.xlane.xlu0 %1972
        %v1974 = vsel %vm1217, %v1906, 0.0
        %1975 = vadd.xlane.f32.xlu0 %v1974
        %v1976 = vpop.xlane.xlu0 %1975
        %v1977 = vsel %vm1217, %v1908, 0.0
        %1978 = vadd.xlane.f32.xlu0 %v1977
        %v1979 = vpop.xlane.xlu0 %1978
        %v1980 = vsel %vm1217, %v1910, 0.0
        %1981 = vadd.xlane.f32.xlu0 %v1980
        %v1982 = vpop.xlane.xlu0 %1981
        %v1983 = vrcp.pop %v1913
        %v1984 = vmul.f32 %v1864, %v1983
        %v1985 = vrcp.pop %v1916
        %v1986 = vmul.f32 %v1866, %v1985
        %v1987 = vrcp.pop %v1919
        %v1988 = vmul.f32 %v1868, %v1987
        %v1989 = vrcp.pop %v1922
        %v1990 = vmul.f32 %v1870, %v1989
        %v1991 = vrcp.pop %v1925
        %v1992 = vmul.f32 %v1872, %v1991
        %v1993 = vrcp.pop %v1928
        %v1994 = vmul.f32 %v1874, %v1993
        %v1995 = vrcp.pop %v1931
        %v1996 = vmul.f32 %v1876, %v1995
        %v1997 = vrcp.pop %v1934
        %v1998 = vmul.f32 %v1878, %v1997
        %v1999 = vrcp.pop %v1937
        %v2000 = vmul.f32 %v1880, %v1999
        %v2001 = vrcp.pop %v1940
        %v2002 = vmul.f32 %v1882, %v2001
        %v2003 = vrcp.pop %v1943
        %v2004 = vmul.f32 %v1884, %v2003
        %v2005 = vrcp.pop %v1946
        %v2006 = vmul.f32 %v1886, %v2005
        %v2007 = vrcp.pop %v1949
        %v2008 = vmul.f32 %v1888, %v2007
        %v2009 = vrcp.pop %v1952
        %v2010 = vmul.f32 %v1890, %v2009
        %v2011 = vrcp.pop %v1955
        %v2012 = vmul.f32 %v1892, %v2011
        %v2013 = vrcp.pop %v1958
        %v2014 = vmul.f32 %v1894, %v2013
        %v2015 = vrcp.pop %v1961
        %v2016 = vmul.f32 %v1896, %v2015
        %v2017 = vrcp.pop %v1964
        %v2018 = vmul.f32 %v1898, %v2017
        %v2019 = vrcp.pop %v1967
        %v2020 = vmul.f32 %v1900, %v2019
        %v2021 = vrcp.pop %v1970
        %v2022 = vmul.f32 %v1902, %v2021
        %v2023 = vrcp.pop %v1973
        %v2024 = vmul.f32 %v1904, %v2023
        %v2025 = vrcp.pop %v1976
        %v2026 = vmul.f32 %v1906, %v2025
        %v2027 = vrcp.pop %v1979
        %v2028 = vmul.f32 %v1908, %v2027
        %v2029 = vrcp.pop %v1982
        %v2030 = vmul.f32 %v1910, %v2029
        %v2031 = vmul.f32 %v1984, %v1049
        %v2032 = vmul.f32 %v1986, %v1050
        %v2033 = vmul.f32 %v1988, %v1051
        %v2034 = vmul.f32 %v1990, %v1052
        %v2035 = vmul.f32 %v1992, %v1053
        %v2036 = vmul.f32 %v1994, %v1054
        %v2037 = vmul.f32 %v1996, %v1055
        %v2038 = vmul.f32 %v1998, %v1056
        %v2039 = vmul.f32 %v2000, %v1057
        %v2040 = vmul.f32 %v2002, %v1058
        %v2041 = vmul.f32 %v2004, %v1059
        %v2042 = vmul.f32 %v2006, %v1060
        %v2043 = vmul.f32 %v2008, %v1061
        %v2044 = vmul.f32 %v2010, %v1062
        %v2045 = vmul.f32 %v2012, %v1063
        %v2046 = vmul.f32 %v2014, %v1064
        %v2047 = vmul.f32 %v2016, %v1065
        %v2048 = vmul.f32 %v2018, %v1066
        %v2049 = vmul.f32 %v2020, %v1067
        %v2050 = vmul.f32 %v2022, %v1068
        %v2051 = vmul.f32 %v2024, %v1069
        %v2052 = vmul.f32 %v2026, %v1070
        %v2053 = vmul.f32 %v2028, %v1071
        %v2054 = vmul.f32 %v2030, %v1072
        %2079 = vrot.lane.b32.xlu0 %v1984, 8
        %v2080 = vpop.permute.xlu0 %2079
        %2081 = vrot.lane.b32.xlu0 %v1986, 8
        %v2082 = vpop.permute.xlu0 %2081
        %2083 = vrot.lane.b32.xlu0 %v1988, 8
        %v2084 = vpop.permute.xlu0 %2083
        %2085 = vrot.lane.b32.xlu0 %v1990, 8
        %v2086 = vpop.permute.xlu0 %2085
        %2087 = vrot.lane.b32.xlu0 %v1992, 8
        %v2088 = vpop.permute.xlu0 %2087
        %2089 = vrot.lane.b32.xlu0 %v1994, 8
        %v2090 = vpop.permute.xlu0 %2089
        %2091 = vrot.lane.b32.xlu0 %v1996, 8
        %v2092 = vpop.permute.xlu0 %2091
        %2093 = vrot.lane.b32.xlu0 %v1998, 8
        %v2094 = vpop.permute.xlu0 %2093
        %2095 = vrot.lane.b32.xlu0 %v2000, 8
        %v2096 = vpop.permute.xlu0 %2095
        %2097 = vrot.lane.b32.xlu0 %v2002, 8
        %v2098 = vpop.permute.xlu0 %2097
        %2099 = vrot.lane.b32.xlu0 %v2004, 8
        %v2100 = vpop.permute.xlu0 %2099
        %2101 = vrot.lane.b32.xlu0 %v2006, 8
        %v2102 = vpop.permute.xlu0 %2101
        %2103 = vrot.lane.b32.xlu0 %v2008, 8
        %v2104 = vpop.permute.xlu0 %2103
        %2105 = vrot.lane.b32.xlu0 %v2010, 8
        %v2106 = vpop.permute.xlu0 %2105
        %2107 = vrot.lane.b32.xlu0 %v2012, 8
        %v2108 = vpop.permute.xlu0 %2107
        %2109 = vrot.lane.b32.xlu0 %v2014, 8
        %v2110 = vpop.permute.xlu0 %2109
        %2111 = vrot.lane.b32.xlu0 %v2016, 8
        %v2112 = vpop.permute.xlu0 %2111
        %2113 = vrot.lane.b32.xlu0 %v2018, 8
        %v2114 = vpop.permute.xlu0 %2113
        %2115 = vrot.lane.b32.xlu0 %v2020, 8
        %v2116 = vpop.permute.xlu0 %2115
        %2117 = vrot.lane.b32.xlu0 %v2022, 8
        %v2118 = vpop.permute.xlu0 %2117
        %2119 = vrot.lane.b32.xlu0 %v2024, 8
        %v2120 = vpop.permute.xlu0 %2119
        %2121 = vrot.lane.b32.xlu0 %v2026, 8
        %v2122 = vpop.permute.xlu0 %2121
        %2123 = vrot.lane.b32.xlu0 %v2028, 8
        %v2124 = vpop.permute.xlu0 %2123
        %2125 = vrot.lane.b32.xlu0 %v2030, 8
        %v2126 = vpop.permute.xlu0 %2125
        %v2151 = vsel %vm1217, %v2031, %v2080
        %v2152 = vsel %vm1217, %v2032, %v2082
        %v2153 = vsel %vm1217, %v2033, %v2084
        %v2154 = vsel %vm1217, %v2034, %v2086
        %v2155 = vsel %vm1217, %v2035, %v2088
        %v2156 = vsel %vm1217, %v2036, %v2090
        %v2157 = vsel %vm1217, %v2037, %v2092
        %v2158 = vsel %vm1217, %v2038, %v2094
        %v2159 = vsel %vm1217, %v2039, %v2096
        %v2160 = vsel %vm1217, %v2040, %v2098
        %v2161 = vsel %vm1217, %v2041, %v2100
        %v2162 = vsel %vm1217, %v2042, %v2102
        %v2163 = vsel %vm1217, %v2043, %v2104
        %v2164 = vsel %vm1217, %v2044, %v2106
        %v2165 = vsel %vm1217, %v2045, %v2108
        %v2166 = vsel %vm1217, %v2046, %v2110
        %v2167 = vsel %vm1217, %v2047, %v2112
        %v2168 = vsel %vm1217, %v2048, %v2114
        %v2169 = vsel %vm1217, %v2049, %v2116
        %v2170 = vsel %vm1217, %v2050, %v2118
        %v2171 = vsel %vm1217, %v2051, %v2120
        %v2172 = vsel %vm1217, %v2052, %v2122
        %v2173 = vsel %vm1217, %v2053, %v2124
        %v2174 = vsel %vm1217, %v2054, %v2126
        %v2175 = vld [vmem:[%s15] sm:$0xf]
        %v2176 = vld [vmem:[%s15 + $0x4] sm:$0xf]
        %v2177 = vpack.c.bf16 %v2152, %v2151
        %v2178 = vpack.c.bf16 %v2154, %v2153
        %v2179 = vpack.c.bf16 %v2156, %v2155
        %v2180 = vpack.c.bf16 %v2158, %v2157
        %v2181 = vpack.c.bf16 %v2160, %v2159
        %v2182 = vpack.c.bf16 %v2162, %v2161
        %v2183 = vpack.c.bf16 %v2164, %v2163
        %v2184 = vpack.c.bf16 %v2166, %v2165
        %v2185 = vpack.c.bf16 %v2168, %v2167
        %v2186 = vpack.c.bf16 %v2170, %v2169
        %v2187 = vpack.c.bf16 %v2172, %v2171
        %v2188 = vpack.c.bf16 %v2174, %v2173
        %v2191 = vunpack.c.l.b16 %v2175
        %v2192 = vunpack.c.l.b16 %v2176
        %v2193 = vpack.c.b16 %v2192, %v2191
        %vm2195 = vcmask 130048
        %v2197 = vsel %vm2195, %v2177, 0
        %v2200 = vsel %vm2195, %v2178, 0
        %v2203 = vsel %vm2195, %v2179, 0
        %v2206 = vsel %vm2195, %v2180, 0
        %v2209 = vsel %vm2195, %v2181, 0
        %v2212 = vsel %vm2195, %v2182, 0
        %v2215 = vsel %vm2195, %v2183, 0
        %v2218 = vsel %vm2195, %v2184, 0
        %v2221 = vsel %vm2195, %v2185, 0
        %v2224 = vsel %vm2195, %v2186, 0
        %v2227 = vsel %vm2195, %v2187, 0
        %v2230 = vsel %vm2195, %v2188, 0
        %2232 = vmatprep.subr.bf16.mxu0 0
        %2233 = vmatpush1.bf16.msra.mxu0 %v2193
        %2234 = vmatprep.subr.bf16.mxu0 0
        %2235 = vmatpush1.bf16.msra.mxu0 0
        %2236 = vmatprep.subr.bf16.mxu0 0
        %2237 = vmatpush1.bf16.msra.mxu0 0
        %2238 = vmatprep.subr.bf16.mxu0 0
        %2239 = vmatpush1.bf16.msra.mxu0 0
        %2240 = vmatprep.subr.bf16.mxu0 0
        %2241 = vmatpush1.bf16.msra.mxu0 0
        %2242 = vmatprep.subr.bf16.mxu0 0
        %2243 = vmatpush1.bf16.msra.mxu0 0
        %2244 = vmatprep.subr.bf16.mxu0 0
        %2245 = vmatpush1.bf16.msra.mxu0 0
        %2246 = vmatprep.subr.bf16.mxu0 0
        %2247 = vmatpush1.bf16.msra.mxu0 0
        %2248 = vmatprep.subr.bf16.mxu0 0
        %2249 = vmatpush1.bf16.msra.mxu0 0
        %2250 = vmatprep.subr.bf16.mxu0 0
        %2251 = vmatpush1.bf16.msra.mxu0 0
        %2252 = vmatprep.subr.bf16.mxu0 0
        %2253 = vmatpush1.bf16.msra.mxu0 0
        %2254 = vmatprep.subr.bf16.mxu0 0
        %2255 = vmatpush1.bf16.msra.mxu0 0
        %2256 = vmatprep.subr.bf16.mxu0 0
        %2257 = vmatpush1.bf16.msra.mxu0 0
        %2258 = vmatprep.subr.bf16.mxu0 0
        %2259 = vmatpush1.bf16.msra.mxu0 0
        %2260 = vmatprep.subr.bf16.mxu0 0
        %2261 = vmatpush1.bf16.msra.mxu0 0
        %2262 = vmatprep.subr.bf16.mxu0 0
        %2263 = vmatpush1.bf16.msra.mxu0 0
        %2264 = vmatprep.mubr.bf16.mxu0 0
        %2265 = vmatmul.mubr.bf16.gmra.mrb[0].mxu0 %v2197
        %v2266 = vpop.f32.mrb[0].mxu0
        %v2267 = vadd.f32 0.0, %v2266
        %v2268 = vpop.f32.mrb[0].mxu0
        %v2269 = vpop.f32.mrb[0].mxu0
        %v2270 = vadd.f32 0.0, %v2269
        %v2271 = vpop.f32.mrb[0].mxu0
        %2272 = vmatprep.mubr.bf16.mxu0 0
        %2273 = vmatmul.mubr.bf16.gmra.mrb[0].mxu0 %v2200
        %v2274 = vpop.f32.mrb[0].mxu0
        %v2275 = vadd.f32 0.0, %v2274
        %v2276 = vpop.f32.mrb[0].mxu0
        %v2277 = vpop.f32.mrb[0].mxu0
        %v2278 = vadd.f32 0.0, %v2277
        %v2279 = vpop.f32.mrb[0].mxu0
        %2280 = vmatprep.mubr.bf16.mxu0 0
        %2281 = vmatmul.mubr.bf16.gmra.mrb[0].mxu0 %v2203
        %v2282 = vpop.f32.mrb[0].mxu0
        %v2283 = vadd.f32 0.0, %v2282
        %v2284 = vpop.f32.mrb[0].mxu0
        %v2285 = vpop.f32.mrb[0].mxu0
        %v2286 = vadd.f32 0.0, %v2285
        %v2287 = vpop.f32.mrb[0].mxu0
        %2288 = vmatprep.mubr.bf16.mxu0 0
        %2289 = vmatmul.mubr.bf16.gmra.mrb[0].mxu0 %v2206
        %v2290 = vpop.f32.mrb[0].mxu0
        %v2291 = vadd.f32 0.0, %v2290
        %v2292 = vpop.f32.mrb[0].mxu0
        %v2293 = vpop.f32.mrb[0].mxu0
        %v2294 = vadd.f32 0.0, %v2293
        %v2295 = vpop.f32.mrb[0].mxu0
        %2296 = vmatprep.mubr.bf16.mxu0 0
        %2297 = vmatmul.mubr.bf16.gmra.mrb[0].mxu0 %v2209
        %v2298 = vpop.f32.mrb[0].mxu0
        %v2299 = vadd.f32 0.0, %v2298
        %v2300 = vpop.f32.mrb[0].mxu0
        %v2301 = vpop.f32.mrb[0].mxu0
        %v2302 = vadd.f32 0.0, %v2301
        %v2303 = vpop.f32.mrb[0].mxu0
        %2304 = vmatprep.mubr.bf16.mxu0 0
        %2305 = vmatmul.mubr.bf16.gmra.mrb[0].mxu0 %v2212
        %v2306 = vpop.f32.mrb[0].mxu0
        %v2307 = vadd.f32 0.0, %v2306
        %v2308 = vpop.f32.mrb[0].mxu0
        %v2309 = vpop.f32.mrb[0].mxu0
        %v2310 = vadd.f32 0.0, %v2309
        %v2311 = vpop.f32.mrb[0].mxu0
        %2312 = vmatprep.mubr.bf16.mxu0 0
        %2313 = vmatmul.mubr.bf16.gmra.mrb[0].mxu0 %v2215
        %v2314 = vpop.f32.mrb[0].mxu0
        %v2315 = vadd.f32 0.0, %v2314
        %v2316 = vpop.f32.mrb[0].mxu0
        %v2317 = vpop.f32.mrb[0].mxu0
        %v2318 = vadd.f32 0.0, %v2317
        %v2319 = vpop.f32.mrb[0].mxu0
        %2320 = vmatprep.mubr.bf16.mxu0 0
        %2321 = vmatmul.mubr.bf16.gmra.mrb[0].mxu0 %v2218
        %v2322 = vpop.f32.mrb[0].mxu0
        %v2323 = vadd.f32 0.0, %v2322
        %v2324 = vpop.f32.mrb[0].mxu0
        %v2325 = vpop.f32.mrb[0].mxu0
        %v2326 = vadd.f32 0.0, %v2325
        %v2327 = vpop.f32.mrb[0].mxu0
        %2328 = vmatprep.mubr.bf16.mxu0 0
        %2329 = vmatmul.mubr.bf16.gmra.mrb[0].mxu0 %v2221
        %v2330 = vpop.f32.mrb[0].mxu0
        %v2331 = vadd.f32 0.0, %v2330
        %v2332 = vpop.f32.mrb[0].mxu0
        %v2333 = vpop.f32.mrb[0].mxu0
        %v2334 = vadd.f32 0.0, %v2333
        %v2335 = vpop.f32.mrb[0].mxu0
        %2336 = vmatprep.mubr.bf16.mxu0 0
        %2337 = vmatmul.mubr.bf16.gmra.mrb[0].mxu0 %v2224
        %v2338 = vpop.f32.mrb[0].mxu0
        %v2339 = vadd.f32 0.0, %v2338
        %v2340 = vpop.f32.mrb[0].mxu0
        %v2341 = vpop.f32.mrb[0].mxu0
        %v2342 = vadd.f32 0.0, %v2341
        %v2343 = vpop.f32.mrb[0].mxu0
        %2344 = vmatprep.mubr.bf16.mxu0 0
        %2345 = vmatmul.mubr.bf16.gmra.mrb[0].mxu0 %v2227
        %v2346 = vpop.f32.mrb[0].mxu0
        %v2347 = vadd.f32 0.0, %v2346
        %v2348 = vpop.f32.mrb[0].mxu0
        %v2349 = vpop.f32.mrb[0].mxu0
        %v2350 = vadd.f32 0.0, %v2349
        %v2351 = vpop.f32.mrb[0].mxu0
        %2352 = vmatprep.mubr.bf16.mxu0 0
        %2353 = vmatmul.mubr.bf16.gmra.mrb[0].mxu0 %v2230
        %v2354 = vpop.f32.mrb[0].mxu0
        %v2355 = vadd.f32 0.0, %v2354
        %v2356 = vpop.f32.mrb[0].mxu0
        %v2357 = vpop.f32.mrb[0].mxu0
        %v2358 = vadd.f32 0.0, %v2357
        %v2359 = vpop.f32.mrb[0].mxu0
        %2360 = vdwg.mxu0
        %2361 = vst [vmem:[#allocation2] sm:$0xff] %v2267
        %2362 = vst [vmem:[#allocation2 + $0x8] sm:$0xff] %v2270
        %2363 = vst [vmem:[#allocation2 + $0x10] sm:$0xff] %v2275
        %2364 = vst [vmem:[#allocation2 + $0x18] sm:$0xff] %v2278
        %2365 = vst [vmem:[#allocation2 + $0x20] sm:$0xff] %v2283
        %2366 = vst [vmem:[#allocation2 + $0x28] sm:$0xff] %v2286
        %2367 = vst [vmem:[#allocation2 + $0x30] sm:$0xff] %v2291
        %2368 = vst [vmem:[#allocation2 + $0x38] sm:$0xff] %v2294
        %2369 = vst [vmem:[#allocation2 + $0x40] sm:$0xff] %v2299
        %2370 = vst [vmem:[#allocation2 + $0x48] sm:$0xff] %v2302
        %2371 = vst [vmem:[#allocation2 + $0x50] sm:$0xff] %v2307
        %2372 = vst [vmem:[#allocation2 + $0x58] sm:$0xff] %v2310
        %2373 = vst [vmem:[#allocation2 + $0x60] sm:$0xff] %v2315
        %2374 = vst [vmem:[#allocation2 + $0x68] sm:$0xff] %v2318
        %2375 = vst [vmem:[#allocation2 + $0x70] sm:$0xff] %v2323
        %2376 = vst [vmem:[#allocation2 + $0x78] sm:$0xff] %v2326
        %2377 = vst [vmem:[#allocation2 + $0x80] sm:$0xff] %v2331
        %2378 = vst [vmem:[#allocation2 + $0x88] sm:$0xff] %v2334
        %2379 = vst [vmem:[#allocation2 + $0x90] sm:$0xff] %v2339
        %2380 = vst [vmem:[#allocation2 + $0x98] sm:$0xff] %v2342
        %2381 = vst [vmem:[#allocation2 + $0xa0] sm:$0xff] %v2347
        %2382 = vst [vmem:[#allocation2 + $0xa8] sm:$0xff] %v2350
        %2383 = vst [vmem:[#allocation2 + $0xb0] sm:$0xff] %v2355
        %2384 = vst [vmem:[#allocation2 + $0xb8] sm:$0xff] %v2358
        %v2385 = vld [vmem:[%s17] sm:$0x7]
        %v2386 = vld [vmem:[%s19] sm:$0x1]
        %v2388 = vlaneseq
        %v2389 = vshrl.u32 %v2388, 7
        %v2390 = vsub.s32 0, %v2389
        %v2391 = vrot.slane %v2386, %v2390
        %v2394 = vsel %vm1093, %v2385, 0
        %2396 = vmatprep.subr.bf16.mxu0 0
        %2397 = vmatpush1.bf16.msra.mxu0 %v2394
        %2398 = vmatprep.subr.bf16.mxu0 0
        %2399 = vmatpush1.bf16.msra.mxu0 0
        %2400 = vmatprep.subr.bf16.mxu0 0
        %2401 = vmatpush1.bf16.msra.mxu0 0
        %2402 = vmatprep.subr.bf16.mxu0 0
        %2403 = vmatpush1.bf16.msra.mxu0 0
        %2404 = vmatprep.subr.bf16.mxu0 0
        %2405 = vmatpush1.bf16.msra.mxu0 0
        %2406 = vmatprep.subr.bf16.mxu0 0
        %2407 = vmatpush1.bf16.msra.mxu0 0
        %2408 = vmatprep.subr.bf16.mxu0 0
        %2409 = vmatpush1.bf16.msra.mxu0 0
        %2410 = vmatprep.subr.bf16.mxu0 0
        %2411 = vmatpush1.bf16.msra.mxu0 0
        %2412 = vmatprep.subr.bf16.mxu0 0
        %2413 = vmatpush1.bf16.msra.mxu0 0
        %2414 = vmatprep.subr.bf16.mxu0 0
        %2415 = vmatpush1.bf16.msra.mxu0 0
        %2416 = vmatprep.subr.bf16.mxu0 0
        %2417 = vmatpush1.bf16.msra.mxu0 0
        %2418 = vmatprep.subr.bf16.mxu0 0
        %2419 = vmatpush1.bf16.msra.mxu0 0
        %2420 = vmatprep.subr.bf16.mxu0 0
        %2421 = vmatpush1.bf16.msra.mxu0 0
        %2422 = vmatprep.subr.bf16.mxu0 0
        %2423 = vmatpush1.bf16.msra.mxu0 0
        %2424 = vmatprep.subr.bf16.mxu0 0
        %2425 = vmatpush1.bf16.msra.mxu0 0
        %2426 = vmatprep.subr.bf16.mxu0 0
        %2427 = vmatpush1.bf16.msra.mxu0 0
        %2428 = vmatprep.mubr.bf16.mxu0 0
        %2429 = vmatmul.mubr.bf16.gmra.mrb[0].mxu0 %v1088
        %v2430 = vpop.f32.mrb[0].mxu0
        %v2431 = vadd.f32 %v2391, %v2430
        %v2432 = vpop.f32.mrb[0].mxu0
        %v2433 = vpop.f32.mrb[0].mxu0
        %v2434 = vadd.f32 %v2391, %v2433
        %v2435 = vpop.f32.mrb[0].mxu0
        %2436 = vmatprep.mubr.bf16.mxu0 0
        %2437 = vmatmul.mubr.bf16.gmra.mrb[0].mxu0 %v1091
        %v2438 = vpop.f32.mrb[0].mxu0
        %v2439 = vadd.f32 %v2391, %v2438
        %v2440 = vpop.f32.mrb[0].mxu0
        %v2441 = vpop.f32.mrb[0].mxu0
        %v2442 = vpop.f32.mrb[0].mxu0
        %2443 = vdwg.mxu0
        %vm2444 = vcmp.gt.f32.partialorder %v2431, 0.0
        %vm2445 = vcmp.gt.f32.partialorder %v2434, 0.0
        %vm2446 = vcmp.gt.f32.partialorder %v2439, 0.0
        %v2447 = vmin.f32 %v2431, 0.0
        %v2448 = vmin.f32 %v2434, 0.0
        %v2449 = vmin.f32 %v2439, 0.0
        %v2450 = vmul.f32 %v2447, 1.442695
        %v2451 = vpow.pop %v2450
        %v2452 = vmul.f32 %v2448, 1.442695
        %v2453 = vpow.pop %v2452
        %v2454 = vmul.f32 %v2449, 1.442695
        %v2455 = vpow.pop %v2454
        %v2456 = vsub.f32 %v2451, 1.0
        %v2457 = vsub.f32 %v2453, 1.0
        %v2458 = vsub.f32 %v2455, 1.0
        %v2459 = vsel %vm2444, %v2431, %v2456
        %v2460 = vsel %vm2445, %v2434, %v2457
        %v2461 = vsel %vm2446, %v2439, %v2458
        %v2462 = vld [vmem:[%s21] sm:$0xf]
        %v2463 = vld [vmem:[%s21 + $0x4] sm:$0xf]
        %v2464 = vld [vmem:[%s21 + $0x8] sm:$0xf]
        %v2465 = vld [vmem:[%s21 + $0xc] sm:$0xf]
        %v2466 = vld [vmem:[%s21 + $0x10] sm:$0xf]
        %v2467 = vld [vmem:[%s21 + $0x14] sm:$0xf]
        %v2468 = vld [vmem:[%s21 + $0x18] sm:$0xf]
        %v2469 = vld [vmem:[%s21 + $0x1c] sm:$0xf]
        %v2470 = vld [vmem:[%s21 + $0x20] sm:$0xf]
        %v2471 = vld [vmem:[%s21 + $0x24] sm:$0xf]
        %v2472 = vld [vmem:[%s21 + $0x28] sm:$0xf]
        %v2473 = vld [vmem:[%s21 + $0x2c] sm:$0xf]
        %v2474 = vld [vmem:[%s21 + $0x30] sm:$0xf]
        %v2475 = vld [vmem:[%s21 + $0x34] sm:$0xf]
        %v2476 = vld [vmem:[%s21 + $0x38] sm:$0xf]
        %v2477 = vld [vmem:[%s21 + $0x3c] sm:$0xf]
        %v2478 = vpack.c.bf16 %v2460, %v2459
        %v2479 = vpack.c.bf16 %v2461, %v2461
        %v2480 = vld [vmem:[%s23] sm:$0x1]
        %v2482 = vlaneseq
        %v2483 = vshrl.u32 %v2482, 7
        %v2484 = vsub.s32 0, %v2483
        %v2485 = vrot.slane %v2480, %v2484
        %v2503 = vunpack.c.l.b16 %v2462
        %v2504 = vunpack.c.l.b16 %v2463
        %v2505 = vunpack.c.l.b16 %v2464
        %v2506 = vunpack.c.l.b16 %v2465
        %v2507 = vunpack.c.l.b16 %v2466
        %v2508 = vunpack.c.l.b16 %v2467
        %v2509 = vunpack.c.l.b16 %v2468
        %v2510 = vunpack.c.l.b16 %v2469
        %v2511 = vunpack.c.l.b16 %v2470
        %v2512 = vunpack.c.l.b16 %v2471
        %v2513 = vunpack.c.l.b16 %v2472
        %v2514 = vunpack.c.l.b16 %v2473
        %v2515 = vunpack.c.l.b16 %v2474
        %v2516 = vunpack.c.l.b16 %v2475
        %v2517 = vunpack.c.l.b16 %v2476
        %v2518 = vunpack.c.l.b16 %v2477
        %v2519 = vpack.c.b16 %v2504, %v2503
        %v2520 = vpack.c.b16 %v2506, %v2505
        %v2521 = vpack.c.b16 %v2508, %v2507
        %v2522 = vpack.c.b16 %v2510, %v2509
        %v2523 = vpack.c.b16 %v2512, %v2511
        %v2524 = vpack.c.b16 %v2514, %v2513
        %v2525 = vpack.c.b16 %v2516, %v2515
        %v2526 = vpack.c.b16 %v2518, %v2517
        %2535 = vmatprep.subr.bf16.mxu0 0
        %2536 = vmatpush1.bf16.msra.mxu0 %v2519
        %2537 = vmatprep.subr.bf16.mxu0 0
        %2538 = vmatpush1.bf16.msra.mxu0 %v2520
        %2539 = vmatprep.subr.bf16.mxu0 0
        %2540 = vmatpush1.bf16.msra.mxu0 %v2521
        %2541 = vmatprep.subr.bf16.mxu0 0
        %2542 = vmatpush1.bf16.msra.mxu0 %v2522
        %2543 = vmatprep.subr.bf16.mxu0 0
        %2544 = vmatpush1.bf16.msra.mxu0 %v2523
        %2545 = vmatprep.subr.bf16.mxu0 0
        %2546 = vmatpush1.bf16.msra.mxu0 %v2524
        %2547 = vmatprep.subr.bf16.mxu0 0
        %2548 = vmatpush1.bf16.msra.mxu0 %v2525
        %2549 = vmatprep.subr.bf16.mxu0 0
        %2550 = vmatpush1.bf16.msra.mxu0 %v2526
        %2551 = vmatprep.subr.bf16.mxu0 0
        %2552 = vmatpush1.bf16.msra.mxu0 0
        %2553 = vmatprep.subr.bf16.mxu0 0
        %2554 = vmatpush1.bf16.msra.mxu0 0
        %2555 = vmatprep.subr.bf16.mxu0 0
        %2556 = vmatpush1.bf16.msra.mxu0 0
        %2557 = vmatprep.subr.bf16.mxu0 0
        %2558 = vmatpush1.bf16.msra.mxu0 0
        %2559 = vmatprep.subr.bf16.mxu0 0
        %2560 = vmatpush1.bf16.msra.mxu0 0
        %2561 = vmatprep.subr.bf16.mxu0 0
        %2562 = vmatpush1.bf16.msra.mxu0 0
        %2563 = vmatprep.subr.bf16.mxu0 0
        %2564 = vmatpush1.bf16.msra.mxu0 0
        %2565 = vmatprep.subr.bf16.mxu0 0
        %2566 = vmatpush1.bf16.msra.mxu0 0
        %2567 = vmatprep.mubr.bf16.mxu0 0
        %2568 = vmatmul.mubr.bf16.gmra.mrb[0].mxu0 %v2478
        %v2569 = vpop.f32.mrb[0].mxu0
        %v2570 = vadd.f32 %v2485, %v2569
        %v2571 = vpop.f32.mrb[0].mxu0
        %v2572 = vpop.f32.mrb[0].mxu0
        %v2573 = vadd.f32 %v2485, %v2572
        %v2574 = vpop.f32.mrb[0].mxu0
        %2575 = vmatprep.mubr.bf16.mxu0 0
        %2576 = vmatmul.mubr.bf16.gmra.mrb[0].mxu0 %v2479
        %v2577 = vpop.f32.mrb[0].mxu0
        %v2578 = vadd.f32 %v2485, %v2577
        %v2579 = vpop.f32.mrb[0].mxu0
        %v2580 = vpop.f32.mrb[0].mxu0
        %v2581 = vpop.f32.mrb[0].mxu0
        %2582 = vdwg.mxu0
        %2583 = vst [vmem:[#allocation4] sm:$0xff] %v2570
        %2584 = vst [vmem:[#allocation4 + $0x8] sm:$0xff] %v2573
        %2585 = vst [vmem:[#allocation4 + $0x10] sm:$0xff] %v2578
        %v2586 = vld [vmem:[%s25] sm:$0x7]
        %v2587 = vld [vmem:[%s27] sm:$0x1]
        %v2589 = vlaneseq
        %v2590 = vshrl.u32 %v2589, 7
        %v2591 = vsub.s32 0, %v2590
        %v2592 = vrot.slane %v2587, %v2591
        %v2595 = vsel %vm1093, %v2586, 0
        %2597 = vmatprep.subr.bf16.mxu0 0
        %2598 = vmatpush1.bf16.msra.mxu0 %v2595
        %2599 = vmatprep.subr.bf16.mxu0 0
        %2600 = vmatpush1.bf16.msra.mxu0 0
        %2601 = vmatprep.subr.bf16.mxu0 0
        %2602 = vmatpush1.bf16.msra.mxu0 0
        %2603 = vmatprep.subr.bf16.mxu0 0
        %2604 = vmatpush1.bf16.msra.mxu0 0
        %2605 = vmatprep.subr.bf16.mxu0 0
        %2606 = vmatpush1.bf16.msra.mxu0 0
        %2607 = vmatprep.subr.bf16.mxu0 0
        %2608 = vmatpush1.bf16.msra.mxu0 0
        %2609 = vmatprep.subr.bf16.mxu0 0
        %2610 = vmatpush1.bf16.msra.mxu0 0
        %2611 = vmatprep.subr.bf16.mxu0 0
        %2612 = vmatpush1.bf16.msra.mxu0 0
        %2613 = vmatprep.subr.bf16.mxu0 0
        %2614 = vmatpush1.bf16.msra.mxu0 0
        %2615 = vmatprep.subr.bf16.mxu0 0
        %2616 = vmatpush1.bf16.msra.mxu0 0
        %2617 = vmatprep.subr.bf16.mxu0 0
        %2618 = vmatpush1.bf16.msra.mxu0 0
        %2619 = vmatprep.subr.bf16.mxu0 0
        %2620 = vmatpush1.bf16.msra.mxu0 0
        %2621 = vmatprep.subr.bf16.mxu0 0
        %2622 = vmatpush1.bf16.msra.mxu0 0
        %2623 = vmatprep.subr.bf16.mxu0 0
        %2624 = vmatpush1.bf16.msra.mxu0 0
        %2625 = vmatprep.subr.bf16.mxu0 0
        %2626 = vmatpush1.bf16.msra.mxu0 0
        %2627 = vmatprep.subr.bf16.mxu0 0
        %2628 = vmatpush1.bf16.msra.mxu0 0
        %2629 = vmatprep.mubr.bf16.mxu0 0
        %2630 = vmatmul.mubr.bf16.gmra.mrb[0].mxu0 %v1088
        %v2631 = vpop.f32.mrb[0].mxu0
        %v2632 = vadd.f32 %v2592, %v2631
        %v2633 = vpop.f32.mrb[0].mxu0
        %v2634 = vpop.f32.mrb[0].mxu0
        %v2635 = vadd.f32 %v2592, %v2634
        %v2636 = vpop.f32.mrb[0].mxu0
        %2637 = vmatprep.mubr.bf16.mxu0 0
        %2638 = vmatmul.mubr.bf16.gmra.mrb[0].mxu0 %v1091
        %v2639 = vpop.f32.mrb[0].mxu0
        %v2640 = vadd.f32 %v2592, %v2639
        %v2641 = vpop.f32.mrb[0].mxu0
        %v2642 = vpop.f32.mrb[0].mxu0
        %v2643 = vpop.f32.mrb[0].mxu0
        %2644 = vdwg.mxu0
        %vm2645 = vcmp.gt.f32.partialorder %v2632, 0.0
        %vm2646 = vcmp.gt.f32.partialorder %v2635, 0.0
        %vm2647 = vcmp.gt.f32.partialorder %v2640, 0.0
        %v2648 = vmin.f32 %v2632, 0.0
        %v2649 = vmin.f32 %v2635, 0.0
        %v2650 = vmin.f32 %v2640, 0.0
        %v2651 = vmul.f32 %v2648, 1.442695
        %v2652 = vpow.pop %v2651
        %v2653 = vmul.f32 %v2649, 1.442695
        %v2654 = vpow.pop %v2653
        %v2655 = vmul.f32 %v2650, 1.442695
        %v2656 = vpow.pop %v2655
        %v2657 = vsub.f32 %v2652, 1.0
        %v2658 = vsub.f32 %v2654, 1.0
        %v2659 = vsub.f32 %v2656, 1.0
        %v2660 = vsel %vm2645, %v2632, %v2657
        %v2661 = vsel %vm2646, %v2635, %v2658
        %v2662 = vsel %vm2647, %v2640, %v2659
        %v2663 = vld [vmem:[%s29] sm:$0xf]
        %v2664 = vld [vmem:[%s29 + $0x4] sm:$0xf]
        %v2665 = vld [vmem:[%s29 + $0x8] sm:$0xf]
        %v2666 = vld [vmem:[%s29 + $0xc] sm:$0xf]
        %v2667 = vld [vmem:[%s29 + $0x10] sm:$0xf]
        %v2668 = vld [vmem:[%s29 + $0x14] sm:$0xf]
        %v2669 = vld [vmem:[%s29 + $0x18] sm:$0xf]
        %v2670 = vld [vmem:[%s29 + $0x1c] sm:$0xf]
        %v2671 = vld [vmem:[%s29 + $0x20] sm:$0xf]
        %v2672 = vld [vmem:[%s29 + $0x24] sm:$0xf]
        %v2673 = vld [vmem:[%s29 + $0x28] sm:$0xf]
        %v2674 = vld [vmem:[%s29 + $0x2c] sm:$0xf]
        %v2675 = vld [vmem:[%s29 + $0x30] sm:$0xf]
        %v2676 = vld [vmem:[%s29 + $0x34] sm:$0xf]
        %v2677 = vld [vmem:[%s29 + $0x38] sm:$0xf]
        %v2678 = vld [vmem:[%s29 + $0x3c] sm:$0xf]
        %v2679 = vpack.c.bf16 %v2661, %v2660
        %v2680 = vpack.c.bf16 %v2662, %v2662
        %v2681 = vld [vmem:[%s31] sm:$0x1]
        %v2683 = vlaneseq
        %v2684 = vshrl.u32 %v2683, 7
        %v2685 = vsub.s32 0, %v2684
        %v2686 = vrot.slane %v2681, %v2685
        %v2704 = vunpack.c.l.b16 %v2663
        %v2705 = vunpack.c.l.b16 %v2664
        %v2706 = vunpack.c.l.b16 %v2665
        %v2707 = vunpack.c.l.b16 %v2666
        %v2708 = vunpack.c.l.b16 %v2667
        %v2709 = vunpack.c.l.b16 %v2668
        %v2710 = vunpack.c.l.b16 %v2669
        %v2711 = vunpack.c.l.b16 %v2670
        %v2712 = vunpack.c.l.b16 %v2671
        %v2713 = vunpack.c.l.b16 %v2672
        %v2714 = vunpack.c.l.b16 %v2673
        %v2715 = vunpack.c.l.b16 %v2674
        %v2716 = vunpack.c.l.b16 %v2675
        %v2717 = vunpack.c.l.b16 %v2676
        %v2718 = vunpack.c.l.b16 %v2677
        %v2719 = vunpack.c.l.b16 %v2678
        %v2720 = vpack.c.b16 %v2705, %v2704
        %v2721 = vpack.c.b16 %v2707, %v2706
        %v2722 = vpack.c.b16 %v2709, %v2708
        %v2723 = vpack.c.b16 %v2711, %v2710
        %v2724 = vpack.c.b16 %v2713, %v2712
        %v2725 = vpack.c.b16 %v2715, %v2714
        %v2726 = vpack.c.b16 %v2717, %v2716
        %v2727 = vpack.c.b16 %v2719, %v2718
        %2736 = vmatprep.subr.bf16.mxu0 0
        %2737 = vmatpush1.bf16.msra.mxu0 %v2720
        %2738 = vmatprep.subr.bf16.mxu0 0
        %2739 = vmatpush1.bf16.msra.mxu0 %v2721
        %2740 = vmatprep.subr.bf16.mxu0 0
        %2741 = vmatpush1.bf16.msra.mxu0 %v2722
        %2742 = vmatprep.subr.bf16.mxu0 0
        %2743 = vmatpush1.bf16.msra.mxu0 %v2723
        %2744 = vmatprep.subr.bf16.mxu0 0
        %2745 = vmatpush1.bf16.msra.mxu0 %v2724
        %2746 = vmatprep.subr.bf16.mxu0 0
        %2747 = vmatpush1.bf16.msra.mxu0 %v2725
        %2748 = vmatprep.subr.bf16.mxu0 0
        %2749 = vmatpush1.bf16.msra.mxu0 %v2726
        %2750 = vmatprep.subr.bf16.mxu0 0
        %2751 = vmatpush1.bf16.msra.mxu0 %v2727
        %2752 = vmatprep.subr.bf16.mxu0 0
        %2753 = vmatpush1.bf16.msra.mxu0 0
        %2754 = vmatprep.subr.bf16.mxu0 0
        %2755 = vmatpush1.bf16.msra.mxu0 0
        %2756 = vmatprep.subr.bf16.mxu0 0
        %2757 = vmatpush1.bf16.msra.mxu0 0
        %2758 = vmatprep.subr.bf16.mxu0 0
        %2759 = vmatpush1.bf16.msra.mxu0 0
        %2760 = vmatprep.subr.bf16.mxu0 0
        %2761 = vmatpush1.bf16.msra.mxu0 0
        %2762 = vmatprep.subr.bf16.mxu0 0
        %2763 = vmatpush1.bf16.msra.mxu0 0
        %2764 = vmatprep.subr.bf16.mxu0 0
        %2765 = vmatpush1.bf16.msra.mxu0 0
        %2766 = vmatprep.subr.bf16.mxu0 0
        %2767 = vmatpush1.bf16.msra.mxu0 0
        %2768 = vmatprep.mubr.bf16.mxu0 0
        %2769 = vmatmul.mubr.bf16.gmra.mrb[0].mxu0 %v2679
        %v2770 = vpop.f32.mrb[0].mxu0
        %v2771 = vadd.f32 %v2686, %v2770
        %v2772 = vpop.f32.mrb[0].mxu0
        %v2773 = vpop.f32.mrb[0].mxu0
        %v2774 = vadd.f32 %v2686, %v2773
        %v2775 = vpop.f32.mrb[0].mxu0
        %2776 = vmatprep.mubr.bf16.mxu0 0
        %2777 = vmatmul.mubr.bf16.gmra.mrb[0].mxu0 %v2680
        %v2778 = vpop.f32.mrb[0].mxu0
        %v2779 = vadd.f32 %v2686, %v2778
        %v2780 = vpop.f32.mrb[0].mxu0
        %v2781 = vpop.f32.mrb[0].mxu0
        %v2782 = vpop.f32.mrb[0].mxu0
        %2783 = vdwg.mxu0
        %2784 = vst [vmem:[#allocation5] sm:$0xff] %v2771
        %2785 = vst [vmem:[#allocation5 + $0x8] sm:$0xff] %v2774
        %2786 = vst [vmem:[#allocation5 + $0x10] sm:$0xff] %v2779
        %v2787 = vld [vmem:[%s33] sm:$0xff]
        %v2788 = vld [vmem:[%s33 + $0x8] sm:$0xff]
        %v2789 = vld [vmem:[%s33 + $0x10] sm:$0xff]
        %v2790 = vld [vmem:[%s33 + $0x18] sm:$0xff]
        %v2791 = vld [vmem:[%s33 + $0x20] sm:$0xff]
        %v2792 = vld [vmem:[%s33 + $0x28] sm:$0xff]
        %v2793 = vld [vmem:[%s33 + $0x30] sm:$0xff]
        %v2794 = vld [vmem:[%s33 + $0x38] sm:$0xff]
        %v2795 = vld [vmem:[%s33 + $0x40] sm:$0xff]
        %v2796 = vld [vmem:[%s33 + $0x48] sm:$0xff]
        %v2797 = vld [vmem:[%s33 + $0x50] sm:$0xff]
        %v2798 = vld [vmem:[%s33 + $0x58] sm:$0xff]
        %v2799 = vld [vmem:[%s33 + $0x60] sm:$0xff]
        %v2800 = vld [vmem:[%s33 + $0x68] sm:$0xff]
        %v2801 = vld [vmem:[%s33 + $0x70] sm:$0xff]
        %v2802 = vld [vmem:[%s33 + $0x78] sm:$0xff]
        %v2803 = vld [vmem:[%s33 + $0x80] sm:$0xff]
        %v2804 = vld [vmem:[%s33 + $0x88] sm:$0xff]
        %v2805 = vld [vmem:[%s33 + $0x90] sm:$0xff]
        %v2806 = vld [vmem:[%s33 + $0x98] sm:$0xff]
        %v2807 = vld [vmem:[%s33 + $0xa0] sm:$0xff]
        %v2808 = vld [vmem:[%s33 + $0xa8] sm:$0xff]
        %v2809 = vld [vmem:[%s33 + $0xb0] sm:$0xff]
        %v2810 = vld [vmem:[%s33 + $0xb8] sm:$0xff]
        %v2811 = vld [vmem:[%s33 + $0xc0] sm:$0xff]
        %v2812 = vld [vmem:[%s33 + $0xc8] sm:$0xff]
        %v2813 = vld [vmem:[%s33 + $0xd0] sm:$0xff]
        %v2814 = vld [vmem:[%s33 + $0xd8] sm:$0xff]
        %v2815 = vld [vmem:[%s33 + $0xe0] sm:$0xff]
        %v2816 = vld [vmem:[%s33 + $0xe8] sm:$0xff]
        %v2817 = vld [vmem:[%s33 + $0xf0] sm:$0xff]
        %v2818 = vld [vmem:[%s33 + $0xf8] sm:$0xff]
        %v2819 = vpack.c.bf16 %v2270, %v2267
        %v2820 = vpack.c.bf16 %v2278, %v2275
        %v2821 = vpack.c.bf16 %v2286, %v2283
        %v2822 = vpack.c.bf16 %v2294, %v2291
        %v2823 = vpack.c.bf16 %v2302, %v2299
        %v2824 = vpack.c.bf16 %v2310, %v2307
        %v2825 = vpack.c.bf16 %v2318, %v2315
        %v2826 = vpack.c.bf16 %v2326, %v2323
        %v2827 = vpack.c.bf16 %v2334, %v2331
        %v2828 = vpack.c.bf16 %v2342, %v2339
        %v2829 = vpack.c.bf16 %v2350, %v2347
        %v2830 = vpack.c.bf16 %v2358, %v2355
        %v2831 = vld [vmem:[%s37] sm:$0xf]
        %v2833 = vlaneseq
        %v2834 = vshrl.u32 %v2833, 7
        %v2835 = vsub.s32 0, %v2834
        %v2836 = vrot.slane %v2831, %v2835
        %v2837 = vlaneseq
        %v2838 = vshrl.u32 %v2837, 7
        %v2839 = vsub.s32 1, %v2838
        %v2840 = vrot.slane %v2831, %v2839
        %v2841 = vlaneseq
        %v2842 = vshrl.u32 %v2841, 7
        %v2843 = vsub.s32 2, %v2842
        %v2844 = vrot.slane %v2831, %v2843
        %v2845 = vlaneseq
        %v2846 = vshrl.u32 %v2845, 7
        %v2847 = vsub.s32 3, %v2846
        %v2848 = vrot.slane %v2831, %v2847
        %v2885 = vunpack.c.l.b16 %v2787
        %v2886 = vunpack.c.h.b16 %v2787
        %v2887 = vunpack.c.l.b16 %v2788
        %v2888 = vunpack.c.h.b16 %v2788
        %v2889 = vunpack.c.l.b16 %v2789
        %v2890 = vunpack.c.h.b16 %v2789
        %v2891 = vunpack.c.l.b16 %v2790
        %v2892 = vunpack.c.h.b16 %v2790
        %v2893 = vunpack.c.l.b16 %v2791
        %v2894 = vunpack.c.h.b16 %v2791
        %v2895 = vunpack.c.l.b16 %v2792
        %v2896 = vunpack.c.h.b16 %v2792
        %v2897 = vunpack.c.l.b16 %v2793
        %v2898 = vunpack.c.h.b16 %v2793
        %v2899 = vunpack.c.l.b16 %v2794
        %v2900 = vunpack.c.h.b16 %v2794
        %v2901 = vunpack.c.l.b16 %v2795
        %v2902 = vunpack.c.h.b16 %v2795
        %v2903 = vunpack.c.l.b16 %v2796
        %v2904 = vunpack.c.h.b16 %v2796
        %v2905 = vunpack.c.l.b16 %v2797
        %v2906 = vunpack.c.h.b16 %v2797
        %v2907 = vunpack.c.l.b16 %v2798
        %v2908 = vunpack.c.h.b16 %v2798
        %v2909 = vunpack.c.l.b16 %v2799
        %v2910 = vunpack.c.h.b16 %v2799
        %v2911 = vunpack.c.l.b16 %v2800
        %v2912 = vunpack.c.h.b16 %v2800
        %v2913 = vunpack.c.l.b16 %v2801
        %v2914 = vunpack.c.h.b16 %v2801
        %v2915 = vunpack.c.l.b16 %v2802
        %v2916 = vunpack.c.h.b16 %v2802
        %v2917 = vunpack.c.l.b16 %v2803
        %v2918 = vunpack.c.h.b16 %v2803
        %v2919 = vunpack.c.l.b16 %v2804
        %v2920 = vunpack.c.h.b16 %v2804
        %v2921 = vunpack.c.l.b16 %v2805
        %v2922 = vunpack.c.h.b16 %v2805
        %v2923 = vunpack.c.l.b16 %v2806
        %v2924 = vunpack.c.h.b16 %v2806
        %v2925 = vunpack.c.l.b16 %v2807
        %v2926 = vunpack.c.h.b16 %v2807
        %v2927 = vunpack.c.l.b16 %v2808
        %v2928 = vunpack.c.h.b16 %v2808
        %v2929 = vunpack.c.l.b16 %v2809
        %v2930 = vunpack.c.h.b16 %v2809
        %v2931 = vunpack.c.l.b16 %v2810
        %v2932 = vunpack.c.h.b16 %v2810
        %v2933 = vunpack.c.l.b16 %v2811
        %v2934 = vunpack.c.h.b16 %v2811
        %v2935 = vunpack.c.l.b16 %v2812
        %v2936 = vunpack.c.h.b16 %v2812
        %v2937 = vunpack.c.l.b16 %v2813
        %v2938 = vunpack.c.h.b16 %v2813
        %v2939 = vunpack.c.l.b16 %v2814
        %v2940 = vunpack.c.h.b16 %v2814
        %v2941 = vunpack.c.l.b16 %v2815
        %v2942 = vunpack.c.h.b16 %v2815
        %v2943 = vunpack.c.l.b16 %v2816
        %v2944 = vunpack.c.h.b16 %v2816
        %v2945 = vunpack.c.l.b16 %v2817
        %v2946 = vunpack.c.h.b16 %v2817
        %v2947 = vunpack.c.l.b16 %v2818
        %v2948 = vunpack.c.h.b16 %v2818
        %v2949 = vpack.c.b16 %v2889, %v2885
        %v2950 = vpack.c.b16 %v2890, %v2886
        %v2951 = vpack.c.b16 %v2891, %v2887
        %v2952 = vpack.c.b16 %v2892, %v2888
        %v2953 = vpack.c.b16 %v2897, %v2893
        %v2954 = vpack.c.b16 %v2898, %v2894
        %v2955 = vpack.c.b16 %v2899, %v2895
        %v2956 = vpack.c.b16 %v2900, %v2896
        %v2957 = vpack.c.b16 %v2905, %v2901
        %v2958 = vpack.c.b16 %v2906, %v2902
        %v2959 = vpack.c.b16 %v2907, %v2903
        %v2960 = vpack.c.b16 %v2908, %v2904
        %v2961 = vpack.c.b16 %v2913, %v2909
        %v2962 = vpack.c.b16 %v2914, %v2910
        %v2963 = vpack.c.b16 %v2915, %v2911
        %v2964 = vpack.c.b16 %v2916, %v2912
        %v2965 = vpack.c.b16 %v2921, %v2917
        %v2966 = vpack.c.b16 %v2922, %v2918
        %v2967 = vpack.c.b16 %v2923, %v2919
        %v2968 = vpack.c.b16 %v2924, %v2920
        %v2969 = vpack.c.b16 %v2929, %v2925
        %v2970 = vpack.c.b16 %v2930, %v2926
        %v2971 = vpack.c.b16 %v2931, %v2927
        %v2972 = vpack.c.b16 %v2932, %v2928
        %v2973 = vpack.c.b16 %v2937, %v2933
        %v2974 = vpack.c.b16 %v2938, %v2934
        %v2975 = vpack.c.b16 %v2939, %v2935
        %v2976 = vpack.c.b16 %v2940, %v2936
        %v2977 = vpack.c.b16 %v2945, %v2941
        %v2978 = vpack.c.b16 %v2946, %v2942
        %v2979 = vpack.c.b16 %v2947, %v2943
        %v2980 = vpack.c.b16 %v2948, %v2944
        %3013 = vmatprep.subr.bf16.mxu0 %v2950
        %3014 = vmatpush1.bf16.msra.mxu0 %v2949
        %3015 = vmatprep.subr.bf16.mxu0 %v2954
        %3016 = vmatpush1.bf16.msra.mxu0 %v2953
        %3017 = vmatprep.subr.bf16.mxu0 %v2958
        %3018 = vmatpush1.bf16.msra.mxu0 %v2957
        %3019 = vmatprep.subr.bf16.mxu0 %v2962
        %3020 = vmatpush1.bf16.msra.mxu0 %v2961
        %3021 = vmatprep.subr.bf16.mxu0 %v2966
        %3022 = vmatpush1.bf16.msra.mxu0 %v2965
        %3023 = vmatprep.subr.bf16.mxu0 %v2970
        %3024 = vmatpush1.bf16.msra.mxu0 %v2969
        %3025 = vmatprep.subr.bf16.mxu0 %v2974
        %3026 = vmatpush1.bf16.msra.mxu0 %v2973
        %3027 = vmatprep.subr.bf16.mxu0 %v2978
        %3028 = vmatpush1.bf16.msra.mxu0 %v2977
        %3029 = vmatprep.subr.bf16.mxu0 0
        %3030 = vmatpush1.bf16.msra.mxu0 0
        %3031 = vmatprep.subr.bf16.mxu0 0
        %3032 = vmatpush1.bf16.msra.mxu0 0
        %3033 = vmatprep.subr.bf16.mxu0 0
        %3034 = vmatpush1.bf16.msra.mxu0 0
        %3035 = vmatprep.subr.bf16.mxu0 0
        %3036 = vmatpush1.bf16.msra.mxu0 0
        %3037 = vmatprep.subr.bf16.mxu0 0
        %3038 = vmatpush1.bf16.msra.mxu0 0
        %3039 = vmatprep.subr.bf16.mxu0 0
        %3040 = vmatpush1.bf16.msra.mxu0 0
        %3041 = vmatprep.subr.bf16.mxu0 0
        %3042 = vmatpush1.bf16.msra.mxu0 0
        %3043 = vmatprep.subr.bf16.mxu0 0
        %3044 = vmatpush1.bf16.msra.mxu0 0
        %3045 = vmatprep.mubr.bf16.mxu0 0
        %3046 = vmatmul.mubr.bf16.gmra.mrb[0].mxu0 %v2819
        %v3047 = vpop.f32.mrb[0].mxu0
        %v3048 = vadd.f32 %v2836, %v3047
        %v3049 = vpop.f32.mrb[0].mxu0
        %v3050 = vadd.f32 %v2840, %v3049
        %v3051 = vpop.f32.mrb[0].mxu0
        %v3052 = vadd.f32 %v2836, %v3051
        %v3053 = vpop.f32.mrb[0].mxu0
        %v3054 = vadd.f32 %v2840, %v3053
        %3055 = vmatprep.mubr.bf16.mxu0 0
        %3056 = vmatmul.mubr.bf16.gmra.mrb[0].mxu0 %v2820
        %v3057 = vpop.f32.mrb[0].mxu0
        %v3058 = vadd.f32 %v2836, %v3057
        %v3059 = vpop.f32.mrb[0].mxu0
        %v3060 = vadd.f32 %v2840, %v3059
        %v3061 = vpop.f32.mrb[0].mxu0
        %v3062 = vadd.f32 %v2836, %v3061
        %v3063 = vpop.f32.mrb[0].mxu0
        %v3064 = vadd.f32 %v2840, %v3063
        %3065 = vmatprep.mubr.bf16.mxu0 0
        %3066 = vmatmul.mubr.bf16.gmra.mrb[0].mxu0 %v2821
        %v3067 = vpop.f32.mrb[0].mxu0
        %v3068 = vadd.f32 %v2836, %v3067
        %v3069 = vpop.f32.mrb[0].mxu0
        %v3070 = vadd.f32 %v2840, %v3069
        %v3071 = vpop.f32.mrb[0].mxu0
        %v3072 = vadd.f32 %v2836, %v3071
        %v3073 = vpop.f32.mrb[0].mxu0
        %v3074 = vadd.f32 %v2840, %v3073
        %3075 = vmatprep.mubr.bf16.mxu0 0
        %3076 = vmatmul.mubr.bf16.gmra.mrb[0].mxu0 %v2822
        %v3077 = vpop.f32.mrb[0].mxu0
        %v3078 = vadd.f32 %v2836, %v3077
        %v3079 = vpop.f32.mrb[0].mxu0
        %v3080 = vadd.f32 %v2840, %v3079
        %v3081 = vpop.f32.mrb[0].mxu0
        %v3082 = vadd.f32 %v2836, %v3081
        %v3083 = vpop.f32.mrb[0].mxu0
        %v3084 = vadd.f32 %v2840, %v3083
        %3085 = vmatprep.mubr.bf16.mxu0 0
        %3086 = vmatmul.mubr.bf16.gmra.mrb[0].mxu0 %v2823
        %v3087 = vpop.f32.mrb[0].mxu0
        %v3088 = vadd.f32 %v2836, %v3087
        %v3089 = vpop.f32.mrb[0].mxu0
        %v3090 = vadd.f32 %v2840, %v3089
        %v3091 = vpop.f32.mrb[0].mxu0
        %v3092 = vadd.f32 %v2836, %v3091
        %v3093 = vpop.f32.mrb[0].mxu0
        %v3094 = vadd.f32 %v2840, %v3093
        %3095 = vmatprep.mubr.bf16.mxu0 0
        %3096 = vmatmul.mubr.bf16.gmra.mrb[0].mxu0 %v2824
        %v3097 = vpop.f32.mrb[0].mxu0
        %v3098 = vadd.f32 %v2836, %v3097
        %v3099 = vpop.f32.mrb[0].mxu0
        %v3100 = vadd.f32 %v2840, %v3099
        %v3101 = vpop.f32.mrb[0].mxu0
        %v3102 = vadd.f32 %v2836, %v3101
        %v3103 = vpop.f32.mrb[0].mxu0
        %v3104 = vadd.f32 %v2840, %v3103
        %3105 = vmatprep.mubr.bf16.mxu0 0
        %3106 = vmatmul.mubr.bf16.gmra.mrb[0].mxu0 %v2825
        %v3107 = vpop.f32.mrb[0].mxu0
        %v3108 = vadd.f32 %v2836, %v3107
        %v3109 = vpop.f32.mrb[0].mxu0
        %v3110 = vadd.f32 %v2840, %v3109
        %v3111 = vpop.f32.mrb[0].mxu0
        %v3112 = vadd.f32 %v2836, %v3111
        %v3113 = vpop.f32.mrb[0].mxu0
        %v3114 = vadd.f32 %v2840, %v3113
        %3115 = vmatprep.mubr.bf16.mxu0 0
        %3116 = vmatmul.mubr.bf16.gmra.mrb[0].mxu0 %v2826
        %v3117 = vpop.f32.mrb[0].mxu0
        %v3118 = vadd.f32 %v2836, %v3117
        %v3119 = vpop.f32.mrb[0].mxu0
        %v3120 = vadd.f32 %v2840, %v3119
        %v3121 = vpop.f32.mrb[0].mxu0
        %v3122 = vadd.f32 %v2836, %v3121
        %v3123 = vpop.f32.mrb[0].mxu0
        %v3124 = vadd.f32 %v2840, %v3123
        %3125 = vmatprep.mubr.bf16.mxu0 0
        %3126 = vmatmul.mubr.bf16.gmra.mrb[0].mxu0 %v2827
        %v3127 = vpop.f32.mrb[0].mxu0
        %v3128 = vadd.f32 %v2836, %v3127
        %v3129 = vpop.f32.mrb[0].mxu0
        %v3130 = vadd.f32 %v2840, %v3129
        %v3131 = vpop.f32.mrb[0].mxu0
        %v3132 = vadd.f32 %v2836, %v3131
        %v3133 = vpop.f32.mrb[0].mxu0
        %v3134 = vadd.f32 %v2840, %v3133
        %3135 = vmatprep.mubr.bf16.mxu0 0
        %3136 = vmatmul.mubr.bf16.gmra.mrb[0].mxu0 %v2828
        %v3137 = vpop.f32.mrb[0].mxu0
        %v3138 = vadd.f32 %v2836, %v3137
        %v3139 = vpop.f32.mrb[0].mxu0
        %v3140 = vadd.f32 %v2840, %v3139
        %v3141 = vpop.f32.mrb[0].mxu0
        %v3142 = vadd.f32 %v2836, %v3141
        %v3143 = vpop.f32.mrb[0].mxu0
        %v3144 = vadd.f32 %v2840, %v3143
        %3145 = vmatprep.mubr.bf16.mxu0 0
        %3146 = vmatmul.mubr.bf16.gmra.mrb[0].mxu0 %v2829
        %v3147 = vpop.f32.mrb[0].mxu0
        %v3148 = vadd.f32 %v2836, %v3147
        %v3149 = vpop.f32.mrb[0].mxu0
        %v3150 = vadd.f32 %v2840, %v3149
        %v3151 = vpop.f32.mrb[0].mxu0
        %v3152 = vadd.f32 %v2836, %v3151
        %v3153 = vpop.f32.mrb[0].mxu0
        %v3154 = vadd.f32 %v2840, %v3153
        %3155 = vmatprep.mubr.bf16.mxu0 0
        %3156 = vmatmul.mubr.bf16.gmra.mrb[0].mxu0 %v2830
        %v3157 = vpop.f32.mrb[0].mxu0
        %v3158 = vadd.f32 %v2836, %v3157
        %v3159 = vpop.f32.mrb[0].mxu0
        %v3160 = vadd.f32 %v2840, %v3159
        %v3161 = vpop.f32.mrb[0].mxu0
        %v3162 = vadd.f32 %v2836, %v3161
        %v3163 = vpop.f32.mrb[0].mxu0
        %v3164 = vadd.f32 %v2840, %v3163
        %3165 = vdwg.mxu0
        %3166 = vmatprep.subr.bf16.mxu0 %v2952
        %3167 = vmatpush1.bf16.msra.mxu0 %v2951
        %3168 = vmatprep.subr.bf16.mxu0 %v2956
        %3169 = vmatpush1.bf16.msra.mxu0 %v2955
        %3170 = vmatprep.subr.bf16.mxu0 %v2960
        %3171 = vmatpush1.bf16.msra.mxu0 %v2959
        %3172 = vmatprep.subr.bf16.mxu0 %v2964
        %3173 = vmatpush1.bf16.msra.mxu0 %v2963
        %3174 = vmatprep.subr.bf16.mxu0 %v2968
        %3175 = vmatpush1.bf16.msra.mxu0 %v2967
        %3176 = vmatprep.subr.bf16.mxu0 %v2972
        %3177 = vmatpush1.bf16.msra.mxu0 %v2971
        %3178 = vmatprep.subr.bf16.mxu0 %v2976
        %3179 = vmatpush1.bf16.msra.mxu0 %v2975
        %3180 = vmatprep.subr.bf16.mxu0 %v2980
        %3181 = vmatpush1.bf16.msra.mxu0 %v2979
        %3182 = vmatprep.subr.bf16.mxu0 0
        %3183 = vmatpush1.bf16.msra.mxu0 0
        %3184 = vmatprep.subr.bf16.mxu0 0
        %3185 = vmatpush1.bf16.msra.mxu0 0
        %3186 = vmatprep.subr.bf16.mxu0 0
        %3187 = vmatpush1.bf16.msra.mxu0 0
        %3188 = vmatprep.subr.bf16.mxu0 0
        %3189 = vmatpush1.bf16.msra.mxu0 0
        %3190 = vmatprep.subr.bf16.mxu0 0
        %3191 = vmatpush1.bf16.msra.mxu0 0
        %3192 = vmatprep.subr.bf16.mxu0 0
        %3193 = vmatpush1.bf16.msra.mxu0 0
        %3194 = vmatprep.subr.bf16.mxu0 0
        %3195 = vmatpush1.bf16.msra.mxu0 0
        %3196 = vmatprep.subr.bf16.mxu0 0
        %3197 = vmatpush1.bf16.msra.mxu0 0
        %3198 = vmatprep.mubr.bf16.mxu0 0
        %3199 = vmatmul.mubr.bf16.gmra.mrb[0].mxu0 %v2819
        %v3200 = vpop.f32.mrb[0].mxu0
        %v3201 = vadd.f32 %v2844, %v3200
        %v3202 = vpop.f32.mrb[0].mxu0
        %v3203 = vadd.f32 %v2848, %v3202
        %v3204 = vpop.f32.mrb[0].mxu0
        %v3205 = vadd.f32 %v2844, %v3204
        %v3206 = vpop.f32.mrb[0].mxu0
        %v3207 = vadd.f32 %v2848, %v3206
        %3208 = vmatprep.mubr.bf16.mxu0 0
        %3209 = vmatmul.mubr.bf16.gmra.mrb[0].mxu0 %v2820
        %v3210 = vpop.f32.mrb[0].mxu0
        %v3211 = vadd.f32 %v2844, %v3210
        %v3212 = vpop.f32.mrb[0].mxu0
        %v3213 = vadd.f32 %v2848, %v3212
        %v3214 = vpop.f32.mrb[0].mxu0
        %v3215 = vadd.f32 %v2844, %v3214
        %v3216 = vpop.f32.mrb[0].mxu0
        %v3217 = vadd.f32 %v2848, %v3216
        %3218 = vmatprep.mubr.bf16.mxu0 0
        %3219 = vmatmul.mubr.bf16.gmra.mrb[0].mxu0 %v2821
        %v3220 = vpop.f32.mrb[0].mxu0
        %v3221 = vadd.f32 %v2844, %v3220
        %v3222 = vpop.f32.mrb[0].mxu0
        %v3223 = vadd.f32 %v2848, %v3222
        %v3224 = vpop.f32.mrb[0].mxu0
        %v3225 = vadd.f32 %v2844, %v3224
        %v3226 = vpop.f32.mrb[0].mxu0
        %v3227 = vadd.f32 %v2848, %v3226
        %3228 = vmatprep.mubr.bf16.mxu0 0
        %3229 = vmatmul.mubr.bf16.gmra.mrb[0].mxu0 %v2822
        %v3230 = vpop.f32.mrb[0].mxu0
        %v3231 = vadd.f32 %v2844, %v3230
        %v3232 = vpop.f32.mrb[0].mxu0
        %v3233 = vadd.f32 %v2848, %v3232
        %v3234 = vpop.f32.mrb[0].mxu0
        %v3235 = vadd.f32 %v2844, %v3234
        %v3236 = vpop.f32.mrb[0].mxu0
        %v3237 = vadd.f32 %v2848, %v3236
        %3238 = vmatprep.mubr.bf16.mxu0 0
        %3239 = vmatmul.mubr.bf16.gmra.mrb[0].mxu0 %v2823
        %v3240 = vpop.f32.mrb[0].mxu0
        %v3241 = vadd.f32 %v2844, %v3240
        %v3242 = vpop.f32.mrb[0].mxu0
        %v3243 = vadd.f32 %v2848, %v3242
        %v3244 = vpop.f32.mrb[0].mxu0
        %v3245 = vadd.f32 %v2844, %v3244
        %v3246 = vpop.f32.mrb[0].mxu0
        %v3247 = vadd.f32 %v2848, %v3246
        %3248 = vmatprep.mubr.bf16.mxu0 0
        %3249 = vmatmul.mubr.bf16.gmra.mrb[0].mxu0 %v2824
        %v3250 = vpop.f32.mrb[0].mxu0
        %v3251 = vadd.f32 %v2844, %v3250
        %v3252 = vpop.f32.mrb[0].mxu0
        %v3253 = vadd.f32 %v2848, %v3252
        %v3254 = vpop.f32.mrb[0].mxu0
        %v3255 = vadd.f32 %v2844, %v3254
        %v3256 = vpop.f32.mrb[0].mxu0
        %v3257 = vadd.f32 %v2848, %v3256
        %3258 = vmatprep.mubr.bf16.mxu0 0
        %3259 = vmatmul.mubr.bf16.gmra.mrb[0].mxu0 %v2825
        %v3260 = vpop.f32.mrb[0].mxu0
        %v3261 = vadd.f32 %v2844, %v3260
        %v3262 = vpop.f32.mrb[0].mxu0
        %v3263 = vadd.f32 %v2848, %v3262
        %v3264 = vpop.f32.mrb[0].mxu0
        %v3265 = vadd.f32 %v2844, %v3264
        %v3266 = vpop.f32.mrb[0].mxu0
        %v3267 = vadd.f32 %v2848, %v3266
        %3268 = vmatprep.mubr.bf16.mxu0 0
        %3269 = vmatmul.mubr.bf16.gmra.mrb[0].mxu0 %v2826
        %v3270 = vpop.f32.mrb[0].mxu0
        %v3271 = vadd.f32 %v2844, %v3270
        %v3272 = vpop.f32.mrb[0].mxu0
        %v3273 = vadd.f32 %v2848, %v3272
        %v3274 = vpop.f32.mrb[0].mxu0
        %v3275 = vadd.f32 %v2844, %v3274
        %v3276 = vpop.f32.mrb[0].mxu0
        %v3277 = vadd.f32 %v2848, %v3276
        %3278 = vmatprep.mubr.bf16.mxu0 0
        %3279 = vmatmul.mubr.bf16.gmra.mrb[0].mxu0 %v2827
        %v3280 = vpop.f32.mrb[0].mxu0
        %v3281 = vadd.f32 %v2844, %v3280
        %v3282 = vpop.f32.mrb[0].mxu0
        %v3283 = vadd.f32 %v2848, %v3282
        %v3284 = vpop.f32.mrb[0].mxu0
        %v3285 = vadd.f32 %v2844, %v3284
        %v3286 = vpop.f32.mrb[0].mxu0
        %v3287 = vadd.f32 %v2848, %v3286
        %3288 = vmatprep.mubr.bf16.mxu0 0
        %3289 = vmatmul.mubr.bf16.gmra.mrb[0].mxu0 %v2828
        %v3290 = vpop.f32.mrb[0].mxu0
        %v3291 = vadd.f32 %v2844, %v3290
        %v3292 = vpop.f32.mrb[0].mxu0
        %v3293 = vadd.f32 %v2848, %v3292
        %v3294 = vpop.f32.mrb[0].mxu0
        %v3295 = vadd.f32 %v2844, %v3294
        %v3296 = vpop.f32.mrb[0].mxu0
        %v3297 = vadd.f32 %v2848, %v3296
        %3298 = vmatprep.mubr.bf16.mxu0 0
        %3299 = vmatmul.mubr.bf16.gmra.mrb[0].mxu0 %v2829
        %v3300 = vpop.f32.mrb[0].mxu0
        %v3301 = vadd.f32 %v2844, %v3300
        %v3302 = vpop.f32.mrb[0].mxu0
        %v3303 = vadd.f32 %v2848, %v3302
        %v3304 = vpop.f32.mrb[0].mxu0
        %v3305 = vadd.f32 %v2844, %v3304
        %v3306 = vpop.f32.mrb[0].mxu0
        %v3307 = vadd.f32 %v2848, %v3306
        %3308 = vmatprep.mubr.bf16.mxu0 0
        %3309 = vmatmul.mubr.bf16.gmra.mrb[0].mxu0 %v2830
        %v3310 = vpop.f32.mrb[0].mxu0
        %v3311 = vadd.f32 %v2844, %v3310
        %v3312 = vpop.f32.mrb[0].mxu0
        %v3313 = vadd.f32 %v2848, %v3312
        %v3314 = vpop.f32.mrb[0].mxu0
        %v3315 = vadd.f32 %v2844, %v3314
        %v3316 = vpop.f32.mrb[0].mxu0
        %v3317 = vadd.f32 %v2848, %v3316
        %3318 = vdwg.mxu0
        %v3319 = vpack.c.bf16 %v3052, %v3048
        %v3320 = vpack.c.bf16 %v3054, %v3050
        %v3321 = vpack.c.bf16 %v3205, %v3201
        %v3322 = vpack.c.bf16 %v3207, %v3203
        %v3323 = vpack.c.bf16 %v3058, %v3058
        %v3324 = vpack.c.bf16 %v3060, %v3060
        %v3325 = vpack.c.bf16 %v3211, %v3211
        %v3326 = vpack.c.bf16 %v3213, %v3213
        %v3327 = vpack.c.bf16 %v3068, %v3062
        %v3328 = vpack.c.bf16 %v3070, %v3064
        %v3329 = vpack.c.bf16 %v3221, %v3215
        %v3330 = vpack.c.bf16 %v3223, %v3217
        %v3331 = vpack.c.bf16 %v3072, %v3072
        %v3332 = vpack.c.bf16 %v3074, %v3074
        %v3333 = vpack.c.bf16 %v3225, %v3225
        %v3334 = vpack.c.bf16 %v3227, %v3227
        %v3335 = vpack.c.bf16 %v3082, %v3078
        %v3336 = vpack.c.bf16 %v3084, %v3080
        %v3337 = vpack.c.bf16 %v3235, %v3231
        %v3338 = vpack.c.bf16 %v3237, %v3233
        %v3339 = vpack.c.bf16 %v3088, %v3088
        %v3340 = vpack.c.bf16 %v3090, %v3090
        %v3341 = vpack.c.bf16 %v3241, %v3241
        %v3342 = vpack.c.bf16 %v3243, %v3243
        %v3343 = vpack.c.bf16 %v3098, %v3092
        %v3344 = vpack.c.bf16 %v3100, %v3094
        %v3345 = vpack.c.bf16 %v3251, %v3245
        %v3346 = vpack.c.bf16 %v3253, %v3247
        %v3347 = vpack.c.bf16 %v3102, %v3102
        %v3348 = vpack.c.bf16 %v3104, %v3104
        %v3349 = vpack.c.bf16 %v3255, %v3255
        %v3350 = vpack.c.bf16 %v3257, %v3257
        %v3351 = vpack.c.bf16 %v3112, %v3108
        %v3352 = vpack.c.bf16 %v3114, %v3110
        %v3353 = vpack.c.bf16 %v3265, %v3261
        %v3354 = vpack.c.bf16 %v3267, %v3263
        %v3355 = vpack.c.bf16 %v3118, %v3118
        %v3356 = vpack.c.bf16 %v3120, %v3120
        %v3357 = vpack.c.bf16 %v3271, %v3271
        %v3358 = vpack.c.bf16 %v3273, %v3273
        %v3359 = vpack.c.bf16 %v3128, %v3122
        %v3360 = vpack.c.bf16 %v3130, %v3124
        %v3361 = vpack.c.bf16 %v3281, %v3275
        %v3362 = vpack.c.bf16 %v3283, %v3277
        %v3363 = vpack.c.bf16 %v3132, %v3132
        %v3364 = vpack.c.bf16 %v3134, %v3134
        %v3365 = vpack.c.bf16 %v3285, %v3285
        %v3366 = vpack.c.bf16 %v3287, %v3287
        %v3367 = vpack.c.bf16 %v3142, %v3138
        %v3368 = vpack.c.bf16 %v3144, %v3140
        %v3369 = vpack.c.bf16 %v3295, %v3291
        %v3370 = vpack.c.bf16 %v3297, %v3293
        %v3371 = vpack.c.bf16 %v3148, %v3148
        %v3372 = vpack.c.bf16 %v3150, %v3150
        %v3373 = vpack.c.bf16 %v3301, %v3301
        %v3374 = vpack.c.bf16 %v3303, %v3303
        %v3375 = vpack.c.bf16 %v3158, %v3152
        %v3376 = vpack.c.bf16 %v3160, %v3154
        %v3377 = vpack.c.bf16 %v3311, %v3305
        %v3378 = vpack.c.bf16 %v3313, %v3307
        %v3379 = vpack.c.bf16 %v3162, %v3162
        %v3380 = vpack.c.bf16 %v3164, %v3164
        %v3381 = vpack.c.bf16 %v3315, %v3315
        %v3382 = vpack.c.bf16 %v3317, %v3317
        %v3447 = vunpack.c.l.b16 %v3319
        %v3448 = vunpack.c.l.b16 %v3320
        %v3449 = vunpack.c.l.b16 %v3321
        %v3450 = vunpack.c.l.b16 %v3322
        %v3451 = vunpack.c.h.b16 %v3319
        %v3452 = vunpack.c.h.b16 %v3320
        %v3453 = vunpack.c.h.b16 %v3321
        %v3454 = vunpack.c.h.b16 %v3322
        %v3455 = vunpack.c.l.b16 %v3323
        %v3456 = vunpack.c.l.b16 %v3324
        %v3457 = vunpack.c.l.b16 %v3325
        %v3458 = vunpack.c.l.b16 %v3326
        %v3459 = vunpack.c.l.b16 %v3327
        %v3460 = vunpack.c.l.b16 %v3328
        %v3461 = vunpack.c.l.b16 %v3329
        %v3462 = vunpack.c.l.b16 %v3330
        %v3463 = vunpack.c.h.b16 %v3327
        %v3464 = vunpack.c.h.b16 %v3328
        %v3465 = vunpack.c.h.b16 %v3329
        %v3466 = vunpack.c.h.b16 %v3330
        %v3467 = vunpack.c.l.b16 %v3331
        %v3468 = vunpack.c.l.b16 %v3332
        %v3469 = vunpack.c.l.b16 %v3333
        %v3470 = vunpack.c.l.b16 %v3334
        %v3471 = vunpack.c.l.b16 %v3335
        %v3472 = vunpack.c.l.b16 %v3336
        %v3473 = vunpack.c.l.b16 %v3337
        %v3474 = vunpack.c.l.b16 %v3338
        %v3475 = vunpack.c.h.b16 %v3335
        %v3476 = vunpack.c.h.b16 %v3336
        %v3477 = vunpack.c.h.b16 %v3337
        %v3478 = vunpack.c.h.b16 %v3338
        %v3479 = vunpack.c.l.b16 %v3339
        %v3480 = vunpack.c.l.b16 %v3340
        %v3481 = vunpack.c.l.b16 %v3341
        %v3482 = vunpack.c.l.b16 %v3342
        %v3483 = vunpack.c.l.b16 %v3343
        %v3484 = vunpack.c.l.b16 %v3344
        %v3485 = vunpack.c.l.b16 %v3345
        %v3486 = vunpack.c.l.b16 %v3346
        %v3487 = vunpack.c.h.b16 %v3343
        %v3488 = vunpack.c.h.b16 %v3344
        %v3489 = vunpack.c.h.b16 %v3345
        %v3490 = vunpack.c.h.b16 %v3346
        %v3491 = vunpack.c.l.b16 %v3347
        %v3492 = vunpack.c.l.b16 %v3348
        %v3493 = vunpack.c.l.b16 %v3349
        %v3494 = vunpack.c.l.b16 %v3350
        %v3495 = vunpack.c.l.b16 %v3351
        %v3496 = vunpack.c.l.b16 %v3352
        %v3497 = vunpack.c.l.b16 %v3353
        %v3498 = vunpack.c.l.b16 %v3354
        %v3499 = vunpack.c.h.b16 %v3351
        %v3500 = vunpack.c.h.b16 %v3352
        %v3501 = vunpack.c.h.b16 %v3353
        %v3502 = vunpack.c.h.b16 %v3354
        %v3503 = vunpack.c.l.b16 %v3355
        %v3504 = vunpack.c.l.b16 %v3356
        %v3505 = vunpack.c.l.b16 %v3357
        %v3506 = vunpack.c.l.b16 %v3358
        %v3507 = vunpack.c.l.b16 %v3359
        %v3508 = vunpack.c.l.b16 %v3360
        %v3509 = vunpack.c.l.b16 %v3361
        %v3510 = vunpack.c.l.b16 %v3362
        %v3511 = vunpack.c.h.b16 %v3359
        %v3512 = vunpack.c.h.b16 %v3360
        %v3513 = vunpack.c.h.b16 %v3361
        %v3514 = vunpack.c.h.b16 %v3362
        %v3515 = vunpack.c.l.b16 %v3363
        %v3516 = vunpack.c.l.b16 %v3364
        %v3517 = vunpack.c.l.b16 %v3365
        %v3518 = vunpack.c.l.b16 %v3366
        %v3519 = vunpack.c.l.b16 %v3367
        %v3520 = vunpack.c.l.b16 %v3368
        %v3521 = vunpack.c.l.b16 %v3369
        %v3522 = vunpack.c.l.b16 %v3370
        %v3523 = vunpack.c.h.b16 %v3367
        %v3524 = vunpack.c.h.b16 %v3368
        %v3525 = vunpack.c.h.b16 %v3369
        %v3526 = vunpack.c.h.b16 %v3370
        %v3527 = vunpack.c.l.b16 %v3371
        %v3528 = vunpack.c.l.b16 %v3372
        %v3529 = vunpack.c.l.b16 %v3373
        %v3530 = vunpack.c.l.b16 %v3374
        %v3531 = vunpack.c.l.b16 %v3375
        %v3532 = vunpack.c.l.b16 %v3376
        %v3533 = vunpack.c.l.b16 %v3377
        %v3534 = vunpack.c.l.b16 %v3378
        %v3535 = vunpack.c.h.b16 %v3375
        %v3536 = vunpack.c.h.b16 %v3376
        %v3537 = vunpack.c.h.b16 %v3377
        %v3538 = vunpack.c.h.b16 %v3378
        %v3539 = vunpack.c.l.b16 %v3379
        %v3540 = vunpack.c.l.b16 %v3380
        %v3541 = vunpack.c.l.b16 %v3381
        %v3542 = vunpack.c.l.b16 %v3382
        %v3543 = vpack.c.b16 %v3448, %v3447
        %v3544 = vpack.c.b16 %v3450, %v3449
        %v3545 = vpack.c.b16 %v3452, %v3451
        %v3546 = vpack.c.b16 %v3454, %v3453
        %v3547 = vpack.c.b16 %v3456, %v3455
        %v3548 = vpack.c.b16 %v3458, %v3457
        %v3549 = vpack.c.b16 %v3460, %v3459
        %v3550 = vpack.c.b16 %v3462, %v3461
        %v3551 = vpack.c.b16 %v3464, %v3463
        %v3552 = vpack.c.b16 %v3466, %v3465
        %v3553 = vpack.c.b16 %v3468, %v3467
        %v3554 = vpack.c.b16 %v3470, %v3469
        %v3555 = vpack.c.b16 %v3472, %v3471
        %v3556 = vpack.c.b16 %v3474, %v3473
        %v3557 = vpack.c.b16 %v3476, %v3475
        %v3558 = vpack.c.b16 %v3478, %v3477
        %v3559 = vpack.c.b16 %v3480, %v3479
        %v3560 = vpack.c.b16 %v3482, %v3481
        %v3561 = vpack.c.b16 %v3484, %v3483
        %v3562 = vpack.c.b16 %v3486, %v3485
        %v3563 = vpack.c.b16 %v3488, %v3487
        %v3564 = vpack.c.b16 %v3490, %v3489
        %v3565 = vpack.c.b16 %v3492, %v3491
        %v3566 = vpack.c.b16 %v3494, %v3493
        %v3567 = vpack.c.b16 %v3496, %v3495
        %v3568 = vpack.c.b16 %v3498, %v3497
        %v3569 = vpack.c.b16 %v3500, %v3499
        %v3570 = vpack.c.b16 %v3502, %v3501
        %v3571 = vpack.c.b16 %v3504, %v3503
        %v3572 = vpack.c.b16 %v3506, %v3505
        %v3573 = vpack.c.b16 %v3508, %v3507
        %v3574 = vpack.c.b16 %v3510, %v3509
        %v3575 = vpack.c.b16 %v3512, %v3511
        %v3576 = vpack.c.b16 %v3514, %v3513
        %v3577 = vpack.c.b16 %v3516, %v3515
        %v3578 = vpack.c.b16 %v3518, %v3517
        %v3579 = vpack.c.b16 %v3520, %v3519
        %v3580 = vpack.c.b16 %v3522, %v3521
        %v3581 = vpack.c.b16 %v3524, %v3523
        %v3582 = vpack.c.b16 %v3526, %v3525
        %v3583 = vpack.c.b16 %v3528, %v3527
        %v3584 = vpack.c.b16 %v3530, %v3529
        %v3585 = vpack.c.b16 %v3532, %v3531
        %v3586 = vpack.c.b16 %v3534, %v3533
        %v3587 = vpack.c.b16 %v3536, %v3535
        %v3588 = vpack.c.b16 %v3538, %v3537
        %v3589 = vpack.c.b16 %v3540, %v3539
        %v3590 = vpack.c.b16 %v3542, %v3541
        %3639 = vst [vmem:[#allocation3] sm:$0xff] %v3543
        %3640 = vst [vmem:[#allocation3 + $0x8] sm:$0xff] %v3544
        %3641 = vst [vmem:[#allocation3 + $0x10] sm:$0xff] %v3545
        %3642 = vst [vmem:[#allocation3 + $0x18] sm:$0xff] %v3546
        %3643 = vst [vmem:[#allocation3 + $0x20] sm:$0xff] %v3547
        %3644 = vst [vmem:[#allocation3 + $0x28] sm:$0xff] %v3548
        %3645 = vst [vmem:[#allocation3 + $0x30] sm:$0xff] %v3549
        %3646 = vst [vmem:[#allocation3 + $0x38] sm:$0xff] %v3550
        %3647 = vst [vmem:[#allocation3 + $0x40] sm:$0xff] %v3551
        %3648 = vst [vmem:[#allocation3 + $0x48] sm:$0xff] %v3552
        %3649 = vst [vmem:[#allocation3 + $0x50] sm:$0xff] %v3553
        %3650 = vst [vmem:[#allocation3 + $0x58] sm:$0xff] %v3554
        %3651 = vst [vmem:[#allocation3 + $0x60] sm:$0xff] %v3555
        %3652 = vst [vmem:[#allocation3 + $0x68] sm:$0xff] %v3556
        %3653 = vst [vmem:[#allocation3 + $0x70] sm:$0xff] %v3557
        %3654 = vst [vmem:[#allocation3 + $0x78] sm:$0xff] %v3558
        %3655 = vst [vmem:[#allocation3 + $0x80] sm:$0xff] %v3559
        %3656 = vst [vmem:[#allocation3 + $0x88] sm:$0xff] %v3560
        %3657 = vst [vmem:[#allocation3 + $0x90] sm:$0xff] %v3561
        %3658 = vst [vmem:[#allocation3 + $0x98] sm:$0xff] %v3562
        %3659 = vst [vmem:[#allocation3 + $0xa0] sm:$0xff] %v3563
        %3660 = vst [vmem:[#allocation3 + $0xa8] sm:$0xff] %v3564
        %3661 = vst [vmem:[#allocation3 + $0xb0] sm:$0xff] %v3565
        %3662 = vst [vmem:[#allocation3 + $0xb8] sm:$0xff] %v3566
        %3663 = vst [vmem:[#allocation3 + $0xc0] sm:$0xff] %v3567
        %3664 = vst [vmem:[#allocation3 + $0xc8] sm:$0xff] %v3568
        %3665 = vst [vmem:[#allocation3 + $0xd0] sm:$0xff] %v3569
        %3666 = vst [vmem:[#allocation3 + $0xd8] sm:$0xff] %v3570
        %3667 = vst [vmem:[#allocation3 + $0xe0] sm:$0xff] %v3571
        %3668 = vst [vmem:[#allocation3 + $0xe8] sm:$0xff] %v3572
        %3669 = vst [vmem:[#allocation3 + $0xf0] sm:$0xff] %v3573
        %3670 = vst [vmem:[#allocation3 + $0xf8] sm:$0xff] %v3574
        %3671 = vst [vmem:[#allocation3 + $0x100] sm:$0xff] %v3575
        %3672 = vst [vmem:[#allocation3 + $0x108] sm:$0xff] %v3576
        %3673 = vst [vmem:[#allocation3 + $0x110] sm:$0xff] %v3577
        %3674 = vst [vmem:[#allocation3 + $0x118] sm:$0xff] %v3578
        %3675 = vst [vmem:[#allocation3 + $0x120] sm:$0xff] %v3579
        %3676 = vst [vmem:[#allocation3 + $0x128] sm:$0xff] %v3580
        %3677 = vst [vmem:[#allocation3 + $0x130] sm:$0xff] %v3581
        %3678 = vst [vmem:[#allocation3 + $0x138] sm:$0xff] %v3582
        %3679 = vst [vmem:[#allocation3 + $0x140] sm:$0xff] %v3583
        %3680 = vst [vmem:[#allocation3 + $0x148] sm:$0xff] %v3584
        %3681 = vst [vmem:[#allocation3 + $0x150] sm:$0xff] %v3585
        %3682 = vst [vmem:[#allocation3 + $0x158] sm:$0xff] %v3586
        %3683 = vst [vmem:[#allocation3 + $0x160] sm:$0xff] %v3587
        %3684 = vst [vmem:[#allocation3 + $0x168] sm:$0xff] %v3588
        %3685 = vst [vmem:[#allocation3 + $0x170] sm:$0xff] %v3589
        %3686 = vst [vmem:[#allocation3 + $0x178] sm:$0xff] %v3590
        %v3687 = vld [vmem:[%s35] sm:$0xff]
        %v3688 = vld [vmem:[%s35 + $0x8] sm:$0xff]
        %v3689 = vld [vmem:[%s35 + $0x10] sm:$0xff]
        %v3690 = vld [vmem:[%s35 + $0x18] sm:$0xff]
        %v3691 = vld [vmem:[%s35 + $0x20] sm:$0xff]
        %v3692 = vld [vmem:[%s35 + $0x28] sm:$0xff]
        %v3693 = vld [vmem:[%s35 + $0x30] sm:$0xff]
        %v3694 = vld [vmem:[%s35 + $0x38] sm:$0xff]
        %v3695 = vld [vmem:[%s35 + $0x40] sm:$0xff]
        %v3696 = vld [vmem:[%s35 + $0x48] sm:$0xff]
        %v3697 = vld [vmem:[%s35 + $0x50] sm:$0xff]
        %v3698 = vld [vmem:[%s35 + $0x58] sm:$0xff]
        %v3699 = vld [vmem:[%s35 + $0x60] sm:$0xff]
        %v3700 = vld [vmem:[%s35 + $0x68] sm:$0xff]
        %v3701 = vld [vmem:[%s35 + $0x70] sm:$0xff]
        %v3702 = vld [vmem:[%s35 + $0x78] sm:$0xff]
        %v3703 = vld [vmem:[%s35 + $0x80] sm:$0xff]
        %v3704 = vld [vmem:[%s35 + $0x88] sm:$0xff]
        %v3705 = vld [vmem:[%s35 + $0x90] sm:$0xff]
        %v3706 = vld [vmem:[%s35 + $0x98] sm:$0xff]
        %v3707 = vld [vmem:[%s35 + $0xa0] sm:$0xff]
        %v3708 = vld [vmem:[%s35 + $0xa8] sm:$0xff]
        %v3709 = vld [vmem:[%s35 + $0xb0] sm:$0xff]
        %v3710 = vld [vmem:[%s35 + $0xb8] sm:$0xff]
        %v3711 = vld [vmem:[%s35 + $0xc0] sm:$0xff]
        %v3712 = vld [vmem:[%s35 + $0xc8] sm:$0xff]
        %v3713 = vld [vmem:[%s35 + $0xd0] sm:$0xff]
        %v3714 = vld [vmem:[%s35 + $0xd8] sm:$0xff]
        %v3715 = vld [vmem:[%s35 + $0xe0] sm:$0xff]
        %v3716 = vld [vmem:[%s35 + $0xe8] sm:$0xff]
        %v3717 = vld [vmem:[%s35 + $0xf0] sm:$0xff]
        %v3718 = vld [vmem:[%s35 + $0xf8] sm:$0xff]
        %v3719 = vld [vmem:[#allocation4] sm:$0xff]
        %v3720 = vld [vmem:[#allocation4 + $0x8] sm:$0xff]
        %v3721 = vld [vmem:[#allocation4 + $0x10] sm:$0xff]
        %v3722 = vld [vmem:[#allocation5] sm:$0xff]
        %v3723 = vld [vmem:[#allocation5 + $0x8] sm:$0xff]
        %v3724 = vld [vmem:[#allocation5 + $0x10] sm:$0xff]
        %v3725 = vld [vmem:[#allocation3] sm:$0xff]
        %v3726 = vld [vmem:[#allocation3 + $0x8] sm:$0xff]
        %v3727 = vld [vmem:[#allocation3 + $0x10] sm:$0xff]
        %v3728 = vld [vmem:[#allocation3 + $0x18] sm:$0xff]
        %v3729 = vld [vmem:[#allocation3 + $0x20] sm:$0xff]
        %v3730 = vld [vmem:[#allocation3 + $0x28] sm:$0xff]
        %v3731 = vunpack.c.l.bf16 %v3725
        %v3732 = vunpack.c.h.bf16 %v3725
        %v3733 = vunpack.c.l.bf16 %v3726
        %v3734 = vunpack.c.h.bf16 %v3726
        %v3735 = vunpack.c.l.bf16 %v3727
        %v3736 = vunpack.c.h.bf16 %v3727
        %v3737 = vunpack.c.l.bf16 %v3728
        %v3738 = vunpack.c.h.bf16 %v3728
        %v3739 = vunpack.c.l.bf16 %v3729
        %v3740 = vunpack.c.h.bf16 %v3729
        %v3741 = vunpack.c.l.bf16 %v3730
        %v3742 = vunpack.c.h.bf16 %v3730
        %v3743 = vpack.c.bf16 %v3720, %v3719
        %v3744 = vpack.c.bf16 %v3721, %v3721
        %v3777 = vunpack.c.l.b16 %v3687
        %v3778 = vunpack.c.h.b16 %v3687
        %v3779 = vunpack.c.l.b16 %v3688
        %v3780 = vunpack.c.h.b16 %v3688
        %v3781 = vunpack.c.l.b16 %v3689
        %v3782 = vunpack.c.h.b16 %v3689
        %v3783 = vunpack.c.l.b16 %v3690
        %v3784 = vunpack.c.h.b16 %v3690
        %v3785 = vunpack.c.l.b16 %v3691
        %v3786 = vunpack.c.h.b16 %v3691
        %v3787 = vunpack.c.l.b16 %v3692
        %v3788 = vunpack.c.h.b16 %v3692
        %v3789 = vunpack.c.l.b16 %v3693
        %v3790 = vunpack.c.h.b16 %v3693
        %v3791 = vunpack.c.l.b16 %v3694
        %v3792 = vunpack.c.h.b16 %v3694
        %v3793 = vunpack.c.l.b16 %v3695
        %v3794 = vunpack.c.h.b16 %v3695
        %v3795 = vunpack.c.l.b16 %v3696
        %v3796 = vunpack.c.h.b16 %v3696
        %v3797 = vunpack.c.l.b16 %v3697
        %v3798 = vunpack.c.h.b16 %v3697
        %v3799 = vunpack.c.l.b16 %v3698
        %v3800 = vunpack.c.h.b16 %v3698
        %v3801 = vunpack.c.l.b16 %v3699
        %v3802 = vunpack.c.h.b16 %v3699
        %v3803 = vunpack.c.l.b16 %v3700
        %v3804 = vunpack.c.h.b16 %v3700
        %v3805 = vunpack.c.l.b16 %v3701
        %v3806 = vunpack.c.h.b16 %v3701
        %v3807 = vunpack.c.l.b16 %v3702
        %v3808 = vunpack.c.h.b16 %v3702
        %v3809 = vunpack.c.l.b16 %v3703
        %v3810 = vunpack.c.h.b16 %v3703
        %v3811 = vunpack.c.l.b16 %v3704
        %v3812 = vunpack.c.h.b16 %v3704
        %v3813 = vunpack.c.l.b16 %v3705
        %v3814 = vunpack.c.h.b16 %v3705
        %v3815 = vunpack.c.l.b16 %v3706
        %v3816 = vunpack.c.h.b16 %v3706
        %v3817 = vunpack.c.l.b16 %v3707
        %v3818 = vunpack.c.h.b16 %v3707
        %v3819 = vunpack.c.l.b16 %v3708
        %v3820 = vunpack.c.h.b16 %v3708
        %v3821 = vunpack.c.l.b16 %v3709
        %v3822 = vunpack.c.h.b16 %v3709
        %v3823 = vunpack.c.l.b16 %v3710
        %v3824 = vunpack.c.h.b16 %v3710
        %v3825 = vunpack.c.l.b16 %v3711
        %v3826 = vunpack.c.h.b16 %v3711
        %v3827 = vunpack.c.l.b16 %v3712
        %v3828 = vunpack.c.h.b16 %v3712
        %v3829 = vunpack.c.l.b16 %v3713
        %v3830 = vunpack.c.h.b16 %v3713
        %v3831 = vunpack.c.l.b16 %v3714
        %v3832 = vunpack.c.h.b16 %v3714
        %v3833 = vunpack.c.l.b16 %v3715
        %v3834 = vunpack.c.h.b16 %v3715
        %v3835 = vunpack.c.l.b16 %v3716
        %v3836 = vunpack.c.h.b16 %v3716
        %v3837 = vunpack.c.l.b16 %v3717
        %v3838 = vunpack.c.h.b16 %v3717
        %v3839 = vunpack.c.l.b16 %v3718
        %v3840 = vunpack.c.h.b16 %v3718
        %v3841 = vpack.c.b16 %v3781, %v3777
        %v3842 = vpack.c.b16 %v3782, %v3778
        %v3843 = vpack.c.b16 %v3783, %v3779
        %v3844 = vpack.c.b16 %v3784, %v3780
        %v3845 = vpack.c.b16 %v3789, %v3785
        %v3846 = vpack.c.b16 %v3790, %v3786
        %v3847 = vpack.c.b16 %v3791, %v3787
        %v3848 = vpack.c.b16 %v3792, %v3788
        %v3849 = vpack.c.b16 %v3797, %v3793
        %v3850 = vpack.c.b16 %v3798, %v3794
        %v3851 = vpack.c.b16 %v3799, %v3795
        %v3852 = vpack.c.b16 %v3800, %v3796
        %v3853 = vpack.c.b16 %v3805, %v3801
        %v3854 = vpack.c.b16 %v3806, %v3802
        %v3855 = vpack.c.b16 %v3807, %v3803
        %v3856 = vpack.c.b16 %v3808, %v3804
        %v3857 = vpack.c.b16 %v3813, %v3809
        %v3858 = vpack.c.b16 %v3814, %v3810
        %v3859 = vpack.c.b16 %v3815, %v3811
        %v3860 = vpack.c.b16 %v3816, %v3812
        %v3861 = vpack.c.b16 %v3821, %v3817
        %v3862 = vpack.c.b16 %v3822, %v3818
        %v3863 = vpack.c.b16 %v3823, %v3819
        %v3864 = vpack.c.b16 %v3824, %v3820
        %v3865 = vpack.c.b16 %v3829, %v3825
        %v3866 = vpack.c.b16 %v3830, %v3826
        %v3867 = vpack.c.b16 %v3831, %v3827
        %v3868 = vpack.c.b16 %v3832, %v3828
        %v3869 = vpack.c.b16 %v3837, %v3833
        %v3870 = vpack.c.b16 %v3838, %v3834
        %v3871 = vpack.c.b16 %v3839, %v3835
        %v3872 = vpack.c.b16 %v3840, %v3836
        %3905 = vmatprep.subr.bf16.mxu0 %v3842
        %3906 = vmatpush1.bf16.msra.mxu0 %v3841
        %3907 = vmatprep.subr.bf16.mxu0 %v3846
        %3908 = vmatpush1.bf16.msra.mxu0 %v3845
        %3909 = vmatprep.subr.bf16.mxu0 %v3850
        %3910 = vmatpush1.bf16.msra.mxu0 %v3849
        %3911 = vmatprep.subr.bf16.mxu0 %v3854
        %3912 = vmatpush1.bf16.msra.mxu0 %v3853
        %3913 = vmatprep.subr.bf16.mxu0 %v3858
        %3914 = vmatpush1.bf16.msra.mxu0 %v3857
        %3915 = vmatprep.subr.bf16.mxu0 %v3862
        %3916 = vmatpush1.bf16.msra.mxu0 %v3861
        %3917 = vmatprep.subr.bf16.mxu0 %v3866
        %3918 = vmatpush1.bf16.msra.mxu0 %v3865
        %3919 = vmatprep.subr.bf16.mxu0 %v3870
        %3920 = vmatpush1.bf16.msra.mxu0 %v3869
        %3921 = vmatprep.subr.bf16.mxu0 0
        %3922 = vmatpush1.bf16.msra.mxu0 0
        %3923 = vmatprep.subr.bf16.mxu0 0
        %3924 = vmatpush1.bf16.msra.mxu0 0
        %3925 = vmatprep.subr.bf16.mxu0 0
        %3926 = vmatpush1.bf16.msra.mxu0 0
        %3927 = vmatprep.subr.bf16.mxu0 0
        %3928 = vmatpush1.bf16.msra.mxu0 0
        %3929 = vmatprep.subr.bf16.mxu0 0
        %3930 = vmatpush1.bf16.msra.mxu0 0
        %3931 = vmatprep.subr.bf16.mxu0 0
        %3932 = vmatpush1.bf16.msra.mxu0 0
        %3933 = vmatprep.subr.bf16.mxu0 0
        %3934 = vmatpush1.bf16.msra.mxu0 0
        %3935 = vmatprep.subr.bf16.mxu0 0
        %3936 = vmatpush1.bf16.msra.mxu0 0
        %3937 = vmatprep.mubr.bf16.mxu0 0
        %3938 = vmatmul.mubr.bf16.gmra.mrb[0].mxu0 %v3743
        %v3939 = vpop.f32.mrb[0].mxu0
        %v3940 = vadd.f32 0.0, %v3939
        %v3941 = vpop.f32.mrb[0].mxu0
        %v3942 = vadd.f32 0.0, %v3941
        %v3943 = vpop.f32.mrb[0].mxu0
        %v3944 = vadd.f32 0.0, %v3943
        %v3945 = vpop.f32.mrb[0].mxu0
        %v3946 = vadd.f32 0.0, %v3945
        %3947 = vmatprep.mubr.bf16.mxu0 0
        %3948 = vmatmul.mubr.bf16.gmra.mrb[0].mxu0 %v3744
        %v3949 = vpop.f32.mrb[0].mxu0
        %v3950 = vadd.f32 0.0, %v3949
        %v3951 = vpop.f32.mrb[0].mxu0
        %v3952 = vadd.f32 0.0, %v3951
        %v3953 = vpop.f32.mrb[0].mxu0
        %v3954 = vpop.f32.mrb[0].mxu0
        %3955 = vdwg.mxu0
        %3956 = vmatprep.subr.bf16.mxu0 %v3844
        %3957 = vmatpush1.bf16.msra.mxu0 %v3843
        %3958 = vmatprep.subr.bf16.mxu0 %v3848
        %3959 = vmatpush1.bf16.msra.mxu0 %v3847
        %3960 = vmatprep.subr.bf16.mxu0 %v3852
        %3961 = vmatpush1.bf16.msra.mxu0 %v3851
        %3962 = vmatprep.subr.bf16.mxu0 %v3856
        %3963 = vmatpush1.bf16.msra.mxu0 %v3855
        %3964 = vmatprep.subr.bf16.mxu0 %v3860
        %3965 = vmatpush1.bf16.msra.mxu0 %v3859
        %3966 = vmatprep.subr.bf16.mxu0 %v3864
        %3967 = vmatpush1.bf16.msra.mxu0 %v3863
        %3968 = vmatprep.subr.bf16.mxu0 %v3868
        %3969 = vmatpush1.bf16.msra.mxu0 %v3867
        %3970 = vmatprep.subr.bf16.mxu0 %v3872
        %3971 = vmatpush1.bf16.msra.mxu0 %v3871
        %3972 = vmatprep.subr.bf16.mxu0 0
        %3973 = vmatpush1.bf16.msra.mxu0 0
        %3974 = vmatprep.subr.bf16.mxu0 0
        %3975 = vmatpush1.bf16.msra.mxu0 0
        %3976 = vmatprep.subr.bf16.mxu0 0
        %3977 = vmatpush1.bf16.msra.mxu0 0
        %3978 = vmatprep.subr.bf16.mxu0 0
        %3979 = vmatpush1.bf16.msra.mxu0 0
        %3980 = vmatprep.subr.bf16.mxu0 0
        %3981 = vmatpush1.bf16.msra.mxu0 0
        %3982 = vmatprep.subr.bf16.mxu0 0
        %3983 = vmatpush1.bf16.msra.mxu0 0
        %3984 = vmatprep.subr.bf16.mxu0 0
        %3985 = vmatpush1.bf16.msra.mxu0 0
        %3986 = vmatprep.subr.bf16.mxu0 0
        %3987 = vmatpush1.bf16.msra.mxu0 0
        %3988 = vmatprep.mubr.bf16.mxu0 0
        %3989 = vmatmul.mubr.bf16.gmra.mrb[0].mxu0 %v3743
        %v3990 = vpop.f32.mrb[0].mxu0
        %v3991 = vadd.f32 0.0, %v3990
        %v3992 = vpop.f32.mrb[0].mxu0
        %v3993 = vadd.f32 0.0, %v3992
        %v3994 = vpop.f32.mrb[0].mxu0
        %v3995 = vadd.f32 0.0, %v3994
        %v3996 = vpop.f32.mrb[0].mxu0
        %v3997 = vadd.f32 0.0, %v3996
        %3998 = vmatprep.mubr.bf16.mxu0 0
        %3999 = vmatmul.mubr.bf16.gmra.mrb[0].mxu0 %v3744
        %v4000 = vpop.f32.mrb[0].mxu0
        %v4001 = vadd.f32 0.0, %v4000
        %v4002 = vpop.f32.mrb[0].mxu0
        %v4003 = vadd.f32 0.0, %v4002
        %v4004 = vpop.f32.mrb[0].mxu0
        %v4005 = vpop.f32.mrb[0].mxu0
        %4006 = vdwg.mxu0
        %v4007 = vadd.f32 %v3731, %v3940
        %v4008 = vadd.f32 %v3732, %v3942
        %v4009 = vadd.f32 %v3733, %v3991
        %v4010 = vadd.f32 %v3734, %v3993
        %v4011 = vadd.f32 %v3735, %v3944
        %v4012 = vadd.f32 %v3736, %v3946
        %v4013 = vadd.f32 %v3737, %v3995
        %v4014 = vadd.f32 %v3738, %v3997
        %v4015 = vadd.f32 %v3739, %v3950
        %v4016 = vadd.f32 %v3740, %v3952
        %v4017 = vadd.f32 %v3741, %v4001
        %v4018 = vadd.f32 %v3742, %v4003
        %v4019 = vxor.u32 %v4007, 2147483648
        %v4020 = vxor.u32 %v4011, 2147483648
        %v4021 = vxor.u32 %v4015, 2147483648
        %v4022 = vmul.f32 %v4019, 1.442695
        %v4023 = vpow.pop %v4022
        %v4024 = vmul.f32 %v4020, 1.442695
        %v4025 = vpow.pop %v4024
        %v4026 = vmul.f32 %v4021, 1.442695
        %v4027 = vpow.pop %v4026
        %v4028 = vadd.f32 %v4023, 1.0
        %v4029 = vadd.f32 %v4025, 1.0
        %v4030 = vadd.f32 %v4027, 1.0
        %v4031 = vrcp.pop %v4028
        %v4032 = vmul.f32 1.0, %v4031
        %v4033 = vrcp.pop %v4029
        %v4034 = vmul.f32 1.0, %v4033
        %v4035 = vrcp.pop %v4030
        %v4036 = vmul.f32 1.0, %v4035
        %v4037 = vxor.u32 %v4008, 2147483648
        %v4038 = vxor.u32 %v4012, 2147483648
        %v4039 = vxor.u32 %v4016, 2147483648
        %v4040 = vmul.f32 %v4037, 1.442695
        %v4041 = vpow.pop %v4040
        %v4042 = vmul.f32 %v4038, 1.442695
        %v4043 = vpow.pop %v4042
        %v4044 = vmul.f32 %v4039, 1.442695
        %v4045 = vpow.pop %v4044
        %v4046 = vadd.f32 %v4041, 1.0
        %v4047 = vadd.f32 %v4043, 1.0
        %v4048 = vadd.f32 %v4045, 1.0
        %v4049 = vrcp.pop %v4046
        %v4050 = vmul.f32 1.0, %v4049
        %v4051 = vrcp.pop %v4047
        %v4052 = vmul.f32 1.0, %v4051
        %v4053 = vrcp.pop %v4048
        %v4054 = vmul.f32 1.0, %v4053
        %v4055 = vtanh.pop %v4009
        %v4056 = vtanh.pop %v4013
        %v4057 = vtanh.pop %v4017
        %v4058 = vxor.u32 %v4010, 2147483648
        %v4059 = vxor.u32 %v4014, 2147483648
        %v4060 = vxor.u32 %v4018, 2147483648
        %v4061 = vmul.f32 %v4058, 1.442695
        %v4062 = vpow.pop %v4061
        %v4063 = vmul.f32 %v4059, 1.442695
        %v4064 = vpow.pop %v4063
        %v4065 = vmul.f32 %v4060, 1.442695
        %v4066 = vpow.pop %v4065
        %v4067 = vadd.f32 %v4062, 1.0
        %v4068 = vadd.f32 %v4064, 1.0
        %v4069 = vadd.f32 %v4066, 1.0
        %v4070 = vrcp.pop %v4067
        %v4071 = vmul.f32 1.0, %v4070
        %v4072 = vrcp.pop %v4068
        %v4073 = vmul.f32 1.0, %v4072
        %v4074 = vrcp.pop %v4069
        %v4075 = vmul.f32 1.0, %v4074
        %v4076 = vmul.f32 %v4050, %v3722
        %v4077 = vmul.f32 %v4052, %v3723
        %v4078 = vmul.f32 %v4054, %v3724
        %v4079 = vmul.f32 %v4032, %v4055
        %v4080 = vmul.f32 %v4034, %v4056
        %v4081 = vmul.f32 %v4036, %v4057
        %v4082 = vadd.f32 %v4076, %v4079
        %v4083 = vadd.f32 %v4077, %v4080
        %v4084 = vadd.f32 %v4078, %v4081
        %v4085 = vtanh.pop %v4082
        %v4086 = vtanh.pop %v4083
        %v4087 = vtanh.pop %v4084
        %v4088 = vmul.f32 %v4071, %v4085
        %v4089 = vmul.f32 %v4073, %v4086
        %v4090 = vmul.f32 %v4075, %v4087
        %4091 = vst [vmem:[#allocation4] sm:$0xff] %v4088
        %4092 = vst [vmem:[#allocation4 + $0x8] sm:$0xff] %v4089
        %4093 = vst [vmem:[#allocation4 + $0x10] sm:$0xff] %v4090
        %4094 = vst [vmem:[#allocation5] sm:$0xff] %v4082
        %4095 = vst [vmem:[#allocation5 + $0x8] sm:$0xff] %v4083
        %4096 = vst [vmem:[#allocation5 + $0x10] sm:$0xff] %v4084
        %4097 = vst [vmem:[%s1039] sm:$0xff] %v4088
        %4098 = vst [vmem:[%s1039 + $0x8] sm:$0xff] %v4089
        %4099 = vst [vmem:[%s1039 + $0x10] sm:$0xff] %v4090
        %v4100 = vld [vmem:[#allocation4] sm:$0xff]
        %v4101 = vld [vmem:[#allocation4 + $0x8] sm:$0xff]
        %v4102 = vld [vmem:[#allocation4 + $0x10] sm:$0xff]
        %v4103 = vld [vmem:[#allocation5] sm:$0xff]
        %v4104 = vld [vmem:[#allocation5 + $0x8] sm:$0xff]
        %v4105 = vld [vmem:[#allocation5 + $0x10] sm:$0xff]
        %s4106 = scalar_lea.vmem [#allocation3], 48
        %v4107 = vld [vmem:[%s4106] sm:$0xff]
        %v4108 = vld [vmem:[%s4106 + $0x8] sm:$0xff]
        %v4109 = vld [vmem:[%s4106 + $0x10] sm:$0xff]
        %v4110 = vld [vmem:[%s4106 + $0x18] sm:$0xff]
        %v4111 = vld [vmem:[%s4106 + $0x20] sm:$0xff]
        %v4112 = vld [vmem:[%s4106 + $0x28] sm:$0xff]
        %v4113 = vunpack.c.l.bf16 %v4107
        %v4114 = vunpack.c.h.bf16 %v4107
        %v4115 = vunpack.c.l.bf16 %v4108
        %v4116 = vunpack.c.h.bf16 %v4108
        %v4117 = vunpack.c.l.bf16 %v4109
        %v4118 = vunpack.c.h.bf16 %v4109
        %v4119 = vunpack.c.l.bf16 %v4110
        %v4120 = vunpack.c.h.bf16 %v4110
        %v4121 = vunpack.c.l.bf16 %v4111
        %v4122 = vunpack.c.h.bf16 %v4111
        %v4123 = vunpack.c.l.bf16 %v4112
        %v4124 = vunpack.c.h.bf16 %v4112
        %v4125 = vpack.c.bf16 %v4101, %v4100
        %v4126 = vpack.c.bf16 %v4102, %v4102
        %4127 = vmatprep.subr.bf16.mxu0 %v3842
        %4128 = vmatpush1.bf16.msra.mxu0 %v3841
        %4129 = vmatprep.subr.bf16.mxu0 %v3846
        %4130 = vmatpush1.bf16.msra.mxu0 %v3845
        %4131 = vmatprep.subr.bf16.mxu0 %v3850
        %4132 = vmatpush1.bf16.msra.mxu0 %v3849
        %4133 = vmatprep.subr.bf16.mxu0 %v3854
        %4134 = vmatpush1.bf16.msra.mxu0 %v3853
        %4135 = vmatprep.subr.bf16.mxu0 %v3858
        %4136 = vmatpush1.bf16.msra.mxu0 %v3857
        %4137 = vmatprep.subr.bf16.mxu0 %v3862
        %4138 = vmatpush1.bf16.msra.mxu0 %v3861
        %4139 = vmatprep.subr.bf16.mxu0 %v3866
        %4140 = vmatpush1.bf16.msra.mxu0 %v3865
        %4141 = vmatprep.subr.bf16.mxu0 %v3870
        %4142 = vmatpush1.bf16.msra.mxu0 %v3869
        %4143 = vmatprep.subr.bf16.mxu0 0
        %4144 = vmatpush1.bf16.msra.mxu0 0
        %4145 = vmatprep.subr.bf16.mxu0 0
        %4146 = vmatpush1.bf16.msra.mxu0 0
        %4147 = vmatprep.subr.bf16.mxu0 0
        %4148 = vmatpush1.bf16.msra.mxu0 0
        %4149 = vmatprep.subr.bf16.mxu0 0
        %4150 = vmatpush1.bf16.msra.mxu0 0
        %4151 = vmatprep.subr.bf16.mxu0 0
        %4152 = vmatpush1.bf16.msra.mxu0 0
        %4153 = vmatprep.subr.bf16.mxu0 0
        %4154 = vmatpush1.bf16.msra.mxu0 0
        %4155 = vmatprep.subr.bf16.mxu0 0
        %4156 = vmatpush1.bf16.msra.mxu0 0
        %4157 = vmatprep.subr.bf16.mxu0 0
        %4158 = vmatpush1.bf16.msra.mxu0 0
        %4159 = vmatprep.mubr.bf16.mxu0 0
        %4160 = vmatmul.mubr.bf16.gmra.mrb[0].mxu0 %v4125
        %v4161 = vpop.f32.mrb[0].mxu0
        %v4162 = vadd.f32 0.0, %v4161
        %v4163 = vpop.f32.mrb[0].mxu0
        %v4164 = vadd.f32 0.0, %v4163
        %v4165 = vpop.f32.mrb[0].mxu0
        %v4166 = vadd.f32 0.0, %v4165
        %v4167 = vpop.f32.mrb[0].mxu0
        %v4168 = vadd.f32 0.0, %v4167
        %4169 = vmatprep.mubr.bf16.mxu0 0
        %4170 = vmatmul.mubr.bf16.gmra.mrb[0].mxu0 %v4126
        %v4171 = vpop.f32.mrb[0].mxu0
        %v4172 = vadd.f32 0.0, %v4171
        %v4173 = vpop.f32.mrb[0].mxu0
        %v4174 = vadd.f32 0.0, %v4173
        %v4175 = vpop.f32.mrb[0].mxu0
        %v4176 = vpop.f32.mrb[0].mxu0
        %4177 = vdwg.mxu0
        %4178 = vmatprep.subr.bf16.mxu0 %v3844
        %4179 = vmatpush1.bf16.msra.mxu0 %v3843
        %4180 = vmatprep.subr.bf16.mxu0 %v3848
        %4181 = vmatpush1.bf16.msra.mxu0 %v3847
        %4182 = vmatprep.subr.bf16.mxu0 %v3852
        %4183 = vmatpush1.bf16.msra.mxu0 %v3851
        %4184 = vmatprep.subr.bf16.mxu0 %v3856
        %4185 = vmatpush1.bf16.msra.mxu0 %v3855
        %4186 = vmatprep.subr.bf16.mxu0 %v3860
        %4187 = vmatpush1.bf16.msra.mxu0 %v3859
        %4188 = vmatprep.subr.bf16.mxu0 %v3864
        %4189 = vmatpush1.bf16.msra.mxu0 %v3863
        %4190 = vmatprep.subr.bf16.mxu0 %v3868
        %4191 = vmatpush1.bf16.msra.mxu0 %v3867
        %4192 = vmatprep.subr.bf16.mxu0 %v3872
        %4193 = vmatpush1.bf16.msra.mxu0 %v3871
        %4194 = vmatprep.subr.bf16.mxu0 0
        %4195 = vmatpush1.bf16.msra.mxu0 0
        %4196 = vmatprep.subr.bf16.mxu0 0
        %4197 = vmatpush1.bf16.msra.mxu0 0
        %4198 = vmatprep.subr.bf16.mxu0 0
        %4199 = vmatpush1.bf16.msra.mxu0 0
        %4200 = vmatprep.subr.bf16.mxu0 0
        %4201 = vmatpush1.bf16.msra.mxu0 0
        %4202 = vmatprep.subr.bf16.mxu0 0
        %4203 = vmatpush1.bf16.msra.mxu0 0
        %4204 = vmatprep.subr.bf16.mxu0 0
        %4205 = vmatpush1.bf16.msra.mxu0 0
        %4206 = vmatprep.subr.bf16.mxu0 0
        %4207 = vmatpush1.bf16.msra.mxu0 0
        %4208 = vmatprep.subr.bf16.mxu0 0
        %4209 = vmatpush1.bf16.msra.mxu0 0
        %4210 = vmatprep.mubr.bf16.mxu0 0
        %4211 = vmatmul.mubr.bf16.gmra.mrb[0].mxu0 %v4125
        %v4212 = vpop.f32.mrb[0].mxu0
        %v4213 = vadd.f32 0.0, %v4212
        %v4214 = vpop.f32.mrb[0].mxu0
        %v4215 = vadd.f32 0.0, %v4214
        %v4216 = vpop.f32.mrb[0].mxu0
        %v4217 = vadd.f32 0.0, %v4216
        %v4218 = vpop.f32.mrb[0].mxu0
        %v4219 = vadd.f32 0.0, %v4218
        %4220 = vmatprep.mubr.bf16.mxu0 0
        %4221 = vmatmul.mubr.bf16.gmra.mrb[0].mxu0 %v4126
        %v4222 = vpop.f32.mrb[0].mxu0
        %v4223 = vadd.f32 0.0, %v4222
        %v4224 = vpop.f32.mrb[0].mxu0
        %v4225 = vadd.f32 0.0, %v4224
        %v4226 = vpop.f32.mrb[0].mxu0
        %v4227 = vpop.f32.mrb[0].mxu0
        %4228 = vdwg.mxu0
        %v4229 = vadd.f32 %v4113, %v4162
        %v4230 = vadd.f32 %v4114, %v4164
        %v4231 = vadd.f32 %v4115, %v4213
        %v4232 = vadd.f32 %v4116, %v4215
        %v4233 = vadd.f32 %v4117, %v4166
        %v4234 = vadd.f32 %v4118, %v4168
        %v4235 = vadd.f32 %v4119, %v4217
        %v4236 = vadd.f32 %v4120, %v4219
        %v4237 = vadd.f32 %v4121, %v4172
        %v4238 = vadd.f32 %v4122, %v4174
        %v4239 = vadd.f32 %v4123, %v4223
        %v4240 = vadd.f32 %v4124, %v4225
        %v4241 = vxor.u32 %v4229, 2147483648
        %v4242 = vxor.u32 %v4233, 2147483648
        %v4243 = vxor.u32 %v4237, 2147483648
        %v4244 = vmul.f32 %v4241, 1.442695
        %v4245 = vpow.pop %v4244
        %v4246 = vmul.f32 %v4242, 1.442695
        %v4247 = vpow.pop %v4246
        %v4248 = vmul.f32 %v4243, 1.442695
        %v4249 = vpow.pop %v4248
        %v4250 = vadd.f32 %v4245, 1.0
        %v4251 = vadd.f32 %v4247, 1.0
        %v4252 = vadd.f32 %v4249, 1.0
        %v4253 = vrcp.pop %v4250
        %v4254 = vmul.f32 1.0, %v4253
        %v4255 = vrcp.pop %v4251
        %v4256 = vmul.f32 1.0, %v4255
        %v4257 = vrcp.pop %v4252
        %v4258 = vmul.f32 1.0, %v4257
        %v4259 = vxor.u32 %v4230, 2147483648
        %v4260 = vxor.u32 %v4234, 2147483648
        %v4261 = vxor.u32 %v4238, 2147483648
        %v4262 = vmul.f32 %v4259, 1.442695
        %v4263 = vpow.pop %v4262
        %v4264 = vmul.f32 %v4260, 1.442695
        %v4265 = vpow.pop %v4264
        %v4266 = vmul.f32 %v4261, 1.442695
        %v4267 = vpow.pop %v4266
        %v4268 = vadd.f32 %v4263, 1.0
        %v4269 = vadd.f32 %v4265, 1.0
        %v4270 = vadd.f32 %v4267, 1.0
        %v4271 = vrcp.pop %v4268
        %v4272 = vmul.f32 1.0, %v4271
        %v4273 = vrcp.pop %v4269
        %v4274 = vmul.f32 1.0, %v4273
        %v4275 = vrcp.pop %v4270
        %v4276 = vmul.f32 1.0, %v4275
        %v4277 = vtanh.pop %v4231
        %v4278 = vtanh.pop %v4235
        %v4279 = vtanh.pop %v4239
        %v4280 = vxor.u32 %v4232, 2147483648
        %v4281 = vxor.u32 %v4236, 2147483648
        %v4282 = vxor.u32 %v4240, 2147483648
        %v4283 = vmul.f32 %v4280, 1.442695
        %v4284 = vpow.pop %v4283
        %v4285 = vmul.f32 %v4281, 1.442695
        %v4286 = vpow.pop %v4285
        %v4287 = vmul.f32 %v4282, 1.442695
        %v4288 = vpow.pop %v4287
        %v4289 = vadd.f32 %v4284, 1.0
        %v4290 = vadd.f32 %v4286, 1.0
        %v4291 = vadd.f32 %v4288, 1.0
        %v4292 = vrcp.pop %v4289
        %v4293 = vmul.f32 1.0, %v4292
        %v4294 = vrcp.pop %v4290
        %v4295 = vmul.f32 1.0, %v4294
        %v4296 = vrcp.pop %v4291
        %v4297 = vmul.f32 1.0, %v4296
        %v4298 = vmul.f32 %v4272, %v4103
        %v4299 = vmul.f32 %v4274, %v4104
        %v4300 = vmul.f32 %v4276, %v4105
        %v4301 = vmul.f32 %v4254, %v4277
        %v4302 = vmul.f32 %v4256, %v4278
        %v4303 = vmul.f32 %v4258, %v4279
        %v4304 = vadd.f32 %v4298, %v4301
        %v4305 = vadd.f32 %v4299, %v4302
        %v4306 = vadd.f32 %v4300, %v4303
        %v4307 = vtanh.pop %v4304
        %v4308 = vtanh.pop %v4305
        %v4309 = vtanh.pop %v4306
        %v4310 = vmul.f32 %v4293, %v4307
        %v4311 = vmul.f32 %v4295, %v4308
        %v4312 = vmul.f32 %v4297, %v4309
        %4313 = vst [vmem:[#allocation4] sm:$0xff] %v4310
        %4314 = vst [vmem:[#allocation4 + $0x8] sm:$0xff] %v4311
        %4315 = vst [vmem:[#allocation4 + $0x10] sm:$0xff] %v4312
        %4316 = vst [vmem:[#allocation5] sm:$0xff] %v4304
        %4317 = vst [vmem:[#allocation5 + $0x8] sm:$0xff] %v4305
        %4318 = vst [vmem:[#allocation5 + $0x10] sm:$0xff] %v4306
        %s4319 = scalar_lea.vmem %s1039, 24 [#allocation7]
        %4320 = vst [vmem:[%s4319] sm:$0xff] %v4310
        %4321 = vst [vmem:[%s4319 + $0x8] sm:$0xff] %v4311
        %4322 = vst [vmem:[%s4319 + $0x10] sm:$0xff] %v4312
        %v4323 = vld [vmem:[#allocation4] sm:$0xff]
        %v4324 = vld [vmem:[#allocation4 + $0x8] sm:$0xff]
        %v4325 = vld [vmem:[#allocation4 + $0x10] sm:$0xff]
        %v4326 = vld [vmem:[#allocation5] sm:$0xff]
        %v4327 = vld [vmem:[#allocation5 + $0x8] sm:$0xff]
        %v4328 = vld [vmem:[#allocation5 + $0x10] sm:$0xff]
        %s4329 = scalar_lea.vmem [#allocation3], 96
        %v4330 = vld [vmem:[%s4329] sm:$0xff]
        %v4331 = vld [vmem:[%s4329 + $0x8] sm:$0xff]
        %v4332 = vld [vmem:[%s4329 + $0x10] sm:$0xff]
        %v4333 = vld [vmem:[%s4329 + $0x18] sm:$0xff]
        %v4334 = vld [vmem:[%s4329 + $0x20] sm:$0xff]
        %v4335 = vld [vmem:[%s4329 + $0x28] sm:$0xff]
        %v4336 = vunpack.c.l.bf16 %v4330
        %v4337 = vunpack.c.h.bf16 %v4330
        %v4338 = vunpack.c.l.bf16 %v4331
        %v4339 = vunpack.c.h.bf16 %v4331
        %v4340 = vunpack.c.l.bf16 %v4332
        %v4341 = vunpack.c.h.bf16 %v4332
        %v4342 = vunpack.c.l.bf16 %v4333
        %v4343 = vunpack.c.h.bf16 %v4333
        %v4344 = vunpack.c.l.bf16 %v4334
        %v4345 = vunpack.c.h.bf16 %v4334
        %v4346 = vunpack.c.l.bf16 %v4335
        %v4347 = vunpack.c.h.bf16 %v4335
        %v4348 = vpack.c.bf16 %v4324, %v4323
        %v4349 = vpack.c.bf16 %v4325, %v4325
        %4350 = vmatprep.subr.bf16.mxu0 %v3842
        %4351 = vmatpush1.bf16.msra.mxu0 %v3841
        %4352 = vmatprep.subr.bf16.mxu0 %v3846
        %4353 = vmatpush1.bf16.msra.mxu0 %v3845
        %4354 = vmatprep.subr.bf16.mxu0 %v3850
        %4355 = vmatpush1.bf16.msra.mxu0 %v3849
        %4356 = vmatprep.subr.bf16.mxu0 %v3854
        %4357 = vmatpush1.bf16.msra.mxu0 %v3853
        %4358 = vmatprep.subr.bf16.mxu0 %v3858
        %4359 = vmatpush1.bf16.msra.mxu0 %v3857
        %4360 = vmatprep.subr.bf16.mxu0 %v3862
        %4361 = vmatpush1.bf16.msra.mxu0 %v3861
        %4362 = vmatprep.subr.bf16.mxu0 %v3866
        %4363 = vmatpush1.bf16.msra.mxu0 %v3865
        %4364 = vmatprep.subr.bf16.mxu0 %v3870
        %4365 = vmatpush1.bf16.msra.mxu0 %v3869
        %4366 = vmatprep.subr.bf16.mxu0 0
        %4367 = vmatpush1.bf16.msra.mxu0 0
        %4368 = vmatprep.subr.bf16.mxu0 0
        %4369 = vmatpush1.bf16.msra.mxu0 0
        %4370 = vmatprep.subr.bf16.mxu0 0
        %4371 = vmatpush1.bf16.msra.mxu0 0
        %4372 = vmatprep.subr.bf16.mxu0 0
        %4373 = vmatpush1.bf16.msra.mxu0 0
        %4374 = vmatprep.subr.bf16.mxu0 0
        %4375 = vmatpush1.bf16.msra.mxu0 0
        %4376 = vmatprep.subr.bf16.mxu0 0
        %4377 = vmatpush1.bf16.msra.mxu0 0
        %4378 = vmatprep.subr.bf16.mxu0 0
        %4379 = vmatpush1.bf16.msra.mxu0 0
        %4380 = vmatprep.subr.bf16.mxu0 0
        %4381 = vmatpush1.bf16.msra.mxu0 0
        %4382 = vmatprep.mubr.bf16.mxu0 0
        %4383 = vmatmul.mubr.bf16.gmra.mrb[0].mxu0 %v4348
        %v4384 = vpop.f32.mrb[0].mxu0
        %v4385 = vadd.f32 0.0, %v4384
        %v4386 = vpop.f32.mrb[0].mxu0
        %v4387 = vadd.f32 0.0, %v4386
        %v4388 = vpop.f32.mrb[0].mxu0
        %v4389 = vadd.f32 0.0, %v4388
        %v4390 = vpop.f32.mrb[0].mxu0
        %v4391 = vadd.f32 0.0, %v4390
        %4392 = vmatprep.mubr.bf16.mxu0 0
        %4393 = vmatmul.mubr.bf16.gmra.mrb[0].mxu0 %v4349
        %v4394 = vpop.f32.mrb[0].mxu0
        %v4395 = vadd.f32 0.0, %v4394
        %v4396 = vpop.f32.mrb[0].mxu0
        %v4397 = vadd.f32 0.0, %v4396
        %v4398 = vpop.f32.mrb[0].mxu0
        %v4399 = vpop.f32.mrb[0].mxu0
        %4400 = vdwg.mxu0
        %4401 = vmatprep.subr.bf16.mxu0 %v3844
        %4402 = vmatpush1.bf16.msra.mxu0 %v3843
        %4403 = vmatprep.subr.bf16.mxu0 %v3848
        %4404 = vmatpush1.bf16.msra.mxu0 %v3847
        %4405 = vmatprep.subr.bf16.mxu0 %v3852
        %4406 = vmatpush1.bf16.msra.mxu0 %v3851
        %4407 = vmatprep.subr.bf16.mxu0 %v3856
        %4408 = vmatpush1.bf16.msra.mxu0 %v3855
        %4409 = vmatprep.subr.bf16.mxu0 %v3860
        %4410 = vmatpush1.bf16.msra.mxu0 %v3859
        %4411 = vmatprep.subr.bf16.mxu0 %v3864
        %4412 = vmatpush1.bf16.msra.mxu0 %v3863
        %4413 = vmatprep.subr.bf16.mxu0 %v3868
        %4414 = vmatpush1.bf16.msra.mxu0 %v3867
        %4415 = vmatprep.subr.bf16.mxu0 %v3872
        %4416 = vmatpush1.bf16.msra.mxu0 %v3871
        %4417 = vmatprep.subr.bf16.mxu0 0
        %4418 = vmatpush1.bf16.msra.mxu0 0
        %4419 = vmatprep.subr.bf16.mxu0 0
        %4420 = vmatpush1.bf16.msra.mxu0 0
        %4421 = vmatprep.subr.bf16.mxu0 0
        %4422 = vmatpush1.bf16.msra.mxu0 0
        %4423 = vmatprep.subr.bf16.mxu0 0
        %4424 = vmatpush1.bf16.msra.mxu0 0
        %4425 = vmatprep.subr.bf16.mxu0 0
        %4426 = vmatpush1.bf16.msra.mxu0 0
        %4427 = vmatprep.subr.bf16.mxu0 0
        %4428 = vmatpush1.bf16.msra.mxu0 0
        %4429 = vmatprep.subr.bf16.mxu0 0
        %4430 = vmatpush1.bf16.msra.mxu0 0
        %4431 = vmatprep.subr.bf16.mxu0 0
        %4432 = vmatpush1.bf16.msra.mxu0 0
        %4433 = vmatprep.mubr.bf16.mxu0 0
        %4434 = vmatmul.mubr.bf16.gmra.mrb[0].mxu0 %v4348
        %v4435 = vpop.f32.mrb[0].mxu0
        %v4436 = vadd.f32 0.0, %v4435
        %v4437 = vpop.f32.mrb[0].mxu0
        %v4438 = vadd.f32 0.0, %v4437
        %v4439 = vpop.f32.mrb[0].mxu0
        %v4440 = vadd.f32 0.0, %v4439
        %v4441 = vpop.f32.mrb[0].mxu0
        %v4442 = vadd.f32 0.0, %v4441
        %4443 = vmatprep.mubr.bf16.mxu0 0
        %4444 = vmatmul.mubr.bf16.gmra.mrb[0].mxu0 %v4349
        %v4445 = vpop.f32.mrb[0].mxu0
        %v4446 = vadd.f32 0.0, %v4445
        %v4447 = vpop.f32.mrb[0].mxu0
        %v4448 = vadd.f32 0.0, %v4447
        %v4449 = vpop.f32.mrb[0].mxu0
        %v4450 = vpop.f32.mrb[0].mxu0
        %4451 = vdwg.mxu0
        %v4452 = vadd.f32 %v4336, %v4385
        %v4453 = vadd.f32 %v4337, %v4387
        %v4454 = vadd.f32 %v4338, %v4436
        %v4455 = vadd.f32 %v4339, %v4438
        %v4456 = vadd.f32 %v4340, %v4389
        %v4457 = vadd.f32 %v4341, %v4391
        %v4458 = vadd.f32 %v4342, %v4440
        %v4459 = vadd.f32 %v4343, %v4442
        %v4460 = vadd.f32 %v4344, %v4395
        %v4461 = vadd.f32 %v4345, %v4397
        %v4462 = vadd.f32 %v4346, %v4446
        %v4463 = vadd.f32 %v4347, %v4448
        %v4464 = vxor.u32 %v4452, 2147483648
        %v4465 = vxor.u32 %v4456, 2147483648
        %v4466 = vxor.u32 %v4460, 2147483648
        %v4467 = vmul.f32 %v4464, 1.442695
        %v4468 = vpow.pop %v4467
        %v4469 = vmul.f32 %v4465, 1.442695
        %v4470 = vpow.pop %v4469
        %v4471 = vmul.f32 %v4466, 1.442695
        %v4472 = vpow.pop %v4471
        %v4473 = vadd.f32 %v4468, 1.0
        %v4474 = vadd.f32 %v4470, 1.0
        %v4475 = vadd.f32 %v4472, 1.0
        %v4476 = vrcp.pop %v4473
        %v4477 = vmul.f32 1.0, %v4476
        %v4478 = vrcp.pop %v4474
        %v4479 = vmul.f32 1.0, %v4478
        %v4480 = vrcp.pop %v4475
        %v4481 = vmul.f32 1.0, %v4480
        %v4482 = vxor.u32 %v4453, 2147483648
        %v4483 = vxor.u32 %v4457, 2147483648
        %v4484 = vxor.u32 %v4461, 2147483648
        %v4485 = vmul.f32 %v4482, 1.442695
        %v4486 = vpow.pop %v4485
        %v4487 = vmul.f32 %v4483, 1.442695
        %v4488 = vpow.pop %v4487
        %v4489 = vmul.f32 %v4484, 1.442695
        %v4490 = vpow.pop %v4489
        %v4491 = vadd.f32 %v4486, 1.0
        %v4492 = vadd.f32 %v4488, 1.0
        %v4493 = vadd.f32 %v4490, 1.0
        %v4494 = vrcp.pop %v4491
        %v4495 = vmul.f32 1.0, %v4494
        %v4496 = vrcp.pop %v4492
        %v4497 = vmul.f32 1.0, %v4496
        %v4498 = vrcp.pop %v4493
        %v4499 = vmul.f32 1.0, %v4498
        %v4500 = vtanh.pop %v4454
        %v4501 = vtanh.pop %v4458
        %v4502 = vtanh.pop %v4462
        %v4503 = vxor.u32 %v4455, 2147483648
        %v4504 = vxor.u32 %v4459, 2147483648
        %v4505 = vxor.u32 %v4463, 2147483648
        %v4506 = vmul.f32 %v4503, 1.442695
        %v4507 = vpow.pop %v4506
        %v4508 = vmul.f32 %v4504, 1.442695
        %v4509 = vpow.pop %v4508
        %v4510 = vmul.f32 %v4505, 1.442695
        %v4511 = vpow.pop %v4510
        %v4512 = vadd.f32 %v4507, 1.0
        %v4513 = vadd.f32 %v4509, 1.0
        %v4514 = vadd.f32 %v4511, 1.0
        %v4515 = vrcp.pop %v4512
        %v4516 = vmul.f32 1.0, %v4515
        %v4517 = vrcp.pop %v4513
        %v4518 = vmul.f32 1.0, %v4517
        %v4519 = vrcp.pop %v4514
        %v4520 = vmul.f32 1.0, %v4519
        %v4521 = vmul.f32 %v4495, %v4326
        %v4522 = vmul.f32 %v4497, %v4327
        %v4523 = vmul.f32 %v4499, %v4328
        %v4524 = vmul.f32 %v4477, %v4500
        %v4525 = vmul.f32 %v4479, %v4501
        %v4526 = vmul.f32 %v4481, %v4502
        %v4527 = vadd.f32 %v4521, %v4524
        %v4528 = vadd.f32 %v4522, %v4525
        %v4529 = vadd.f32 %v4523, %v4526
        %v4530 = vtanh.pop %v4527
        %v4531 = vtanh.pop %v4528
        %v4532 = vtanh.pop %v4529
        %v4533 = vmul.f32 %v4516, %v4530
        %v4534 = vmul.f32 %v4518, %v4531
        %v4535 = vmul.f32 %v4520, %v4532
        %4536 = vst [vmem:[#allocation4] sm:$0xff] %v4533
        %4537 = vst [vmem:[#allocation4 + $0x8] sm:$0xff] %v4534
        %4538 = vst [vmem:[#allocation4 + $0x10] sm:$0xff] %v4535
        %4539 = vst [vmem:[#allocation5] sm:$0xff] %v4527
        %4540 = vst [vmem:[#allocation5 + $0x8] sm:$0xff] %v4528
        %4541 = vst [vmem:[#allocation5 + $0x10] sm:$0xff] %v4529
        %s4542 = scalar_lea.vmem %s1039, 48 [#allocation7]
        %4543 = vst [vmem:[%s4542] sm:$0xff] %v4533
        %4544 = vst [vmem:[%s4542 + $0x8] sm:$0xff] %v4534
        %4545 = vst [vmem:[%s4542 + $0x10] sm:$0xff] %v4535
        %v4546 = vld [vmem:[#allocation4] sm:$0xff]
        %v4547 = vld [vmem:[#allocation4 + $0x8] sm:$0xff]
        %v4548 = vld [vmem:[#allocation4 + $0x10] sm:$0xff]
        %v4549 = vld [vmem:[#allocation5] sm:$0xff]
        %v4550 = vld [vmem:[#allocation5 + $0x8] sm:$0xff]
        %v4551 = vld [vmem:[#allocation5 + $0x10] sm:$0xff]
        %s4552 = scalar_lea.vmem [#allocation3], 144
        %v4553 = vld [vmem:[%s4552] sm:$0xff]
        %v4554 = vld [vmem:[%s4552 + $0x8] sm:$0xff]
        %v4555 = vld [vmem:[%s4552 + $0x10] sm:$0xff]
        %v4556 = vld [vmem:[%s4552 + $0x18] sm:$0xff]
        %v4557 = vld [vmem:[%s4552 + $0x20] sm:$0xff]
        %v4558 = vld [vmem:[%s4552 + $0x28] sm:$0xff]
        %v4559 = vunpack.c.l.bf16 %v4553
        %v4560 = vunpack.c.h.bf16 %v4553
        %v4561 = vunpack.c.l.bf16 %v4554
        %v4562 = vunpack.c.h.bf16 %v4554
        %v4563 = vunpack.c.l.bf16 %v4555
        %v4564 = vunpack.c.h.bf16 %v4555
        %v4565 = vunpack.c.l.bf16 %v4556
        %v4566 = vunpack.c.h.bf16 %v4556
        %v4567 = vunpack.c.l.bf16 %v4557
        %v4568 = vunpack.c.h.bf16 %v4557
        %v4569 = vunpack.c.l.bf16 %v4558
        %v4570 = vunpack.c.h.bf16 %v4558
        %v4571 = vpack.c.bf16 %v4547, %v4546
        %v4572 = vpack.c.bf16 %v4548, %v4548
        %4573 = vmatprep.subr.bf16.mxu0 %v3842
        %4574 = vmatpush1.bf16.msra.mxu0 %v3841
        %4575 = vmatprep.subr.bf16.mxu0 %v3846
        %4576 = vmatpush1.bf16.msra.mxu0 %v3845
        %4577 = vmatprep.subr.bf16.mxu0 %v3850
        %4578 = vmatpush1.bf16.msra.mxu0 %v3849
        %4579 = vmatprep.subr.bf16.mxu0 %v3854
        %4580 = vmatpush1.bf16.msra.mxu0 %v3853
        %4581 = vmatprep.subr.bf16.mxu0 %v3858
        %4582 = vmatpush1.bf16.msra.mxu0 %v3857
        %4583 = vmatprep.subr.bf16.mxu0 %v3862
        %4584 = vmatpush1.bf16.msra.mxu0 %v3861
        %4585 = vmatprep.subr.bf16.mxu0 %v3866
        %4586 = vmatpush1.bf16.msra.mxu0 %v3865
        %4587 = vmatprep.subr.bf16.mxu0 %v3870
        %4588 = vmatpush1.bf16.msra.mxu0 %v3869
        %4589 = vmatprep.subr.bf16.mxu0 0
        %4590 = vmatpush1.bf16.msra.mxu0 0
        %4591 = vmatprep.subr.bf16.mxu0 0
        %4592 = vmatpush1.bf16.msra.mxu0 0
        %4593 = vmatprep.subr.bf16.mxu0 0
        %4594 = vmatpush1.bf16.msra.mxu0 0
        %4595 = vmatprep.subr.bf16.mxu0 0
        %4596 = vmatpush1.bf16.msra.mxu0 0
        %4597 = vmatprep.subr.bf16.mxu0 0
        %4598 = vmatpush1.bf16.msra.mxu0 0
        %4599 = vmatprep.subr.bf16.mxu0 0
        %4600 = vmatpush1.bf16.msra.mxu0 0
        %4601 = vmatprep.subr.bf16.mxu0 0
        %4602 = vmatpush1.bf16.msra.mxu0 0
        %4603 = vmatprep.subr.bf16.mxu0 0
        %4604 = vmatpush1.bf16.msra.mxu0 0
        %4605 = vmatprep.mubr.bf16.mxu0 0
        %4606 = vmatmul.mubr.bf16.gmra.mrb[0].mxu0 %v4571
        %v4607 = vpop.f32.mrb[0].mxu0
        %v4608 = vadd.f32 0.0, %v4607
        %v4609 = vpop.f32.mrb[0].mxu0
        %v4610 = vadd.f32 0.0, %v4609
        %v4611 = vpop.f32.mrb[0].mxu0
        %v4612 = vadd.f32 0.0, %v4611
        %v4613 = vpop.f32.mrb[0].mxu0
        %v4614 = vadd.f32 0.0, %v4613
        %4615 = vmatprep.mubr.bf16.mxu0 0
        %4616 = vmatmul.mubr.bf16.gmra.mrb[0].mxu0 %v4572
        %v4617 = vpop.f32.mrb[0].mxu0
        %v4618 = vadd.f32 0.0, %v4617
        %v4619 = vpop.f32.mrb[0].mxu0
        %v4620 = vadd.f32 0.0, %v4619
        %v4621 = vpop.f32.mrb[0].mxu0
        %v4622 = vpop.f32.mrb[0].mxu0
        %4623 = vdwg.mxu0
        %4624 = vmatprep.subr.bf16.mxu0 %v3844
        %4625 = vmatpush1.bf16.msra.mxu0 %v3843
        %4626 = vmatprep.subr.bf16.mxu0 %v3848
        %4627 = vmatpush1.bf16.msra.mxu0 %v3847
        %4628 = vmatprep.subr.bf16.mxu0 %v3852
        %4629 = vmatpush1.bf16.msra.mxu0 %v3851
        %4630 = vmatprep.subr.bf16.mxu0 %v3856
        %4631 = vmatpush1.bf16.msra.mxu0 %v3855
        %4632 = vmatprep.subr.bf16.mxu0 %v3860
        %4633 = vmatpush1.bf16.msra.mxu0 %v3859
        %4634 = vmatprep.subr.bf16.mxu0 %v3864
        %4635 = vmatpush1.bf16.msra.mxu0 %v3863
        %4636 = vmatprep.subr.bf16.mxu0 %v3868
        %4637 = vmatpush1.bf16.msra.mxu0 %v3867
        %4638 = vmatprep.subr.bf16.mxu0 %v3872
        %4639 = vmatpush1.bf16.msra.mxu0 %v3871
        %4640 = vmatprep.subr.bf16.mxu0 0
        %4641 = vmatpush1.bf16.msra.mxu0 0
        %4642 = vmatprep.subr.bf16.mxu0 0
        %4643 = vmatpush1.bf16.msra.mxu0 0
        %4644 = vmatprep.subr.bf16.mxu0 0
        %4645 = vmatpush1.bf16.msra.mxu0 0
        %4646 = vmatprep.subr.bf16.mxu0 0
        %4647 = vmatpush1.bf16.msra.mxu0 0
        %4648 = vmatprep.subr.bf16.mxu0 0
        %4649 = vmatpush1.bf16.msra.mxu0 0
        %4650 = vmatprep.subr.bf16.mxu0 0
        %4651 = vmatpush1.bf16.msra.mxu0 0
        %4652 = vmatprep.subr.bf16.mxu0 0
        %4653 = vmatpush1.bf16.msra.mxu0 0
        %4654 = vmatprep.subr.bf16.mxu0 0
        %4655 = vmatpush1.bf16.msra.mxu0 0
        %4656 = vmatprep.mubr.bf16.mxu0 0
        %4657 = vmatmul.mubr.bf16.gmra.mrb[0].mxu0 %v4571
        %v4658 = vpop.f32.mrb[0].mxu0
        %v4659 = vadd.f32 0.0, %v4658
        %v4660 = vpop.f32.mrb[0].mxu0
        %v4661 = vadd.f32 0.0, %v4660
        %v4662 = vpop.f32.mrb[0].mxu0
        %v4663 = vadd.f32 0.0, %v4662
        %v4664 = vpop.f32.mrb[0].mxu0
        %v4665 = vadd.f32 0.0, %v4664
        %4666 = vmatprep.mubr.bf16.mxu0 0
        %4667 = vmatmul.mubr.bf16.gmra.mrb[0].mxu0 %v4572
        %v4668 = vpop.f32.mrb[0].mxu0
        %v4669 = vadd.f32 0.0, %v4668
        %v4670 = vpop.f32.mrb[0].mxu0
        %v4671 = vadd.f32 0.0, %v4670
        %v4672 = vpop.f32.mrb[0].mxu0
        %v4673 = vpop.f32.mrb[0].mxu0
        %4674 = vdwg.mxu0
        %v4675 = vadd.f32 %v4559, %v4608
        %v4676 = vadd.f32 %v4560, %v4610
        %v4677 = vadd.f32 %v4561, %v4659
        %v4678 = vadd.f32 %v4562, %v4661
        %v4679 = vadd.f32 %v4563, %v4612
        %v4680 = vadd.f32 %v4564, %v4614
        %v4681 = vadd.f32 %v4565, %v4663
        %v4682 = vadd.f32 %v4566, %v4665
        %v4683 = vadd.f32 %v4567, %v4618
        %v4684 = vadd.f32 %v4568, %v4620
        %v4685 = vadd.f32 %v4569, %v4669
        %v4686 = vadd.f32 %v4570, %v4671
        %v4687 = vxor.u32 %v4675, 2147483648
        %v4688 = vxor.u32 %v4679, 2147483648
        %v4689 = vxor.u32 %v4683, 2147483648
        %v4690 = vmul.f32 %v4687, 1.442695
        %v4691 = vpow.pop %v4690
        %v4692 = vmul.f32 %v4688, 1.442695
        %v4693 = vpow.pop %v4692
        %v4694 = vmul.f32 %v4689, 1.442695
        %v4695 = vpow.pop %v4694
        %v4696 = vadd.f32 %v4691, 1.0
        %v4697 = vadd.f32 %v4693, 1.0
        %v4698 = vadd.f32 %v4695, 1.0
        %v4699 = vrcp.pop %v4696
        %v4700 = vmul.f32 1.0, %v4699
        %v4701 = vrcp.pop %v4697
        %v4702 = vmul.f32 1.0, %v4701
        %v4703 = vrcp.pop %v4698
        %v4704 = vmul.f32 1.0, %v4703
        %v4705 = vxor.u32 %v4676, 2147483648
        %v4706 = vxor.u32 %v4680, 2147483648
        %v4707 = vxor.u32 %v4684, 2147483648
        %v4708 = vmul.f32 %v4705, 1.442695
        %v4709 = vpow.pop %v4708
        %v4710 = vmul.f32 %v4706, 1.442695
        %v4711 = vpow.pop %v4710
        %v4712 = vmul.f32 %v4707, 1.442695
        %v4713 = vpow.pop %v4712
        %v4714 = vadd.f32 %v4709, 1.0
        %v4715 = vadd.f32 %v4711, 1.0
        %v4716 = vadd.f32 %v4713, 1.0
        %v4717 = vrcp.pop %v4714
        %v4718 = vmul.f32 1.0, %v4717
        %v4719 = vrcp.pop %v4715
        %v4720 = vmul.f32 1.0, %v4719
        %v4721 = vrcp.pop %v4716
        %v4722 = vmul.f32 1.0, %v4721
        %v4723 = vtanh.pop %v4677
        %v4724 = vtanh.pop %v4681
        %v4725 = vtanh.pop %v4685
        %v4726 = vxor.u32 %v4678, 2147483648
        %v4727 = vxor.u32 %v4682, 2147483648
        %v4728 = vxor.u32 %v4686, 2147483648
        %v4729 = vmul.f32 %v4726, 1.442695
        %v4730 = vpow.pop %v4729
        %v4731 = vmul.f32 %v4727, 1.442695
        %v4732 = vpow.pop %v4731
        %v4733 = vmul.f32 %v4728, 1.442695
        %v4734 = vpow.pop %v4733
        %v4735 = vadd.f32 %v4730, 1.0
        %v4736 = vadd.f32 %v4732, 1.0
        %v4737 = vadd.f32 %v4734, 1.0
        %v4738 = vrcp.pop %v4735
        %v4739 = vmul.f32 1.0, %v4738
        %v4740 = vrcp.pop %v4736
        %v4741 = vmul.f32 1.0, %v4740
        %v4742 = vrcp.pop %v4737
        %v4743 = vmul.f32 1.0, %v4742
        %v4744 = vmul.f32 %v4718, %v4549
        %v4745 = vmul.f32 %v4720, %v4550
        %v4746 = vmul.f32 %v4722, %v4551
        %v4747 = vmul.f32 %v4700, %v4723
        %v4748 = vmul.f32 %v4702, %v4724
        %v4749 = vmul.f32 %v4704, %v4725
        %v4750 = vadd.f32 %v4744, %v4747
        %v4751 = vadd.f32 %v4745, %v4748
        %v4752 = vadd.f32 %v4746, %v4749
        %v4753 = vtanh.pop %v4750
        %v4754 = vtanh.pop %v4751
        %v4755 = vtanh.pop %v4752
        %v4756 = vmul.f32 %v4739, %v4753
        %v4757 = vmul.f32 %v4741, %v4754
        %v4758 = vmul.f32 %v4743, %v4755
        %4759 = vst [vmem:[#allocation4] sm:$0xff] %v4756
        %4760 = vst [vmem:[#allocation4 + $0x8] sm:$0xff] %v4757
        %4761 = vst [vmem:[#allocation4 + $0x10] sm:$0xff] %v4758
        %4762 = vst [vmem:[#allocation5] sm:$0xff] %v4750
        %4763 = vst [vmem:[#allocation5 + $0x8] sm:$0xff] %v4751
        %4764 = vst [vmem:[#allocation5 + $0x10] sm:$0xff] %v4752
        %s4765 = scalar_lea.vmem %s1039, 72 [#allocation7]
        %4766 = vst [vmem:[%s4765] sm:$0xff] %v4756
        %4767 = vst [vmem:[%s4765 + $0x8] sm:$0xff] %v4757
        %4768 = vst [vmem:[%s4765 + $0x10] sm:$0xff] %v4758
        %v4769 = vld [vmem:[#allocation4] sm:$0xff]
        %v4770 = vld [vmem:[#allocation4 + $0x8] sm:$0xff]
        %v4771 = vld [vmem:[#allocation4 + $0x10] sm:$0xff]
        %v4772 = vld [vmem:[#allocation5] sm:$0xff]
        %v4773 = vld [vmem:[#allocation5 + $0x8] sm:$0xff]
        %v4774 = vld [vmem:[#allocation5 + $0x10] sm:$0xff]
        %s4775 = scalar_lea.vmem [#allocation3], 192
        %v4776 = vld [vmem:[%s4775] sm:$0xff]
        %v4777 = vld [vmem:[%s4775 + $0x8] sm:$0xff]
        %v4778 = vld [vmem:[%s4775 + $0x10] sm:$0xff]
        %v4779 = vld [vmem:[%s4775 + $0x18] sm:$0xff]
        %v4780 = vld [vmem:[%s4775 + $0x20] sm:$0xff]
        %v4781 = vld [vmem:[%s4775 + $0x28] sm:$0xff]
        %v4782 = vunpack.c.l.bf16 %v4776
        %v4783 = vunpack.c.h.bf16 %v4776
        %v4784 = vunpack.c.l.bf16 %v4777
        %v4785 = vunpack.c.h.bf16 %v4777
        %v4786 = vunpack.c.l.bf16 %v4778
        %v4787 = vunpack.c.h.bf16 %v4778
        %v4788 = vunpack.c.l.bf16 %v4779
        %v4789 = vunpack.c.h.bf16 %v4779
        %v4790 = vunpack.c.l.bf16 %v4780
        %v4791 = vunpack.c.h.bf16 %v4780
        %v4792 = vunpack.c.l.bf16 %v4781
        %v4793 = vunpack.c.h.bf16 %v4781
        %v4794 = vpack.c.bf16 %v4770, %v4769
        %v4795 = vpack.c.bf16 %v4771, %v4771
        %4796 = vmatprep.subr.bf16.mxu0 %v3842
        %4797 = vmatpush1.bf16.msra.mxu0 %v3841
        %4798 = vmatprep.subr.bf16.mxu0 %v3846
        %4799 = vmatpush1.bf16.msra.mxu0 %v3845
        %4800 = vmatprep.subr.bf16.mxu0 %v3850
        %4801 = vmatpush1.bf16.msra.mxu0 %v3849
        %4802 = vmatprep.subr.bf16.mxu0 %v3854
        %4803 = vmatpush1.bf16.msra.mxu0 %v3853
        %4804 = vmatprep.subr.bf16.mxu0 %v3858
        %4805 = vmatpush1.bf16.msra.mxu0 %v3857
        %4806 = vmatprep.subr.bf16.mxu0 %v3862
        %4807 = vmatpush1.bf16.msra.mxu0 %v3861
        %4808 = vmatprep.subr.bf16.mxu0 %v3866
        %4809 = vmatpush1.bf16.msra.mxu0 %v3865
        %4810 = vmatprep.subr.bf16.mxu0 %v3870
        %4811 = vmatpush1.bf16.msra.mxu0 %v3869
        %4812 = vmatprep.subr.bf16.mxu0 0
        %4813 = vmatpush1.bf16.msra.mxu0 0
        %4814 = vmatprep.subr.bf16.mxu0 0
        %4815 = vmatpush1.bf16.msra.mxu0 0
        %4816 = vmatprep.subr.bf16.mxu0 0
        %4817 = vmatpush1.bf16.msra.mxu0 0
        %4818 = vmatprep.subr.bf16.mxu0 0
        %4819 = vmatpush1.bf16.msra.mxu0 0
        %4820 = vmatprep.subr.bf16.mxu0 0
        %4821 = vmatpush1.bf16.msra.mxu0 0
        %4822 = vmatprep.subr.bf16.mxu0 0
        %4823 = vmatpush1.bf16.msra.mxu0 0
        %4824 = vmatprep.subr.bf16.mxu0 0
        %4825 = vmatpush1.bf16.msra.mxu0 0
        %4826 = vmatprep.subr.bf16.mxu0 0
        %4827 = vmatpush1.bf16.msra.mxu0 0
        %4828 = vmatprep.mubr.bf16.mxu0 0
        %4829 = vmatmul.mubr.bf16.gmra.mrb[0].mxu0 %v4794
        %v4830 = vpop.f32.mrb[0].mxu0
        %v4831 = vadd.f32 0.0, %v4830
        %v4832 = vpop.f32.mrb[0].mxu0
        %v4833 = vadd.f32 0.0, %v4832
        %v4834 = vpop.f32.mrb[0].mxu0
        %v4835 = vadd.f32 0.0, %v4834
        %v4836 = vpop.f32.mrb[0].mxu0
        %v4837 = vadd.f32 0.0, %v4836
        %4838 = vmatprep.mubr.bf16.mxu0 0
        %4839 = vmatmul.mubr.bf16.gmra.mrb[0].mxu0 %v4795
        %v4840 = vpop.f32.mrb[0].mxu0
        %v4841 = vadd.f32 0.0, %v4840
        %v4842 = vpop.f32.mrb[0].mxu0
        %v4843 = vadd.f32 0.0, %v4842
        %v4844 = vpop.f32.mrb[0].mxu0
        %v4845 = vpop.f32.mrb[0].mxu0
        %4846 = vdwg.mxu0
        %4847 = vmatprep.subr.bf16.mxu0 %v3844
        %4848 = vmatpush1.bf16.msra.mxu0 %v3843
        %4849 = vmatprep.subr.bf16.mxu0 %v3848
        %4850 = vmatpush1.bf16.msra.mxu0 %v3847
        %4851 = vmatprep.subr.bf16.mxu0 %v3852
        %4852 = vmatpush1.bf16.msra.mxu0 %v3851
        %4853 = vmatprep.subr.bf16.mxu0 %v3856
        %4854 = vmatpush1.bf16.msra.mxu0 %v3855
        %4855 = vmatprep.subr.bf16.mxu0 %v3860
        %4856 = vmatpush1.bf16.msra.mxu0 %v3859
        %4857 = vmatprep.subr.bf16.mxu0 %v3864
        %4858 = vmatpush1.bf16.msra.mxu0 %v3863
        %4859 = vmatprep.subr.bf16.mxu0 %v3868
        %4860 = vmatpush1.bf16.msra.mxu0 %v3867
        %4861 = vmatprep.subr.bf16.mxu0 %v3872
        %4862 = vmatpush1.bf16.msra.mxu0 %v3871
        %4863 = vmatprep.subr.bf16.mxu0 0
        %4864 = vmatpush1.bf16.msra.mxu0 0
        %4865 = vmatprep.subr.bf16.mxu0 0
        %4866 = vmatpush1.bf16.msra.mxu0 0
        %4867 = vmatprep.subr.bf16.mxu0 0
        %4868 = vmatpush1.bf16.msra.mxu0 0
        %4869 = vmatprep.subr.bf16.mxu0 0
        %4870 = vmatpush1.bf16.msra.mxu0 0
        %4871 = vmatprep.subr.bf16.mxu0 0
        %4872 = vmatpush1.bf16.msra.mxu0 0
        %4873 = vmatprep.subr.bf16.mxu0 0
        %4874 = vmatpush1.bf16.msra.mxu0 0
        %4875 = vmatprep.subr.bf16.mxu0 0
        %4876 = vmatpush1.bf16.msra.mxu0 0
        %4877 = vmatprep.subr.bf16.mxu0 0
        %4878 = vmatpush1.bf16.msra.mxu0 0
        %4879 = vmatprep.mubr.bf16.mxu0 0
        %4880 = vmatmul.mubr.bf16.gmra.mrb[0].mxu0 %v4794
        %v4881 = vpop.f32.mrb[0].mxu0
        %v4882 = vadd.f32 0.0, %v4881
        %v4883 = vpop.f32.mrb[0].mxu0
        %v4884 = vadd.f32 0.0, %v4883
        %v4885 = vpop.f32.mrb[0].mxu0
        %v4886 = vadd.f32 0.0, %v4885
        %v4887 = vpop.f32.mrb[0].mxu0
        %v4888 = vadd.f32 0.0, %v4887
        %4889 = vmatprep.mubr.bf16.mxu0 0
        %4890 = vmatmul.mubr.bf16.gmra.mrb[0].mxu0 %v4795
        %v4891 = vpop.f32.mrb[0].mxu0
        %v4892 = vadd.f32 0.0, %v4891
        %v4893 = vpop.f32.mrb[0].mxu0
        %v4894 = vadd.f32 0.0, %v4893
        %v4895 = vpop.f32.mrb[0].mxu0
        %v4896 = vpop.f32.mrb[0].mxu0
        %4897 = vdwg.mxu0
        %v4898 = vadd.f32 %v4782, %v4831
        %v4899 = vadd.f32 %v4783, %v4833
        %v4900 = vadd.f32 %v4784, %v4882
        %v4901 = vadd.f32 %v4785, %v4884
        %v4902 = vadd.f32 %v4786, %v4835
        %v4903 = vadd.f32 %v4787, %v4837
        %v4904 = vadd.f32 %v4788, %v4886
        %v4905 = vadd.f32 %v4789, %v4888
        %v4906 = vadd.f32 %v4790, %v4841
        %v4907 = vadd.f32 %v4791, %v4843
        %v4908 = vadd.f32 %v4792, %v4892
        %v4909 = vadd.f32 %v4793, %v4894
        %v4910 = vxor.u32 %v4898, 2147483648
        %v4911 = vxor.u32 %v4902, 2147483648
        %v4912 = vxor.u32 %v4906, 2147483648
        %v4913 = vmul.f32 %v4910, 1.442695
        %v4914 = vpow.pop %v4913
        %v4915 = vmul.f32 %v4911, 1.442695
        %v4916 = vpow.pop %v4915
        %v4917 = vmul.f32 %v4912, 1.442695
        %v4918 = vpow.pop %v4917
        %v4919 = vadd.f32 %v4914, 1.0
        %v4920 = vadd.f32 %v4916, 1.0
        %v4921 = vadd.f32 %v4918, 1.0
        %v4922 = vrcp.pop %v4919
        %v4923 = vmul.f32 1.0, %v4922
        %v4924 = vrcp.pop %v4920
        %v4925 = vmul.f32 1.0, %v4924
        %v4926 = vrcp.pop %v4921
        %v4927 = vmul.f32 1.0, %v4926
        %v4928 = vxor.u32 %v4899, 2147483648
        %v4929 = vxor.u32 %v4903, 2147483648
        %v4930 = vxor.u32 %v4907, 2147483648
        %v4931 = vmul.f32 %v4928, 1.442695
        %v4932 = vpow.pop %v4931
        %v4933 = vmul.f32 %v4929, 1.442695
        %v4934 = vpow.pop %v4933
        %v4935 = vmul.f32 %v4930, 1.442695
        %v4936 = vpow.pop %v4935
        %v4937 = vadd.f32 %v4932, 1.0
        %v4938 = vadd.f32 %v4934, 1.0
        %v4939 = vadd.f32 %v4936, 1.0
        %v4940 = vrcp.pop %v4937
        %v4941 = vmul.f32 1.0, %v4940
        %v4942 = vrcp.pop %v4938
        %v4943 = vmul.f32 1.0, %v4942
        %v4944 = vrcp.pop %v4939
        %v4945 = vmul.f32 1.0, %v4944
        %v4946 = vtanh.pop %v4900
        %v4947 = vtanh.pop %v4904
        %v4948 = vtanh.pop %v4908
        %v4949 = vxor.u32 %v4901, 2147483648
        %v4950 = vxor.u32 %v4905, 2147483648
        %v4951 = vxor.u32 %v4909, 2147483648
        %v4952 = vmul.f32 %v4949, 1.442695
        %v4953 = vpow.pop %v4952
        %v4954 = vmul.f32 %v4950, 1.442695
        %v4955 = vpow.pop %v4954
        %v4956 = vmul.f32 %v4951, 1.442695
        %v4957 = vpow.pop %v4956
        %v4958 = vadd.f32 %v4953, 1.0
        %v4959 = vadd.f32 %v4955, 1.0
        %v4960 = vadd.f32 %v4957, 1.0
        %v4961 = vrcp.pop %v4958
        %v4962 = vmul.f32 1.0, %v4961
        %v4963 = vrcp.pop %v4959
        %v4964 = vmul.f32 1.0, %v4963
        %v4965 = vrcp.pop %v4960
        %v4966 = vmul.f32 1.0, %v4965
        %v4967 = vmul.f32 %v4941, %v4772
        %v4968 = vmul.f32 %v4943, %v4773
        %v4969 = vmul.f32 %v4945, %v4774
        %v4970 = vmul.f32 %v4923, %v4946
        %v4971 = vmul.f32 %v4925, %v4947
        %v4972 = vmul.f32 %v4927, %v4948
        %v4973 = vadd.f32 %v4967, %v4970
        %v4974 = vadd.f32 %v4968, %v4971
        %v4975 = vadd.f32 %v4969, %v4972
        %v4976 = vtanh.pop %v4973
        %v4977 = vtanh.pop %v4974
        %v4978 = vtanh.pop %v4975
        %v4979 = vmul.f32 %v4962, %v4976
        %v4980 = vmul.f32 %v4964, %v4977
        %v4981 = vmul.f32 %v4966, %v4978
        %4982 = vst [vmem:[#allocation4] sm:$0xff] %v4979
        %4983 = vst [vmem:[#allocation4 + $0x8] sm:$0xff] %v4980
        %4984 = vst [vmem:[#allocation4 + $0x10] sm:$0xff] %v4981
        %4985 = vst [vmem:[#allocation5] sm:$0xff] %v4973
        %4986 = vst [vmem:[#allocation5 + $0x8] sm:$0xff] %v4974
        %4987 = vst [vmem:[#allocation5 + $0x10] sm:$0xff] %v4975
        %s4988 = scalar_lea.vmem %s1039, 96 [#allocation7]
        %4989 = vst [vmem:[%s4988] sm:$0xff] %v4979
        %4990 = vst [vmem:[%s4988 + $0x8] sm:$0xff] %v4980
        %4991 = vst [vmem:[%s4988 + $0x10] sm:$0xff] %v4981
        %v4992 = vld [vmem:[#allocation4] sm:$0xff]
        %v4993 = vld [vmem:[#allocation4 + $0x8] sm:$0xff]
        %v4994 = vld [vmem:[#allocation4 + $0x10] sm:$0xff]
        %v4995 = vld [vmem:[#allocation5] sm:$0xff]
        %v4996 = vld [vmem:[#allocation5 + $0x8] sm:$0xff]
        %v4997 = vld [vmem:[#allocation5 + $0x10] sm:$0xff]
        %s4998 = scalar_lea.vmem [#allocation3], 240
        %v4999 = vld [vmem:[%s4998] sm:$0xff]
        %v5000 = vld [vmem:[%s4998 + $0x8] sm:$0xff]
        %v5001 = vld [vmem:[%s4998 + $0x10] sm:$0xff]
        %v5002 = vld [vmem:[%s4998 + $0x18] sm:$0xff]
        %v5003 = vld [vmem:[%s4998 + $0x20] sm:$0xff]
        %v5004 = vld [vmem:[%s4998 + $0x28] sm:$0xff]
        %v5005 = vunpack.c.l.bf16 %v4999
        %v5006 = vunpack.c.h.bf16 %v4999
        %v5007 = vunpack.c.l.bf16 %v5000
        %v5008 = vunpack.c.h.bf16 %v5000
        %v5009 = vunpack.c.l.bf16 %v5001
        %v5010 = vunpack.c.h.bf16 %v5001
        %v5011 = vunpack.c.l.bf16 %v5002
        %v5012 = vunpack.c.h.bf16 %v5002
        %v5013 = vunpack.c.l.bf16 %v5003
        %v5014 = vunpack.c.h.bf16 %v5003
        %v5015 = vunpack.c.l.bf16 %v5004
        %v5016 = vunpack.c.h.bf16 %v5004
        %v5017 = vpack.c.bf16 %v4993, %v4992
        %v5018 = vpack.c.bf16 %v4994, %v4994
        %5019 = vmatprep.subr.bf16.mxu0 %v3842
        %5020 = vmatpush1.bf16.msra.mxu0 %v3841
        %5021 = vmatprep.subr.bf16.mxu0 %v3846
        %5022 = vmatpush1.bf16.msra.mxu0 %v3845
        %5023 = vmatprep.subr.bf16.mxu0 %v3850
        %5024 = vmatpush1.bf16.msra.mxu0 %v3849
        %5025 = vmatprep.subr.bf16.mxu0 %v3854
        %5026 = vmatpush1.bf16.msra.mxu0 %v3853
        %5027 = vmatprep.subr.bf16.mxu0 %v3858
        %5028 = vmatpush1.bf16.msra.mxu0 %v3857
        %5029 = vmatprep.subr.bf16.mxu0 %v3862
        %5030 = vmatpush1.bf16.msra.mxu0 %v3861
        %5031 = vmatprep.subr.bf16.mxu0 %v3866
        %5032 = vmatpush1.bf16.msra.mxu0 %v3865
        %5033 = vmatprep.subr.bf16.mxu0 %v3870
        %5034 = vmatpush1.bf16.msra.mxu0 %v3869
        %5035 = vmatprep.subr.bf16.mxu0 0
        %5036 = vmatpush1.bf16.msra.mxu0 0
        %5037 = vmatprep.subr.bf16.mxu0 0
        %5038 = vmatpush1.bf16.msra.mxu0 0
        %5039 = vmatprep.subr.bf16.mxu0 0
        %5040 = vmatpush1.bf16.msra.mxu0 0
        %5041 = vmatprep.subr.bf16.mxu0 0
        %5042 = vmatpush1.bf16.msra.mxu0 0
        %5043 = vmatprep.subr.bf16.mxu0 0
        %5044 = vmatpush1.bf16.msra.mxu0 0
        %5045 = vmatprep.subr.bf16.mxu0 0
        %5046 = vmatpush1.bf16.msra.mxu0 0
        %5047 = vmatprep.subr.bf16.mxu0 0
        %5048 = vmatpush1.bf16.msra.mxu0 0
        %5049 = vmatprep.subr.bf16.mxu0 0
        %5050 = vmatpush1.bf16.msra.mxu0 0
        %5051 = vmatprep.mubr.bf16.mxu0 0
        %5052 = vmatmul.mubr.bf16.gmra.mrb[0].mxu0 %v5017
        %v5053 = vpop.f32.mrb[0].mxu0
        %v5054 = vadd.f32 0.0, %v5053
        %v5055 = vpop.f32.mrb[0].mxu0
        %v5056 = vadd.f32 0.0, %v5055
        %v5057 = vpop.f32.mrb[0].mxu0
        %v5058 = vadd.f32 0.0, %v5057
        %v5059 = vpop.f32.mrb[0].mxu0
        %v5060 = vadd.f32 0.0, %v5059
        %5061 = vmatprep.mubr.bf16.mxu0 0
        %5062 = vmatmul.mubr.bf16.gmra.mrb[0].mxu0 %v5018
        %v5063 = vpop.f32.mrb[0].mxu0
        %v5064 = vadd.f32 0.0, %v5063
        %v5065 = vpop.f32.mrb[0].mxu0
        %v5066 = vadd.f32 0.0, %v5065
        %v5067 = vpop.f32.mrb[0].mxu0
        %v5068 = vpop.f32.mrb[0].mxu0
        %5069 = vdwg.mxu0
        %5070 = vmatprep.subr.bf16.mxu0 %v3844
        %5071 = vmatpush1.bf16.msra.mxu0 %v3843
        %5072 = vmatprep.subr.bf16.mxu0 %v3848
        %5073 = vmatpush1.bf16.msra.mxu0 %v3847
        %5074 = vmatprep.subr.bf16.mxu0 %v3852
        %5075 = vmatpush1.bf16.msra.mxu0 %v3851
        %5076 = vmatprep.subr.bf16.mxu0 %v3856
        %5077 = vmatpush1.bf16.msra.mxu0 %v3855
        %5078 = vmatprep.subr.bf16.mxu0 %v3860
        %5079 = vmatpush1.bf16.msra.mxu0 %v3859
        %5080 = vmatprep.subr.bf16.mxu0 %v3864
        %5081 = vmatpush1.bf16.msra.mxu0 %v3863
        %5082 = vmatprep.subr.bf16.mxu0 %v3868
        %5083 = vmatpush1.bf16.msra.mxu0 %v3867
        %5084 = vmatprep.subr.bf16.mxu0 %v3872
        %5085 = vmatpush1.bf16.msra.mxu0 %v3871
        %5086 = vmatprep.subr.bf16.mxu0 0
        %5087 = vmatpush1.bf16.msra.mxu0 0
        %5088 = vmatprep.subr.bf16.mxu0 0
        %5089 = vmatpush1.bf16.msra.mxu0 0
        %5090 = vmatprep.subr.bf16.mxu0 0
        %5091 = vmatpush1.bf16.msra.mxu0 0
        %5092 = vmatprep.subr.bf16.mxu0 0
        %5093 = vmatpush1.bf16.msra.mxu0 0
        %5094 = vmatprep.subr.bf16.mxu0 0
        %5095 = vmatpush1.bf16.msra.mxu0 0
        %5096 = vmatprep.subr.bf16.mxu0 0
        %5097 = vmatpush1.bf16.msra.mxu0 0
        %5098 = vmatprep.subr.bf16.mxu0 0
        %5099 = vmatpush1.bf16.msra.mxu0 0
        %5100 = vmatprep.subr.bf16.mxu0 0
        %5101 = vmatpush1.bf16.msra.mxu0 0
        %5102 = vmatprep.mubr.bf16.mxu0 0
        %5103 = vmatmul.mubr.bf16.gmra.mrb[0].mxu0 %v5017
        %v5104 = vpop.f32.mrb[0].mxu0
        %v5105 = vadd.f32 0.0, %v5104
        %v5106 = vpop.f32.mrb[0].mxu0
        %v5107 = vadd.f32 0.0, %v5106
        %v5108 = vpop.f32.mrb[0].mxu0
        %v5109 = vadd.f32 0.0, %v5108
        %v5110 = vpop.f32.mrb[0].mxu0
        %v5111 = vadd.f32 0.0, %v5110
        %5112 = vmatprep.mubr.bf16.mxu0 0
        %5113 = vmatmul.mubr.bf16.gmra.mrb[0].mxu0 %v5018
        %v5114 = vpop.f32.mrb[0].mxu0
        %v5115 = vadd.f32 0.0, %v5114
        %v5116 = vpop.f32.mrb[0].mxu0
        %v5117 = vadd.f32 0.0, %v5116
        %v5118 = vpop.f32.mrb[0].mxu0
        %v5119 = vpop.f32.mrb[0].mxu0
        %5120 = vdwg.mxu0
        %v5121 = vadd.f32 %v5005, %v5054
        %v5122 = vadd.f32 %v5006, %v5056
        %v5123 = vadd.f32 %v5007, %v5105
        %v5124 = vadd.f32 %v5008, %v5107
        %v5125 = vadd.f32 %v5009, %v5058
        %v5126 = vadd.f32 %v5010, %v5060
        %v5127 = vadd.f32 %v5011, %v5109
        %v5128 = vadd.f32 %v5012, %v5111
        %v5129 = vadd.f32 %v5013, %v5064
        %v5130 = vadd.f32 %v5014, %v5066
        %v5131 = vadd.f32 %v5015, %v5115
        %v5132 = vadd.f32 %v5016, %v5117
        %v5133 = vxor.u32 %v5121, 2147483648
        %v5134 = vxor.u32 %v5125, 2147483648
        %v5135 = vxor.u32 %v5129, 2147483648
        %v5136 = vmul.f32 %v5133, 1.442695
        %v5137 = vpow.pop %v5136
        %v5138 = vmul.f32 %v5134, 1.442695
        %v5139 = vpow.pop %v5138
        %v5140 = vmul.f32 %v5135, 1.442695
        %v5141 = vpow.pop %v5140
        %v5142 = vadd.f32 %v5137, 1.0
        %v5143 = vadd.f32 %v5139, 1.0
        %v5144 = vadd.f32 %v5141, 1.0
        %v5145 = vrcp.pop %v5142
        %v5146 = vmul.f32 1.0, %v5145
        %v5147 = vrcp.pop %v5143
        %v5148 = vmul.f32 1.0, %v5147
        %v5149 = vrcp.pop %v5144
        %v5150 = vmul.f32 1.0, %v5149
        %v5151 = vxor.u32 %v5122, 2147483648
        %v5152 = vxor.u32 %v5126, 2147483648
        %v5153 = vxor.u32 %v5130, 2147483648
        %v5154 = vmul.f32 %v5151, 1.442695
        %v5155 = vpow.pop %v5154
        %v5156 = vmul.f32 %v5152, 1.442695
        %v5157 = vpow.pop %v5156
        %v5158 = vmul.f32 %v5153, 1.442695
        %v5159 = vpow.pop %v5158
        %v5160 = vadd.f32 %v5155, 1.0
        %v5161 = vadd.f32 %v5157, 1.0
        %v5162 = vadd.f32 %v5159, 1.0
        %v5163 = vrcp.pop %v5160
        %v5164 = vmul.f32 1.0, %v5163
        %v5165 = vrcp.pop %v5161
        %v5166 = vmul.f32 1.0, %v5165
        %v5167 = vrcp.pop %v5162
        %v5168 = vmul.f32 1.0, %v5167
        %v5169 = vtanh.pop %v5123
        %v5170 = vtanh.pop %v5127
        %v5171 = vtanh.pop %v5131
        %v5172 = vxor.u32 %v5124, 2147483648
        %v5173 = vxor.u32 %v5128, 2147483648
        %v5174 = vxor.u32 %v5132, 2147483648
        %v5175 = vmul.f32 %v5172, 1.442695
        %v5176 = vpow.pop %v5175
        %v5177 = vmul.f32 %v5173, 1.442695
        %v5178 = vpow.pop %v5177
        %v5179 = vmul.f32 %v5174, 1.442695
        %v5180 = vpow.pop %v5179
        %v5181 = vadd.f32 %v5176, 1.0
        %v5182 = vadd.f32 %v5178, 1.0
        %v5183 = vadd.f32 %v5180, 1.0
        %v5184 = vrcp.pop %v5181
        %v5185 = vmul.f32 1.0, %v5184
        %v5186 = vrcp.pop %v5182
        %v5187 = vmul.f32 1.0, %v5186
        %v5188 = vrcp.pop %v5183
        %v5189 = vmul.f32 1.0, %v5188
        %v5190 = vmul.f32 %v5164, %v4995
        %v5191 = vmul.f32 %v5166, %v4996
        %v5192 = vmul.f32 %v5168, %v4997
        %v5193 = vmul.f32 %v5146, %v5169
        %v5194 = vmul.f32 %v5148, %v5170
        %v5195 = vmul.f32 %v5150, %v5171
        %v5196 = vadd.f32 %v5190, %v5193
        %v5197 = vadd.f32 %v5191, %v5194
        %v5198 = vadd.f32 %v5192, %v5195
        %v5199 = vtanh.pop %v5196
        %v5200 = vtanh.pop %v5197
        %v5201 = vtanh.pop %v5198
        %v5202 = vmul.f32 %v5185, %v5199
        %v5203 = vmul.f32 %v5187, %v5200
        %v5204 = vmul.f32 %v5189, %v5201
        %5205 = vst [vmem:[#allocation4] sm:$0xff] %v5202
        %5206 = vst [vmem:[#allocation4 + $0x8] sm:$0xff] %v5203
        %5207 = vst [vmem:[#allocation4 + $0x10] sm:$0xff] %v5204
        %5208 = vst [vmem:[#allocation5] sm:$0xff] %v5196
        %5209 = vst [vmem:[#allocation5 + $0x8] sm:$0xff] %v5197
        %5210 = vst [vmem:[#allocation5 + $0x10] sm:$0xff] %v5198
        %s5211 = scalar_lea.vmem %s1039, 120 [#allocation7]
        %5212 = vst [vmem:[%s5211] sm:$0xff] %v5202
        %5213 = vst [vmem:[%s5211 + $0x8] sm:$0xff] %v5203
        %5214 = vst [vmem:[%s5211 + $0x10] sm:$0xff] %v5204
        %v5215 = vld [vmem:[#allocation4] sm:$0xff]
        %v5216 = vld [vmem:[#allocation4 + $0x8] sm:$0xff]
        %v5217 = vld [vmem:[#allocation4 + $0x10] sm:$0xff]
        %v5218 = vld [vmem:[#allocation5] sm:$0xff]
        %v5219 = vld [vmem:[#allocation5 + $0x8] sm:$0xff]
        %v5220 = vld [vmem:[#allocation5 + $0x10] sm:$0xff]
        %s5221 = scalar_lea.vmem [#allocation3], 288
        %v5222 = vld [vmem:[%s5221] sm:$0xff]
        %v5223 = vld [vmem:[%s5221 + $0x8] sm:$0xff]
        %v5224 = vld [vmem:[%s5221 + $0x10] sm:$0xff]
        %v5225 = vld [vmem:[%s5221 + $0x18] sm:$0xff]
        %v5226 = vld [vmem:[%s5221 + $0x20] sm:$0xff]
        %v5227 = vld [vmem:[%s5221 + $0x28] sm:$0xff]
        %v5228 = vunpack.c.l.bf16 %v5222
        %v5229 = vunpack.c.h.bf16 %v5222
        %v5230 = vunpack.c.l.bf16 %v5223
        %v5231 = vunpack.c.h.bf16 %v5223
        %v5232 = vunpack.c.l.bf16 %v5224
        %v5233 = vunpack.c.h.bf16 %v5224
        %v5234 = vunpack.c.l.bf16 %v5225
        %v5235 = vunpack.c.h.bf16 %v5225
        %v5236 = vunpack.c.l.bf16 %v5226
        %v5237 = vunpack.c.h.bf16 %v5226
        %v5238 = vunpack.c.l.bf16 %v5227
        %v5239 = vunpack.c.h.bf16 %v5227
        %v5240 = vpack.c.bf16 %v5216, %v5215
        %v5241 = vpack.c.bf16 %v5217, %v5217
        %5242 = vmatprep.subr.bf16.mxu0 %v3842
        %5243 = vmatpush1.bf16.msra.mxu0 %v3841
        %5244 = vmatprep.subr.bf16.mxu0 %v3846
        %5245 = vmatpush1.bf16.msra.mxu0 %v3845
        %5246 = vmatprep.subr.bf16.mxu0 %v3850
        %5247 = vmatpush1.bf16.msra.mxu0 %v3849
        %5248 = vmatprep.subr.bf16.mxu0 %v3854
        %5249 = vmatpush1.bf16.msra.mxu0 %v3853
        %5250 = vmatprep.subr.bf16.mxu0 %v3858
        %5251 = vmatpush1.bf16.msra.mxu0 %v3857
        %5252 = vmatprep.subr.bf16.mxu0 %v3862
        %5253 = vmatpush1.bf16.msra.mxu0 %v3861
        %5254 = vmatprep.subr.bf16.mxu0 %v3866
        %5255 = vmatpush1.bf16.msra.mxu0 %v3865
        %5256 = vmatprep.subr.bf16.mxu0 %v3870
        %5257 = vmatpush1.bf16.msra.mxu0 %v3869
        %5258 = vmatprep.subr.bf16.mxu0 0
        %5259 = vmatpush1.bf16.msra.mxu0 0
        %5260 = vmatprep.subr.bf16.mxu0 0
        %5261 = vmatpush1.bf16.msra.mxu0 0
        %5262 = vmatprep.subr.bf16.mxu0 0
        %5263 = vmatpush1.bf16.msra.mxu0 0
        %5264 = vmatprep.subr.bf16.mxu0 0
        %5265 = vmatpush1.bf16.msra.mxu0 0
        %5266 = vmatprep.subr.bf16.mxu0 0
        %5267 = vmatpush1.bf16.msra.mxu0 0
        %5268 = vmatprep.subr.bf16.mxu0 0
        %5269 = vmatpush1.bf16.msra.mxu0 0
        %5270 = vmatprep.subr.bf16.mxu0 0
        %5271 = vmatpush1.bf16.msra.mxu0 0
        %5272 = vmatprep.subr.bf16.mxu0 0
        %5273 = vmatpush1.bf16.msra.mxu0 0
        %5274 = vmatprep.mubr.bf16.mxu0 0
        %5275 = vmatmul.mubr.bf16.gmra.mrb[0].mxu0 %v5240
        %v5276 = vpop.f32.mrb[0].mxu0
        %v5277 = vadd.f32 0.0, %v5276
        %v5278 = vpop.f32.mrb[0].mxu0
        %v5279 = vadd.f32 0.0, %v5278
        %v5280 = vpop.f32.mrb[0].mxu0
        %v5281 = vadd.f32 0.0, %v5280
        %v5282 = vpop.f32.mrb[0].mxu0
        %v5283 = vadd.f32 0.0, %v5282
        %5284 = vmatprep.mubr.bf16.mxu0 0
        %5285 = vmatmul.mubr.bf16.gmra.mrb[0].mxu0 %v5241
        %v5286 = vpop.f32.mrb[0].mxu0
        %v5287 = vadd.f32 0.0, %v5286
        %v5288 = vpop.f32.mrb[0].mxu0
        %v5289 = vadd.f32 0.0, %v5288
        %v5290 = vpop.f32.mrb[0].mxu0
        %v5291 = vpop.f32.mrb[0].mxu0
        %5292 = vdwg.mxu0
        %5293 = vmatprep.subr.bf16.mxu0 %v3844
        %5294 = vmatpush1.bf16.msra.mxu0 %v3843
        %5295 = vmatprep.subr.bf16.mxu0 %v3848
        %5296 = vmatpush1.bf16.msra.mxu0 %v3847
        %5297 = vmatprep.subr.bf16.mxu0 %v3852
        %5298 = vmatpush1.bf16.msra.mxu0 %v3851
        %5299 = vmatprep.subr.bf16.mxu0 %v3856
        %5300 = vmatpush1.bf16.msra.mxu0 %v3855
        %5301 = vmatprep.subr.bf16.mxu0 %v3860
        %5302 = vmatpush1.bf16.msra.mxu0 %v3859
        %5303 = vmatprep.subr.bf16.mxu0 %v3864
        %5304 = vmatpush1.bf16.msra.mxu0 %v3863
        %5305 = vmatprep.subr.bf16.mxu0 %v3868
        %5306 = vmatpush1.bf16.msra.mxu0 %v3867
        %5307 = vmatprep.subr.bf16.mxu0 %v3872
        %5308 = vmatpush1.bf16.msra.mxu0 %v3871
        %5309 = vmatprep.subr.bf16.mxu0 0
        %5310 = vmatpush1.bf16.msra.mxu0 0
        %5311 = vmatprep.subr.bf16.mxu0 0
        %5312 = vmatpush1.bf16.msra.mxu0 0
        %5313 = vmatprep.subr.bf16.mxu0 0
        %5314 = vmatpush1.bf16.msra.mxu0 0
        %5315 = vmatprep.subr.bf16.mxu0 0
        %5316 = vmatpush1.bf16.msra.mxu0 0
        %5317 = vmatprep.subr.bf16.mxu0 0
        %5318 = vmatpush1.bf16.msra.mxu0 0
        %5319 = vmatprep.subr.bf16.mxu0 0
        %5320 = vmatpush1.bf16.msra.mxu0 0
        %5321 = vmatprep.subr.bf16.mxu0 0
        %5322 = vmatpush1.bf16.msra.mxu0 0
        %5323 = vmatprep.subr.bf16.mxu0 0
        %5324 = vmatpush1.bf16.msra.mxu0 0
        %5325 = vmatprep.mubr.bf16.mxu0 0
        %5326 = vmatmul.mubr.bf16.gmra.mrb[0].mxu0 %v5240
        %v5327 = vpop.f32.mrb[0].mxu0
        %v5328 = vadd.f32 0.0, %v5327
        %v5329 = vpop.f32.mrb[0].mxu0
        %v5330 = vadd.f32 0.0, %v5329
        %v5331 = vpop.f32.mrb[0].mxu0
        %v5332 = vadd.f32 0.0, %v5331
        %v5333 = vpop.f32.mrb[0].mxu0
        %v5334 = vadd.f32 0.0, %v5333
        %5335 = vmatprep.mubr.bf16.mxu0 0
        %5336 = vmatmul.mubr.bf16.gmra.mrb[0].mxu0 %v5241
        %v5337 = vpop.f32.mrb[0].mxu0
        %v5338 = vadd.f32 0.0, %v5337
        %v5339 = vpop.f32.mrb[0].mxu0
        %v5340 = vadd.f32 0.0, %v5339
        %v5341 = vpop.f32.mrb[0].mxu0
        %v5342 = vpop.f32.mrb[0].mxu0
        %5343 = vdwg.mxu0
        %v5344 = vadd.f32 %v5228, %v5277
        %v5345 = vadd.f32 %v5229, %v5279
        %v5346 = vadd.f32 %v5230, %v5328
        %v5347 = vadd.f32 %v5231, %v5330
        %v5348 = vadd.f32 %v5232, %v5281
        %v5349 = vadd.f32 %v5233, %v5283
        %v5350 = vadd.f32 %v5234, %v5332
        %v5351 = vadd.f32 %v5235, %v5334
        %v5352 = vadd.f32 %v5236, %v5287
        %v5353 = vadd.f32 %v5237, %v5289
        %v5354 = vadd.f32 %v5238, %v5338
        %v5355 = vadd.f32 %v5239, %v5340
        %v5356 = vxor.u32 %v5344, 2147483648
        %v5357 = vxor.u32 %v5348, 2147483648
        %v5358 = vxor.u32 %v5352, 2147483648
        %v5359 = vmul.f32 %v5356, 1.442695
        %v5360 = vpow.pop %v5359
        %v5361 = vmul.f32 %v5357, 1.442695
        %v5362 = vpow.pop %v5361
        %v5363 = vmul.f32 %v5358, 1.442695
        %v5364 = vpow.pop %v5363
        %v5365 = vadd.f32 %v5360, 1.0
        %v5366 = vadd.f32 %v5362, 1.0
        %v5367 = vadd.f32 %v5364, 1.0
        %v5368 = vrcp.pop %v5365
        %v5369 = vmul.f32 1.0, %v5368
        %v5370 = vrcp.pop %v5366
        %v5371 = vmul.f32 1.0, %v5370
        %v5372 = vrcp.pop %v5367
        %v5373 = vmul.f32 1.0, %v5372
        %v5374 = vxor.u32 %v5345, 2147483648
        %v5375 = vxor.u32 %v5349, 2147483648
        %v5376 = vxor.u32 %v5353, 2147483648
        %v5377 = vmul.f32 %v5374, 1.442695
        %v5378 = vpow.pop %v5377
        %v5379 = vmul.f32 %v5375, 1.442695
        %v5380 = vpow.pop %v5379
        %v5381 = vmul.f32 %v5376, 1.442695
        %v5382 = vpow.pop %v5381
        %v5383 = vadd.f32 %v5378, 1.0
        %v5384 = vadd.f32 %v5380, 1.0
        %v5385 = vadd.f32 %v5382, 1.0
        %v5386 = vrcp.pop %v5383
        %v5387 = vmul.f32 1.0, %v5386
        %v5388 = vrcp.pop %v5384
        %v5389 = vmul.f32 1.0, %v5388
        %v5390 = vrcp.pop %v5385
        %v5391 = vmul.f32 1.0, %v5390
        %v5392 = vtanh.pop %v5346
        %v5393 = vtanh.pop %v5350
        %v5394 = vtanh.pop %v5354
        %v5395 = vxor.u32 %v5347, 2147483648
        %v5396 = vxor.u32 %v5351, 2147483648
        %v5397 = vxor.u32 %v5355, 2147483648
        %v5398 = vmul.f32 %v5395, 1.442695
        %v5399 = vpow.pop %v5398
        %v5400 = vmul.f32 %v5396, 1.442695
        %v5401 = vpow.pop %v5400
        %v5402 = vmul.f32 %v5397, 1.442695
        %v5403 = vpow.pop %v5402
        %v5404 = vadd.f32 %v5399, 1.0
        %v5405 = vadd.f32 %v5401, 1.0
        %v5406 = vadd.f32 %v5403, 1.0
        %v5407 = vrcp.pop %v5404
        %v5408 = vmul.f32 1.0, %v5407
        %v5409 = vrcp.pop %v5405
        %v5410 = vmul.f32 1.0, %v5409
        %v5411 = vrcp.pop %v5406
        %v5412 = vmul.f32 1.0, %v5411
        %v5413 = vmul.f32 %v5387, %v5218
        %v5414 = vmul.f32 %v5389, %v5219
        %v5415 = vmul.f32 %v5391, %v5220
        %v5416 = vmul.f32 %v5369, %v5392
        %v5417 = vmul.f32 %v5371, %v5393
        %v5418 = vmul.f32 %v5373, %v5394
        %v5419 = vadd.f32 %v5413, %v5416
        %v5420 = vadd.f32 %v5414, %v5417
        %v5421 = vadd.f32 %v5415, %v5418
        %v5422 = vtanh.pop %v5419
        %v5423 = vtanh.pop %v5420
        %v5424 = vtanh.pop %v5421
        %v5425 = vmul.f32 %v5408, %v5422
        %v5426 = vmul.f32 %v5410, %v5423
        %v5427 = vmul.f32 %v5412, %v5424
        %5428 = vst [vmem:[#allocation4] sm:$0xff] %v5425
        %5429 = vst [vmem:[#allocation4 + $0x8] sm:$0xff] %v5426
        %5430 = vst [vmem:[#allocation4 + $0x10] sm:$0xff] %v5427
        %5431 = vst [vmem:[#allocation5] sm:$0xff] %v5419
        %5432 = vst [vmem:[#allocation5 + $0x8] sm:$0xff] %v5420
        %5433 = vst [vmem:[#allocation5 + $0x10] sm:$0xff] %v5421
        %s5434 = scalar_lea.vmem %s1039, 144 [#allocation7]
        %5435 = vst [vmem:[%s5434] sm:$0xff] %v5425
        %5436 = vst [vmem:[%s5434 + $0x8] sm:$0xff] %v5426
        %5437 = vst [vmem:[%s5434 + $0x10] sm:$0xff] %v5427
        %v5438 = vld [vmem:[#allocation4] sm:$0xff]
        %v5439 = vld [vmem:[#allocation4 + $0x8] sm:$0xff]
        %v5440 = vld [vmem:[#allocation4 + $0x10] sm:$0xff]
        %v5441 = vld [vmem:[#allocation5] sm:$0xff]
        %v5442 = vld [vmem:[#allocation5 + $0x8] sm:$0xff]
        %v5443 = vld [vmem:[#allocation5 + $0x10] sm:$0xff]
        %s5444 = scalar_lea.vmem [#allocation3], 336
        %v5445 = vld [vmem:[%s5444] sm:$0xff]
        %v5446 = vld [vmem:[%s5444 + $0x8] sm:$0xff]
        %v5447 = vld [vmem:[%s5444 + $0x10] sm:$0xff]
        %v5448 = vld [vmem:[%s5444 + $0x18] sm:$0xff]
        %v5449 = vld [vmem:[%s5444 + $0x20] sm:$0xff]
        %v5450 = vld [vmem:[%s5444 + $0x28] sm:$0xff]
        %v5451 = vunpack.c.l.bf16 %v5445
        %v5452 = vunpack.c.h.bf16 %v5445
        %v5453 = vunpack.c.l.bf16 %v5446
        %v5454 = vunpack.c.h.bf16 %v5446
        %v5455 = vunpack.c.l.bf16 %v5447
        %v5456 = vunpack.c.h.bf16 %v5447
        %v5457 = vunpack.c.l.bf16 %v5448
        %v5458 = vunpack.c.h.bf16 %v5448
        %v5459 = vunpack.c.l.bf16 %v5449
        %v5460 = vunpack.c.h.bf16 %v5449
        %v5461 = vunpack.c.l.bf16 %v5450
        %v5462 = vunpack.c.h.bf16 %v5450
        %v5463 = vpack.c.bf16 %v5439, %v5438
        %v5464 = vpack.c.bf16 %v5440, %v5440
        %5465 = vmatprep.subr.bf16.mxu0 %v3842
        %5466 = vmatpush1.bf16.msra.mxu0 %v3841
        %5467 = vmatprep.subr.bf16.mxu0 %v3846
        %5468 = vmatpush1.bf16.msra.mxu0 %v3845
        %5469 = vmatprep.subr.bf16.mxu0 %v3850
        %5470 = vmatpush1.bf16.msra.mxu0 %v3849
        %5471 = vmatprep.subr.bf16.mxu0 %v3854
        %5472 = vmatpush1.bf16.msra.mxu0 %v3853
        %5473 = vmatprep.subr.bf16.mxu0 %v3858
        %5474 = vmatpush1.bf16.msra.mxu0 %v3857
        %5475 = vmatprep.subr.bf16.mxu0 %v3862
        %5476 = vmatpush1.bf16.msra.mxu0 %v3861
        %5477 = vmatprep.subr.bf16.mxu0 %v3866
        %5478 = vmatpush1.bf16.msra.mxu0 %v3865
        %5479 = vmatprep.subr.bf16.mxu0 %v3870
        %5480 = vmatpush1.bf16.msra.mxu0 %v3869
        %5481 = vmatprep.subr.bf16.mxu0 0
        %5482 = vmatpush1.bf16.msra.mxu0 0
        %5483 = vmatprep.subr.bf16.mxu0 0
        %5484 = vmatpush1.bf16.msra.mxu0 0
        %5485 = vmatprep.subr.bf16.mxu0 0
        %5486 = vmatpush1.bf16.msra.mxu0 0
        %5487 = vmatprep.subr.bf16.mxu0 0
        %5488 = vmatpush1.bf16.msra.mxu0 0
        %5489 = vmatprep.subr.bf16.mxu0 0
        %5490 = vmatpush1.bf16.msra.mxu0 0
        %5491 = vmatprep.subr.bf16.mxu0 0
        %5492 = vmatpush1.bf16.msra.mxu0 0
        %5493 = vmatprep.subr.bf16.mxu0 0
        %5494 = vmatpush1.bf16.msra.mxu0 0
        %5495 = vmatprep.subr.bf16.mxu0 0
        %5496 = vmatpush1.bf16.msra.mxu0 0
        %5497 = vmatprep.mubr.bf16.mxu0 0
        %5498 = vmatmul.mubr.bf16.gmra.mrb[0].mxu0 %v5463
        %v5499 = vpop.f32.mrb[0].mxu0
        %v5500 = vadd.f32 0.0, %v5499
        %v5501 = vpop.f32.mrb[0].mxu0
        %v5502 = vadd.f32 0.0, %v5501
        %v5503 = vpop.f32.mrb[0].mxu0
        %v5504 = vadd.f32 0.0, %v5503
        %v5505 = vpop.f32.mrb[0].mxu0
        %v5506 = vadd.f32 0.0, %v5505
        %5507 = vmatprep.mubr.bf16.mxu0 0
        %5508 = vmatmul.mubr.bf16.gmra.mrb[0].mxu0 %v5464
        %v5509 = vpop.f32.mrb[0].mxu0
        %v5510 = vadd.f32 0.0, %v5509
        %v5511 = vpop.f32.mrb[0].mxu0
        %v5512 = vadd.f32 0.0, %v5511
        %v5513 = vpop.f32.mrb[0].mxu0
        %v5514 = vpop.f32.mrb[0].mxu0
        %5515 = vdwg.mxu0
        %5516 = vmatprep.subr.bf16.mxu0 %v3844
        %5517 = vmatpush1.bf16.msra.mxu0 %v3843
        %5518 = vmatprep.subr.bf16.mxu0 %v3848
        %5519 = vmatpush1.bf16.msra.mxu0 %v3847
        %5520 = vmatprep.subr.bf16.mxu0 %v3852
        %5521 = vmatpush1.bf16.msra.mxu0 %v3851
        %5522 = vmatprep.subr.bf16.mxu0 %v3856
        %5523 = vmatpush1.bf16.msra.mxu0 %v3855
        %5524 = vmatprep.subr.bf16.mxu0 %v3860
        %5525 = vmatpush1.bf16.msra.mxu0 %v3859
        %5526 = vmatprep.subr.bf16.mxu0 %v3864
        %5527 = vmatpush1.bf16.msra.mxu0 %v3863
        %5528 = vmatprep.subr.bf16.mxu0 %v3868
        %5529 = vmatpush1.bf16.msra.mxu0 %v3867
        %5530 = vmatprep.subr.bf16.mxu0 %v3872
        %5531 = vmatpush1.bf16.msra.mxu0 %v3871
        %5532 = vmatprep.subr.bf16.mxu0 0
        %5533 = vmatpush1.bf16.msra.mxu0 0
        %5534 = vmatprep.subr.bf16.mxu0 0
        %5535 = vmatpush1.bf16.msra.mxu0 0
        %5536 = vmatprep.subr.bf16.mxu0 0
        %5537 = vmatpush1.bf16.msra.mxu0 0
        %5538 = vmatprep.subr.bf16.mxu0 0
        %5539 = vmatpush1.bf16.msra.mxu0 0
        %5540 = vmatprep.subr.bf16.mxu0 0
        %5541 = vmatpush1.bf16.msra.mxu0 0
        %5542 = vmatprep.subr.bf16.mxu0 0
        %5543 = vmatpush1.bf16.msra.mxu0 0
        %5544 = vmatprep.subr.bf16.mxu0 0
        %5545 = vmatpush1.bf16.msra.mxu0 0
        %5546 = vmatprep.subr.bf16.mxu0 0
        %5547 = vmatpush1.bf16.msra.mxu0 0
        %5548 = vmatprep.mubr.bf16.mxu0 0
        %5549 = vmatmul.mubr.bf16.gmra.mrb[0].mxu0 %v5463
        %v5550 = vpop.f32.mrb[0].mxu0
        %v5551 = vadd.f32 0.0, %v5550
        %v5552 = vpop.f32.mrb[0].mxu0
        %v5553 = vadd.f32 0.0, %v5552
        %v5554 = vpop.f32.mrb[0].mxu0
        %v5555 = vadd.f32 0.0, %v5554
        %v5556 = vpop.f32.mrb[0].mxu0
        %v5557 = vadd.f32 0.0, %v5556
        %5558 = vmatprep.mubr.bf16.mxu0 0
        %5559 = vmatmul.mubr.bf16.gmra.mrb[0].mxu0 %v5464
        %v5560 = vpop.f32.mrb[0].mxu0
        %v5561 = vadd.f32 0.0, %v5560
        %v5562 = vpop.f32.mrb[0].mxu0
        %v5563 = vadd.f32 0.0, %v5562
        %v5564 = vpop.f32.mrb[0].mxu0
        %v5565 = vpop.f32.mrb[0].mxu0
        %5566 = vdwg.mxu0
        %v5567 = vadd.f32 %v5451, %v5500
        %v5568 = vadd.f32 %v5452, %v5502
        %v5569 = vadd.f32 %v5453, %v5551
        %v5570 = vadd.f32 %v5454, %v5553
        %v5571 = vadd.f32 %v5455, %v5504
        %v5572 = vadd.f32 %v5456, %v5506
        %v5573 = vadd.f32 %v5457, %v5555
        %v5574 = vadd.f32 %v5458, %v5557
        %v5575 = vadd.f32 %v5459, %v5510
        %v5576 = vadd.f32 %v5460, %v5512
        %v5577 = vadd.f32 %v5461, %v5561
        %v5578 = vadd.f32 %v5462, %v5563
        %v5579 = vxor.u32 %v5567, 2147483648
        %v5580 = vxor.u32 %v5571, 2147483648
        %v5581 = vxor.u32 %v5575, 2147483648
        %v5582 = vmul.f32 %v5579, 1.442695
        %v5583 = vpow.pop %v5582
        %v5584 = vmul.f32 %v5580, 1.442695
        %v5585 = vpow.pop %v5584
        %v5586 = vmul.f32 %v5581, 1.442695
        %v5587 = vpow.pop %v5586
        %v5588 = vadd.f32 %v5583, 1.0
        %v5589 = vadd.f32 %v5585, 1.0
        %v5590 = vadd.f32 %v5587, 1.0
        %v5591 = vrcp.pop %v5588
        %v5592 = vmul.f32 1.0, %v5591
        %v5593 = vrcp.pop %v5589
        %v5594 = vmul.f32 1.0, %v5593
        %v5595 = vrcp.pop %v5590
        %v5596 = vmul.f32 1.0, %v5595
        %v5597 = vxor.u32 %v5568, 2147483648
        %v5598 = vxor.u32 %v5572, 2147483648
        %v5599 = vxor.u32 %v5576, 2147483648
        %v5600 = vmul.f32 %v5597, 1.442695
        %v5601 = vpow.pop %v5600
        %v5602 = vmul.f32 %v5598, 1.442695
        %v5603 = vpow.pop %v5602
        %v5604 = vmul.f32 %v5599, 1.442695
        %v5605 = vpow.pop %v5604
        %v5606 = vadd.f32 %v5601, 1.0
        %v5607 = vadd.f32 %v5603, 1.0
        %v5608 = vadd.f32 %v5605, 1.0
        %v5609 = vrcp.pop %v5606
        %v5610 = vmul.f32 1.0, %v5609
        %v5611 = vrcp.pop %v5607
        %v5612 = vmul.f32 1.0, %v5611
        %v5613 = vrcp.pop %v5608
        %v5614 = vmul.f32 1.0, %v5613
        %v5615 = vtanh.pop %v5569
        %v5616 = vtanh.pop %v5573
        %v5617 = vtanh.pop %v5577
        %v5618 = vxor.u32 %v5570, 2147483648
        %v5619 = vxor.u32 %v5574, 2147483648
        %v5620 = vxor.u32 %v5578, 2147483648
        %v5621 = vmul.f32 %v5618, 1.442695
        %v5622 = vpow.pop %v5621
        %v5623 = vmul.f32 %v5619, 1.442695
        %v5624 = vpow.pop %v5623
        %v5625 = vmul.f32 %v5620, 1.442695
        %v5626 = vpow.pop %v5625
        %v5627 = vadd.f32 %v5622, 1.0
        %v5628 = vadd.f32 %v5624, 1.0
        %v5629 = vadd.f32 %v5626, 1.0
        %v5630 = vrcp.pop %v5627
        %v5631 = vmul.f32 1.0, %v5630
        %v5632 = vrcp.pop %v5628
        %v5633 = vmul.f32 1.0, %v5632
        %v5634 = vrcp.pop %v5629
        %v5635 = vmul.f32 1.0, %v5634
        %v5636 = vmul.f32 %v5610, %v5441
        %v5637 = vmul.f32 %v5612, %v5442
        %v5638 = vmul.f32 %v5614, %v5443
        %v5639 = vmul.f32 %v5592, %v5615
        %v5640 = vmul.f32 %v5594, %v5616
        %v5641 = vmul.f32 %v5596, %v5617
        %v5642 = vadd.f32 %v5636, %v5639
        %v5643 = vadd.f32 %v5637, %v5640
        %v5644 = vadd.f32 %v5638, %v5641
        %v5645 = vtanh.pop %v5642
        %v5646 = vtanh.pop %v5643
        %v5647 = vtanh.pop %v5644
        %v5648 = vmul.f32 %v5631, %v5645
        %v5649 = vmul.f32 %v5633, %v5646
        %v5650 = vmul.f32 %v5635, %v5647
        %5651 = vst [vmem:[#allocation4] sm:$0xff] %v5648
        %5652 = vst [vmem:[#allocation4 + $0x8] sm:$0xff] %v5649
        %5653 = vst [vmem:[#allocation4 + $0x10] sm:$0xff] %v5650
        %5654 = vst [vmem:[#allocation5] sm:$0xff] %v5642
        %5655 = vst [vmem:[#allocation5 + $0x8] sm:$0xff] %v5643
        %5656 = vst [vmem:[#allocation5 + $0x10] sm:$0xff] %v5644
        %s5657 = scalar_lea.vmem %s1039, 168 [#allocation7]
        %5658 = vst [vmem:[%s5657] sm:$0xff] %v5648
        %5659 = vst [vmem:[%s5657 + $0x8] sm:$0xff] %v5649
        %5660 = vst [vmem:[%s5657 + $0x10] sm:$0xff] %v5650
        %v5661 = vld [vmem:[%s1039] sm:$0xff]
        %v5662 = vld [vmem:[%s1039 + $0x8] sm:$0xff]
        %v5663 = vld [vmem:[%s1039 + $0x10] sm:$0xff]
        %v5664 = vld [vmem:[%s1039 + $0x18] sm:$0xff]
        %v5665 = vld [vmem:[%s1039 + $0x20] sm:$0xff]
        %v5666 = vld [vmem:[%s1039 + $0x28] sm:$0xff]
        %v5667 = vld [vmem:[%s1039 + $0x30] sm:$0xff]
        %v5668 = vld [vmem:[%s1039 + $0x38] sm:$0xff]
        %v5669 = vld [vmem:[%s1039 + $0x40] sm:$0xff]
        %v5670 = vld [vmem:[%s1039 + $0x48] sm:$0xff]
        %v5671 = vld [vmem:[%s1039 + $0x50] sm:$0xff]
        %v5672 = vld [vmem:[%s1039 + $0x58] sm:$0xff]
        %v5673 = vld [vmem:[%s1039 + $0x60] sm:$0xff]
        %v5674 = vld [vmem:[%s1039 + $0x68] sm:$0xff]
        %v5675 = vld [vmem:[%s1039 + $0x70] sm:$0xff]
        %v5676 = vld [vmem:[%s1039 + $0x78] sm:$0xff]
        %v5677 = vld [vmem:[%s1039 + $0x80] sm:$0xff]
        %v5678 = vld [vmem:[%s1039 + $0x88] sm:$0xff]
        %v5679 = vld [vmem:[%s1039 + $0x90] sm:$0xff]
        %v5680 = vld [vmem:[%s1039 + $0x98] sm:$0xff]
        %v5681 = vld [vmem:[%s1039 + $0xa0] sm:$0xff]
        %v5682 = vld [vmem:[%s1039 + $0xa8] sm:$0xff]
        %v5683 = vld [vmem:[%s1039 + $0xb0] sm:$0xff]
        %v5684 = vld [vmem:[%s1039 + $0xb8] sm:$0xff]
        %v5685 = vld [vmem:[#allocation2] sm:$0xff]
        %v5686 = vld [vmem:[#allocation2 + $0x8] sm:$0xff]
        %v5687 = vld [vmem:[#allocation2 + $0x10] sm:$0xff]
        %v5688 = vld [vmem:[#allocation2 + $0x18] sm:$0xff]
        %v5689 = vld [vmem:[#allocation2 + $0x20] sm:$0xff]
        %v5690 = vld [vmem:[#allocation2 + $0x28] sm:$0xff]
        %v5691 = vld [vmem:[#allocation2 + $0x30] sm:$0xff]
        %v5692 = vld [vmem:[#allocation2 + $0x38] sm:$0xff]
        %v5693 = vld [vmem:[#allocation2 + $0x40] sm:$0xff]
        %v5694 = vld [vmem:[#allocation2 + $0x48] sm:$0xff]
        %v5695 = vld [vmem:[#allocation2 + $0x50] sm:$0xff]
        %v5696 = vld [vmem:[#allocation2 + $0x58] sm:$0xff]
        %v5697 = vld [vmem:[#allocation2 + $0x60] sm:$0xff]
        %v5698 = vld [vmem:[#allocation2 + $0x68] sm:$0xff]
        %v5699 = vld [vmem:[#allocation2 + $0x70] sm:$0xff]
        %v5700 = vld [vmem:[#allocation2 + $0x78] sm:$0xff]
        %v5701 = vld [vmem:[#allocation2 + $0x80] sm:$0xff]
        %v5702 = vld [vmem:[#allocation2 + $0x88] sm:$0xff]
        %v5703 = vld [vmem:[#allocation2 + $0x90] sm:$0xff]
        %v5704 = vld [vmem:[#allocation2 + $0x98] sm:$0xff]
        %v5705 = vld [vmem:[#allocation2 + $0xa0] sm:$0xff]
        %v5706 = vld [vmem:[#allocation2 + $0xa8] sm:$0xff]
        %v5707 = vld [vmem:[#allocation2 + $0xb0] sm:$0xff]
        %v5708 = vld [vmem:[#allocation2 + $0xb8] sm:$0xff]
        %v5709 = vadd.f32 %v5661, %v5685
        %v5710 = vadd.f32 %v5662, %v5686
        %v5711 = vadd.f32 %v5663, %v5687
        %v5712 = vadd.f32 %v5664, %v5688
        %v5713 = vadd.f32 %v5665, %v5689
        %v5714 = vadd.f32 %v5666, %v5690
        %v5715 = vadd.f32 %v5667, %v5691
        %v5716 = vadd.f32 %v5668, %v5692
        %v5717 = vadd.f32 %v5669, %v5693
        %v5718 = vadd.f32 %v5670, %v5694
        %v5719 = vadd.f32 %v5671, %v5695
        %v5720 = vadd.f32 %v5672, %v5696
        %v5721 = vadd.f32 %v5673, %v5697
        %v5722 = vadd.f32 %v5674, %v5698
        %v5723 = vadd.f32 %v5675, %v5699
        %v5724 = vadd.f32 %v5676, %v5700
        %v5725 = vadd.f32 %v5677, %v5701
        %v5726 = vadd.f32 %v5678, %v5702
        %v5727 = vadd.f32 %v5679, %v5703
        %v5728 = vadd.f32 %v5680, %v5704
        %v5729 = vadd.f32 %v5681, %v5705
        %v5730 = vadd.f32 %v5682, %v5706
        %v5731 = vadd.f32 %v5683, %v5707
        %v5732 = vadd.f32 %v5684, %v5708
        %v5733 = vld [vmem:[%s39] sm:$0x1]
        %v5734 = vld [vmem:[%s41] sm:$0x1]
        %5735 = vadd.xlane.f32.xlu0 %v5709
        %v5736 = vpop.xlane.xlu0 %5735
        %5737 = vadd.xlane.f32.xlu0 %v5710
        %v5738 = vpop.xlane.xlu0 %5737
        %5739 = vadd.xlane.f32.xlu0 %v5711
        %v5740 = vpop.xlane.xlu0 %5739
        %5741 = vadd.xlane.f32.xlu0 %v5712
        %v5742 = vpop.xlane.xlu0 %5741
        %5743 = vadd.xlane.f32.xlu0 %v5713
        %v5744 = vpop.xlane.xlu0 %5743
        %5745 = vadd.xlane.f32.xlu0 %v5714
        %v5746 = vpop.xlane.xlu0 %5745
        %5747 = vadd.xlane.f32.xlu0 %v5715
        %v5748 = vpop.xlane.xlu0 %5747
        %5749 = vadd.xlane.f32.xlu0 %v5716
        %v5750 = vpop.xlane.xlu0 %5749
        %5751 = vadd.xlane.f32.xlu0 %v5717
        %v5752 = vpop.xlane.xlu0 %5751
        %5753 = vadd.xlane.f32.xlu0 %v5718
        %v5754 = vpop.xlane.xlu0 %5753
        %5755 = vadd.xlane.f32.xlu0 %v5719
        %v5756 = vpop.xlane.xlu0 %5755
        %5757 = vadd.xlane.f32.xlu0 %v5720
        %v5758 = vpop.xlane.xlu0 %5757
        %5759 = vadd.xlane.f32.xlu0 %v5721
        %v5760 = vpop.xlane.xlu0 %5759
        %5761 = vadd.xlane.f32.xlu0 %v5722
        %v5762 = vpop.xlane.xlu0 %5761
        %5763 = vadd.xlane.f32.xlu0 %v5723
        %v5764 = vpop.xlane.xlu0 %5763
        %5765 = vadd.xlane.f32.xlu0 %v5724
        %v5766 = vpop.xlane.xlu0 %5765
        %5767 = vadd.xlane.f32.xlu0 %v5725
        %v5768 = vpop.xlane.xlu0 %5767
        %5769 = vadd.xlane.f32.xlu0 %v5726
        %v5770 = vpop.xlane.xlu0 %5769
        %5771 = vadd.xlane.f32.xlu0 %v5727
        %v5772 = vpop.xlane.xlu0 %5771
        %5773 = vadd.xlane.f32.xlu0 %v5728
        %v5774 = vpop.xlane.xlu0 %5773
        %5775 = vadd.xlane.f32.xlu0 %v5729
        %v5776 = vpop.xlane.xlu0 %5775
        %5777 = vadd.xlane.f32.xlu0 %v5730
        %v5778 = vpop.xlane.xlu0 %5777
        %5779 = vadd.xlane.f32.xlu0 %v5731
        %v5780 = vpop.xlane.xlu0 %5779
        %5781 = vadd.xlane.f32.xlu0 %v5732
        %v5782 = vpop.xlane.xlu0 %5781
        %v5783 = vrcp.pop 128.0
        %v5784 = vmul.f32 %v5736, %v5783
        %v5785 = vmul.f32 %v5738, %v5783
        %v5786 = vmul.f32 %v5740, %v5783
        %v5787 = vmul.f32 %v5742, %v5783
        %v5788 = vmul.f32 %v5744, %v5783
        %v5789 = vmul.f32 %v5746, %v5783
        %v5790 = vmul.f32 %v5748, %v5783
        %v5791 = vmul.f32 %v5750, %v5783
        %v5792 = vmul.f32 %v5752, %v5783
        %v5793 = vmul.f32 %v5754, %v5783
        %v5794 = vmul.f32 %v5756, %v5783
        %v5795 = vmul.f32 %v5758, %v5783
        %v5796 = vmul.f32 %v5760, %v5783
        %v5797 = vmul.f32 %v5762, %v5783
        %v5798 = vmul.f32 %v5764, %v5783
        %v5799 = vmul.f32 %v5766, %v5783
        %v5800 = vmul.f32 %v5768, %v5783
        %v5801 = vmul.f32 %v5770, %v5783
        %v5802 = vmul.f32 %v5772, %v5783
        %v5803 = vmul.f32 %v5774, %v5783
        %v5804 = vmul.f32 %v5776, %v5783
        %v5805 = vmul.f32 %v5778, %v5783
        %v5806 = vmul.f32 %v5780, %v5783
        %v5807 = vmul.f32 %v5782, %v5783
        %v5808 = vsub.f32 %v5709, %v5784
        %v5809 = vsub.f32 %v5710, %v5785
        %v5810 = vsub.f32 %v5711, %v5786
        %v5811 = vsub.f32 %v5712, %v5787
        %v5812 = vsub.f32 %v5713, %v5788
        %v5813 = vsub.f32 %v5714, %v5789
        %v5814 = vsub.f32 %v5715, %v5790
        %v5815 = vsub.f32 %v5716, %v5791
        %v5816 = vsub.f32 %v5717, %v5792
        %v5817 = vsub.f32 %v5718, %v5793
        %v5818 = vsub.f32 %v5719, %v5794
        %v5819 = vsub.f32 %v5720, %v5795
        %v5820 = vsub.f32 %v5721, %v5796
        %v5821 = vsub.f32 %v5722, %v5797
        %v5822 = vsub.f32 %v5723, %v5798
        %v5823 = vsub.f32 %v5724, %v5799
        %v5824 = vsub.f32 %v5725, %v5800
        %v5825 = vsub.f32 %v5726, %v5801
        %v5826 = vsub.f32 %v5727, %v5802
        %v5827 = vsub.f32 %v5728, %v5803
        %v5828 = vsub.f32 %v5729, %v5804
        %v5829 = vsub.f32 %v5730, %v5805
        %v5830 = vsub.f32 %v5731, %v5806
        %v5831 = vsub.f32 %v5732, %v5807
        %v5832 = vmul.f32 %v5808, %v5808
        %v5833 = vmul.f32 %v5809, %v5809
        %v5834 = vmul.f32 %v5810, %v5810
        %v5835 = vmul.f32 %v5811, %v5811
        %v5836 = vmul.f32 %v5812, %v5812
        %v5837 = vmul.f32 %v5813, %v5813
        %v5838 = vmul.f32 %v5814, %v5814
        %v5839 = vmul.f32 %v5815, %v5815
        %v5840 = vmul.f32 %v5816, %v5816
        %v5841 = vmul.f32 %v5817, %v5817
        %v5842 = vmul.f32 %v5818, %v5818
        %v5843 = vmul.f32 %v5819, %v5819
        %v5844 = vmul.f32 %v5820, %v5820
        %v5845 = vmul.f32 %v5821, %v5821
        %v5846 = vmul.f32 %v5822, %v5822
        %v5847 = vmul.f32 %v5823, %v5823
        %v5848 = vmul.f32 %v5824, %v5824
        %v5849 = vmul.f32 %v5825, %v5825
        %v5850 = vmul.f32 %v5826, %v5826
        %v5851 = vmul.f32 %v5827, %v5827
        %v5852 = vmul.f32 %v5828, %v5828
        %v5853 = vmul.f32 %v5829, %v5829
        %v5854 = vmul.f32 %v5830, %v5830
        %v5855 = vmul.f32 %v5831, %v5831
        %5856 = vadd.xlane.f32.xlu0 %v5832
        %v5857 = vpop.xlane.xlu0 %5856
        %5858 = vadd.xlane.f32.xlu0 %v5833
        %v5859 = vpop.xlane.xlu0 %5858
        %5860 = vadd.xlane.f32.xlu0 %v5834
        %v5861 = vpop.xlane.xlu0 %5860
        %5862 = vadd.xlane.f32.xlu0 %v5835
        %v5863 = vpop.xlane.xlu0 %5862
        %5864 = vadd.xlane.f32.xlu0 %v5836
        %v5865 = vpop.xlane.xlu0 %5864
        %5866 = vadd.xlane.f32.xlu0 %v5837
        %v5867 = vpop.xlane.xlu0 %5866
        %5868 = vadd.xlane.f32.xlu0 %v5838
        %v5869 = vpop.xlane.xlu0 %5868
        %5870 = vadd.xlane.f32.xlu0 %v5839
        %v5871 = vpop.xlane.xlu0 %5870
        %5872 = vadd.xlane.f32.xlu0 %v5840
        %v5873 = vpop.xlane.xlu0 %5872
        %5874 = vadd.xlane.f32.xlu0 %v5841
        %v5875 = vpop.xlane.xlu0 %5874
        %5876 = vadd.xlane.f32.xlu0 %v5842
        %v5877 = vpop.xlane.xlu0 %5876
        %5878 = vadd.xlane.f32.xlu0 %v5843
        %v5879 = vpop.xlane.xlu0 %5878
        %5880 = vadd.xlane.f32.xlu0 %v5844
        %v5881 = vpop.xlane.xlu0 %5880
        %5882 = vadd.xlane.f32.xlu0 %v5845
        %v5883 = vpop.xlane.xlu0 %5882
        %5884 = vadd.xlane.f32.xlu0 %v5846
        %v5885 = vpop.xlane.xlu0 %5884
        %5886 = vadd.xlane.f32.xlu0 %v5847
        %v5887 = vpop.xlane.xlu0 %5886
        %5888 = vadd.xlane.f32.xlu0 %v5848
        %v5889 = vpop.xlane.xlu0 %5888
        %5890 = vadd.xlane.f32.xlu0 %v5849
        %v5891 = vpop.xlane.xlu0 %5890
        %5892 = vadd.xlane.f32.xlu0 %v5850
        %v5893 = vpop.xlane.xlu0 %5892
        %5894 = vadd.xlane.f32.xlu0 %v5851
        %v5895 = vpop.xlane.xlu0 %5894
        %5896 = vadd.xlane.f32.xlu0 %v5852
        %v5897 = vpop.xlane.xlu0 %5896
        %5898 = vadd.xlane.f32.xlu0 %v5853
        %v5899 = vpop.xlane.xlu0 %5898
        %5900 = vadd.xlane.f32.xlu0 %v5854
        %v5901 = vpop.xlane.xlu0 %5900
        %5902 = vadd.xlane.f32.xlu0 %v5855
        %v5903 = vpop.xlane.xlu0 %5902
        %v5904 = vmul.f32 %v5857, %v5783
        %v5905 = vmul.f32 %v5859, %v5783
        %v5906 = vmul.f32 %v5861, %v5783
        %v5907 = vmul.f32 %v5863, %v5783
        %v5908 = vmul.f32 %v5865, %v5783
        %v5909 = vmul.f32 %v5867, %v5783
        %v5910 = vmul.f32 %v5869, %v5783
        %v5911 = vmul.f32 %v5871, %v5783
        %v5912 = vmul.f32 %v5873, %v5783
        %v5913 = vmul.f32 %v5875, %v5783
        %v5914 = vmul.f32 %v5877, %v5783
        %v5915 = vmul.f32 %v5879, %v5783
        %v5916 = vmul.f32 %v5881, %v5783
        %v5917 = vmul.f32 %v5883, %v5783
        %v5918 = vmul.f32 %v5885, %v5783
        %v5919 = vmul.f32 %v5887, %v5783
        %v5920 = vmul.f32 %v5889, %v5783
        %v5921 = vmul.f32 %v5891, %v5783
        %v5922 = vmul.f32 %v5893, %v5783
        %v5923 = vmul.f32 %v5895, %v5783
        %v5924 = vmul.f32 %v5897, %v5783
        %v5925 = vmul.f32 %v5899, %v5783
        %v5926 = vmul.f32 %v5901, %v5783
        %v5927 = vmul.f32 %v5903, %v5783
        %v5928 = vadd.f32 %v5904, 1e-05
        %v5929 = vadd.f32 %v5905, 1e-05
        %v5930 = vadd.f32 %v5906, 1e-05
        %v5931 = vadd.f32 %v5907, 1e-05
        %v5932 = vadd.f32 %v5908, 1e-05
        %v5933 = vadd.f32 %v5909, 1e-05
        %v5934 = vadd.f32 %v5910, 1e-05
        %v5935 = vadd.f32 %v5911, 1e-05
        %v5936 = vadd.f32 %v5912, 1e-05
        %v5937 = vadd.f32 %v5913, 1e-05
        %v5938 = vadd.f32 %v5914, 1e-05
        %v5939 = vadd.f32 %v5915, 1e-05
        %v5940 = vadd.f32 %v5916, 1e-05
        %v5941 = vadd.f32 %v5917, 1e-05
        %v5942 = vadd.f32 %v5918, 1e-05
        %v5943 = vadd.f32 %v5919, 1e-05
        %v5944 = vadd.f32 %v5920, 1e-05
        %v5945 = vadd.f32 %v5921, 1e-05
        %v5946 = vadd.f32 %v5922, 1e-05
        %v5947 = vadd.f32 %v5923, 1e-05
        %v5948 = vadd.f32 %v5924, 1e-05
        %v5949 = vadd.f32 %v5925, 1e-05
        %v5950 = vadd.f32 %v5926, 1e-05
        %v5951 = vadd.f32 %v5927, 1e-05
        %v5952 = vrsqrt.pop %v5928
        %v5953 = vrsqrt.pop %v5929
        %v5954 = vrsqrt.pop %v5930
        %v5955 = vrsqrt.pop %v5931
        %v5956 = vrsqrt.pop %v5932
        %v5957 = vrsqrt.pop %v5933
        %v5958 = vrsqrt.pop %v5934
        %v5959 = vrsqrt.pop %v5935
        %v5960 = vrsqrt.pop %v5936
        %v5961 = vrsqrt.pop %v5937
        %v5962 = vrsqrt.pop %v5938
        %v5963 = vrsqrt.pop %v5939
        %v5964 = vrsqrt.pop %v5940
        %v5965 = vrsqrt.pop %v5941
        %v5966 = vrsqrt.pop %v5942
        %v5967 = vrsqrt.pop %v5943
        %v5968 = vrsqrt.pop %v5944
        %v5969 = vrsqrt.pop %v5945
        %v5970 = vrsqrt.pop %v5946
        %v5971 = vrsqrt.pop %v5947
        %v5972 = vrsqrt.pop %v5948
        %v5973 = vrsqrt.pop %v5949
        %v5974 = vrsqrt.pop %v5950
        %v5975 = vrsqrt.pop %v5951
        %v5976 = vmul.f32 %v5808, %v5952
        %v5977 = vmul.f32 %v5809, %v5953
        %v5978 = vmul.f32 %v5810, %v5954
        %v5979 = vmul.f32 %v5811, %v5955
        %v5980 = vmul.f32 %v5812, %v5956
        %v5981 = vmul.f32 %v5813, %v5957
        %v5982 = vmul.f32 %v5814, %v5958
        %v5983 = vmul.f32 %v5815, %v5959
        %v5984 = vmul.f32 %v5816, %v5960
        %v5985 = vmul.f32 %v5817, %v5961
        %v5986 = vmul.f32 %v5818, %v5962
        %v5987 = vmul.f32 %v5819, %v5963
        %v5988 = vmul.f32 %v5820, %v5964
        %v5989 = vmul.f32 %v5821, %v5965
        %v5990 = vmul.f32 %v5822, %v5966
        %v5991 = vmul.f32 %v5823, %v5967
        %v5992 = vmul.f32 %v5824, %v5968
        %v5993 = vmul.f32 %v5825, %v5969
        %v5994 = vmul.f32 %v5826, %v5970
        %v5995 = vmul.f32 %v5827, %v5971
        %v5996 = vmul.f32 %v5828, %v5972
        %v5997 = vmul.f32 %v5829, %v5973
        %v5998 = vmul.f32 %v5830, %v5974
        %v5999 = vmul.f32 %v5831, %v5975
        %v6001 = vlaneseq
        %v6002 = vshrl.u32 %v6001, 7
        %v6003 = vsub.s32 0, %v6002
        %v6004 = vrot.slane %v5733, %v6003
        %v6006 = vmul.f32 %v5976, %v6004
        %v6007 = vmul.f32 %v5977, %v6004
        %v6008 = vmul.f32 %v5978, %v6004
        %v6009 = vmul.f32 %v5979, %v6004
        %v6010 = vmul.f32 %v5980, %v6004
        %v6011 = vmul.f32 %v5981, %v6004
        %v6012 = vmul.f32 %v5982, %v6004
        %v6013 = vmul.f32 %v5983, %v6004
        %v6014 = vmul.f32 %v5984, %v6004
        %v6015 = vmul.f32 %v5985, %v6004
        %v6016 = vmul.f32 %v5986, %v6004
        %v6017 = vmul.f32 %v5987, %v6004
        %v6018 = vmul.f32 %v5988, %v6004
        %v6019 = vmul.f32 %v5989, %v6004
        %v6020 = vmul.f32 %v5990, %v6004
        %v6021 = vmul.f32 %v5991, %v6004
        %v6022 = vmul.f32 %v5992, %v6004
        %v6023 = vmul.f32 %v5993, %v6004
        %v6024 = vmul.f32 %v5994, %v6004
        %v6025 = vmul.f32 %v5995, %v6004
        %v6026 = vmul.f32 %v5996, %v6004
        %v6027 = vmul.f32 %v5997, %v6004
        %v6028 = vmul.f32 %v5998, %v6004
        %v6029 = vmul.f32 %v5999, %v6004
        %v6031 = vlaneseq
        %v6032 = vshrl.u32 %v6031, 7
        %v6033 = vsub.s32 0, %v6032
        %v6034 = vrot.slane %v5734, %v6033
        %v6036 = vadd.f32 %v6006, %v6034
        %v6037 = vadd.f32 %v6007, %v6034
        %v6038 = vadd.f32 %v6008, %v6034
        %v6039 = vadd.f32 %v6009, %v6034
        %v6040 = vadd.f32 %v6010, %v6034
        %v6041 = vadd.f32 %v6011, %v6034
        %v6042 = vadd.f32 %v6012, %v6034
        %v6043 = vadd.f32 %v6013, %v6034
        %v6044 = vadd.f32 %v6014, %v6034
        %v6045 = vadd.f32 %v6015, %v6034
        %v6046 = vadd.f32 %v6016, %v6034
        %v6047 = vadd.f32 %v6017, %v6034
        %v6048 = vadd.f32 %v6018, %v6034
        %v6049 = vadd.f32 %v6019, %v6034
        %v6050 = vadd.f32 %v6020, %v6034
        %v6051 = vadd.f32 %v6021, %v6034
        %v6052 = vadd.f32 %v6022, %v6034
        %v6053 = vadd.f32 %v6023, %v6034
        %v6054 = vadd.f32 %v6024, %v6034
        %v6055 = vadd.f32 %v6025, %v6034
        %v6056 = vadd.f32 %v6026, %v6034
        %v6057 = vadd.f32 %v6027, %v6034
        %v6058 = vadd.f32 %v6028, %v6034
        %v6059 = vadd.f32 %v6029, %v6034
        %v6060 = vld [vmem:[%s43] sm:$0xf]
        %v6061 = vld [vmem:[%s43 + $0x4] sm:$0xf]
        %v6062 = vld [vmem:[%s43 + $0x8] sm:$0xf]
        %v6063 = vld [vmem:[%s43 + $0xc] sm:$0xf]
        %v6064 = vld [vmem:[%s43 + $0x10] sm:$0xf]
        %v6065 = vld [vmem:[%s43 + $0x14] sm:$0xf]
        %v6066 = vld [vmem:[%s43 + $0x18] sm:$0xf]
        %v6067 = vld [vmem:[%s43 + $0x1c] sm:$0xf]
        %v6068 = vld [vmem:[%s43 + $0x20] sm:$0xf]
        %v6069 = vld [vmem:[%s43 + $0x24] sm:$0xf]
        %v6070 = vld [vmem:[%s43 + $0x28] sm:$0xf]
        %v6071 = vld [vmem:[%s43 + $0x2c] sm:$0xf]
        %v6072 = vld [vmem:[%s43 + $0x30] sm:$0xf]
        %v6073 = vld [vmem:[%s43 + $0x34] sm:$0xf]
        %v6074 = vld [vmem:[%s43 + $0x38] sm:$0xf]
        %v6075 = vld [vmem:[%s43 + $0x3c] sm:$0xf]
        %v6076 = vpack.c.bf16 %v6037, %v6036
        %v6077 = vpack.c.bf16 %v6039, %v6038
        %v6078 = vpack.c.bf16 %v6041, %v6040
        %v6079 = vpack.c.bf16 %v6043, %v6042
        %v6080 = vpack.c.bf16 %v6045, %v6044
        %v6081 = vpack.c.bf16 %v6047, %v6046
        %v6082 = vpack.c.bf16 %v6049, %v6048
        %v6083 = vpack.c.bf16 %v6051, %v6050
        %v6084 = vpack.c.bf16 %v6053, %v6052
        %v6085 = vpack.c.bf16 %v6055, %v6054
        %v6086 = vpack.c.bf16 %v6057, %v6056
        %v6087 = vpack.c.bf16 %v6059, %v6058
        %v6088 = vld [vmem:[%s45] sm:$0x1]
        %v6090 = vlaneseq
        %v6091 = vshrl.u32 %v6090, 7
        %v6092 = vsub.s32 0, %v6091
        %v6093 = vrot.slane %v6088, %v6092
        %v6111 = vunpack.c.l.b16 %v6060
        %v6112 = vunpack.c.l.b16 %v6061
        %v6113 = vunpack.c.l.b16 %v6062
        %v6114 = vunpack.c.l.b16 %v6063
        %v6115 = vunpack.c.l.b16 %v6064
        %v6116 = vunpack.c.l.b16 %v6065
        %v6117 = vunpack.c.l.b16 %v6066
        %v6118 = vunpack.c.l.b16 %v6067
        %v6119 = vunpack.c.l.b16 %v6068
        %v6120 = vunpack.c.l.b16 %v6069
        %v6121 = vunpack.c.l.b16 %v6070
        %v6122 = vunpack.c.l.b16 %v6071
        %v6123 = vunpack.c.l.b16 %v6072
        %v6124 = vunpack.c.l.b16 %v6073
        %v6125 = vunpack.c.l.b16 %v6074
        %v6126 = vunpack.c.l.b16 %v6075
        %v6127 = vpack.c.b16 %v6112, %v6111
        %v6128 = vpack.c.b16 %v6114, %v6113
        %v6129 = vpack.c.b16 %v6116, %v6115
        %v6130 = vpack.c.b16 %v6118, %v6117
        %v6131 = vpack.c.b16 %v6120, %v6119
        %v6132 = vpack.c.b16 %v6122, %v6121
        %v6133 = vpack.c.b16 %v6124, %v6123
        %v6134 = vpack.c.b16 %v6126, %v6125
        %6143 = vmatprep.subr.bf16.mxu0 0
        %6144 = vmatpush1.bf16.msra.mxu0 %v6127
        %6145 = vmatprep.subr.bf16.mxu0 0
        %6146 = vmatpush1.bf16.msra.mxu0 %v6128
        %6147 = vmatprep.subr.bf16.mxu0 0
        %6148 = vmatpush1.bf16.msra.mxu0 %v6129
        %6149 = vmatprep.subr.bf16.mxu0 0
        %6150 = vmatpush1.bf16.msra.mxu0 %v6130
        %6151 = vmatprep.subr.bf16.mxu0 0
        %6152 = vmatpush1.bf16.msra.mxu0 %v6131
        %6153 = vmatprep.subr.bf16.mxu0 0
        %6154 = vmatpush1.bf16.msra.mxu0 %v6132
        %6155 = vmatprep.subr.bf16.mxu0 0
        %6156 = vmatpush1.bf16.msra.mxu0 %v6133
        %6157 = vmatprep.subr.bf16.mxu0 0
        %6158 = vmatpush1.bf16.msra.mxu0 %v6134
        %6159 = vmatprep.subr.bf16.mxu0 0
        %6160 = vmatpush1.bf16.msra.mxu0 0
        %6161 = vmatprep.subr.bf16.mxu0 0
        %6162 = vmatpush1.bf16.msra.mxu0 0
        %6163 = vmatprep.subr.bf16.mxu0 0
        %6164 = vmatpush1.bf16.msra.mxu0 0
        %6165 = vmatprep.subr.bf16.mxu0 0
        %6166 = vmatpush1.bf16.msra.mxu0 0
        %6167 = vmatprep.subr.bf16.mxu0 0
        %6168 = vmatpush1.bf16.msra.mxu0 0
        %6169 = vmatprep.subr.bf16.mxu0 0
        %6170 = vmatpush1.bf16.msra.mxu0 0
        %6171 = vmatprep.subr.bf16.mxu0 0
        %6172 = vmatpush1.bf16.msra.mxu0 0
        %6173 = vmatprep.subr.bf16.mxu0 0
        %6174 = vmatpush1.bf16.msra.mxu0 0
        %6175 = vmatprep.mubr.bf16.mxu0 0
        %6176 = vmatmul.mubr.bf16.gmra.mrb[0].mxu0 %v6076
        %v6177 = vpop.f32.mrb[0].mxu0
        %v6178 = vadd.f32 %v6093, %v6177
        %v6179 = vpop.f32.mrb[0].mxu0
        %v6180 = vpop.f32.mrb[0].mxu0
        %v6181 = vadd.f32 %v6093, %v6180
        %v6182 = vpop.f32.mrb[0].mxu0
        %6183 = vmatprep.mubr.bf16.mxu0 0
        %6184 = vmatmul.mubr.bf16.gmra.mrb[0].mxu0 %v6077
        %v6185 = vpop.f32.mrb[0].mxu0
        %v6186 = vadd.f32 %v6093, %v6185
        %v6187 = vpop.f32.mrb[0].mxu0
        %v6188 = vpop.f32.mrb[0].mxu0
        %v6189 = vadd.f32 %v6093, %v6188
        %v6190 = vpop.f32.mrb[0].mxu0
        %6191 = vmatprep.mubr.bf16.mxu0 0
        %6192 = vmatmul.mubr.bf16.gmra.mrb[0].mxu0 %v6078
        %v6193 = vpop.f32.mrb[0].mxu0
        %v6194 = vadd.f32 %v6093, %v6193
        %v6195 = vpop.f32.mrb[0].mxu0
        %v6196 = vpop.f32.mrb[0].mxu0
        %v6197 = vadd.f32 %v6093, %v6196
        %v6198 = vpop.f32.mrb[0].mxu0
        %6199 = vmatprep.mubr.bf16.mxu0 0
        %6200 = vmatmul.mubr.bf16.gmra.mrb[0].mxu0 %v6079
        %v6201 = vpop.f32.mrb[0].mxu0
        %v6202 = vadd.f32 %v6093, %v6201
        %v6203 = vpop.f32.mrb[0].mxu0
        %v6204 = vpop.f32.mrb[0].mxu0
        %v6205 = vadd.f32 %v6093, %v6204
        %v6206 = vpop.f32.mrb[0].mxu0
        %6207 = vmatprep.mubr.bf16.mxu0 0
        %6208 = vmatmul.mubr.bf16.gmra.mrb[0].mxu0 %v6080
        %v6209 = vpop.f32.mrb[0].mxu0
        %v6210 = vadd.f32 %v6093, %v6209
        %v6211 = vpop.f32.mrb[0].mxu0
        %v6212 = vpop.f32.mrb[0].mxu0
        %v6213 = vadd.f32 %v6093, %v6212
        %v6214 = vpop.f32.mrb[0].mxu0
        %6215 = vmatprep.mubr.bf16.mxu0 0
        %6216 = vmatmul.mubr.bf16.gmra.mrb[0].mxu0 %v6081
        %v6217 = vpop.f32.mrb[0].mxu0
        %v6218 = vadd.f32 %v6093, %v6217
        %v6219 = vpop.f32.mrb[0].mxu0
        %v6220 = vpop.f32.mrb[0].mxu0
        %v6221 = vadd.f32 %v6093, %v6220
        %v6222 = vpop.f32.mrb[0].mxu0
        %6223 = vmatprep.mubr.bf16.mxu0 0
        %6224 = vmatmul.mubr.bf16.gmra.mrb[0].mxu0 %v6082
        %v6225 = vpop.f32.mrb[0].mxu0
        %v6226 = vadd.f32 %v6093, %v6225
        %v6227 = vpop.f32.mrb[0].mxu0
        %v6228 = vpop.f32.mrb[0].mxu0
        %v6229 = vadd.f32 %v6093, %v6228
        %v6230 = vpop.f32.mrb[0].mxu0
        %6231 = vmatprep.mubr.bf16.mxu0 0
        %6232 = vmatmul.mubr.bf16.gmra.mrb[0].mxu0 %v6083
        %v6233 = vpop.f32.mrb[0].mxu0
        %v6234 = vadd.f32 %v6093, %v6233
        %v6235 = vpop.f32.mrb[0].mxu0
        %v6236 = vpop.f32.mrb[0].mxu0
        %v6237 = vadd.f32 %v6093, %v6236
        %v6238 = vpop.f32.mrb[0].mxu0
        %6239 = vmatprep.mubr.bf16.mxu0 0
        %6240 = vmatmul.mubr.bf16.gmra.mrb[0].mxu0 %v6084
        %v6241 = vpop.f32.mrb[0].mxu0
        %v6242 = vadd.f32 %v6093, %v6241
        %v6243 = vpop.f32.mrb[0].mxu0
        %v6244 = vpop.f32.mrb[0].mxu0
        %v6245 = vadd.f32 %v6093, %v6244
        %v6246 = vpop.f32.mrb[0].mxu0
        %6247 = vmatprep.mubr.bf16.mxu0 0
        %6248 = vmatmul.mubr.bf16.gmra.mrb[0].mxu0 %v6085
        %v6249 = vpop.f32.mrb[0].mxu0
        %v6250 = vadd.f32 %v6093, %v6249
        %v6251 = vpop.f32.mrb[0].mxu0
        %v6252 = vpop.f32.mrb[0].mxu0
        %v6253 = vadd.f32 %v6093, %v6252
        %v6254 = vpop.f32.mrb[0].mxu0
        %6255 = vmatprep.mubr.bf16.mxu0 0
        %6256 = vmatmul.mubr.bf16.gmra.mrb[0].mxu0 %v6086
        %v6257 = vpop.f32.mrb[0].mxu0
        %v6258 = vadd.f32 %v6093, %v6257
        %v6259 = vpop.f32.mrb[0].mxu0
        %v6260 = vpop.f32.mrb[0].mxu0
        %v6261 = vadd.f32 %v6093, %v6260
        %v6262 = vpop.f32.mrb[0].mxu0
        %6263 = vmatprep.mubr.bf16.mxu0 0
        %6264 = vmatmul.mubr.bf16.gmra.mrb[0].mxu0 %v6087
        %v6265 = vpop.f32.mrb[0].mxu0
        %v6266 = vadd.f32 %v6093, %v6265
        %v6267 = vpop.f32.mrb[0].mxu0
        %v6268 = vpop.f32.mrb[0].mxu0
        %v6269 = vadd.f32 %v6093, %v6268
        %v6270 = vpop.f32.mrb[0].mxu0
        %6271 = vdwg.mxu0
        %v6272 = vadd.f32 %v6178, %v1191
        %v6273 = vadd.f32 %v6181, %v1194
        %v6274 = vadd.f32 %v6186, %v1199
        %v6275 = vadd.f32 %v6189, %v1191
        %v6276 = vadd.f32 %v6194, %v1194
        %v6277 = vadd.f32 %v6197, %v1199
        %v6278 = vadd.f32 %v6202, %v1191
        %v6279 = vadd.f32 %v6205, %v1194
        %v6280 = vadd.f32 %v6210, %v1199
        %v6281 = vadd.f32 %v6213, %v1191
        %v6282 = vadd.f32 %v6218, %v1194
        %v6283 = vadd.f32 %v6221, %v1199
        %v6284 = vadd.f32 %v6226, %v1191
        %v6285 = vadd.f32 %v6229, %v1194
        %v6286 = vadd.f32 %v6234, %v1199
        %v6287 = vadd.f32 %v6237, %v1191
        %v6288 = vadd.f32 %v6242, %v1194
        %v6289 = vadd.f32 %v6245, %v1199
        %v6290 = vadd.f32 %v6250, %v1191
        %v6291 = vadd.f32 %v6253, %v1194
        %v6292 = vadd.f32 %v6258, %v1199
        %v6293 = vadd.f32 %v6261, %v1191
        %v6294 = vadd.f32 %v6266, %v1194
        %v6295 = vadd.f32 %v6269, %v1199
        %vm6296 = vcmp.gt.f32.partialorder %v6272, 0.0
        %vm6297 = vcmp.gt.f32.partialorder %v6273, 0.0
        %vm6298 = vcmp.gt.f32.partialorder %v6274, 0.0
        %vm6299 = vcmp.gt.f32.partialorder %v6275, 0.0
        %vm6300 = vcmp.gt.f32.partialorder %v6276, 0.0
        %vm6301 = vcmp.gt.f32.partialorder %v6277, 0.0
        %vm6302 = vcmp.gt.f32.partialorder %v6278, 0.0
        %vm6303 = vcmp.gt.f32.partialorder %v6279, 0.0
        %vm6304 = vcmp.gt.f32.partialorder %v6280, 0.0
        %vm6305 = vcmp.gt.f32.partialorder %v6281, 0.0
        %vm6306 = vcmp.gt.f32.partialorder %v6282, 0.0
        %vm6307 = vcmp.gt.f32.partialorder %v6283, 0.0
        %vm6308 = vcmp.gt.f32.partialorder %v6284, 0.0
        %vm6309 = vcmp.gt.f32.partialorder %v6285, 0.0
        %vm6310 = vcmp.gt.f32.partialorder %v6286, 0.0
        %vm6311 = vcmp.gt.f32.partialorder %v6287, 0.0
        %vm6312 = vcmp.gt.f32.partialorder %v6288, 0.0
        %vm6313 = vcmp.gt.f32.partialorder %v6289, 0.0
        %vm6314 = vcmp.gt.f32.partialorder %v6290, 0.0
        %vm6315 = vcmp.gt.f32.partialorder %v6291, 0.0
        %vm6316 = vcmp.gt.f32.partialorder %v6292, 0.0
        %vm6317 = vcmp.gt.f32.partialorder %v6293, 0.0
        %vm6318 = vcmp.gt.f32.partialorder %v6294, 0.0
        %vm6319 = vcmp.gt.f32.partialorder %v6295, 0.0
        %v6320 = vmin.f32 %v6272, 0.0
        %v6321 = vmin.f32 %v6273, 0.0
        %v6322 = vmin.f32 %v6274, 0.0
        %v6323 = vmin.f32 %v6275, 0.0
        %v6324 = vmin.f32 %v6276, 0.0
        %v6325 = vmin.f32 %v6277, 0.0
        %v6326 = vmin.f32 %v6278, 0.0
        %v6327 = vmin.f32 %v6279, 0.0
        %v6328 = vmin.f32 %v6280, 0.0
        %v6329 = vmin.f32 %v6281, 0.0
        %v6330 = vmin.f32 %v6282, 0.0
        %v6331 = vmin.f32 %v6283, 0.0
        %v6332 = vmin.f32 %v6284, 0.0
        %v6333 = vmin.f32 %v6285, 0.0
        %v6334 = vmin.f32 %v6286, 0.0
        %v6335 = vmin.f32 %v6287, 0.0
        %v6336 = vmin.f32 %v6288, 0.0
        %v6337 = vmin.f32 %v6289, 0.0
        %v6338 = vmin.f32 %v6290, 0.0
        %v6339 = vmin.f32 %v6291, 0.0
        %v6340 = vmin.f32 %v6292, 0.0
        %v6341 = vmin.f32 %v6293, 0.0
        %v6342 = vmin.f32 %v6294, 0.0
        %v6343 = vmin.f32 %v6295, 0.0
        %v6344 = vmul.f32 %v6320, 1.442695
        %v6345 = vpow.pop %v6344
        %v6346 = vmul.f32 %v6321, 1.442695
        %v6347 = vpow.pop %v6346
        %v6348 = vmul.f32 %v6322, 1.442695
        %v6349 = vpow.pop %v6348
        %v6350 = vmul.f32 %v6323, 1.442695
        %v6351 = vpow.pop %v6350
        %v6352 = vmul.f32 %v6324, 1.442695
        %v6353 = vpow.pop %v6352
        %v6354 = vmul.f32 %v6325, 1.442695
        %v6355 = vpow.pop %v6354
        %v6356 = vmul.f32 %v6326, 1.442695
        %v6357 = vpow.pop %v6356
        %v6358 = vmul.f32 %v6327, 1.442695
        %v6359 = vpow.pop %v6358
        %v6360 = vmul.f32 %v6328, 1.442695
        %v6361 = vpow.pop %v6360
        %v6362 = vmul.f32 %v6329, 1.442695
        %v6363 = vpow.pop %v6362
        %v6364 = vmul.f32 %v6330, 1.442695
        %v6365 = vpow.pop %v6364
        %v6366 = vmul.f32 %v6331, 1.442695
        %v6367 = vpow.pop %v6366
        %v6368 = vmul.f32 %v6332, 1.442695
        %v6369 = vpow.pop %v6368
        %v6370 = vmul.f32 %v6333, 1.442695
        %v6371 = vpow.pop %v6370
        %v6372 = vmul.f32 %v6334, 1.442695
        %v6373 = vpow.pop %v6372
        %v6374 = vmul.f32 %v6335, 1.442695
        %v6375 = vpow.pop %v6374
        %v6376 = vmul.f32 %v6336, 1.442695
        %v6377 = vpow.pop %v6376
        %v6378 = vmul.f32 %v6337, 1.442695
        %v6379 = vpow.pop %v6378
        %v6380 = vmul.f32 %v6338, 1.442695
        %v6381 = vpow.pop %v6380
        %v6382 = vmul.f32 %v6339, 1.442695
        %v6383 = vpow.pop %v6382
        %v6384 = vmul.f32 %v6340, 1.442695
        %v6385 = vpow.pop %v6384
        %v6386 = vmul.f32 %v6341, 1.442695
        %v6387 = vpow.pop %v6386
        %v6388 = vmul.f32 %v6342, 1.442695
        %v6389 = vpow.pop %v6388
        %v6390 = vmul.f32 %v6343, 1.442695
        %v6391 = vpow.pop %v6390
        %v6392 = vsub.f32 %v6345, 1.0
        %v6393 = vsub.f32 %v6347, 1.0
        %v6394 = vsub.f32 %v6349, 1.0
        %v6395 = vsub.f32 %v6351, 1.0
        %v6396 = vsub.f32 %v6353, 1.0
        %v6397 = vsub.f32 %v6355, 1.0
        %v6398 = vsub.f32 %v6357, 1.0
        %v6399 = vsub.f32 %v6359, 1.0
        %v6400 = vsub.f32 %v6361, 1.0
        %v6401 = vsub.f32 %v6363, 1.0
        %v6402 = vsub.f32 %v6365, 1.0
        %v6403 = vsub.f32 %v6367, 1.0
        %v6404 = vsub.f32 %v6369, 1.0
        %v6405 = vsub.f32 %v6371, 1.0
        %v6406 = vsub.f32 %v6373, 1.0
        %v6407 = vsub.f32 %v6375, 1.0
        %v6408 = vsub.f32 %v6377, 1.0
        %v6409 = vsub.f32 %v6379, 1.0
        %v6410 = vsub.f32 %v6381, 1.0
        %v6411 = vsub.f32 %v6383, 1.0
        %v6412 = vsub.f32 %v6385, 1.0
        %v6413 = vsub.f32 %v6387, 1.0
        %v6414 = vsub.f32 %v6389, 1.0
        %v6415 = vsub.f32 %v6391, 1.0
        %v6416 = vsel %vm6296, %v6272, %v6392
        %v6417 = vsel %vm6297, %v6273, %v6393
        %v6418 = vsel %vm6298, %v6274, %v6394
        %v6419 = vsel %vm6299, %v6275, %v6395
        %v6420 = vsel %vm6300, %v6276, %v6396
        %v6421 = vsel %vm6301, %v6277, %v6397
        %v6422 = vsel %vm6302, %v6278, %v6398
        %v6423 = vsel %vm6303, %v6279, %v6399
        %v6424 = vsel %vm6304, %v6280, %v6400
        %v6425 = vsel %vm6305, %v6281, %v6401
        %v6426 = vsel %vm6306, %v6282, %v6402
        %v6427 = vsel %vm6307, %v6283, %v6403
        %v6428 = vsel %vm6308, %v6284, %v6404
        %v6429 = vsel %vm6309, %v6285, %v6405
        %v6430 = vsel %vm6310, %v6286, %v6406
        %v6431 = vsel %vm6311, %v6287, %v6407
        %v6432 = vsel %vm6312, %v6288, %v6408
        %v6433 = vsel %vm6313, %v6289, %v6409
        %v6434 = vsel %vm6314, %v6290, %v6410
        %v6435 = vsel %vm6315, %v6291, %v6411
        %v6436 = vsel %vm6316, %v6292, %v6412
        %v6437 = vsel %vm6317, %v6293, %v6413
        %v6438 = vsel %vm6318, %v6294, %v6414
        %v6439 = vsel %vm6319, %v6295, %v6415
        %v6440 = vld [vmem:[%s51] sm:$0xf]
        %v6441 = vld [vmem:[%s51 + $0x4] sm:$0xf]
        %v6442 = vld [vmem:[%s51 + $0x8] sm:$0xf]
        %v6443 = vld [vmem:[%s51 + $0xc] sm:$0xf]
        %v6444 = vld [vmem:[%s51 + $0x10] sm:$0xf]
        %v6445 = vld [vmem:[%s51 + $0x14] sm:$0xf]
        %v6446 = vld [vmem:[%s51 + $0x18] sm:$0xf]
        %v6447 = vld [vmem:[%s51 + $0x1c] sm:$0xf]
        %v6448 = vld [vmem:[%s51 + $0x20] sm:$0xf]
        %v6449 = vld [vmem:[%s51 + $0x24] sm:$0xf]
        %v6450 = vld [vmem:[%s51 + $0x28] sm:$0xf]
        %v6451 = vld [vmem:[%s51 + $0x2c] sm:$0xf]
        %v6452 = vld [vmem:[%s51 + $0x30] sm:$0xf]
        %v6453 = vld [vmem:[%s51 + $0x34] sm:$0xf]
        %v6454 = vld [vmem:[%s51 + $0x38] sm:$0xf]
        %v6455 = vld [vmem:[%s51 + $0x3c] sm:$0xf]
        %v6456 = vpack.c.bf16 %v6417, %v6416
        %v6457 = vpack.c.bf16 %v6419, %v6418
        %v6458 = vpack.c.bf16 %v6421, %v6420
        %v6459 = vpack.c.bf16 %v6423, %v6422
        %v6460 = vpack.c.bf16 %v6425, %v6424
        %v6461 = vpack.c.bf16 %v6427, %v6426
        %v6462 = vpack.c.bf16 %v6429, %v6428
        %v6463 = vpack.c.bf16 %v6431, %v6430
        %v6464 = vpack.c.bf16 %v6433, %v6432
        %v6465 = vpack.c.bf16 %v6435, %v6434
        %v6466 = vpack.c.bf16 %v6437, %v6436
        %v6467 = vpack.c.bf16 %v6439, %v6438
        %v6468 = vld [vmem:[%s53] sm:$0x1]
        %v6470 = vlaneseq
        %v6471 = vshrl.u32 %v6470, 7
        %v6472 = vsub.s32 0, %v6471
        %v6473 = vrot.slane %v6468, %v6472
        %v6491 = vunpack.c.l.b16 %v6440
        %v6492 = vunpack.c.l.b16 %v6441
        %v6493 = vunpack.c.l.b16 %v6442
        %v6494 = vunpack.c.l.b16 %v6443
        %v6495 = vunpack.c.l.b16 %v6444
        %v6496 = vunpack.c.l.b16 %v6445
        %v6497 = vunpack.c.l.b16 %v6446
        %v6498 = vunpack.c.l.b16 %v6447
        %v6499 = vunpack.c.l.b16 %v6448
        %v6500 = vunpack.c.l.b16 %v6449
        %v6501 = vunpack.c.l.b16 %v6450
        %v6502 = vunpack.c.l.b16 %v6451
        %v6503 = vunpack.c.l.b16 %v6452
        %v6504 = vunpack.c.l.b16 %v6453
        %v6505 = vunpack.c.l.b16 %v6454
        %v6506 = vunpack.c.l.b16 %v6455
        %v6507 = vpack.c.b16 %v6492, %v6491
        %v6508 = vpack.c.b16 %v6494, %v6493
        %v6509 = vpack.c.b16 %v6496, %v6495
        %v6510 = vpack.c.b16 %v6498, %v6497
        %v6511 = vpack.c.b16 %v6500, %v6499
        %v6512 = vpack.c.b16 %v6502, %v6501
        %v6513 = vpack.c.b16 %v6504, %v6503
        %v6514 = vpack.c.b16 %v6506, %v6505
        %6523 = vmatprep.subr.bf16.mxu0 0
        %6524 = vmatpush1.bf16.msra.mxu0 %v6507
        %6525 = vmatprep.subr.bf16.mxu0 0
        %6526 = vmatpush1.bf16.msra.mxu0 %v6508
        %6527 = vmatprep.subr.bf16.mxu0 0
        %6528 = vmatpush1.bf16.msra.mxu0 %v6509
        %6529 = vmatprep.subr.bf16.mxu0 0
        %6530 = vmatpush1.bf16.msra.mxu0 %v6510
        %6531 = vmatprep.subr.bf16.mxu0 0
        %6532 = vmatpush1.bf16.msra.mxu0 %v6511
        %6533 = vmatprep.subr.bf16.mxu0 0
        %6534 = vmatpush1.bf16.msra.mxu0 %v6512
        %6535 = vmatprep.subr.bf16.mxu0 0
        %6536 = vmatpush1.bf16.msra.mxu0 %v6513
        %6537 = vmatprep.subr.bf16.mxu0 0
        %6538 = vmatpush1.bf16.msra.mxu0 %v6514
        %6539 = vmatprep.subr.bf16.mxu0 0
        %6540 = vmatpush1.bf16.msra.mxu0 0
        %6541 = vmatprep.subr.bf16.mxu0 0
        %6542 = vmatpush1.bf16.msra.mxu0 0
        %6543 = vmatprep.subr.bf16.mxu0 0
        %6544 = vmatpush1.bf16.msra.mxu0 0
        %6545 = vmatprep.subr.bf16.mxu0 0
        %6546 = vmatpush1.bf16.msra.mxu0 0
        %6547 = vmatprep.subr.bf16.mxu0 0
        %6548 = vmatpush1.bf16.msra.mxu0 0
        %6549 = vmatprep.subr.bf16.mxu0 0
        %6550 = vmatpush1.bf16.msra.mxu0 0
        %6551 = vmatprep.subr.bf16.mxu0 0
        %6552 = vmatpush1.bf16.msra.mxu0 0
        %6553 = vmatprep.subr.bf16.mxu0 0
        %6554 = vmatpush1.bf16.msra.mxu0 0
        %6555 = vmatprep.mubr.bf16.mxu0 0
        %6556 = vmatmul.mubr.bf16.gmra.mrb[0].mxu0 %v6456
        %v6557 = vpop.f32.mrb[0].mxu0
        %v6558 = vadd.f32 %v6473, %v6557
        %v6559 = vpop.f32.mrb[0].mxu0
        %v6560 = vpop.f32.mrb[0].mxu0
        %v6561 = vadd.f32 %v6473, %v6560
        %v6562 = vpop.f32.mrb[0].mxu0
        %6563 = vmatprep.mubr.bf16.mxu0 0
        %6564 = vmatmul.mubr.bf16.gmra.mrb[0].mxu0 %v6457
        %v6565 = vpop.f32.mrb[0].mxu0
        %v6566 = vadd.f32 %v6473, %v6565
        %v6567 = vpop.f32.mrb[0].mxu0
        %v6568 = vpop.f32.mrb[0].mxu0
        %v6569 = vadd.f32 %v6473, %v6568
        %v6570 = vpop.f32.mrb[0].mxu0
        %6571 = vmatprep.mubr.bf16.mxu0 0
        %6572 = vmatmul.mubr.bf16.gmra.mrb[0].mxu0 %v6458
        %v6573 = vpop.f32.mrb[0].mxu0
        %v6574 = vadd.f32 %v6473, %v6573
        %v6575 = vpop.f32.mrb[0].mxu0
        %v6576 = vpop.f32.mrb[0].mxu0
        %v6577 = vadd.f32 %v6473, %v6576
        %v6578 = vpop.f32.mrb[0].mxu0
        %6579 = vmatprep.mubr.bf16.mxu0 0
        %6580 = vmatmul.mubr.bf16.gmra.mrb[0].mxu0 %v6459
        %v6581 = vpop.f32.mrb[0].mxu0
        %v6582 = vadd.f32 %v6473, %v6581
        %v6583 = vpop.f32.mrb[0].mxu0
        %v6584 = vpop.f32.mrb[0].mxu0
        %v6585 = vadd.f32 %v6473, %v6584
        %v6586 = vpop.f32.mrb[0].mxu0
        %6587 = vmatprep.mubr.bf16.mxu0 0
        %6588 = vmatmul.mubr.bf16.gmra.mrb[0].mxu0 %v6460
        %v6589 = vpop.f32.mrb[0].mxu0
        %v6590 = vadd.f32 %v6473, %v6589
        %v6591 = vpop.f32.mrb[0].mxu0
        %v6592 = vpop.f32.mrb[0].mxu0
        %v6593 = vadd.f32 %v6473, %v6592
        %v6594 = vpop.f32.mrb[0].mxu0
        %6595 = vmatprep.mubr.bf16.mxu0 0
        %6596 = vmatmul.mubr.bf16.gmra.mrb[0].mxu0 %v6461
        %v6597 = vpop.f32.mrb[0].mxu0
        %v6598 = vadd.f32 %v6473, %v6597
        %v6599 = vpop.f32.mrb[0].mxu0
        %v6600 = vpop.f32.mrb[0].mxu0
        %v6601 = vadd.f32 %v6473, %v6600
        %v6602 = vpop.f32.mrb[0].mxu0
        %6603 = vmatprep.mubr.bf16.mxu0 0
        %6604 = vmatmul.mubr.bf16.gmra.mrb[0].mxu0 %v6462
        %v6605 = vpop.f32.mrb[0].mxu0
        %v6606 = vadd.f32 %v6473, %v6605
        %v6607 = vpop.f32.mrb[0].mxu0
        %v6608 = vpop.f32.mrb[0].mxu0
        %v6609 = vadd.f32 %v6473, %v6608
        %v6610 = vpop.f32.mrb[0].mxu0
        %6611 = vmatprep.mubr.bf16.mxu0 0
        %6612 = vmatmul.mubr.bf16.gmra.mrb[0].mxu0 %v6463
        %v6613 = vpop.f32.mrb[0].mxu0
        %v6614 = vadd.f32 %v6473, %v6613
        %v6615 = vpop.f32.mrb[0].mxu0
        %v6616 = vpop.f32.mrb[0].mxu0
        %v6617 = vadd.f32 %v6473, %v6616
        %v6618 = vpop.f32.mrb[0].mxu0
        %6619 = vmatprep.mubr.bf16.mxu0 0
        %6620 = vmatmul.mubr.bf16.gmra.mrb[0].mxu0 %v6464
        %v6621 = vpop.f32.mrb[0].mxu0
        %v6622 = vadd.f32 %v6473, %v6621
        %v6623 = vpop.f32.mrb[0].mxu0
        %v6624 = vpop.f32.mrb[0].mxu0
        %v6625 = vadd.f32 %v6473, %v6624
        %v6626 = vpop.f32.mrb[0].mxu0
        %6627 = vmatprep.mubr.bf16.mxu0 0
        %6628 = vmatmul.mubr.bf16.gmra.mrb[0].mxu0 %v6465
        %v6629 = vpop.f32.mrb[0].mxu0
        %v6630 = vadd.f32 %v6473, %v6629
        %v6631 = vpop.f32.mrb[0].mxu0
        %v6632 = vpop.f32.mrb[0].mxu0
        %v6633 = vadd.f32 %v6473, %v6632
        %v6634 = vpop.f32.mrb[0].mxu0
        %6635 = vmatprep.mubr.bf16.mxu0 0
        %6636 = vmatmul.mubr.bf16.gmra.mrb[0].mxu0 %v6466
        %v6637 = vpop.f32.mrb[0].mxu0
        %v6638 = vadd.f32 %v6473, %v6637
        %v6639 = vpop.f32.mrb[0].mxu0
        %v6640 = vpop.f32.mrb[0].mxu0
        %v6641 = vadd.f32 %v6473, %v6640
        %v6642 = vpop.f32.mrb[0].mxu0
        %6643 = vmatprep.mubr.bf16.mxu0 0
        %6644 = vmatmul.mubr.bf16.gmra.mrb[0].mxu0 %v6467
        %v6645 = vpop.f32.mrb[0].mxu0
        %v6646 = vadd.f32 %v6473, %v6645
        %v6647 = vpop.f32.mrb[0].mxu0
        %v6648 = vpop.f32.mrb[0].mxu0
        %v6649 = vadd.f32 %v6473, %v6648
        %v6650 = vpop.f32.mrb[0].mxu0
        %6651 = vdwg.mxu0
        %v6652 = vadd.f32 %v6558, %v6036
        %v6653 = vadd.f32 %v6561, %v6037
        %v6654 = vadd.f32 %v6566, %v6038
        %v6655 = vadd.f32 %v6569, %v6039
        %v6656 = vadd.f32 %v6574, %v6040
        %v6657 = vadd.f32 %v6577, %v6041
        %v6658 = vadd.f32 %v6582, %v6042
        %v6659 = vadd.f32 %v6585, %v6043
        %v6660 = vadd.f32 %v6590, %v6044
        %v6661 = vadd.f32 %v6593, %v6045
        %v6662 = vadd.f32 %v6598, %v6046
        %v6663 = vadd.f32 %v6601, %v6047
        %v6664 = vadd.f32 %v6606, %v6048
        %v6665 = vadd.f32 %v6609, %v6049
        %v6666 = vadd.f32 %v6614, %v6050
        %v6667 = vadd.f32 %v6617, %v6051
        %v6668 = vadd.f32 %v6622, %v6052
        %v6669 = vadd.f32 %v6625, %v6053
        %v6670 = vadd.f32 %v6630, %v6054
        %v6671 = vadd.f32 %v6633, %v6055
        %v6672 = vadd.f32 %v6638, %v6056
        %v6673 = vadd.f32 %v6641, %v6057
        %v6674 = vadd.f32 %v6646, %v6058
        %v6675 = vadd.f32 %v6649, %v6059
        %v6676 = vld [vmem:[%s55] sm:$0x1]
        %v6677 = vld [vmem:[%s57] sm:$0x1]
        %6678 = vadd.xlane.f32.xlu0 %v6652
        %v6679 = vpop.xlane.xlu0 %6678
        %6680 = vadd.xlane.f32.xlu0 %v6653
        %v6681 = vpop.xlane.xlu0 %6680
        %6682 = vadd.xlane.f32.xlu0 %v6654
        %v6683 = vpop.xlane.xlu0 %6682
        %6684 = vadd.xlane.f32.xlu0 %v6655
        %v6685 = vpop.xlane.xlu0 %6684
        %6686 = vadd.xlane.f32.xlu0 %v6656
        %v6687 = vpop.xlane.xlu0 %6686
        %6688 = vadd.xlane.f32.xlu0 %v6657
        %v6689 = vpop.xlane.xlu0 %6688
        %6690 = vadd.xlane.f32.xlu0 %v6658
        %v6691 = vpop.xlane.xlu0 %6690
        %6692 = vadd.xlane.f32.xlu0 %v6659
        %v6693 = vpop.xlane.xlu0 %6692
        %6694 = vadd.xlane.f32.xlu0 %v6660
        %v6695 = vpop.xlane.xlu0 %6694
        %6696 = vadd.xlane.f32.xlu0 %v6661
        %v6697 = vpop.xlane.xlu0 %6696
        %6698 = vadd.xlane.f32.xlu0 %v6662
        %v6699 = vpop.xlane.xlu0 %6698
        %6700 = vadd.xlane.f32.xlu0 %v6663
        %v6701 = vpop.xlane.xlu0 %6700
        %6702 = vadd.xlane.f32.xlu0 %v6664
        %v6703 = vpop.xlane.xlu0 %6702
        %6704 = vadd.xlane.f32.xlu0 %v6665
        %v6705 = vpop.xlane.xlu0 %6704
        %6706 = vadd.xlane.f32.xlu0 %v6666
        %v6707 = vpop.xlane.xlu0 %6706
        %6708 = vadd.xlane.f32.xlu0 %v6667
        %v6709 = vpop.xlane.xlu0 %6708
        %6710 = vadd.xlane.f32.xlu0 %v6668
        %v6711 = vpop.xlane.xlu0 %6710
        %6712 = vadd.xlane.f32.xlu0 %v6669
        %v6713 = vpop.xlane.xlu0 %6712
        %6714 = vadd.xlane.f32.xlu0 %v6670
        %v6715 = vpop.xlane.xlu0 %6714
        %6716 = vadd.xlane.f32.xlu0 %v6671
        %v6717 = vpop.xlane.xlu0 %6716
        %6718 = vadd.xlane.f32.xlu0 %v6672
        %v6719 = vpop.xlane.xlu0 %6718
        %6720 = vadd.xlane.f32.xlu0 %v6673
        %v6721 = vpop.xlane.xlu0 %6720
        %6722 = vadd.xlane.f32.xlu0 %v6674
        %v6723 = vpop.xlane.xlu0 %6722
        %6724 = vadd.xlane.f32.xlu0 %v6675
        %v6725 = vpop.xlane.xlu0 %6724
        %v6726 = vmul.f32 %v6679, %v5783
        %v6727 = vmul.f32 %v6681, %v5783
        %v6728 = vmul.f32 %v6683, %v5783
        %v6729 = vmul.f32 %v6685, %v5783
        %v6730 = vmul.f32 %v6687, %v5783
        %v6731 = vmul.f32 %v6689, %v5783
        %v6732 = vmul.f32 %v6691, %v5783
        %v6733 = vmul.f32 %v6693, %v5783
        %v6734 = vmul.f32 %v6695, %v5783
        %v6735 = vmul.f32 %v6697, %v5783
        %v6736 = vmul.f32 %v6699, %v5783
        %v6737 = vmul.f32 %v6701, %v5783
        %v6738 = vmul.f32 %v6703, %v5783
        %v6739 = vmul.f32 %v6705, %v5783
        %v6740 = vmul.f32 %v6707, %v5783
        %v6741 = vmul.f32 %v6709, %v5783
        %v6742 = vmul.f32 %v6711, %v5783
        %v6743 = vmul.f32 %v6713, %v5783
        %v6744 = vmul.f32 %v6715, %v5783
        %v6745 = vmul.f32 %v6717, %v5783
        %v6746 = vmul.f32 %v6719, %v5783
        %v6747 = vmul.f32 %v6721, %v5783
        %v6748 = vmul.f32 %v6723, %v5783
        %v6749 = vmul.f32 %v6725, %v5783
        %v6750 = vsub.f32 %v6652, %v6726
        %v6751 = vsub.f32 %v6653, %v6727
        %v6752 = vsub.f32 %v6654, %v6728
        %v6753 = vsub.f32 %v6655, %v6729
        %v6754 = vsub.f32 %v6656, %v6730
        %v6755 = vsub.f32 %v6657, %v6731
        %v6756 = vsub.f32 %v6658, %v6732
        %v6757 = vsub.f32 %v6659, %v6733
        %v6758 = vsub.f32 %v6660, %v6734
        %v6759 = vsub.f32 %v6661, %v6735
        %v6760 = vsub.f32 %v6662, %v6736
        %v6761 = vsub.f32 %v6663, %v6737
        %v6762 = vsub.f32 %v6664, %v6738
        %v6763 = vsub.f32 %v6665, %v6739
        %v6764 = vsub.f32 %v6666, %v6740
        %v6765 = vsub.f32 %v6667, %v6741
        %v6766 = vsub.f32 %v6668, %v6742
        %v6767 = vsub.f32 %v6669, %v6743
        %v6768 = vsub.f32 %v6670, %v6744
        %v6769 = vsub.f32 %v6671, %v6745
        %v6770 = vsub.f32 %v6672, %v6746
        %v6771 = vsub.f32 %v6673, %v6747
        %v6772 = vsub.f32 %v6674, %v6748
        %v6773 = vsub.f32 %v6675, %v6749
        %v6774 = vmul.f32 %v6750, %v6750
        %v6775 = vmul.f32 %v6751, %v6751
        %v6776 = vmul.f32 %v6752, %v6752
        %v6777 = vmul.f32 %v6753, %v6753
        %v6778 = vmul.f32 %v6754, %v6754
        %v6779 = vmul.f32 %v6755, %v6755
        %v6780 = vmul.f32 %v6756, %v6756
        %v6781 = vmul.f32 %v6757, %v6757
        %v6782 = vmul.f32 %v6758, %v6758
        %v6783 = vmul.f32 %v6759, %v6759
        %v6784 = vmul.f32 %v6760, %v6760
        %v6785 = vmul.f32 %v6761, %v6761
        %v6786 = vmul.f32 %v6762, %v6762
        %v6787 = vmul.f32 %v6763, %v6763
        %v6788 = vmul.f32 %v6764, %v6764
        %v6789 = vmul.f32 %v6765, %v6765
        %v6790 = vmul.f32 %v6766, %v6766
        %v6791 = vmul.f32 %v6767, %v6767
        %v6792 = vmul.f32 %v6768, %v6768
        %v6793 = vmul.f32 %v6769, %v6769
        %v6794 = vmul.f32 %v6770, %v6770
        %v6795 = vmul.f32 %v6771, %v6771
        %v6796 = vmul.f32 %v6772, %v6772
        %v6797 = vmul.f32 %v6773, %v6773
        %6798 = vadd.xlane.f32.xlu0 %v6774
        %v6799 = vpop.xlane.xlu0 %6798
        %6800 = vadd.xlane.f32.xlu0 %v6775
        %v6801 = vpop.xlane.xlu0 %6800
        %6802 = vadd.xlane.f32.xlu0 %v6776
        %v6803 = vpop.xlane.xlu0 %6802
        %6804 = vadd.xlane.f32.xlu0 %v6777
        %v6805 = vpop.xlane.xlu0 %6804
        %6806 = vadd.xlane.f32.xlu0 %v6778
        %v6807 = vpop.xlane.xlu0 %6806
        %6808 = vadd.xlane.f32.xlu0 %v6779
        %v6809 = vpop.xlane.xlu0 %6808
        %6810 = vadd.xlane.f32.xlu0 %v6780
        %v6811 = vpop.xlane.xlu0 %6810
        %6812 = vadd.xlane.f32.xlu0 %v6781
        %v6813 = vpop.xlane.xlu0 %6812
        %6814 = vadd.xlane.f32.xlu0 %v6782
        %v6815 = vpop.xlane.xlu0 %6814
        %6816 = vadd.xlane.f32.xlu0 %v6783
        %v6817 = vpop.xlane.xlu0 %6816
        %6818 = vadd.xlane.f32.xlu0 %v6784
        %v6819 = vpop.xlane.xlu0 %6818
        %6820 = vadd.xlane.f32.xlu0 %v6785
        %v6821 = vpop.xlane.xlu0 %6820
        %6822 = vadd.xlane.f32.xlu0 %v6786
        %v6823 = vpop.xlane.xlu0 %6822
        %6824 = vadd.xlane.f32.xlu0 %v6787
        %v6825 = vpop.xlane.xlu0 %6824
        %6826 = vadd.xlane.f32.xlu0 %v6788
        %v6827 = vpop.xlane.xlu0 %6826
        %6828 = vadd.xlane.f32.xlu0 %v6789
        %v6829 = vpop.xlane.xlu0 %6828
        %6830 = vadd.xlane.f32.xlu0 %v6790
        %v6831 = vpop.xlane.xlu0 %6830
        %6832 = vadd.xlane.f32.xlu0 %v6791
        %v6833 = vpop.xlane.xlu0 %6832
        %6834 = vadd.xlane.f32.xlu0 %v6792
        %v6835 = vpop.xlane.xlu0 %6834
        %6836 = vadd.xlane.f32.xlu0 %v6793
        %v6837 = vpop.xlane.xlu0 %6836
        %6838 = vadd.xlane.f32.xlu0 %v6794
        %v6839 = vpop.xlane.xlu0 %6838
        %6840 = vadd.xlane.f32.xlu0 %v6795
        %v6841 = vpop.xlane.xlu0 %6840
        %6842 = vadd.xlane.f32.xlu0 %v6796
        %v6843 = vpop.xlane.xlu0 %6842
        %6844 = vadd.xlane.f32.xlu0 %v6797
        %v6845 = vpop.xlane.xlu0 %6844
        %v6846 = vmul.f32 %v6799, %v5783
        %v6847 = vmul.f32 %v6801, %v5783
        %v6848 = vmul.f32 %v6803, %v5783
        %v6849 = vmul.f32 %v6805, %v5783
        %v6850 = vmul.f32 %v6807, %v5783
        %v6851 = vmul.f32 %v6809, %v5783
        %v6852 = vmul.f32 %v6811, %v5783
        %v6853 = vmul.f32 %v6813, %v5783
        %v6854 = vmul.f32 %v6815, %v5783
        %v6855 = vmul.f32 %v6817, %v5783
        %v6856 = vmul.f32 %v6819, %v5783
        %v6857 = vmul.f32 %v6821, %v5783
        %v6858 = vmul.f32 %v6823, %v5783
        %v6859 = vmul.f32 %v6825, %v5783
        %v6860 = vmul.f32 %v6827, %v5783
        %v6861 = vmul.f32 %v6829, %v5783
        %v6862 = vmul.f32 %v6831, %v5783
        %v6863 = vmul.f32 %v6833, %v5783
        %v6864 = vmul.f32 %v6835, %v5783
        %v6865 = vmul.f32 %v6837, %v5783
        %v6866 = vmul.f32 %v6839, %v5783
        %v6867 = vmul.f32 %v6841, %v5783
        %v6868 = vmul.f32 %v6843, %v5783
        %v6869 = vmul.f32 %v6845, %v5783
        %v6870 = vadd.f32 %v6846, 1e-05
        %v6871 = vadd.f32 %v6847, 1e-05
        %v6872 = vadd.f32 %v6848, 1e-05
        %v6873 = vadd.f32 %v6849, 1e-05
        %v6874 = vadd.f32 %v6850, 1e-05
        %v6875 = vadd.f32 %v6851, 1e-05
        %v6876 = vadd.f32 %v6852, 1e-05
        %v6877 = vadd.f32 %v6853, 1e-05
        %v6878 = vadd.f32 %v6854, 1e-05
        %v6879 = vadd.f32 %v6855, 1e-05
        %v6880 = vadd.f32 %v6856, 1e-05
        %v6881 = vadd.f32 %v6857, 1e-05
        %v6882 = vadd.f32 %v6858, 1e-05
        %v6883 = vadd.f32 %v6859, 1e-05
        %v6884 = vadd.f32 %v6860, 1e-05
        %v6885 = vadd.f32 %v6861, 1e-05
        %v6886 = vadd.f32 %v6862, 1e-05
        %v6887 = vadd.f32 %v6863, 1e-05
        %v6888 = vadd.f32 %v6864, 1e-05
        %v6889 = vadd.f32 %v6865, 1e-05
        %v6890 = vadd.f32 %v6866, 1e-05
        %v6891 = vadd.f32 %v6867, 1e-05
        %v6892 = vadd.f32 %v6868, 1e-05
        %v6893 = vadd.f32 %v6869, 1e-05
        %v6894 = vrsqrt.pop %v6870
        %v6895 = vrsqrt.pop %v6871
        %v6896 = vrsqrt.pop %v6872
        %v6897 = vrsqrt.pop %v6873
        %v6898 = vrsqrt.pop %v6874
        %v6899 = vrsqrt.pop %v6875
        %v6900 = vrsqrt.pop %v6876
        %v6901 = vrsqrt.pop %v6877
        %v6902 = vrsqrt.pop %v6878
        %v6903 = vrsqrt.pop %v6879
        %v6904 = vrsqrt.pop %v6880
        %v6905 = vrsqrt.pop %v6881
        %v6906 = vrsqrt.pop %v6882
        %v6907 = vrsqrt.pop %v6883
        %v6908 = vrsqrt.pop %v6884
        %v6909 = vrsqrt.pop %v6885
        %v6910 = vrsqrt.pop %v6886
        %v6911 = vrsqrt.pop %v6887
        %v6912 = vrsqrt.pop %v6888
        %v6913 = vrsqrt.pop %v6889
        %v6914 = vrsqrt.pop %v6890
        %v6915 = vrsqrt.pop %v6891
        %v6916 = vrsqrt.pop %v6892
        %v6917 = vrsqrt.pop %v6893
        %v6918 = vmul.f32 %v6750, %v6894
        %v6919 = vmul.f32 %v6751, %v6895
        %v6920 = vmul.f32 %v6752, %v6896
        %v6921 = vmul.f32 %v6753, %v6897
        %v6922 = vmul.f32 %v6754, %v6898
        %v6923 = vmul.f32 %v6755, %v6899
        %v6924 = vmul.f32 %v6756, %v6900
        %v6925 = vmul.f32 %v6757, %v6901
        %v6926 = vmul.f32 %v6758, %v6902
        %v6927 = vmul.f32 %v6759, %v6903
        %v6928 = vmul.f32 %v6760, %v6904
        %v6929 = vmul.f32 %v6761, %v6905
        %v6930 = vmul.f32 %v6762, %v6906
        %v6931 = vmul.f32 %v6763, %v6907
        %v6932 = vmul.f32 %v6764, %v6908
        %v6933 = vmul.f32 %v6765, %v6909
        %v6934 = vmul.f32 %v6766, %v6910
        %v6935 = vmul.f32 %v6767, %v6911
        %v6936 = vmul.f32 %v6768, %v6912
        %v6937 = vmul.f32 %v6769, %v6913
        %v6938 = vmul.f32 %v6770, %v6914
        %v6939 = vmul.f32 %v6771, %v6915
        %v6940 = vmul.f32 %v6772, %v6916
        %v6941 = vmul.f32 %v6773, %v6917
        %v6943 = vlaneseq
        %v6944 = vshrl.u32 %v6943, 7
        %v6945 = vsub.s32 0, %v6944
        %v6946 = vrot.slane %v6676, %v6945
        %v6948 = vmul.f32 %v6918, %v6946
        %v6949 = vmul.f32 %v6919, %v6946
        %v6950 = vmul.f32 %v6920, %v6946
        %v6951 = vmul.f32 %v6921, %v6946
        %v6952 = vmul.f32 %v6922, %v6946
        %v6953 = vmul.f32 %v6923, %v6946
        %v6954 = vmul.f32 %v6924, %v6946
        %v6955 = vmul.f32 %v6925, %v6946
        %v6956 = vmul.f32 %v6926, %v6946
        %v6957 = vmul.f32 %v6927, %v6946
        %v6958 = vmul.f32 %v6928, %v6946
        %v6959 = vmul.f32 %v6929, %v6946
        %v6960 = vmul.f32 %v6930, %v6946
        %v6961 = vmul.f32 %v6931, %v6946
        %v6962 = vmul.f32 %v6932, %v6946
        %v6963 = vmul.f32 %v6933, %v6946
        %v6964 = vmul.f32 %v6934, %v6946
        %v6965 = vmul.f32 %v6935, %v6946
        %v6966 = vmul.f32 %v6936, %v6946
        %v6967 = vmul.f32 %v6937, %v6946
        %v6968 = vmul.f32 %v6938, %v6946
        %v6969 = vmul.f32 %v6939, %v6946
        %v6970 = vmul.f32 %v6940, %v6946
        %v6971 = vmul.f32 %v6941, %v6946
        %v6973 = vlaneseq
        %v6974 = vshrl.u32 %v6973, 7
        %v6975 = vsub.s32 0, %v6974
        %v6976 = vrot.slane %v6677, %v6975
        %v6978 = vadd.f32 %v6948, %v6976
        %v6979 = vadd.f32 %v6949, %v6976
        %v6980 = vadd.f32 %v6950, %v6976
        %v6981 = vadd.f32 %v6951, %v6976
        %v6982 = vadd.f32 %v6952, %v6976
        %v6983 = vadd.f32 %v6953, %v6976
        %v6984 = vadd.f32 %v6954, %v6976
        %v6985 = vadd.f32 %v6955, %v6976
        %v6986 = vadd.f32 %v6956, %v6976
        %v6987 = vadd.f32 %v6957, %v6976
        %v6988 = vadd.f32 %v6958, %v6976
        %v6989 = vadd.f32 %v6959, %v6976
        %v6990 = vadd.f32 %v6960, %v6976
        %v6991 = vadd.f32 %v6961, %v6976
        %v6992 = vadd.f32 %v6962, %v6976
        %v6993 = vadd.f32 %v6963, %v6976
        %v6994 = vadd.f32 %v6964, %v6976
        %v6995 = vadd.f32 %v6965, %v6976
        %v6996 = vadd.f32 %v6966, %v6976
        %v6997 = vadd.f32 %v6967, %v6976
        %v6998 = vadd.f32 %v6968, %v6976
        %v6999 = vadd.f32 %v6969, %v6976
        %v7000 = vadd.f32 %v6970, %v6976
        %v7001 = vadd.f32 %v6971, %v6976
        %7002 = vst [vmem:[%s1039] sm:$0xff] %v6978
        %7003 = vst [vmem:[%s1039 + $0x8] sm:$0xff] %v6979
        %7004 = vst [vmem:[%s1039 + $0x10] sm:$0xff] %v6980
        %7005 = vst [vmem:[%s1039 + $0x18] sm:$0xff] %v6981
        %7006 = vst [vmem:[%s1039 + $0x20] sm:$0xff] %v6982
        %7007 = vst [vmem:[%s1039 + $0x28] sm:$0xff] %v6983
        %7008 = vst [vmem:[%s1039 + $0x30] sm:$0xff] %v6984
        %7009 = vst [vmem:[%s1039 + $0x38] sm:$0xff] %v6985
        %7010 = vst [vmem:[%s1039 + $0x40] sm:$0xff] %v6986
        %7011 = vst [vmem:[%s1039 + $0x48] sm:$0xff] %v6987
        %7012 = vst [vmem:[%s1039 + $0x50] sm:$0xff] %v6988
        %7013 = vst [vmem:[%s1039 + $0x58] sm:$0xff] %v6989
        %7014 = vst [vmem:[%s1039 + $0x60] sm:$0xff] %v6990
        %7015 = vst [vmem:[%s1039 + $0x68] sm:$0xff] %v6991
        %7016 = vst [vmem:[%s1039 + $0x70] sm:$0xff] %v6992
        %7017 = vst [vmem:[%s1039 + $0x78] sm:$0xff] %v6993
        %7018 = vst [vmem:[%s1039 + $0x80] sm:$0xff] %v6994
        %7019 = vst [vmem:[%s1039 + $0x88] sm:$0xff] %v6995
        %7020 = vst [vmem:[%s1039 + $0x90] sm:$0xff] %v6996
        %7021 = vst [vmem:[%s1039 + $0x98] sm:$0xff] %v6997
        %7022 = vst [vmem:[%s1039 + $0xa0] sm:$0xff] %v6998
        %7023 = vst [vmem:[%s1039 + $0xa8] sm:$0xff] %v6999
        %7024 = vst [vmem:[%s1039 + $0xb0] sm:$0xff] %v7000
        %7025 = vst [vmem:[%s1039 + $0xb8] sm:$0xff] %v7001
        %s7026 = sand.u32 %s697, 1
        %s7027 = sand.u32 %s697, 1
        %s7028 = smul.addr %s7027, 192
        %s7029 = scalar_lea.vmem [#allocation7], %s7028
        // Predicated region
        $region175: #{temporal_block_forward.1} parent=169 // pred_check
          %p7030 = pneg %p707
        $region176: #{temporal_block_forward.1} parent=169 // pred_check_branch
          %7032 = sbr.rel (%p7030) target = $region178
        $region177: #{temporal_block_forward.1} parent=169 // pred_region
          %s7033 = smul.u32 3, %s70
          %s7034 = smul.addr %s7033, 8
          %s7035 = scalar_lea.vmem %s59, %s7034
          // Predicated region
          $region179: #{temporal_block_forward.1} parent=177 // pred_check
            _
          $region180: #{temporal_block_forward.1} parent=177 // pred_check_branch
            %7037 = sbr.rel (0) target = $region182
          $region181: #{temporal_block_forward.1} parent=177 // pred_region
            // Predicated region
            $region183: #{temporal_block_forward.1} parent=181 // pred_check
              _
            $region184: #{temporal_block_forward.1} parent=181 // pred_check_branch
              %7039 = sbr.rel (0) target = $region186
            $region185: #{temporal_block_forward.1} parent=181 // pred_region
              // Predicated region
              $region198: #{temporal_block_forward.1} parent=185 // pred_check
                _
              $region199: #{temporal_block_forward.1} parent=185 // pred_check_branch
                %7100 = sbr.rel (0) target = $region201
              $region200: #{temporal_block_forward.1} parent=185 // pred_region
                loop: start=0, step=1, limit=1
                $region202: #{temporal_block_forward.1} parent=200 // loop_pre_header
                  _
                $region203: #{temporal_block_forward.1} parent=200 // loop_header
                  %s7102 = sphi 0, %s7106
                  %p7103 = scmp.ge.s32.totalorder %s7102, 1
                  %s7107 = sphi %s7029, %s7029
                  %s7108 = sphi %s7035, %s7035
                $region204: #{temporal_block_forward.1} parent=200 // loop_header_branch
                  %7105 = sbr.rel (%p7103) target = $region208
                $region205: #{temporal_block_forward.1} parent=200 // loop_body
                  %v7109 = vld [vmem:[%s7107] sm:$0xff]
                  %7110 = vst [vmem:[%s7108] sm:$0xff] %v7109
                  %v7111 = vld [vmem:[%s7107 + $0x8] sm:$0xff]
                  %7112 = vst [vmem:[%s7108 + $0x8] sm:$0xff] %v7111
                  %v7113 = vld [vmem:[%s7107 + $0x10] sm:$0xff]
                  %7114 = vst [vmem:[%s7108 + $0x10] sm:$0xff] %v7113
                  %v7115 = vld [vmem:[%s7107 + $0x18] sm:$0xff]
                  %7116 = vst [vmem:[%s7108 + $0x30] sm:$0xff] %v7115
                  %v7117 = vld [vmem:[%s7107 + $0x20] sm:$0xff]
                  %7118 = vst [vmem:[%s7108 + $0x38] sm:$0xff] %v7117
                  %v7119 = vld [vmem:[%s7107 + $0x28] sm:$0xff]
                  %7120 = vst [vmem:[%s7108 + $0x40] sm:$0xff] %v7119
                  %v7121 = vld [vmem:[%s7107 + $0x30] sm:$0xff]
                  %7122 = vst [vmem:[%s7108 + $0x60] sm:$0xff] %v7121
                  %v7123 = vld [vmem:[%s7107 + $0x38] sm:$0xff]
                  %7124 = vst [vmem:[%s7108 + $0x68] sm:$0xff] %v7123
                  %v7125 = vld [vmem:[%s7107 + $0x40] sm:$0xff]
                  %7126 = vst [vmem:[%s7108 + $0x70] sm:$0xff] %v7125
                  %v7127 = vld [vmem:[%s7107 + $0x48] sm:$0xff]
                  %7128 = vst [vmem:[%s7108 + $0x90] sm:$0xff] %v7127
                  %v7129 = vld [vmem:[%s7107 + $0x50] sm:$0xff]
                  %7130 = vst [vmem:[%s7108 + $0x98] sm:$0xff] %v7129
                  %v7131 = vld [vmem:[%s7107 + $0x58] sm:$0xff]
                  %7132 = vst [vmem:[%s7108 + $0xa0] sm:$0xff] %v7131
                  %v7133 = vld [vmem:[%s7107 + $0x60] sm:$0xff]
                  %7134 = vst [vmem:[%s7108 + $0xc0] sm:$0xff] %v7133
                  %v7135 = vld [vmem:[%s7107 + $0x68] sm:$0xff]
                  %7136 = vst [vmem:[%s7108 + $0xc8] sm:$0xff] %v7135
                  %v7137 = vld [vmem:[%s7107 + $0x70] sm:$0xff]
                  %7138 = vst [vmem:[%s7108 + $0xd0] sm:$0xff] %v7137
                  %v7139 = vld [vmem:[%s7107 + $0x78] sm:$0xff]
                  %7140 = vst [vmem:[%s7108 + $0xf0] sm:$0xff] %v7139
                  %v7141 = vld [vmem:[%s7107 + $0x80] sm:$0xff]
                  %7142 = vst [vmem:[%s7108 + $0xf8] sm:$0xff] %v7141
                  %v7143 = vld [vmem:[%s7107 + $0x88] sm:$0xff]
                  %7144 = vst [vmem:[%s7108 + $0x100] sm:$0xff] %v7143
                  %v7145 = vld [vmem:[%s7107 + $0x90] sm:$0xff]
                  %7146 = vst [vmem:[%s7108 + $0x120] sm:$0xff] %v7145
                  %v7147 = vld [vmem:[%s7107 + $0x98] sm:$0xff]
                  %7148 = vst [vmem:[%s7108 + $0x128] sm:$0xff] %v7147
                  %v7149 = vld [vmem:[%s7107 + $0xa0] sm:$0xff]
                  %7150 = vst [vmem:[%s7108 + $0x130] sm:$0xff] %v7149
                  %v7151 = vld [vmem:[%s7107 + $0xa8] sm:$0xff]
                  %7152 = vst [vmem:[%s7108 + $0x150] sm:$0xff] %v7151
                  %v7153 = vld [vmem:[%s7107 + $0xb0] sm:$0xff]
                  %7154 = vst [vmem:[%s7108 + $0x158] sm:$0xff] %v7153
                  %v7155 = vld [vmem:[%s7107 + $0xb8] sm:$0xff]
                  %7156 = vst [vmem:[%s7108 + $0x160] sm:$0xff] %v7155
                $region206: #{temporal_block_forward.1} parent=200 // loop_footer
                  %s7106 = sadd.s32 1, %s7102
                $region207: #{temporal_block_forward.1} parent=200 // loop_footer_branch
                  %7101 = sbr.rel target = $region203
                $region208: #{temporal_block_forward.1} parent=200 // loop_exit
                  _
              $region201: #{temporal_block_forward.1} parent=185 // pred_fallthru
                _
              // Predicated region
              $region209: #{temporal_block_forward.1} parent=185 // pred_check
                _
              $region210: #{temporal_block_forward.1} parent=185 // pred_check_branch
                %7158 = sbr.rel target = $region212
              $region211: #{temporal_block_forward.1} parent=185 // pred_region
                _
              $region212: #{temporal_block_forward.1} parent=185 // pred_fallthru
                _
            $region186: #{temporal_block_forward.1} parent=181 // pred_fallthru
              _
            // Predicated region
            $region187: #{temporal_block_forward.1} parent=181 // pred_check
              _
            $region188: #{temporal_block_forward.1} parent=181 // pred_check_branch
              %7041 = sbr.rel target = $region190
            $region189: #{temporal_block_forward.1} parent=181 // pred_region
              loop: start=0, step=1, limit=1
              $region191: #{temporal_block_forward.1} parent=189 // loop_pre_header
                _
              $region192: #{temporal_block_forward.1} parent=189 // loop_header
                %s7044 = sphi 0, %s7048
                %p7045 = scmp.ge.s32.totalorder %s7044, 1
                %s7049 = sphi %s7029, %s7029
                %s7050 = sphi %s7035, %s7035
              $region193: #{temporal_block_forward.1} parent=189 // loop_header_branch
                %7047 = sbr.rel (%p7045) target = $region197
              $region194: #{temporal_block_forward.1} parent=189 // loop_body
                %v7051 = vld [vmem:[%s7049] sm:$0xff]
                %7052 = vst [vmem:[%s7050] sm:$0xff] %v7051
                %v7053 = vld [vmem:[%s7049 + $0x8] sm:$0xff]
                %7054 = vst [vmem:[%s7050 + $0x8] sm:$0xff] %v7053
                %v7055 = vld [vmem:[%s7049 + $0x10] sm:$0xff]
                %7056 = vst [vmem:[%s7050 + $0x10] sm:$0xff] %v7055
                %v7057 = vld [vmem:[%s7049 + $0x18] sm:$0xff]
                %7058 = vst [vmem:[%s7050 + $0x30] sm:$0xff] %v7057
                %v7059 = vld [vmem:[%s7049 + $0x20] sm:$0xff]
                %7060 = vst [vmem:[%s7050 + $0x38] sm:$0xff] %v7059
                %v7061 = vld [vmem:[%s7049 + $0x28] sm:$0xff]
                %7062 = vst [vmem:[%s7050 + $0x40] sm:$0xff] %v7061
                %v7063 = vld [vmem:[%s7049 + $0x30] sm:$0xff]
                %7064 = vst [vmem:[%s7050 + $0x60] sm:$0xff] %v7063
                %v7065 = vld [vmem:[%s7049 + $0x38] sm:$0xff]
                %7066 = vst [vmem:[%s7050 + $0x68] sm:$0xff] %v7065
                %v7067 = vld [vmem:[%s7049 + $0x40] sm:$0xff]
                %7068 = vst [vmem:[%s7050 + $0x70] sm:$0xff] %v7067
                %v7069 = vld [vmem:[%s7049 + $0x48] sm:$0xff]
                %7070 = vst [vmem:[%s7050 + $0x90] sm:$0xff] %v7069
                %v7071 = vld [vmem:[%s7049 + $0x50] sm:$0xff]
                %7072 = vst [vmem:[%s7050 + $0x98] sm:$0xff] %v7071
                %v7073 = vld [vmem:[%s7049 + $0x58] sm:$0xff]
                %7074 = vst [vmem:[%s7050 + $0xa0] sm:$0xff] %v7073
                %v7075 = vld [vmem:[%s7049 + $0x60] sm:$0xff]
                %7076 = vst [vmem:[%s7050 + $0xc0] sm:$0xff] %v7075
                %v7077 = vld [vmem:[%s7049 + $0x68] sm:$0xff]
                %7078 = vst [vmem:[%s7050 + $0xc8] sm:$0xff] %v7077
                %v7079 = vld [vmem:[%s7049 + $0x70] sm:$0xff]
                %7080 = vst [vmem:[%s7050 + $0xd0] sm:$0xff] %v7079
                %v7081 = vld [vmem:[%s7049 + $0x78] sm:$0xff]
                %7082 = vst [vmem:[%s7050 + $0xf0] sm:$0xff] %v7081
                %v7083 = vld [vmem:[%s7049 + $0x80] sm:$0xff]
                %7084 = vst [vmem:[%s7050 + $0xf8] sm:$0xff] %v7083
                %v7085 = vld [vmem:[%s7049 + $0x88] sm:$0xff]
                %7086 = vst [vmem:[%s7050 + $0x100] sm:$0xff] %v7085
                %v7087 = vld [vmem:[%s7049 + $0x90] sm:$0xff]
                %7088 = vst [vmem:[%s7050 + $0x120] sm:$0xff] %v7087
                %v7089 = vld [vmem:[%s7049 + $0x98] sm:$0xff]
                %7090 = vst [vmem:[%s7050 + $0x128] sm:$0xff] %v7089
                %v7091 = vld [vmem:[%s7049 + $0xa0] sm:$0xff]
                %7092 = vst [vmem:[%s7050 + $0x130] sm:$0xff] %v7091
                %v7093 = vld [vmem:[%s7049 + $0xa8] sm:$0xff]
                %7094 = vst [vmem:[%s7050 + $0x150] sm:$0xff] %v7093
                %v7095 = vld [vmem:[%s7049 + $0xb0] sm:$0xff]
                %7096 = vst [vmem:[%s7050 + $0x158] sm:$0xff] %v7095
                %v7097 = vld [vmem:[%s7049 + $0xb8] sm:$0xff]
                %7098 = vst [vmem:[%s7050 + $0x160] sm:$0xff] %v7097
              $region195: #{temporal_block_forward.1} parent=189 // loop_footer
                %s7048 = sadd.s32 1, %s7044
              $region196: #{temporal_block_forward.1} parent=189 // loop_footer_branch
                %7043 = sbr.rel target = $region192
              $region197: #{temporal_block_forward.1} parent=189 // loop_exit
                _
            $region190: #{temporal_block_forward.1} parent=181 // pred_fallthru
              _
          $region182: #{temporal_block_forward.1} parent=177 // pred_fallthru
            _
          %7159 = vnop
        $region178: #{temporal_block_forward.1} parent=169 // pred_fallthru
          _
      $region170: #{temporal_block_forward.1} parent=5 // pred_fallthru
        _
      %p7160 = scmp.le.s32.totalorder 2, %s65
      // Predicated region
      $region213: #{temporal_block_forward.1} parent=5 // pred_check
        %p7161 = pneg %p7160
      $region214: #{temporal_block_forward.1} parent=5 // pred_check_branch
        %7163 = sbr.rel (%p7161) target = $region216
      $region215: #{temporal_block_forward.1} parent=5 // pred_region
        %s7164 = ssub.s32 %s65, 2
        // Predicated region
        $region217: #{temporal_block_forward.1} parent=215 // pred_check
          %p7165 = pneg %p713
        $region218: #{temporal_block_forward.1} parent=215 // pred_check_branch
          %7167 = sbr.rel (%p7165) target = $region220
        $region219: #{temporal_block_forward.1} parent=215 // pred_region
          %s7168 = sand.u32 %s698, 1
          %s7169 = sand.u32 %s698, 1
          %s7170 = smul.addr %s7169, 192
          %s7171 = scalar_lea.vmem [#allocation7], %s7170
        $region220: #{temporal_block_forward.1} parent=215 // pred_fallthru
          _
      $region216: #{temporal_block_forward.1} parent=5 // pred_fallthru
        _
    $region6: #{temporal_block_forward.1} parent=1 // loop_footer
      %s69 = sadd.s32 1, %s65
    $region7: #{temporal_block_forward.1} parent=1 // loop_footer_branch
      %64 = sbr.rel target = $region3
    $region8: #{temporal_block_forward.1} parent=1 // loop_exit
      _

</llo_original>
